<compile_context>
chip_gen: v7x
topology: tpu7x:2x2x1
jax: 0.10.0
libtpu: 0.0.40
codegen_flags: <defaults>
</compile_context>

<pallas_src>
import jax
import jax.numpy as jnp
from jax.experimental import pallas as pl
from jax.experimental.pallas import tpu as pltpu

BN_EPS = 1e-5

# 32 MiB keeps comfortable headroom on v7x (64 MiB physical VMEM); all activations /
# weights here are far smaller, so a single whole-array block per operand is optimal.
COMPILER_PARAMS = pltpu.CompilerParams(
    vmem_limit_bytes=32 * 1024 * 1024,
    dimension_semantics=("arbitrary",),
)


# ----------------------------- Pallas kernels ------------------------------

def _bn_train(h, g, b):
    # Training-mode BatchNorm in one pass: sum + sum-of-squares -> mu / biased var (f32).
    m = h.shape[0]
    s1 = jnp.sum(h, axis=0, keepdims=True)
    s2 = jnp.sum(h * h, axis=0, keepdims=True)
    mu = s1 / m
    var = s2 / m - mu * mu
    return (h - mu) * jax.lax.rsqrt(var + BN_EPS) * g + b


def _conv_relu_bn_kernel(a_ref, w_ref, cb_ref, g_ref, b_ref, o_ref):
    # im2col conv as one MXU matmul (bf16 operands, f32 accumulate) + bias + ReLU + BN.
    acc = jnp.dot(a_ref[...], w_ref[...], preferred_element_type=jnp.float32)
    acc = jnp.maximum(acc + cb_ref[...], 0.0)
    o_ref[...] = _bn_train(acc, g_ref[...], b_ref[...])


def _max4_kernel(a_ref, b_ref, c_ref, d_ref, o_ref):
    # 2x2 max-pool: elementwise max of the four strided views.
    o_ref[...] = jnp.maximum(jnp.maximum(a_ref[...], b_ref[...]),
                             jnp.maximum(c_ref[...], d_ref[...]))


def _tail_kernel(a_ref, w5_ref, cb5_ref, g5_ref, b5_ref,
                 w6_ref, cb6_ref, g6_ref, b6_ref,
                 fw1_ref, fb1_ref, fw2_ref, fb2_ref, o_ref):
    # conv5 (3x3 on a 3x3 map == full contraction) + ReLU + bn5, conv6 (1x1) + ReLU +
    # bn6, flatten, fc1 + ReLU, fc2 -- all (N, C) matmuls, fused into one kernel.
    h = jnp.dot(a_ref[...], w5_ref[...], preferred_element_type=jnp.float32)
    h = _bn_train(jnp.maximum(h + cb5_ref[...], 0.0), g5_ref[...], b5_ref[...])
    h = jnp.dot(h.astype(jnp.bfloat16), w6_ref[...], preferred_element_type=jnp.float32)
    h = _bn_train(jnp.maximum(h + cb6_ref[...], 0.0), g6_ref[...], b6_ref[...])
    h = jnp.dot(h.astype(jnp.bfloat16), fw1_ref[...], preferred_element_type=jnp.float32)
    h = jnp.maximum(h + fb1_ref[...], 0.0)
    o_ref[...] = (jnp.dot(h.astype(jnp.bfloat16), fw2_ref[...],
                          preferred_element_type=jnp.float32) + fb2_ref[...])


# ----------------------------- pallas_call glue -----------------------------

def _full_spec(shape):
    nd = len(shape)
    return pl.BlockSpec(shape, lambda i, _nd=nd: (0,) * _nd)


def _call(kernel, inputs, out_shape):
    return pl.pallas_call(
        kernel,
        grid=(1,),
        in_specs=[_full_spec(a.shape) for a in inputs],
        out_specs=_full_spec(out_shape.shape),
        out_shape=out_shape,
        compiler_params=COMPILER_PARAMS,
    )(*inputs)


def _im2col(x, kh, kw):
    # VALID conv, stride 1: rows ordered (n, y, x); cols ordered (ky, kx, cin).
    n, h, w, c = x.shape
    ho, wo = h - kh + 1, w - kw + 1
    cols = [x[:, ky:ky + ho, kx:kx + wo, :] for ky in range(kh) for kx in range(kw)]
    patches = jnp.stack(cols, axis=3)                  # (N, Ho, Wo, KH*KW, C)
    return patches.reshape(n * ho * wo, kh * kw * c), (n, ho, wo)


def _conv_w_to_mat(w):
    # PyTorch conv weight (Cout, Cin, KH, KW) -> (KH*KW*Cin, Cout), matching im2col order.
    return jnp.transpose(w, (2, 3, 1, 0)).reshape(-1, w.shape[0])


def conv_relu_bn(x_nhwc, w, bias, gamma, beta):
    cout, _, kh, kw = w.shape
    a, (n, ho, wo) = _im2col(x_nhwc, kh, kw)
    a = a.astype(jnp.bfloat16)                         # bf16 MXU operands, f32 accumulate
    wm = _conv_w_to_mat(w).astype(jnp.bfloat16)
    cb = bias.reshape(1, cout).astype(jnp.float32)
    g = gamma.reshape(1, cout).astype(jnp.float32)
    b = beta.reshape(1, cout).astype(jnp.float32)
    out = _call(_conv_relu_bn_kernel, (a, wm, cb, g, b),
                jax.ShapeDtypeStruct((a.shape[0], cout), jnp.float32))
    return out.reshape(n, ho, wo, cout)


def maxpool2(x_nhwc):
    n, h, w, c = x_nhwc.shape
    ho, wo = h // 2, w // 2
    views = tuple(x_nhwc[:, dy::2, dx::2, :].reshape(n * ho * wo, c)
                  for dy in (0, 1) for dx in (0, 1))
    out = _call(_max4_kernel, views,
                jax.ShapeDtypeStruct((n * ho * wo, c), jnp.float32))
    return out.reshape(n, ho, wo, c)


def tail_head(x_nhwc, p):
    n = x_nhwc.shape[0]
    a = x_nhwc.reshape(n, -1).astype(jnp.bfloat16)     # (N, 3*3*64) == conv5 im2col

    def wmat(w):
        return _conv_w_to_mat(w).astype(jnp.bfloat16)

    def row(v):
        return v.reshape(1, -1).astype(jnp.float32)

    inputs = (
        a,
        wmat(p["conv5_w"]), row(p["conv5_b"]), row(p["bn5_g"]), row(p["bn5_b"]),
        wmat(p["conv6_w"]), row(p["conv6_b"]), row(p["bn6_g"]), row(p["bn6_b"]),
        jnp.transpose(p["fc1_w"]).astype(jnp.bfloat16), row(p["fc1_b"]),
        jnp.transpose(p["fc2_w"]).astype(jnp.bfloat16), row(p["fc2_b"]),
    )
    return _call(_tail_kernel, inputs,
                 jax.ShapeDtypeStruct((n, p["fc2_w"].shape[0]), jnp.float32))


# ----------------------------- MnistNet forward ------------------------------

def mnistnet_forward(params, x_nchw):
    x = jnp.transpose(x_nchw, (0, 2, 3, 1)).astype(jnp.float32)    # NCHW -> NHWC
    # x = relu(conv1(x)); x = bn1(x)
    x = conv_relu_bn(x, params["conv1_w"], params["conv1_b"], params["bn1_g"], params["bn1_b"])
    # x = relu(conv2(x)); x = drop(maxpool(bn2(x), 2))
    x = conv_relu_bn(x, params["conv2_w"], params["conv2_b"], params["bn2_g"], params["bn2_b"])
    x = maxpool2(x)
    # TODO(synk): Dropout2d(p=0.2) has no deterministic parity with torch RNG; identity here.
    # x = relu(conv3(x)); x = bn3(x); x = relu(conv4(x)); x = bn4(x)
    x = conv_relu_bn(x, params["conv3_w"], params["conv3_b"], params["bn3_g"], params["bn3_b"])
    x = conv_relu_bn(x, params["conv4_w"], params["conv4_b"], params["bn4_g"], params["bn4_b"])
    x = maxpool2(x)                                                 # then dropout == identity
    # conv5+bn5, conv6+bn6, flatten, fc1+relu, fc2 fused into one Pallas kernel.
    return tail_head(x, params)


def init_mnistnet_params(key):
    ks = iter(jax.random.split(key, 20))

    def conv(cout, cin, k):
        fan_in = cin * k * k
        w = jax.random.normal(next(ks), (cout, cin, k, k), jnp.float32) * (2.0 / fan_in) ** 0.5
        b = jax.random.uniform(next(ks), (cout,), jnp.float32, -1.0, 1.0) * fan_in ** -0.5
        return w, b

    def linear(cout, cin):
        w = jax.random.normal(next(ks), (cout, cin), jnp.float32) * cin ** -0.5
        b = jax.random.uniform(next(ks), (cout,), jnp.float32, -1.0, 1.0) * cin ** -0.5
        return w, b

    p = {}
    for name, (co, ci, k) in dict(conv1=(32, 1, 5), conv2=(32, 32, 5), conv3=(64, 32, 3),
                                  conv4=(64, 64, 3), conv5=(128, 64, 3), conv6=(128, 128, 1)).items():
        p[f"{name}_w"], p[f"{name}_b"] = conv(co, ci, k)
        idx = name[-1]
        p[f"bn{idx}_g"] = jnp.ones((co,), jnp.float32)
        p[f"bn{idx}_b"] = jnp.zeros((co,), jnp.float32)
    p["fc1_w"], p["fc1_b"] = linear(100, 128)
    p["fc2_w"], p["fc2_b"] = linear(10, 100)
    return p


if __name__ == "__main__":
    key = jax.random.PRNGKey(0)
    pkey, xkey = jax.random.split(key)
    params = init_mnistnet_params(pkey)
    # MNIST-shaped input: 28x28x1 is required so the flatten feeds fc1's 128 features.
    x = jax.random.uniform(xkey, (2, 1, 28, 28), jnp.float32)
    logits = jax.jit(mnistnet_forward)(params, x)
    jax.block_until_ready(logits)
    assert logits.shape == (2, 10) and logits.dtype == jnp.float32
    print("KERNEL_OK")
</pallas_src>

<mosaic_0001>
module attributes {stable_mosaic.version = 11 : i64} {
  func.func @_conv_relu_bn_kernel(%arg0: i32, %arg1: memref<1152x25xbf16, #tpu.memory_space<vmem>>, %arg2: memref<25x32xbf16, #tpu.memory_space<vmem>>, %arg3: memref<1x32xf32, #tpu.memory_space<vmem>>, %arg4: memref<1x32xf32, #tpu.memory_space<vmem>>, %arg5: memref<1x32xf32, #tpu.memory_space<vmem>>, %arg6: memref<1152x32xf32, #tpu.memory_space<vmem>>) attributes {dimension_semantics = [#tpu.dimension_semantics<arbitrary>], iteration_bounds = array<i64: 1>, scalar_prefetch = 0 : i64, scratch_operands = 0 : i64, tpu.core_type = #tpu.core_type<tc>, window_params = [{pipeline_mode = #tpu.pipeline_mode<synchronous>, transform_indices = @transform_0, window_bounds = array<i64: 1152, 25>}, {pipeline_mode = #tpu.pipeline_mode<synchronous>, transform_indices = @transform_1, window_bounds = array<i64: 25, 32>}, {pipeline_mode = #tpu.pipeline_mode<synchronous>, transform_indices = @transform_2, window_bounds = array<i64: 1, 32>}, {pipeline_mode = #tpu.pipeline_mode<synchronous>, transform_indices = @transform_3, window_bounds = array<i64: 1, 32>}, {pipeline_mode = #tpu.pipeline_mode<synchronous>, transform_indices = @transform_4, window_bounds = array<i64: 1, 32>}, {pipeline_mode = #tpu.pipeline_mode<synchronous>, transform_indices = @transform_5, window_bounds = array<i64: 1152, 32>}]} {
    %c0 = arith.constant 0 : index
    %c0_0 = arith.constant 0 : index
    %0 = vector.load %arg1[%c0, %c0_0] : memref<1152x25xbf16, #tpu.memory_space<vmem>>, vector<1152x25xbf16>
    %c0_1 = arith.constant 0 : index
    %c0_2 = arith.constant 0 : index
    %1 = vector.load %arg2[%c0_1, %c0_2] : memref<25x32xbf16, #tpu.memory_space<vmem>>, vector<25x32xbf16>
    %cst = arith.constant dense<0.000000e+00> : vector<1152x32xf32>
    %2 = tpu.matmul %0, %1, %cst {dimension_numbers = #tpu.dot_dimension_numbers<[1], [0], [0], [1], [0, 0, 1, 1], [], []>} : vector<1152x25xbf16>, vector<25x32xbf16>, vector<1152x32xf32> -> vector<1152x32xf32>
    %c0_3 = arith.constant 0 : index
    %c0_4 = arith.constant 0 : index
    %3 = vector.load %arg3[%c0_3, %c0_4] : memref<1x32xf32, #tpu.memory_space<vmem>>, vector<1x32xf32>
    %4 = vector.broadcast %3 : vector<1x32xf32> to vector<1152x32xf32>
    %5 = arith.addf %2, %4 : vector<1152x32xf32>
    %cst_5 = arith.constant 0.000000e+00 : f32
    %6 = vector.broadcast %cst_5 : f32 to vector<1152x32xf32>
    %7 = arith.maximumf %5, %6 : vector<1152x32xf32>
    %c0_6 = arith.constant 0 : index
    %c0_7 = arith.constant 0 : index
    %8 = vector.load %arg4[%c0_6, %c0_7] : memref<1x32xf32, #tpu.memory_space<vmem>>, vector<1x32xf32>
    %c0_8 = arith.constant 0 : index
    %c0_9 = arith.constant 0 : index
    %9 = vector.load %arg5[%c0_8, %c0_9] : memref<1x32xf32, #tpu.memory_space<vmem>>, vector<1x32xf32>
    %cst_10 = arith.constant dense<0.000000e+00> : vector<32xf32>
    %10 = vector.multi_reduction <add>, %7, %cst_10 [0] : vector<1152x32xf32> to vector<32xf32>
    %11 = vector.shape_cast %10 : vector<32xf32> to vector<1x32xf32>
    %12 = arith.mulf %7, %7 : vector<1152x32xf32>
    %cst_11 = arith.constant dense<0.000000e+00> : vector<32xf32>
    %13 = vector.multi_reduction <add>, %12, %cst_11 [0] : vector<1152x32xf32> to vector<32xf32>
    %14 = vector.shape_cast %13 : vector<32xf32> to vector<1x32xf32>
    %cst_12 = arith.constant 1.152000e+03 : f32
    %15 = vector.broadcast %cst_12 : f32 to vector<1x32xf32>
    %16 = arith.divf %11, %15 : vector<1x32xf32>
    %cst_13 = arith.constant 1.152000e+03 : f32
    %17 = vector.broadcast %cst_13 : f32 to vector<1x32xf32>
    %18 = arith.divf %14, %17 : vector<1x32xf32>
    %19 = arith.mulf %16, %16 : vector<1x32xf32>
    %20 = arith.subf %18, %19 : vector<1x32xf32>
    %21 = vector.broadcast %16 : vector<1x32xf32> to vector<1152x32xf32>
    %22 = arith.subf %7, %21 : vector<1152x32xf32>
    %cst_14 = arith.constant 9.99999974E-6 : f32
    %23 = vector.broadcast %cst_14 : f32 to vector<1x32xf32>
    %24 = arith.addf %20, %23 : vector<1x32xf32>
    %25 = math.rsqrt %24 : vector<1x32xf32>
    %26 = vector.broadcast %25 : vector<1x32xf32> to vector<1152x32xf32>
    %27 = arith.mulf %22, %26 : vector<1152x32xf32>
    %28 = vector.broadcast %8 : vector<1x32xf32> to vector<1152x32xf32>
    %29 = arith.mulf %27, %28 : vector<1152x32xf32>
    %30 = vector.broadcast %9 : vector<1x32xf32> to vector<1152x32xf32>
    %31 = arith.addf %29, %30 : vector<1152x32xf32>
    %c0_15 = arith.constant 0 : index
    %c0_16 = arith.constant 0 : index
    %32 = vector.load %arg6[%c0_15, %c0_16] : memref<1152x32xf32, #tpu.memory_space<vmem>>, vector<1152x32xf32>
    tpu.vector_store %arg6[%c0_15, %c0_16], %31 {strides = array<i32>} : memref<1152x32xf32, #tpu.memory_space<vmem>>, vector<1152x32xf32>,
    return
  }
  func.func @transform_0(%arg0: i32) -> (i32, i32) {
    %c0_i32 = arith.constant 0 : i32
    %c0_i32_0 = arith.constant 0 : i32
    %c0_i32_1 = arith.constant 0 : i32
    return %c0_i32, %c0_i32_0 : i32, i32
  }
  func.func @transform_1(%arg0: i32) -> (i32, i32) {
    %c0_i32 = arith.constant 0 : i32
    %c0_i32_0 = arith.constant 0 : i32
    %c0_i32_1 = arith.constant 0 : i32
    return %c0_i32, %c0_i32_0 : i32, i32
  }
  func.func @transform_2(%arg0: i32) -> (i32, i32) {
    %c0_i32 = arith.constant 0 : i32
    %c0_i32_0 = arith.constant 0 : i32
    %c0_i32_1 = arith.constant 0 : i32
    return %c0_i32, %c0_i32_0 : i32, i32
  }
  func.func @transform_3(%arg0: i32) -> (i32, i32) {
    %c0_i32 = arith.constant 0 : i32
    %c0_i32_0 = arith.constant 0 : i32
    %c0_i32_1 = arith.constant 0 : i32
    return %c0_i32, %c0_i32_0 : i32, i32
  }
  func.func @transform_4(%arg0: i32) -> (i32, i32) {
    %c0_i32 = arith.constant 0 : i32
    %c0_i32_0 = arith.constant 0 : i32
    %c0_i32_1 = arith.constant 0 : i32
    return %c0_i32, %c0_i32_0 : i32, i32
  }
  func.func @transform_5(%arg0: i32) -> (i32, i32) {
    %c0_i32 = arith.constant 0 : i32
    %c0_i32_0 = arith.constant 0 : i32
    %c0_i32_1 = arith.constant 0 : i32
    return %c0_i32, %c0_i32_0 : i32, i32
  }
}

module attributes {stable_mosaic.version = 11 : i64} {
  func.func @_conv_relu_bn_kernel(%arg0: i32, %arg1: memref<800x800xbf16, #tpu.memory_space<vmem>>, %arg2: memref<800x32xbf16, #tpu.memory_space<vmem>>, %arg3: memref<1x32xf32, #tpu.memory_space<vmem>>, %arg4: memref<1x32xf32, #tpu.memory_space<vmem>>, %arg5: memref<1x32xf32, #tpu.memory_space<vmem>>, %arg6: memref<800x32xf32, #tpu.memory_space<vmem>>) attributes {dimension_semantics = [#tpu.dimension_semantics<arbitrary>], iteration_bounds = array<i64: 1>, scalar_prefetch = 0 : i64, scratch_operands = 0 : i64, tpu.core_type = #tpu.core_type<tc>, window_params = [{pipeline_mode = #tpu.pipeline_mode<synchronous>, transform_indices = @transform_0, window_bounds = array<i64: 800, 800>}, {pipeline_mode = #tpu.pipeline_mode<synchronous>, transform_indices = @transform_1, window_bounds = array<i64: 800, 32>}, {pipeline_mode = #tpu.pipeline_mode<synchronous>, transform_indices = @transform_2, window_bounds = array<i64: 1, 32>}, {pipeline_mode = #tpu.pipeline_mode<synchronous>, transform_indices = @transform_3, window_bounds = array<i64: 1, 32>}, {pipeline_mode = #tpu.pipeline_mode<synchronous>, transform_indices = @transform_4, window_bounds = array<i64: 1, 32>}, {pipeline_mode = #tpu.pipeline_mode<synchronous>, transform_indices = @transform_5, window_bounds = array<i64: 800, 32>}]} {
    %c0 = arith.constant 0 : index
    %c0_0 = arith.constant 0 : index
    %0 = vector.load %arg1[%c0, %c0_0] : memref<800x800xbf16, #tpu.memory_space<vmem>>, vector<800x800xbf16>
    %c0_1 = arith.constant 0 : index
    %c0_2 = arith.constant 0 : index
    %1 = vector.load %arg2[%c0_1, %c0_2] : memref<800x32xbf16, #tpu.memory_space<vmem>>, vector<800x32xbf16>
    %cst = arith.constant dense<0.000000e+00> : vector<800x32xf32>
    %2 = tpu.matmul %0, %1, %cst {dimension_numbers = #tpu.dot_dimension_numbers<[1], [0], [0], [1], [0, 0, 1, 1], [], []>} : vector<800x800xbf16>, vector<800x32xbf16>, vector<800x32xf32> -> vector<800x32xf32>
    %c0_3 = arith.constant 0 : index
    %c0_4 = arith.constant 0 : index
    %3 = vector.load %arg3[%c0_3, %c0_4] : memref<1x32xf32, #tpu.memory_space<vmem>>, vector<1x32xf32>
    %4 = vector.broadcast %3 : vector<1x32xf32> to vector<800x32xf32>
    %5 = arith.addf %2, %4 : vector<800x32xf32>
    %cst_5 = arith.constant 0.000000e+00 : f32
    %6 = vector.broadcast %cst_5 : f32 to vector<800x32xf32>
    %7 = arith.maximumf %5, %6 : vector<800x32xf32>
    %c0_6 = arith.constant 0 : index
    %c0_7 = arith.constant 0 : index
    %8 = vector.load %arg4[%c0_6, %c0_7] : memref<1x32xf32, #tpu.memory_space<vmem>>, vector<1x32xf32>
    %c0_8 = arith.constant 0 : index
    %c0_9 = arith.constant 0 : index
    %9 = vector.load %arg5[%c0_8, %c0_9] : memref<1x32xf32, #tpu.memory_space<vmem>>, vector<1x32xf32>
    %cst_10 = arith.constant dense<0.000000e+00> : vector<32xf32>
    %10 = vector.multi_reduction <add>, %7, %cst_10 [0] : vector<800x32xf32> to vector<32xf32>
    %11 = vector.shape_cast %10 : vector<32xf32> to vector<1x32xf32>
    %12 = arith.mulf %7, %7 : vector<800x32xf32>
    %cst_11 = arith.constant dense<0.000000e+00> : vector<32xf32>
    %13 = vector.multi_reduction <add>, %12, %cst_11 [0] : vector<800x32xf32> to vector<32xf32>
    %14 = vector.shape_cast %13 : vector<32xf32> to vector<1x32xf32>
    %cst_12 = arith.constant 8.000000e+02 : f32
    %15 = vector.broadcast %cst_12 : f32 to vector<1x32xf32>
    %16 = arith.divf %11, %15 : vector<1x32xf32>
    %cst_13 = arith.constant 8.000000e+02 : f32
    %17 = vector.broadcast %cst_13 : f32 to vector<1x32xf32>
    %18 = arith.divf %14, %17 : vector<1x32xf32>
    %19 = arith.mulf %16, %16 : vector<1x32xf32>
    %20 = arith.subf %18, %19 : vector<1x32xf32>
    %21 = vector.broadcast %16 : vector<1x32xf32> to vector<800x32xf32>
    %22 = arith.subf %7, %21 : vector<800x32xf32>
    %cst_14 = arith.constant 9.99999974E-6 : f32
    %23 = vector.broadcast %cst_14 : f32 to vector<1x32xf32>
    %24 = arith.addf %20, %23 : vector<1x32xf32>
    %25 = math.rsqrt %24 : vector<1x32xf32>
    %26 = vector.broadcast %25 : vector<1x32xf32> to vector<800x32xf32>
    %27 = arith.mulf %22, %26 : vector<800x32xf32>
    %28 = vector.broadcast %8 : vector<1x32xf32> to vector<800x32xf32>
    %29 = arith.mulf %27, %28 : vector<800x32xf32>
    %30 = vector.broadcast %9 : vector<1x32xf32> to vector<800x32xf32>
    %31 = arith.addf %29, %30 : vector<800x32xf32>
    %c0_15 = arith.constant 0 : index
    %c0_16 = arith.constant 0 : index
    %32 = vector.load %arg6[%c0_15, %c0_16] : memref<800x32xf32, #tpu.memory_space<vmem>>, vector<800x32xf32>
    tpu.vector_store %arg6[%c0_15, %c0_16], %31 {strides = array<i32>} : memref<800x32xf32, #tpu.memory_space<vmem>>, vector<800x32xf32>,
    return
  }
  func.func @transform_0(%arg0: i32) -> (i32, i32) {
    %c0_i32 = arith.constant 0 : i32
    %c0_i32_0 = arith.constant 0 : i32
    %c0_i32_1 = arith.constant 0 : i32
    return %c0_i32, %c0_i32_0 : i32, i32
  }
  func.func @transform_1(%arg0: i32) -> (i32, i32) {
    %c0_i32 = arith.constant 0 : i32
    %c0_i32_0 = arith.constant 0 : i32
    %c0_i32_1 = arith.constant 0 : i32
    return %c0_i32, %c0_i32_0 : i32, i32
  }
  func.func @transform_2(%arg0: i32) -> (i32, i32) {
    %c0_i32 = arith.constant 0 : i32
    %c0_i32_0 = arith.constant 0 : i32
    %c0_i32_1 = arith.constant 0 : i32
    return %c0_i32, %c0_i32_0 : i32, i32
  }
  func.func @transform_3(%arg0: i32) -> (i32, i32) {
    %c0_i32 = arith.constant 0 : i32
    %c0_i32_0 = arith.constant 0 : i32
    %c0_i32_1 = arith.constant 0 : i32
    return %c0_i32, %c0_i32_0 : i32, i32
  }
  func.func @transform_4(%arg0: i32) -> (i32, i32) {
    %c0_i32 = arith.constant 0 : i32
    %c0_i32_0 = arith.constant 0 : i32
    %c0_i32_1 = arith.constant 0 : i32
    return %c0_i32, %c0_i32_0 : i32, i32
  }
  func.func @transform_5(%arg0: i32) -> (i32, i32) {
    %c0_i32 = arith.constant 0 : i32
    %c0_i32_0 = arith.constant 0 : i32
    %c0_i32_1 = arith.constant 0 : i32
    return %c0_i32, %c0_i32_0 : i32, i32
  }
}

module attributes {stable_mosaic.version = 11 : i64} {
  func.func @_max4_kernel(%arg0: i32, %arg1: memref<200x32xf32, #tpu.memory_space<vmem>>, %arg2: memref<200x32xf32, #tpu.memory_space<vmem>>, %arg3: memref<200x32xf32, #tpu.memory_space<vmem>>, %arg4: memref<200x32xf32, #tpu.memory_space<vmem>>, %arg5: memref<200x32xf32, #tpu.memory_space<vmem>>) attributes {dimension_semantics = [#tpu.dimension_semantics<arbitrary>], iteration_bounds = array<i64: 1>, scalar_prefetch = 0 : i64, scratch_operands = 0 : i64, tpu.core_type = #tpu.core_type<tc>, window_params = [{pipeline_mode = #tpu.pipeline_mode<synchronous>, transform_indices = @transform_0, window_bounds = array<i64: 200, 32>}, {pipeline_mode = #tpu.pipeline_mode<synchronous>, transform_indices = @transform_1, window_bounds = array<i64: 200, 32>}, {pipeline_mode = #tpu.pipeline_mode<synchronous>, transform_indices = @transform_2, window_bounds = array<i64: 200, 32>}, {pipeline_mode = #tpu.pipeline_mode<synchronous>, transform_indices = @transform_3, window_bounds = array<i64: 200, 32>}, {pipeline_mode = #tpu.pipeline_mode<synchronous>, transform_indices = @transform_4, window_bounds = array<i64: 200, 32>}]} {
    %c0 = arith.constant 0 : index
    %c0_0 = arith.constant 0 : index
    %0 = vector.load %arg1[%c0, %c0_0] : memref<200x32xf32, #tpu.memory_space<vmem>>, vector<200x32xf32>
    %c0_1 = arith.constant 0 : index
    %c0_2 = arith.constant 0 : index
    %1 = vector.load %arg2[%c0_1, %c0_2] : memref<200x32xf32, #tpu.memory_space<vmem>>, vector<200x32xf32>
    %2 = arith.maximumf %0, %1 : vector<200x32xf32>
    %c0_3 = arith.constant 0 : index
    %c0_4 = arith.constant 0 : index
    %3 = vector.load %arg3[%c0_3, %c0_4] : memref<200x32xf32, #tpu.memory_space<vmem>>, vector<200x32xf32>
    %c0_5 = arith.constant 0 : index
    %c0_6 = arith.constant 0 : index
    %4 = vector.load %arg4[%c0_5, %c0_6] : memref<200x32xf32, #tpu.memory_space<vmem>>, vector<200x32xf32>
    %5 = arith.maximumf %3, %4 : vector<200x32xf32>
    %6 = arith.maximumf %2, %5 : vector<200x32xf32>
    %c0_7 = arith.constant 0 : index
    %c0_8 = arith.constant 0 : index
    %7 = vector.load %arg5[%c0_7, %c0_8] : memref<200x32xf32, #tpu.memory_space<vmem>>, vector<200x32xf32>
    tpu.vector_store %arg5[%c0_7, %c0_8], %6 {strides = array<i32>} : memref<200x32xf32, #tpu.memory_space<vmem>>, vector<200x32xf32>,
    return
  }
  func.func @transform_0(%arg0: i32) -> (i32, i32) {
    %c0_i32 = arith.constant 0 : i32
    %c0_i32_0 = arith.constant 0 : i32
    %c0_i32_1 = arith.constant 0 : i32
    return %c0_i32, %c0_i32_0 : i32, i32
  }
  func.func @transform_1(%arg0: i32) -> (i32, i32) {
    %c0_i32 = arith.constant 0 : i32
    %c0_i32_0 = arith.constant 0 : i32
    %c0_i32_1 = arith.constant 0 : i32
    return %c0_i32, %c0_i32_0 : i32, i32
  }
  func.func @transform_2(%arg0: i32) -> (i32, i32) {
    %c0_i32 = arith.constant 0 : i32
    %c0_i32_0 = arith.constant 0 : i32
    %c0_i32_1 = arith.constant 0 : i32
    return %c0_i32, %c0_i32_0 : i32, i32
  }
  func.func @transform_3(%arg0: i32) -> (i32, i32) {
    %c0_i32 = arith.constant 0 : i32
    %c0_i32_0 = arith.constant 0 : i32
    %c0_i32_1 = arith.constant 0 : i32
    return %c0_i32, %c0_i32_0 : i32, i32
  }
  func.func @transform_4(%arg0: i32) -> (i32, i32) {
    %c0_i32 = arith.constant 0 : i32
    %c0_i32_0 = arith.constant 0 : i32
    %c0_i32_1 = arith.constant 0 : i32
    return %c0_i32, %c0_i32_0 : i32, i32
  }
}

module attributes {stable_mosaic.version = 11 : i64} {
  func.func @_conv_relu_bn_kernel(%arg0: i32, %arg1: memref<128x288xbf16, #tpu.memory_space<vmem>>, %arg2: memref<288x64xbf16, #tpu.memory_space<vmem>>, %arg3: memref<1x64xf32, #tpu.memory_space<vmem>>, %arg4: memref<1x64xf32, #tpu.memory_space<vmem>>, %arg5: memref<1x64xf32, #tpu.memory_space<vmem>>, %arg6: memref<128x64xf32, #tpu.memory_space<vmem>>) attributes {dimension_semantics = [#tpu.dimension_semantics<arbitrary>], iteration_bounds = array<i64: 1>, scalar_prefetch = 0 : i64, scratch_operands = 0 : i64, tpu.core_type = #tpu.core_type<tc>, window_params = [{pipeline_mode = #tpu.pipeline_mode<synchronous>, transform_indices = @transform_0, window_bounds = array<i64: 128, 288>}, {pipeline_mode = #tpu.pipeline_mode<synchronous>, transform_indices = @transform_1, window_bounds = array<i64: 288, 64>}, {pipeline_mode = #tpu.pipeline_mode<synchronous>, transform_indices = @transform_2, window_bounds = array<i64: 1, 64>}, {pipeline_mode = #tpu.pipeline_mode<synchronous>, transform_indices = @transform_3, window_bounds = array<i64: 1, 64>}, {pipeline_mode = #tpu.pipeline_mode<synchronous>, transform_indices = @transform_4, window_bounds = array<i64: 1, 64>}, {pipeline_mode = #tpu.pipeline_mode<synchronous>, transform_indices = @transform_5, window_bounds = array<i64: 128, 64>}]} {
    %c0 = arith.constant 0 : index
    %c0_0 = arith.constant 0 : index
    %0 = vector.load %arg1[%c0, %c0_0] : memref<128x288xbf16, #tpu.memory_space<vmem>>, vector<128x288xbf16>
    %c0_1 = arith.constant 0 : index
    %c0_2 = arith.constant 0 : index
    %1 = vector.load %arg2[%c0_1, %c0_2] : memref<288x64xbf16, #tpu.memory_space<vmem>>, vector<288x64xbf16>
    %cst = arith.constant dense<0.000000e+00> : vector<128x64xf32>
    %2 = tpu.matmul %0, %1, %cst {dimension_numbers = #tpu.dot_dimension_numbers<[1], [0], [0], [1], [0, 0, 1, 1], [], []>} : vector<128x288xbf16>, vector<288x64xbf16>, vector<128x64xf32> -> vector<128x64xf32>
    %c0_3 = arith.constant 0 : index
    %c0_4 = arith.constant 0 : index
    %3 = vector.load %arg3[%c0_3, %c0_4] : memref<1x64xf32, #tpu.memory_space<vmem>>, vector<1x64xf32>
    %4 = vector.broadcast %3 : vector<1x64xf32> to vector<128x64xf32>
    %5 = arith.addf %2, %4 : vector<128x64xf32>
    %cst_5 = arith.constant 0.000000e+00 : f32
    %6 = vector.broadcast %cst_5 : f32 to vector<128x64xf32>
    %7 = arith.maximumf %5, %6 : vector<128x64xf32>
    %c0_6 = arith.constant 0 : index
    %c0_7 = arith.constant 0 : index
    %8 = vector.load %arg4[%c0_6, %c0_7] : memref<1x64xf32, #tpu.memory_space<vmem>>, vector<1x64xf32>
    %c0_8 = arith.constant 0 : index
    %c0_9 = arith.constant 0 : index
    %9 = vector.load %arg5[%c0_8, %c0_9] : memref<1x64xf32, #tpu.memory_space<vmem>>, vector<1x64xf32>
    %cst_10 = arith.constant dense<0.000000e+00> : vector<64xf32>
    %10 = vector.multi_reduction <add>, %7, %cst_10 [0] : vector<128x64xf32> to vector<64xf32>
    %11 = vector.shape_cast %10 : vector<64xf32> to vector<1x64xf32>
    %12 = arith.mulf %7, %7 : vector<128x64xf32>
    %cst_11 = arith.constant dense<0.000000e+00> : vector<64xf32>
    %13 = vector.multi_reduction <add>, %12, %cst_11 [0] : vector<128x64xf32> to vector<64xf32>
    %14 = vector.shape_cast %13 : vector<64xf32> to vector<1x64xf32>
    %cst_12 = arith.constant 1.280000e+02 : f32
    %15 = vector.broadcast %cst_12 : f32 to vector<1x64xf32>
    %16 = arith.divf %11, %15 : vector<1x64xf32>
    %cst_13 = arith.constant 1.280000e+02 : f32
    %17 = vector.broadcast %cst_13 : f32 to vector<1x64xf32>
    %18 = arith.divf %14, %17 : vector<1x64xf32>
    %19 = arith.mulf %16, %16 : vector<1x64xf32>
    %20 = arith.subf %18, %19 : vector<1x64xf32>
    %21 = vector.broadcast %16 : vector<1x64xf32> to vector<128x64xf32>
    %22 = arith.subf %7, %21 : vector<128x64xf32>
    %cst_14 = arith.constant 9.99999974E-6 : f32
    %23 = vector.broadcast %cst_14 : f32 to vector<1x64xf32>
    %24 = arith.addf %20, %23 : vector<1x64xf32>
    %25 = math.rsqrt %24 : vector<1x64xf32>
    %26 = vector.broadcast %25 : vector<1x64xf32> to vector<128x64xf32>
    %27 = arith.mulf %22, %26 : vector<128x64xf32>
    %28 = vector.broadcast %8 : vector<1x64xf32> to vector<128x64xf32>
    %29 = arith.mulf %27, %28 : vector<128x64xf32>
    %30 = vector.broadcast %9 : vector<1x64xf32> to vector<128x64xf32>
    %31 = arith.addf %29, %30 : vector<128x64xf32>
    %c0_15 = arith.constant 0 : index
    %c0_16 = arith.constant 0 : index
    %32 = vector.load %arg6[%c0_15, %c0_16] : memref<128x64xf32, #tpu.memory_space<vmem>>, vector<128x64xf32>
    tpu.vector_store %arg6[%c0_15, %c0_16], %31 {strides = array<i32>} : memref<128x64xf32, #tpu.memory_space<vmem>>, vector<128x64xf32>,
    return
  }
  func.func @transform_0(%arg0: i32) -> (i32, i32) {
    %c0_i32 = arith.constant 0 : i32
    %c0_i32_0 = arith.constant 0 : i32
    %c0_i32_1 = arith.constant 0 : i32
    return %c0_i32, %c0_i32_0 : i32, i32
  }
  func.func @transform_1(%arg0: i32) -> (i32, i32) {
    %c0_i32 = arith.constant 0 : i32
    %c0_i32_0 = arith.constant 0 : i32
    %c0_i32_1 = arith.constant 0 : i32
    return %c0_i32, %c0_i32_0 : i32, i32
  }
  func.func @transform_2(%arg0: i32) -> (i32, i32) {
    %c0_i32 = arith.constant 0 : i32
    %c0_i32_0 = arith.constant 0 : i32
    %c0_i32_1 = arith.constant 0 : i32
    return %c0_i32, %c0_i32_0 : i32, i32
  }
  func.func @transform_3(%arg0: i32) -> (i32, i32) {
    %c0_i32 = arith.constant 0 : i32
    %c0_i32_0 = arith.constant 0 : i32
    %c0_i32_1 = arith.constant 0 : i32
    return %c0_i32, %c0_i32_0 : i32, i32
  }
  func.func @transform_4(%arg0: i32) -> (i32, i32) {
    %c0_i32 = arith.constant 0 : i32
    %c0_i32_0 = arith.constant 0 : i32
    %c0_i32_1 = arith.constant 0 : i32
    return %c0_i32, %c0_i32_0 : i32, i32
  }
  func.func @transform_5(%arg0: i32) -> (i32, i32) {
    %c0_i32 = arith.constant 0 : i32
    %c0_i32_0 = arith.constant 0 : i32
    %c0_i32_1 = arith.constant 0 : i32
    return %c0_i32, %c0_i32_0 : i32, i32
  }
}

module attributes {stable_mosaic.version = 11 : i64} {
  func.func @_conv_relu_bn_kernel(%arg0: i32, %arg1: memref<72x576xbf16, #tpu.memory_space<vmem>>, %arg2: memref<576x64xbf16, #tpu.memory_space<vmem>>, %arg3: memref<1x64xf32, #tpu.memory_space<vmem>>, %arg4: memref<1x64xf32, #tpu.memory_space<vmem>>, %arg5: memref<1x64xf32, #tpu.memory_space<vmem>>, %arg6: memref<72x64xf32, #tpu.memory_space<vmem>>) attributes {dimension_semantics = [#tpu.dimension_semantics<arbitrary>], iteration_bounds = array<i64: 1>, scalar_prefetch = 0 : i64, scratch_operands = 0 : i64, tpu.core_type = #tpu.core_type<tc>, window_params = [{pipeline_mode = #tpu.pipeline_mode<synchronous>, transform_indices = @transform_0, window_bounds = array<i64: 72, 576>}, {pipeline_mode = #tpu.pipeline_mode<synchronous>, transform_indices = @transform_1, window_bounds = array<i64: 576, 64>}, {pipeline_mode = #tpu.pipeline_mode<synchronous>, transform_indices = @transform_2, window_bounds = array<i64: 1, 64>}, {pipeline_mode = #tpu.pipeline_mode<synchronous>, transform_indices = @transform_3, window_bounds = array<i64: 1, 64>}, {pipeline_mode = #tpu.pipeline_mode<synchronous>, transform_indices = @transform_4, window_bounds = array<i64: 1, 64>}, {pipeline_mode = #tpu.pipeline_mode<synchronous>, transform_indices = @transform_5, window_bounds = array<i64: 72, 64>}]} {
    %c0 = arith.constant 0 : index
    %c0_0 = arith.constant 0 : index
    %0 = vector.load %arg1[%c0, %c0_0] : memref<72x576xbf16, #tpu.memory_space<vmem>>, vector<72x576xbf16>
    %c0_1 = arith.constant 0 : index
    %c0_2 = arith.constant 0 : index
    %1 = vector.load %arg2[%c0_1, %c0_2] : memref<576x64xbf16, #tpu.memory_space<vmem>>, vector<576x64xbf16>
    %cst = arith.constant dense<0.000000e+00> : vector<72x64xf32>
    %2 = tpu.matmul %0, %1, %cst {dimension_numbers = #tpu.dot_dimension_numbers<[1], [0], [0], [1], [0, 0, 1, 1], [], []>} : vector<72x576xbf16>, vector<576x64xbf16>, vector<72x64xf32> -> vector<72x64xf32>
    %c0_3 = arith.constant 0 : index
    %c0_4 = arith.constant 0 : index
    %3 = vector.load %arg3[%c0_3, %c0_4] : memref<1x64xf32, #tpu.memory_space<vmem>>, vector<1x64xf32>
    %4 = vector.broadcast %3 : vector<1x64xf32> to vector<72x64xf32>
    %5 = arith.addf %2, %4 : vector<72x64xf32>
    %cst_5 = arith.constant 0.000000e+00 : f32
    %6 = vector.broadcast %cst_5 : f32 to vector<72x64xf32>
    %7 = arith.maximumf %5, %6 : vector<72x64xf32>
    %c0_6 = arith.constant 0 : index
    %c0_7 = arith.constant 0 : index
    %8 = vector.load %arg4[%c0_6, %c0_7] : memref<1x64xf32, #tpu.memory_space<vmem>>, vector<1x64xf32>
    %c0_8 = arith.constant 0 : index
    %c0_9 = arith.constant 0 : index
    %9 = vector.load %arg5[%c0_8, %c0_9] : memref<1x64xf32, #tpu.memory_space<vmem>>, vector<1x64xf32>
    %cst_10 = arith.constant dense<0.000000e+00> : vector<64xf32>
    %10 = vector.multi_reduction <add>, %7, %cst_10 [0] : vector<72x64xf32> to vector<64xf32>
    %11 = vector.shape_cast %10 : vector<64xf32> to vector<1x64xf32>
    %12 = arith.mulf %7, %7 : vector<72x64xf32>
    %cst_11 = arith.constant dense<0.000000e+00> : vector<64xf32>
    %13 = vector.multi_reduction <add>, %12, %cst_11 [0] : vector<72x64xf32> to vector<64xf32>
    %14 = vector.shape_cast %13 : vector<64xf32> to vector<1x64xf32>
    %cst_12 = arith.constant 7.200000e+01 : f32
    %15 = vector.broadcast %cst_12 : f32 to vector<1x64xf32>
    %16 = arith.divf %11, %15 : vector<1x64xf32>
    %cst_13 = arith.constant 7.200000e+01 : f32
    %17 = vector.broadcast %cst_13 : f32 to vector<1x64xf32>
    %18 = arith.divf %14, %17 : vector<1x64xf32>
    %19 = arith.mulf %16, %16 : vector<1x64xf32>
    %20 = arith.subf %18, %19 : vector<1x64xf32>
    %21 = vector.broadcast %16 : vector<1x64xf32> to vector<72x64xf32>
    %22 = arith.subf %7, %21 : vector<72x64xf32>
    %cst_14 = arith.constant 9.99999974E-6 : f32
    %23 = vector.broadcast %cst_14 : f32 to vector<1x64xf32>
    %24 = arith.addf %20, %23 : vector<1x64xf32>
    %25 = math.rsqrt %24 : vector<1x64xf32>
    %26 = vector.broadcast %25 : vector<1x64xf32> to vector<72x64xf32>
    %27 = arith.mulf %22, %26 : vector<72x64xf32>
    %28 = vector.broadcast %8 : vector<1x64xf32> to vector<72x64xf32>
    %29 = arith.mulf %27, %28 : vector<72x64xf32>
    %30 = vector.broadcast %9 : vector<1x64xf32> to vector<72x64xf32>
    %31 = arith.addf %29, %30 : vector<72x64xf32>
    %c0_15 = arith.constant 0 : index
    %c0_16 = arith.constant 0 : index
    %32 = vector.load %arg6[%c0_15, %c0_16] : memref<72x64xf32, #tpu.memory_space<vmem>>, vector<72x64xf32>
    tpu.vector_store %arg6[%c0_15, %c0_16], %31 {strides = array<i32>} : memref<72x64xf32, #tpu.memory_space<vmem>>, vector<72x64xf32>,
    return
  }
  func.func @transform_0(%arg0: i32) -> (i32, i32) {
    %c0_i32 = arith.constant 0 : i32
    %c0_i32_0 = arith.constant 0 : i32
    %c0_i32_1 = arith.constant 0 : i32
    return %c0_i32, %c0_i32_0 : i32, i32
  }
  func.func @transform_1(%arg0: i32) -> (i32, i32) {
    %c0_i32 = arith.constant 0 : i32
    %c0_i32_0 = arith.constant 0 : i32
    %c0_i32_1 = arith.constant 0 : i32
    return %c0_i32, %c0_i32_0 : i32, i32
  }
  func.func @transform_2(%arg0: i32) -> (i32, i32) {
    %c0_i32 = arith.constant 0 : i32
    %c0_i32_0 = arith.constant 0 : i32
    %c0_i32_1 = arith.constant 0 : i32
    return %c0_i32, %c0_i32_0 : i32, i32
  }
  func.func @transform_3(%arg0: i32) -> (i32, i32) {
    %c0_i32 = arith.constant 0 : i32
    %c0_i32_0 = arith.constant 0 : i32
    %c0_i32_1 = arith.constant 0 : i32
    return %c0_i32, %c0_i32_0 : i32, i32
  }
  func.func @transform_4(%arg0: i32) -> (i32, i32) {
    %c0_i32 = arith.constant 0 : i32
    %c0_i32_0 = arith.constant 0 : i32
    %c0_i32_1 = arith.constant 0 : i32
    return %c0_i32, %c0_i32_0 : i32, i32
  }
  func.func @transform_5(%arg0: i32) -> (i32, i32) {
    %c0_i32 = arith.constant 0 : i32
    %c0_i32_0 = arith.constant 0 : i32
    %c0_i32_1 = arith.constant 0 : i32
    return %c0_i32, %c0_i32_0 : i32, i32
  }
}

module attributes {stable_mosaic.version = 11 : i64} {
  func.func @_max4_kernel(%arg0: i32, %arg1: memref<18x64xf32, #tpu.memory_space<vmem>>, %arg2: memref<18x64xf32, #tpu.memory_space<vmem>>, %arg3: memref<18x64xf32, #tpu.memory_space<vmem>>, %arg4: memref<18x64xf32, #tpu.memory_space<vmem>>, %arg5: memref<18x64xf32, #tpu.memory_space<vmem>>) attributes {dimension_semantics = [#tpu.dimension_semantics<arbitrary>], iteration_bounds = array<i64: 1>, scalar_prefetch = 0 : i64, scratch_operands = 0 : i64, tpu.core_type = #tpu.core_type<tc>, window_params = [{pipeline_mode = #tpu.pipeline_mode<synchronous>, transform_indices = @transform_0, window_bounds = array<i64: 18, 64>}, {pipeline_mode = #tpu.pipeline_mode<synchronous>, transform_indices = @transform_1, window_bounds = array<i64: 18, 64>}, {pipeline_mode = #tpu.pipeline_mode<synchronous>, transform_indices = @transform_2, window_bounds = array<i64: 18, 64>}, {pipeline_mode = #tpu.pipeline_mode<synchronous>, transform_indices = @transform_3, window_bounds = array<i64: 18, 64>}, {pipeline_mode = #tpu.pipeline_mode<synchronous>, transform_indices = @transform_4, window_bounds = array<i64: 18, 64>}]} {
    %c0 = arith.constant 0 : index
    %c0_0 = arith.constant 0 : index
    %0 = vector.load %arg1[%c0, %c0_0] : memref<18x64xf32, #tpu.memory_space<vmem>>, vector<18x64xf32>
    %c0_1 = arith.constant 0 : index
    %c0_2 = arith.constant 0 : index
    %1 = vector.load %arg2[%c0_1, %c0_2] : memref<18x64xf32, #tpu.memory_space<vmem>>, vector<18x64xf32>
    %2 = arith.maximumf %0, %1 : vector<18x64xf32>
    %c0_3 = arith.constant 0 : index
    %c0_4 = arith.constant 0 : index
    %3 = vector.load %arg3[%c0_3, %c0_4] : memref<18x64xf32, #tpu.memory_space<vmem>>, vector<18x64xf32>
    %c0_5 = arith.constant 0 : index
    %c0_6 = arith.constant 0 : index
    %4 = vector.load %arg4[%c0_5, %c0_6] : memref<18x64xf32, #tpu.memory_space<vmem>>, vector<18x64xf32>
    %5 = arith.maximumf %3, %4 : vector<18x64xf32>
    %6 = arith.maximumf %2, %5 : vector<18x64xf32>
    %c0_7 = arith.constant 0 : index
    %c0_8 = arith.constant 0 : index
    %7 = vector.load %arg5[%c0_7, %c0_8] : memref<18x64xf32, #tpu.memory_space<vmem>>, vector<18x64xf32>
    tpu.vector_store %arg5[%c0_7, %c0_8], %6 {strides = array<i32>} : memref<18x64xf32, #tpu.memory_space<vmem>>, vector<18x64xf32>,
    return
  }
  func.func @transform_0(%arg0: i32) -> (i32, i32) {
    %c0_i32 = arith.constant 0 : i32
    %c0_i32_0 = arith.constant 0 : i32
    %c0_i32_1 = arith.constant 0 : i32
    return %c0_i32, %c0_i32_0 : i32, i32
  }
  func.func @transform_1(%arg0: i32) -> (i32, i32) {
    %c0_i32 = arith.constant 0 : i32
    %c0_i32_0 = arith.constant 0 : i32
    %c0_i32_1 = arith.constant 0 : i32
    return %c0_i32, %c0_i32_0 : i32, i32
  }
  func.func @transform_2(%arg0: i32) -> (i32, i32) {
    %c0_i32 = arith.constant 0 : i32
    %c0_i32_0 = arith.constant 0 : i32
    %c0_i32_1 = arith.constant 0 : i32
    return %c0_i32, %c0_i32_0 : i32, i32
  }
  func.func @transform_3(%arg0: i32) -> (i32, i32) {
    %c0_i32 = arith.constant 0 : i32
    %c0_i32_0 = arith.constant 0 : i32
    %c0_i32_1 = arith.constant 0 : i32
    return %c0_i32, %c0_i32_0 : i32, i32
  }
  func.func @transform_4(%arg0: i32) -> (i32, i32) {
    %c0_i32 = arith.constant 0 : i32
    %c0_i32_0 = arith.constant 0 : i32
    %c0_i32_1 = arith.constant 0 : i32
    return %c0_i32, %c0_i32_0 : i32, i32
  }
}

module attributes {stable_mosaic.version = 11 : i64} {
  func.func @_tail_kernel(%arg0: i32, %arg1: memref<2x576xbf16, #tpu.memory_space<vmem>>, %arg2: memref<576x128xbf16, #tpu.memory_space<vmem>>, %arg3: memref<1x128xf32, #tpu.memory_space<vmem>>, %arg4: memref<1x128xf32, #tpu.memory_space<vmem>>, %arg5: memref<1x128xf32, #tpu.memory_space<vmem>>, %arg6: memref<128x128xbf16, #tpu.memory_space<vmem>>, %arg7: memref<1x128xf32, #tpu.memory_space<vmem>>, %arg8: memref<1x128xf32, #tpu.memory_space<vmem>>, %arg9: memref<1x128xf32, #tpu.memory_space<vmem>>, %arg10: memref<128x100xbf16, #tpu.memory_space<vmem>>, %arg11: memref<1x100xf32, #tpu.memory_space<vmem>>, %arg12: memref<100x10xbf16, #tpu.memory_space<vmem>>, %arg13: memref<1x10xf32, #tpu.memory_space<vmem>>, %arg14: memref<2x10xf32, #tpu.memory_space<vmem>>) attributes {dimension_semantics = [#tpu.dimension_semantics<arbitrary>], iteration_bounds = array<i64: 1>, scalar_prefetch = 0 : i64, scratch_operands = 0 : i64, tpu.core_type = #tpu.core_type<tc>, window_params = [{pipeline_mode = #tpu.pipeline_mode<synchronous>, transform_indices = @transform_0, window_bounds = array<i64: 2, 576>}, {pipeline_mode = #tpu.pipeline_mode<synchronous>, transform_indices = @transform_1, window_bounds = array<i64: 576, 128>}, {pipeline_mode = #tpu.pipeline_mode<synchronous>, transform_indices = @transform_2, window_bounds = array<i64: 1, 128>}, {pipeline_mode = #tpu.pipeline_mode<synchronous>, transform_indices = @transform_3, window_bounds = array<i64: 1, 128>}, {pipeline_mode = #tpu.pipeline_mode<synchronous>, transform_indices = @transform_4, window_bounds = array<i64: 1, 128>}, {pipeline_mode = #tpu.pipeline_mode<synchronous>, transform_indices = @transform_5, window_bounds = array<i64: 128, 128>}, {pipeline_mode = #tpu.pipeline_mode<synchronous>, transform_indices = @transform_6, window_bounds = array<i64: 1, 128>}, {pipeline_mode = #tpu.pipeline_mode<synchronous>, transform_indices = @transform_7, window_bounds = array<i64: 1, 128>}, {pipeline_mode = #tpu.pipeline_mode<synchronous>, transform_indices = @transform_8, window_bounds = array<i64: 1, 128>}, {pipeline_mode = #tpu.pipeline_mode<synchronous>, transform_indices = @transform_9, window_bounds = array<i64: 128, 100>}, {pipeline_mode = #tpu.pipeline_mode<synchronous>, transform_indices = @transform_10, window_bounds = array<i64: 1, 100>}, {pipeline_mode = #tpu.pipeline_mode<synchronous>, transform_indices = @transform_11, window_bounds = array<i64: 100, 10>}, {pipeline_mode = #tpu.pipeline_mode<synchronous>, transform_indices = @transform_12, window_bounds = array<i64: 1, 10>}, {pipeline_mode = #tpu.pipeline_mode<synchronous>, transform_indices = @transform_13, window_bounds = array<i64: 2, 10>}]} {
    %c0 = arith.constant 0 : index
    %c0_0 = arith.constant 0 : index
    %0 = vector.load %arg1[%c0, %c0_0] : memref<2x576xbf16, #tpu.memory_space<vmem>>, vector<2x576xbf16>
    %c0_1 = arith.constant 0 : index
    %c0_2 = arith.constant 0 : index
    %1 = vector.load %arg2[%c0_1, %c0_2] : memref<576x128xbf16, #tpu.memory_space<vmem>>, vector<576x128xbf16>
    %cst = arith.constant dense<0.000000e+00> : vector<2x128xf32>
    %2 = tpu.matmul %0, %1, %cst {dimension_numbers = #tpu.dot_dimension_numbers<[1], [0], [0], [1], [0, 0, 1, 1], [], []>} : vector<2x576xbf16>, vector<576x128xbf16>, vector<2x128xf32> -> vector<2x128xf32>
    %c0_3 = arith.constant 0 : index
    %c0_4 = arith.constant 0 : index
    %3 = vector.load %arg3[%c0_3, %c0_4] : memref<1x128xf32, #tpu.memory_space<vmem>>, vector<1x128xf32>
    %4 = vector.broadcast %3 : vector<1x128xf32> to vector<2x128xf32>
    %5 = arith.addf %2, %4 : vector<2x128xf32>
    %cst_5 = arith.constant 0.000000e+00 : f32
    %6 = vector.broadcast %cst_5 : f32 to vector<2x128xf32>
    %7 = arith.maximumf %5, %6 : vector<2x128xf32>
    %c0_6 = arith.constant 0 : index
    %c0_7 = arith.constant 0 : index
    %8 = vector.load %arg4[%c0_6, %c0_7] : memref<1x128xf32, #tpu.memory_space<vmem>>, vector<1x128xf32>
    %c0_8 = arith.constant 0 : index
    %c0_9 = arith.constant 0 : index
    %9 = vector.load %arg5[%c0_8, %c0_9] : memref<1x128xf32, #tpu.memory_space<vmem>>, vector<1x128xf32>
    %cst_10 = arith.constant dense<0.000000e+00> : vector<128xf32>
    %10 = vector.multi_reduction <add>, %7, %cst_10 [0] : vector<2x128xf32> to vector<128xf32>
    %11 = vector.shape_cast %10 : vector<128xf32> to vector<1x128xf32>
    %12 = arith.mulf %7, %7 : vector<2x128xf32>
    %cst_11 = arith.constant dense<0.000000e+00> : vector<128xf32>
    %13 = vector.multi_reduction <add>, %12, %cst_11 [0] : vector<2x128xf32> to vector<128xf32>
    %14 = vector.shape_cast %13 : vector<128xf32> to vector<1x128xf32>
    %cst_12 = arith.constant 2.000000e+00 : f32
    %15 = vector.broadcast %cst_12 : f32 to vector<1x128xf32>
    %16 = arith.divf %11, %15 : vector<1x128xf32>
    %cst_13 = arith.constant 2.000000e+00 : f32
    %17 = vector.broadcast %cst_13 : f32 to vector<1x128xf32>
    %18 = arith.divf %14, %17 : vector<1x128xf32>
    %19 = arith.mulf %16, %16 : vector<1x128xf32>
    %20 = arith.subf %18, %19 : vector<1x128xf32>
    %21 = vector.broadcast %16 : vector<1x128xf32> to vector<2x128xf32>
    %22 = arith.subf %7, %21 : vector<2x128xf32>
    %cst_14 = arith.constant 9.99999974E-6 : f32
    %23 = vector.broadcast %cst_14 : f32 to vector<1x128xf32>
    %24 = arith.addf %20, %23 : vector<1x128xf32>
    %25 = math.rsqrt %24 : vector<1x128xf32>
    %26 = vector.broadcast %25 : vector<1x128xf32> to vector<2x128xf32>
    %27 = arith.mulf %22, %26 : vector<2x128xf32>
    %28 = vector.broadcast %8 : vector<1x128xf32> to vector<2x128xf32>
    %29 = arith.mulf %27, %28 : vector<2x128xf32>
    %30 = vector.broadcast %9 : vector<1x128xf32> to vector<2x128xf32>
    %31 = arith.addf %29, %30 : vector<2x128xf32>
    %32 = arith.truncf %31 : vector<2x128xf32> to vector<2x128xbf16>
    %c0_15 = arith.constant 0 : index
    %c0_16 = arith.constant 0 : index
    %33 = vector.load %arg6[%c0_15, %c0_16] : memref<128x128xbf16, #tpu.memory_space<vmem>>, vector<128x128xbf16>
    %cst_17 = arith.constant dense<0.000000e+00> : vector<2x128xf32>
    %34 = tpu.matmul %32, %33, %cst_17 {dimension_numbers = #tpu.dot_dimension_numbers<[1], [0], [0], [1], [0, 0, 1, 1], [], []>} : vector<2x128xbf16>, vector<128x128xbf16>, vector<2x128xf32> -> vector<2x128xf32>
    %c0_18 = arith.constant 0 : index
    %c0_19 = arith.constant 0 : index
    %35 = vector.load %arg7[%c0_18, %c0_19] : memref<1x128xf32, #tpu.memory_space<vmem>>, vector<1x128xf32>
    %36 = vector.broadcast %35 : vector<1x128xf32> to vector<2x128xf32>
    %37 = arith.addf %34, %36 : vector<2x128xf32>
    %cst_20 = arith.constant 0.000000e+00 : f32
    %38 = vector.broadcast %cst_20 : f32 to vector<2x128xf32>
    %39 = arith.maximumf %37, %38 : vector<2x128xf32>
    %c0_21 = arith.constant 0 : index
    %c0_22 = arith.constant 0 : index
    %40 = vector.load %arg8[%c0_21, %c0_22] : memref<1x128xf32, #tpu.memory_space<vmem>>, vector<1x128xf32>
    %c0_23 = arith.constant 0 : index
    %c0_24 = arith.constant 0 : index
    %41 = vector.load %arg9[%c0_23, %c0_24] : memref<1x128xf32, #tpu.memory_space<vmem>>, vector<1x128xf32>
    %cst_25 = arith.constant dense<0.000000e+00> : vector<128xf32>
    %42 = vector.multi_reduction <add>, %39, %cst_25 [0] : vector<2x128xf32> to vector<128xf32>
    %43 = vector.shape_cast %42 : vector<128xf32> to vector<1x128xf32>
    %44 = arith.mulf %39, %39 : vector<2x128xf32>
    %cst_26 = arith.constant dense<0.000000e+00> : vector<128xf32>
    %45 = vector.multi_reduction <add>, %44, %cst_26 [0] : vector<2x128xf32> to vector<128xf32>
    %46 = vector.shape_cast %45 : vector<128xf32> to vector<1x128xf32>
    %cst_27 = arith.constant 2.000000e+00 : f32
    %47 = vector.broadcast %cst_27 : f32 to vector<1x128xf32>
    %48 = arith.divf %43, %47 : vector<1x128xf32>
    %cst_28 = arith.constant 2.000000e+00 : f32
    %49 = vector.broadcast %cst_28 : f32 to vector<1x128xf32>
    %50 = arith.divf %46, %49 : vector<1x128xf32>
    %51 = arith.mulf %48, %48 : vector<1x128xf32>
    %52 = arith.subf %50, %51 : vector<1x128xf32>
    %53 = vector.broadcast %48 : vector<1x128xf32> to vector<2x128xf32>
    %54 = arith.subf %39, %53 : vector<2x128xf32>
    %cst_29 = arith.constant 9.99999974E-6 : f32
    %55 = vector.broadcast %cst_29 : f32 to vector<1x128xf32>
    %56 = arith.addf %52, %55 : vector<1x128xf32>
    %57 = math.rsqrt %56 : vector<1x128xf32>
    %58 = vector.broadcast %57 : vector<1x128xf32> to vector<2x128xf32>
    %59 = arith.mulf %54, %58 : vector<2x128xf32>
    %60 = vector.broadcast %40 : vector<1x128xf32> to vector<2x128xf32>
    %61 = arith.mulf %59, %60 : vector<2x128xf32>
    %62 = vector.broadcast %41 : vector<1x128xf32> to vector<2x128xf32>
    %63 = arith.addf %61, %62 : vector<2x128xf32>
    %64 = arith.truncf %63 : vector<2x128xf32> to vector<2x128xbf16>
    %c0_30 = arith.constant 0 : index
    %c0_31 = arith.constant 0 : index
    %65 = vector.load %arg10[%c0_30, %c0_31] : memref<128x100xbf16, #tpu.memory_space<vmem>>, vector<128x100xbf16>
    %cst_32 = arith.constant dense<0.000000e+00> : vector<2x100xf32>
    %66 = tpu.matmul %64, %65, %cst_32 {dimension_numbers = #tpu.dot_dimension_numbers<[1], [0], [0], [1], [0, 0, 1, 1], [], []>} : vector<2x128xbf16>, vector<128x100xbf16>, vector<2x100xf32> -> vector<2x100xf32>
    %c0_33 = arith.constant 0 : index
    %c0_34 = arith.constant 0 : index
    %67 = vector.load %arg11[%c0_33, %c0_34] : memref<1x100xf32, #tpu.memory_space<vmem>>, vector<1x100xf32>
    %68 = vector.broadcast %67 : vector<1x100xf32> to vector<2x100xf32>
    %69 = arith.addf %66, %68 : vector<2x100xf32>
    %cst_35 = arith.constant 0.000000e+00 : f32
    %70 = vector.broadcast %cst_35 : f32 to vector<2x100xf32>
    %71 = arith.maximumf %69, %70 : vector<2x100xf32>
    %72 = arith.truncf %71 : vector<2x100xf32> to vector<2x100xbf16>
    %c0_36 = arith.constant 0 : index
    %c0_37 = arith.constant 0 : index
    %73 = vector.load %arg12[%c0_36, %c0_37] : memref<100x10xbf16, #tpu.memory_space<vmem>>, vector<100x10xbf16>
    %cst_38 = arith.constant dense<0.000000e+00> : vector<2x10xf32>
    %74 = tpu.matmul %72, %73, %cst_38 {dimension_numbers = #tpu.dot_dimension_numbers<[1], [0], [0], [1], [0, 0, 1, 1], [], []>} : vector<2x100xbf16>, vector<100x10xbf16>, vector<2x10xf32> -> vector<2x10xf32>
    %c0_39 = arith.constant 0 : index
    %c0_40 = arith.constant 0 : index
    %75 = vector.load %arg13[%c0_39, %c0_40] : memref<1x10xf32, #tpu.memory_space<vmem>>, vector<1x10xf32>
    %76 = vector.broadcast %75 : vector<1x10xf32> to vector<2x10xf32>
    %77 = arith.addf %74, %76 : vector<2x10xf32>
    %c0_41 = arith.constant 0 : index
    %c0_42 = arith.constant 0 : index
    %78 = vector.load %arg14[%c0_41, %c0_42] : memref<2x10xf32, #tpu.memory_space<vmem>>, vector<2x10xf32>
    tpu.vector_store %arg14[%c0_41, %c0_42], %77 {strides = array<i32>} : memref<2x10xf32, #tpu.memory_space<vmem>>, vector<2x10xf32>,
    return
  }
  func.func @transform_0(%arg0: i32) -> (i32, i32) {
    %c0_i32 = arith.constant 0 : i32
    %c0_i32_0 = arith.constant 0 : i32
    %c0_i32_1 = arith.constant 0 : i32
    return %c0_i32, %c0_i32_0 : i32, i32
  }
  func.func @transform_1(%arg0: i32) -> (i32, i32) {
    %c0_i32 = arith.constant 0 : i32
    %c0_i32_0 = arith.constant 0 : i32
    %c0_i32_1 = arith.constant 0 : i32
    return %c0_i32, %c0_i32_0 : i32, i32
  }
  func.func @transform_2(%arg0: i32) -> (i32, i32) {
    %c0_i32 = arith.constant 0 : i32
    %c0_i32_0 = arith.constant 0 : i32
    %c0_i32_1 = arith.constant 0 : i32
    return %c0_i32, %c0_i32_0 : i32, i32
  }
  func.func @transform_3(%arg0: i32) -> (i32, i32) {
    %c0_i32 = arith.constant 0 : i32
    %c0_i32_0 = arith.constant 0 : i32
    %c0_i32_1 = arith.constant 0 : i32
    return %c0_i32, %c0_i32_0 : i32, i32
  }
  func.func @transform_4(%arg0: i32) -> (i32, i32) {
    %c0_i32 = arith.constant 0 : i32
    %c0_i32_0 = arith.constant 0 : i32
    %c0_i32_1 = arith.constant 0 : i32
    return %c0_i32, %c0_i32_0 : i32, i32
  }
  func.func @transform_5(%arg0: i32) -> (i32, i32) {
    %c0_i32 = arith.constant 0 : i32
    %c0_i32_0 = arith.constant 0 : i32
    %c0_i32_1 = arith.constant 0 : i32
    return %c0_i32, %c0_i32_0 : i32, i32
  }
  func.func @transform_6(%arg0: i32) -> (i32, i32) {
    %c0_i32 = arith.constant 0 : i32
    %c0_i32_0 = arith.constant 0 : i32
    %c0_i32_1 = arith.constant 0 : i32
    return %c0_i32, %c0_i32_0 : i32, i32
  }
  func.func @transform_7(%arg0: i32) -> (i32, i32) {
    %c0_i32 = arith.constant 0 : i32
    %c0_i32_0 = arith.constant 0 : i32
    %c0_i32_1 = arith.constant 0 : i32
    return %c0_i32, %c0_i32_0 : i32, i32
  }
  func.func @transform_8(%arg0: i32) -> (i32, i32) {
    %c0_i32 = arith.constant 0 : i32
    %c0_i32_0 = arith.constant 0 : i32
    %c0_i32_1 = arith.constant 0 : i32
    return %c0_i32, %c0_i32_0 : i32, i32
  }
  func.func @transform_9(%arg0: i32) -> (i32, i32) {
    %c0_i32 = arith.constant 0 : i32
    %c0_i32_0 = arith.constant 0 : i32
    %c0_i32_1 = arith.constant 0 : i32
    return %c0_i32, %c0_i32_0 : i32, i32
  }
  func.func @transform_10(%arg0: i32) -> (i32, i32) {
    %c0_i32 = arith.constant 0 : i32
    %c0_i32_0 = arith.constant 0 : i32
    %c0_i32_1 = arith.constant 0 : i32
    return %c0_i32, %c0_i32_0 : i32, i32
  }
  func.func @transform_11(%arg0: i32) -> (i32, i32) {
    %c0_i32 = arith.constant 0 : i32
    %c0_i32_0 = arith.constant 0 : i32
    %c0_i32_1 = arith.constant 0 : i32
    return %c0_i32, %c0_i32_0 : i32, i32
  }
  func.func @transform_12(%arg0: i32) -> (i32, i32) {
    %c0_i32 = arith.constant 0 : i32
    %c0_i32_0 = arith.constant 0 : i32
    %c0_i32_1 = arith.constant 0 : i32
    return %c0_i32, %c0_i32_0 : i32, i32
  }
  func.func @transform_13(%arg0: i32) -> (i32, i32) {
    %c0_i32 = arith.constant 0 : i32
    %c0_i32_0 = arith.constant 0 : i32
    %c0_i32_1 = arith.constant 0 : i32
    return %c0_i32, %c0_i32_0 : i32, i32
  }
}

</mosaic_0001>

<llo_original>
// kernel: mnistnet_forward.7
$region0: #{mnistnet_forward.7}
  #allocation0 [shape = 'u32[]', space=smem, size = 0x4, offset = 0x4, fixed_abs, tag = 'smem constant byte address 0x4 - core index']
  #allocation1 [shape = 'u32[144,128]{1,0:T(1,128)}', space=vmem, size = 0x12000, scoped, tag = 'internal scratch']
  %s0 = inlined_call_operand.vmem [shape: bf16[1152,25], index: 0, kind: input, shape index: {}]
  %s1 = inlined_call_operand.vmem [shape: bf16[25,32], index: 1, kind: input, shape index: {}]
  %s2 = inlined_call_operand.hbm [shape: f32[1,32], index: 2, kind: input, shape index: {}]
  %s3 = inlined_call_operand.hbm [shape: f32[1,32], index: 3, kind: input, shape index: {}]
  %s4 = inlined_call_operand.hbm [shape: f32[1,32], index: 4, kind: input, shape index: {}]
  %s5 = inlined_call_operand.vmem [shape: f32[1152,32], index: 5, kind: output, shape index: {}]
  %s6 = sld [smem:[#allocation0]]
  $region42: #{mnistnet_forward.7} parent=0
    _
  %s8 = ssub.s32 1, %s6
  %s9 = scalar_select 0, %s8, %s6
  $region1: #{mnistnet_forward.7} parent=0
    #allocation2 [shape = 'u8[512]{0}', space=vmem, size = 0x400, scoped, tag = 'input window, operand 2, single buffered']
    #allocation3 [shape = 's32[1]{0}', space=sflag, size = 0x4, scoped, tag = 'scoped memory for mnistnet_forward.7']
    #allocation4 [shape = 'u8[512]{0}', space=vmem, size = 0x400, scoped, tag = 'input window, operand 3, single buffered']
    #allocation5 [shape = 's32[1]{0}', space=sflag, size = 0x4, scoped, tag = 'scoped memory for mnistnet_forward.7']
    #allocation6 [shape = 'u8[512]{0}', space=vmem, size = 0x400, scoped, tag = 'input window, operand 4, single buffered']
    %10 = vsyncpa [#allocation3], 0
    %11 = vsyncpa [#allocation5], 0
    // Predicated region
    $region2: #{mnistnet_forward.7} parent=1 // pred_check
      _
    $region3: #{mnistnet_forward.7} parent=1 // pred_check_branch
      %13 = sbr.rel (0) target = $region5
    $region4: #{mnistnet_forward.7} parent=1 // pred_region
      _
    $region5: #{mnistnet_forward.7} parent=1 // pred_fallthru
      _
    // Predicated region
    $region6: #{mnistnet_forward.7} parent=1 // pred_check
      _
    $region7: #{mnistnet_forward.7} parent=1 // pred_check_branch
      %15 = sbr.rel (0) target = $region9
    $region8: #{mnistnet_forward.7} parent=1 // pred_region
      _
    $region9: #{mnistnet_forward.7} parent=1 // pred_fallthru
      _
    // Predicated region
    $region10: #{mnistnet_forward.7} parent=1 // pred_check
      _
    $region11: #{mnistnet_forward.7} parent=1 // pred_check_branch
      %17 = sbr.rel (0) target = $region13
    $region12: #{mnistnet_forward.7} parent=1 // pred_region
      %s19 = ssub.s32 16, 16
      %20 = vsyncadd [#allocation3], %s19
      %s22 = sshll.u32 [#allocation2], 4
      %s23 = int_to_ptr.vmem [resolvable:$true] %s22
      %25 = dma.hbm_to_vmem [thread:$0]  %s2, 16, %s23, [#allocation3]
    $region13: #{mnistnet_forward.7} parent=1 // pred_fallthru
      _
    // Predicated region
    $region14: #{mnistnet_forward.7} parent=1 // pred_check
      _
    $region15: #{mnistnet_forward.7} parent=1 // pred_check_branch
      %27 = sbr.rel (0) target = $region17
    $region16: #{mnistnet_forward.7} parent=1 // pred_region
      %s29 = ssub.s32 16, 16
      %30 = vsyncadd [#allocation5], %s29
      %s32 = sshll.u32 [#allocation4], 4
      %s33 = int_to_ptr.vmem [resolvable:$true] %s32
      %35 = dma.hbm_to_vmem [thread:$0]  %s3, 16, %s33, [#allocation5]
    $region17: #{mnistnet_forward.7} parent=1 // pred_fallthru
      _
    // Predicated region
    $region18: #{mnistnet_forward.7} parent=1 // pred_check
      _
    $region19: #{mnistnet_forward.7} parent=1 // pred_check_branch
      %37 = sbr.rel (0) target = $region21
    $region20: #{mnistnet_forward.7} parent=1 // pred_region
      %s39 = ssub.s32 16, 16
      %40 = vsyncadd [#allocation5], %s39
      %s42 = sshll.u32 [#allocation6], 4
      %s43 = int_to_ptr.vmem [resolvable:$true] %s42
      %45 = dma.hbm_to_vmem [thread:$0]  %s4, 16, %s43, [#allocation5]
    $region21: #{mnistnet_forward.7} parent=1 // pred_fallthru
      _
    // Predicated region
    $region22: #{mnistnet_forward.7} parent=1 // pred_check
      _
    $region23: #{mnistnet_forward.7} parent=1 // pred_check_branch
      %47 = sbr.rel (0) target = $region25
    $region24: #{mnistnet_forward.7} parent=1 // pred_region
      %48 = dma.done [#allocation3], 16
    $region25: #{mnistnet_forward.7} parent=1 // pred_fallthru
      _
    // Predicated region
    $region26: #{mnistnet_forward.7} parent=1 // pred_check
      _
    $region27: #{mnistnet_forward.7} parent=1 // pred_check_branch
      %50 = sbr.rel (0) target = $region29
    $region28: #{mnistnet_forward.7} parent=1 // pred_region
      %51 = dma.done [#allocation5], 16
    $region29: #{mnistnet_forward.7} parent=1 // pred_fallthru
      _
    // Predicated region
    $region30: #{mnistnet_forward.7} parent=1 // pred_check
      _
    $region31: #{mnistnet_forward.7} parent=1 // pred_check_branch
      %53 = sbr.rel (0) target = $region33
    $region32: #{mnistnet_forward.7} parent=1 // pred_region
      %54 = dma.done [#allocation5], 16
    $region33: #{mnistnet_forward.7} parent=1 // pred_fallthru
      _
    %v56 = vld [vmem:[%s0] sm:$0xf]
    %v57 = vld [vmem:[%s0 + $0x4] sm:$0xf]
    %v58 = vld [vmem:[%s0 + $0x8] sm:$0xf]
    %v59 = vld [vmem:[%s0 + $0xc] sm:$0xf]
    %v60 = vld [vmem:[%s0 + $0x10] sm:$0xf]
    %v61 = vld [vmem:[%s0 + $0x14] sm:$0xf]
    %v62 = vld [vmem:[%s0 + $0x18] sm:$0xf]
    %v63 = vld [vmem:[%s0 + $0x1c] sm:$0xf]
    %v64 = vld [vmem:[%s0 + $0x20] sm:$0xf]
    %v65 = vld [vmem:[%s0 + $0x24] sm:$0xf]
    %v66 = vld [vmem:[%s0 + $0x28] sm:$0xf]
    %v67 = vld [vmem:[%s0 + $0x2c] sm:$0xf]
    %v68 = vld [vmem:[%s0 + $0x30] sm:$0xf]
    %v69 = vld [vmem:[%s0 + $0x34] sm:$0xf]
    %v70 = vld [vmem:[%s0 + $0x38] sm:$0xf]
    %v71 = vld [vmem:[%s0 + $0x3c] sm:$0xf]
    %v72 = vld [vmem:[%s0 + $0x40] sm:$0xf]
    %v73 = vld [vmem:[%s0 + $0x44] sm:$0xf]
    %v74 = vld [vmem:[%s0 + $0x48] sm:$0xf]
    %v75 = vld [vmem:[%s0 + $0x4c] sm:$0xf]
    %v76 = vld [vmem:[%s0 + $0x50] sm:$0xf]
    %v77 = vld [vmem:[%s0 + $0x54] sm:$0xf]
    %v78 = vld [vmem:[%s0 + $0x58] sm:$0xf]
    %v79 = vld [vmem:[%s0 + $0x5c] sm:$0xf]
    %v80 = vld [vmem:[%s0 + $0x60] sm:$0xf]
    %v81 = vld [vmem:[%s0 + $0x64] sm:$0xf]
    %v82 = vld [vmem:[%s0 + $0x68] sm:$0xf]
    %v83 = vld [vmem:[%s0 + $0x6c] sm:$0xf]
    %v84 = vld [vmem:[%s0 + $0x70] sm:$0xf]
    %v85 = vld [vmem:[%s0 + $0x74] sm:$0xf]
    %v86 = vld [vmem:[%s0 + $0x78] sm:$0xf]
    %v87 = vld [vmem:[%s0 + $0x7c] sm:$0xf]
    %v88 = vld [vmem:[%s0 + $0x80] sm:$0xf]
    %v89 = vld [vmem:[%s0 + $0x84] sm:$0xf]
    %v90 = vld [vmem:[%s0 + $0x88] sm:$0xf]
    %v91 = vld [vmem:[%s0 + $0x8c] sm:$0xf]
    %v92 = vld [vmem:[%s0 + $0x90] sm:$0xf]
    %v93 = vld [vmem:[%s0 + $0x94] sm:$0xf]
    %v94 = vld [vmem:[%s0 + $0x98] sm:$0xf]
    %v95 = vld [vmem:[%s0 + $0x9c] sm:$0xf]
    %v96 = vld [vmem:[%s0 + $0xa0] sm:$0xf]
    %v97 = vld [vmem:[%s0 + $0xa4] sm:$0xf]
    %v98 = vld [vmem:[%s0 + $0xa8] sm:$0xf]
    %v99 = vld [vmem:[%s0 + $0xac] sm:$0xf]
    %v100 = vld [vmem:[%s0 + $0xb0] sm:$0xf]
    %v101 = vld [vmem:[%s0 + $0xb4] sm:$0xf]
    %v102 = vld [vmem:[%s0 + $0xb8] sm:$0xf]
    %v103 = vld [vmem:[%s0 + $0xbc] sm:$0xf]
    %v104 = vld [vmem:[%s0 + $0xc0] sm:$0xf]
    %v105 = vld [vmem:[%s0 + $0xc4] sm:$0xf]
    %v106 = vld [vmem:[%s0 + $0xc8] sm:$0xf]
    %v107 = vld [vmem:[%s0 + $0xcc] sm:$0xf]
    %v108 = vld [vmem:[%s0 + $0xd0] sm:$0xf]
    %v109 = vld [vmem:[%s0 + $0xd4] sm:$0xf]
    %v110 = vld [vmem:[%s0 + $0xd8] sm:$0xf]
    %v111 = vld [vmem:[%s0 + $0xdc] sm:$0xf]
    %v112 = vld [vmem:[%s0 + $0xe0] sm:$0xf]
    %v113 = vld [vmem:[%s0 + $0xe4] sm:$0xf]
    %v114 = vld [vmem:[%s0 + $0xe8] sm:$0xf]
    %v115 = vld [vmem:[%s0 + $0xec] sm:$0xf]
    %v116 = vld [vmem:[%s0 + $0xf0] sm:$0xf]
    %v117 = vld [vmem:[%s0 + $0xf4] sm:$0xf]
    %v118 = vld [vmem:[%s0 + $0xf8] sm:$0xf]
    %v119 = vld [vmem:[%s0 + $0xfc] sm:$0xf]
    %v120 = vld [vmem:[%s0 + $0x100] sm:$0xf]
    %v121 = vld [vmem:[%s0 + $0x104] sm:$0xf]
    %v122 = vld [vmem:[%s0 + $0x108] sm:$0xf]
    %v123 = vld [vmem:[%s0 + $0x10c] sm:$0xf]
    %v124 = vld [vmem:[%s0 + $0x110] sm:$0xf]
    %v125 = vld [vmem:[%s0 + $0x114] sm:$0xf]
    %v126 = vld [vmem:[%s0 + $0x118] sm:$0xf]
    %v127 = vld [vmem:[%s0 + $0x11c] sm:$0xf]
    %v128 = vld [vmem:[%s0 + $0x120] sm:$0xf]
    %v129 = vld [vmem:[%s0 + $0x124] sm:$0xf]
    %v130 = vld [vmem:[%s0 + $0x128] sm:$0xf]
    %v131 = vld [vmem:[%s0 + $0x12c] sm:$0xf]
    %v132 = vld [vmem:[%s0 + $0x130] sm:$0xf]
    %v133 = vld [vmem:[%s0 + $0x134] sm:$0xf]
    %v134 = vld [vmem:[%s0 + $0x138] sm:$0xf]
    %v135 = vld [vmem:[%s0 + $0x13c] sm:$0xf]
    %v136 = vld [vmem:[%s0 + $0x140] sm:$0xf]
    %v137 = vld [vmem:[%s0 + $0x144] sm:$0xf]
    %v138 = vld [vmem:[%s0 + $0x148] sm:$0xf]
    %v139 = vld [vmem:[%s0 + $0x14c] sm:$0xf]
    %v140 = vld [vmem:[%s0 + $0x150] sm:$0xf]
    %v141 = vld [vmem:[%s0 + $0x154] sm:$0xf]
    %v142 = vld [vmem:[%s0 + $0x158] sm:$0xf]
    %v143 = vld [vmem:[%s0 + $0x15c] sm:$0xf]
    %v144 = vld [vmem:[%s0 + $0x160] sm:$0xf]
    %v145 = vld [vmem:[%s0 + $0x164] sm:$0xf]
    %v146 = vld [vmem:[%s0 + $0x168] sm:$0xf]
    %v147 = vld [vmem:[%s0 + $0x16c] sm:$0xf]
    %v148 = vld [vmem:[%s0 + $0x170] sm:$0xf]
    %v149 = vld [vmem:[%s0 + $0x174] sm:$0xf]
    %v150 = vld [vmem:[%s0 + $0x178] sm:$0xf]
    %v151 = vld [vmem:[%s0 + $0x17c] sm:$0xf]
    %v152 = vld [vmem:[%s0 + $0x180] sm:$0xf]
    %v153 = vld [vmem:[%s0 + $0x184] sm:$0xf]
    %v154 = vld [vmem:[%s0 + $0x188] sm:$0xf]
    %v155 = vld [vmem:[%s0 + $0x18c] sm:$0xf]
    %v156 = vld [vmem:[%s0 + $0x190] sm:$0xf]
    %v157 = vld [vmem:[%s0 + $0x194] sm:$0xf]
    %v158 = vld [vmem:[%s0 + $0x198] sm:$0xf]
    %v159 = vld [vmem:[%s0 + $0x19c] sm:$0xf]
    %v160 = vld [vmem:[%s0 + $0x1a0] sm:$0xf]
    %v161 = vld [vmem:[%s0 + $0x1a4] sm:$0xf]
    %v162 = vld [vmem:[%s0 + $0x1a8] sm:$0xf]
    %v163 = vld [vmem:[%s0 + $0x1ac] sm:$0xf]
    %v164 = vld [vmem:[%s0 + $0x1b0] sm:$0xf]
    %v165 = vld [vmem:[%s0 + $0x1b4] sm:$0xf]
    %v166 = vld [vmem:[%s0 + $0x1b8] sm:$0xf]
    %v167 = vld [vmem:[%s0 + $0x1bc] sm:$0xf]
    %v168 = vld [vmem:[%s0 + $0x1c0] sm:$0xf]
    %v169 = vld [vmem:[%s0 + $0x1c4] sm:$0xf]
    %v170 = vld [vmem:[%s0 + $0x1c8] sm:$0xf]
    %v171 = vld [vmem:[%s0 + $0x1cc] sm:$0xf]
    %v172 = vld [vmem:[%s0 + $0x1d0] sm:$0xf]
    %v173 = vld [vmem:[%s0 + $0x1d4] sm:$0xf]
    %v174 = vld [vmem:[%s0 + $0x1d8] sm:$0xf]
    %v175 = vld [vmem:[%s0 + $0x1dc] sm:$0xf]
    %v176 = vld [vmem:[%s0 + $0x1e0] sm:$0xf]
    %v177 = vld [vmem:[%s0 + $0x1e4] sm:$0xf]
    %v178 = vld [vmem:[%s0 + $0x1e8] sm:$0xf]
    %v179 = vld [vmem:[%s0 + $0x1ec] sm:$0xf]
    %v180 = vld [vmem:[%s0 + $0x1f0] sm:$0xf]
    %v181 = vld [vmem:[%s0 + $0x1f4] sm:$0xf]
    %v182 = vld [vmem:[%s0 + $0x1f8] sm:$0xf]
    %v183 = vld [vmem:[%s0 + $0x1fc] sm:$0xf]
    %v184 = vld [vmem:[%s0 + $0x200] sm:$0xf]
    %v185 = vld [vmem:[%s0 + $0x204] sm:$0xf]
    %v186 = vld [vmem:[%s0 + $0x208] sm:$0xf]
    %v187 = vld [vmem:[%s0 + $0x20c] sm:$0xf]
    %v188 = vld [vmem:[%s0 + $0x210] sm:$0xf]
    %v189 = vld [vmem:[%s0 + $0x214] sm:$0xf]
    %v190 = vld [vmem:[%s0 + $0x218] sm:$0xf]
    %v191 = vld [vmem:[%s0 + $0x21c] sm:$0xf]
    %v192 = vld [vmem:[%s0 + $0x220] sm:$0xf]
    %v193 = vld [vmem:[%s0 + $0x224] sm:$0xf]
    %v194 = vld [vmem:[%s0 + $0x228] sm:$0xf]
    %v195 = vld [vmem:[%s0 + $0x22c] sm:$0xf]
    %v196 = vld [vmem:[%s0 + $0x230] sm:$0xf]
    %v197 = vld [vmem:[%s0 + $0x234] sm:$0xf]
    %v198 = vld [vmem:[%s0 + $0x238] sm:$0xf]
    %v199 = vld [vmem:[%s0 + $0x23c] sm:$0xf]
    %v200 = vld [vmem:[%s1] sm:$0xf]
    %v201 = vld [vmem:[%s1 + $0x4] sm:$0xf]
    %v202 = vld [vmem:[%s1 + $0x8] sm:$0xf]
    %v203 = vld [vmem:[%s1 + $0xc] sm:$0x1]
    %v204 = vld [vmem:[#allocation2] sm:$0x1]
    %v206 = vlaneseq
    %v207 = vshrl.u32 %v206, 7
    %v208 = vsub.s32 0, %v207
    %v209 = vrot.slane %v204, %v208
    %v355 = vunpack.c.l.b16 %v56
    %v356 = vunpack.c.l.b16 %v57
    %v357 = vunpack.c.l.b16 %v58
    %v358 = vunpack.c.l.b16 %v59
    %v359 = vunpack.c.l.b16 %v60
    %v360 = vunpack.c.l.b16 %v61
    %v361 = vunpack.c.l.b16 %v62
    %v362 = vunpack.c.l.b16 %v63
    %v363 = vunpack.c.l.b16 %v64
    %v364 = vunpack.c.l.b16 %v65
    %v365 = vunpack.c.l.b16 %v66
    %v366 = vunpack.c.l.b16 %v67
    %v367 = vunpack.c.l.b16 %v68
    %v368 = vunpack.c.l.b16 %v69
    %v369 = vunpack.c.l.b16 %v70
    %v370 = vunpack.c.l.b16 %v71
    %v371 = vunpack.c.l.b16 %v72
    %v372 = vunpack.c.l.b16 %v73
    %v373 = vunpack.c.l.b16 %v74
    %v374 = vunpack.c.l.b16 %v75
    %v375 = vunpack.c.l.b16 %v76
    %v376 = vunpack.c.l.b16 %v77
    %v377 = vunpack.c.l.b16 %v78
    %v378 = vunpack.c.l.b16 %v79
    %v379 = vunpack.c.l.b16 %v80
    %v380 = vunpack.c.l.b16 %v81
    %v381 = vunpack.c.l.b16 %v82
    %v382 = vunpack.c.l.b16 %v83
    %v383 = vunpack.c.l.b16 %v84
    %v384 = vunpack.c.l.b16 %v85
    %v385 = vunpack.c.l.b16 %v86
    %v386 = vunpack.c.l.b16 %v87
    %v387 = vunpack.c.l.b16 %v88
    %v388 = vunpack.c.l.b16 %v89
    %v389 = vunpack.c.l.b16 %v90
    %v390 = vunpack.c.l.b16 %v91
    %v391 = vunpack.c.l.b16 %v92
    %v392 = vunpack.c.l.b16 %v93
    %v393 = vunpack.c.l.b16 %v94
    %v394 = vunpack.c.l.b16 %v95
    %v395 = vunpack.c.l.b16 %v96
    %v396 = vunpack.c.l.b16 %v97
    %v397 = vunpack.c.l.b16 %v98
    %v398 = vunpack.c.l.b16 %v99
    %v399 = vunpack.c.l.b16 %v100
    %v400 = vunpack.c.l.b16 %v101
    %v401 = vunpack.c.l.b16 %v102
    %v402 = vunpack.c.l.b16 %v103
    %v403 = vunpack.c.l.b16 %v104
    %v404 = vunpack.c.l.b16 %v105
    %v405 = vunpack.c.l.b16 %v106
    %v406 = vunpack.c.l.b16 %v107
    %v407 = vunpack.c.l.b16 %v108
    %v408 = vunpack.c.l.b16 %v109
    %v409 = vunpack.c.l.b16 %v110
    %v410 = vunpack.c.l.b16 %v111
    %v411 = vunpack.c.l.b16 %v112
    %v412 = vunpack.c.l.b16 %v113
    %v413 = vunpack.c.l.b16 %v114
    %v414 = vunpack.c.l.b16 %v115
    %v415 = vunpack.c.l.b16 %v116
    %v416 = vunpack.c.l.b16 %v117
    %v417 = vunpack.c.l.b16 %v118
    %v418 = vunpack.c.l.b16 %v119
    %v419 = vunpack.c.l.b16 %v120
    %v420 = vunpack.c.l.b16 %v121
    %v421 = vunpack.c.l.b16 %v122
    %v422 = vunpack.c.l.b16 %v123
    %v423 = vunpack.c.l.b16 %v124
    %v424 = vunpack.c.l.b16 %v125
    %v425 = vunpack.c.l.b16 %v126
    %v426 = vunpack.c.l.b16 %v127
    %v427 = vunpack.c.l.b16 %v128
    %v428 = vunpack.c.l.b16 %v129
    %v429 = vunpack.c.l.b16 %v130
    %v430 = vunpack.c.l.b16 %v131
    %v431 = vunpack.c.l.b16 %v132
    %v432 = vunpack.c.l.b16 %v133
    %v433 = vunpack.c.l.b16 %v134
    %v434 = vunpack.c.l.b16 %v135
    %v435 = vunpack.c.l.b16 %v136
    %v436 = vunpack.c.l.b16 %v137
    %v437 = vunpack.c.l.b16 %v138
    %v438 = vunpack.c.l.b16 %v139
    %v439 = vunpack.c.l.b16 %v140
    %v440 = vunpack.c.l.b16 %v141
    %v441 = vunpack.c.l.b16 %v142
    %v442 = vunpack.c.l.b16 %v143
    %v443 = vunpack.c.l.b16 %v144
    %v444 = vunpack.c.l.b16 %v145
    %v445 = vunpack.c.l.b16 %v146
    %v446 = vunpack.c.l.b16 %v147
    %v447 = vunpack.c.l.b16 %v148
    %v448 = vunpack.c.l.b16 %v149
    %v449 = vunpack.c.l.b16 %v150
    %v450 = vunpack.c.l.b16 %v151
    %v451 = vunpack.c.l.b16 %v152
    %v452 = vunpack.c.l.b16 %v153
    %v453 = vunpack.c.l.b16 %v154
    %v454 = vunpack.c.l.b16 %v155
    %v455 = vunpack.c.l.b16 %v156
    %v456 = vunpack.c.l.b16 %v157
    %v457 = vunpack.c.l.b16 %v158
    %v458 = vunpack.c.l.b16 %v159
    %v459 = vunpack.c.l.b16 %v160
    %v460 = vunpack.c.l.b16 %v161
    %v461 = vunpack.c.l.b16 %v162
    %v462 = vunpack.c.l.b16 %v163
    %v463 = vunpack.c.l.b16 %v164
    %v464 = vunpack.c.l.b16 %v165
    %v465 = vunpack.c.l.b16 %v166
    %v466 = vunpack.c.l.b16 %v167
    %v467 = vunpack.c.l.b16 %v168
    %v468 = vunpack.c.l.b16 %v169
    %v469 = vunpack.c.l.b16 %v170
    %v470 = vunpack.c.l.b16 %v171
    %v471 = vunpack.c.l.b16 %v172
    %v472 = vunpack.c.l.b16 %v173
    %v473 = vunpack.c.l.b16 %v174
    %v474 = vunpack.c.l.b16 %v175
    %v475 = vunpack.c.l.b16 %v176
    %v476 = vunpack.c.l.b16 %v177
    %v477 = vunpack.c.l.b16 %v178
    %v478 = vunpack.c.l.b16 %v179
    %v479 = vunpack.c.l.b16 %v180
    %v480 = vunpack.c.l.b16 %v181
    %v481 = vunpack.c.l.b16 %v182
    %v482 = vunpack.c.l.b16 %v183
    %v483 = vunpack.c.l.b16 %v184
    %v484 = vunpack.c.l.b16 %v185
    %v485 = vunpack.c.l.b16 %v186
    %v486 = vunpack.c.l.b16 %v187
    %v487 = vunpack.c.l.b16 %v188
    %v488 = vunpack.c.l.b16 %v189
    %v489 = vunpack.c.l.b16 %v190
    %v490 = vunpack.c.l.b16 %v191
    %v491 = vunpack.c.l.b16 %v192
    %v492 = vunpack.c.l.b16 %v193
    %v493 = vunpack.c.l.b16 %v194
    %v494 = vunpack.c.l.b16 %v195
    %v495 = vunpack.c.l.b16 %v196
    %v496 = vunpack.c.l.b16 %v197
    %v497 = vunpack.c.l.b16 %v198
    %v498 = vunpack.c.l.b16 %v199
    %v499 = vpack.c.b16 %v356, %v355
    %v500 = vpack.c.b16 %v358, %v357
    %v501 = vpack.c.b16 %v360, %v359
    %v502 = vpack.c.b16 %v362, %v361
    %v503 = vpack.c.b16 %v364, %v363
    %v504 = vpack.c.b16 %v366, %v365
    %v505 = vpack.c.b16 %v368, %v367
    %v506 = vpack.c.b16 %v370, %v369
    %v507 = vpack.c.b16 %v372, %v371
    %v508 = vpack.c.b16 %v374, %v373
    %v509 = vpack.c.b16 %v376, %v375
    %v510 = vpack.c.b16 %v378, %v377
    %v511 = vpack.c.b16 %v380, %v379
    %v512 = vpack.c.b16 %v382, %v381
    %v513 = vpack.c.b16 %v384, %v383
    %v514 = vpack.c.b16 %v386, %v385
    %v515 = vpack.c.b16 %v388, %v387
    %v516 = vpack.c.b16 %v390, %v389
    %v517 = vpack.c.b16 %v392, %v391
    %v518 = vpack.c.b16 %v394, %v393
    %v519 = vpack.c.b16 %v396, %v395
    %v520 = vpack.c.b16 %v398, %v397
    %v521 = vpack.c.b16 %v400, %v399
    %v522 = vpack.c.b16 %v402, %v401
    %v523 = vpack.c.b16 %v404, %v403
    %v524 = vpack.c.b16 %v406, %v405
    %v525 = vpack.c.b16 %v408, %v407
    %v526 = vpack.c.b16 %v410, %v409
    %v527 = vpack.c.b16 %v412, %v411
    %v528 = vpack.c.b16 %v414, %v413
    %v529 = vpack.c.b16 %v416, %v415
    %v530 = vpack.c.b16 %v418, %v417
    %v531 = vpack.c.b16 %v420, %v419
    %v532 = vpack.c.b16 %v422, %v421
    %v533 = vpack.c.b16 %v424, %v423
    %v534 = vpack.c.b16 %v426, %v425
    %v535 = vpack.c.b16 %v428, %v427
    %v536 = vpack.c.b16 %v430, %v429
    %v537 = vpack.c.b16 %v432, %v431
    %v538 = vpack.c.b16 %v434, %v433
    %v539 = vpack.c.b16 %v436, %v435
    %v540 = vpack.c.b16 %v438, %v437
    %v541 = vpack.c.b16 %v440, %v439
    %v542 = vpack.c.b16 %v442, %v441
    %v543 = vpack.c.b16 %v444, %v443
    %v544 = vpack.c.b16 %v446, %v445
    %v545 = vpack.c.b16 %v448, %v447
    %v546 = vpack.c.b16 %v450, %v449
    %v547 = vpack.c.b16 %v452, %v451
    %v548 = vpack.c.b16 %v454, %v453
    %v549 = vpack.c.b16 %v456, %v455
    %v550 = vpack.c.b16 %v458, %v457
    %v551 = vpack.c.b16 %v460, %v459
    %v552 = vpack.c.b16 %v462, %v461
    %v553 = vpack.c.b16 %v464, %v463
    %v554 = vpack.c.b16 %v466, %v465
    %v555 = vpack.c.b16 %v468, %v467
    %v556 = vpack.c.b16 %v470, %v469
    %v557 = vpack.c.b16 %v472, %v471
    %v558 = vpack.c.b16 %v474, %v473
    %v559 = vpack.c.b16 %v476, %v475
    %v560 = vpack.c.b16 %v478, %v477
    %v561 = vpack.c.b16 %v480, %v479
    %v562 = vpack.c.b16 %v482, %v481
    %v563 = vpack.c.b16 %v484, %v483
    %v564 = vpack.c.b16 %v486, %v485
    %v565 = vpack.c.b16 %v488, %v487
    %v566 = vpack.c.b16 %v490, %v489
    %v567 = vpack.c.b16 %v492, %v491
    %v568 = vpack.c.b16 %v494, %v493
    %v569 = vpack.c.b16 %v496, %v495
    %v570 = vpack.c.b16 %v498, %v497
    %v575 = vunpack.c.l.b16 %v200
    %v576 = vunpack.c.l.b16 %v201
    %v577 = vunpack.c.l.b16 %v202
    %v578 = vunpack.c.l.b16 %v203
    %v579 = vpack.c.b16 %v576, %v575
    %v580 = vpack.c.b16 %v578, %v577
    %vm582 = vcmask 203776
    %v584 = vsel %vm582, %v499, 0
    %v587 = vsel %vm582, %v500, 0
    %v590 = vsel %vm582, %v501, 0
    %v593 = vsel %vm582, %v502, 0
    %v596 = vsel %vm582, %v503, 0
    %v599 = vsel %vm582, %v504, 0
    %v602 = vsel %vm582, %v505, 0
    %v605 = vsel %vm582, %v506, 0
    %v608 = vsel %vm582, %v507, 0
    %v611 = vsel %vm582, %v508, 0
    %v614 = vsel %vm582, %v509, 0
    %v617 = vsel %vm582, %v510, 0
    %v620 = vsel %vm582, %v511, 0
    %v623 = vsel %vm582, %v512, 0
    %v626 = vsel %vm582, %v513, 0
    %v629 = vsel %vm582, %v514, 0
    %v632 = vsel %vm582, %v515, 0
    %v635 = vsel %vm582, %v516, 0
    %v638 = vsel %vm582, %v517, 0
    %v641 = vsel %vm582, %v518, 0
    %v644 = vsel %vm582, %v519, 0
    %v647 = vsel %vm582, %v520, 0
    %v650 = vsel %vm582, %v521, 0
    %v653 = vsel %vm582, %v522, 0
    %v656 = vsel %vm582, %v523, 0
    %v659 = vsel %vm582, %v524, 0
    %v662 = vsel %vm582, %v525, 0
    %v665 = vsel %vm582, %v526, 0
    %v668 = vsel %vm582, %v527, 0
    %v671 = vsel %vm582, %v528, 0
    %v674 = vsel %vm582, %v529, 0
    %v677 = vsel %vm582, %v530, 0
    %v680 = vsel %vm582, %v531, 0
    %v683 = vsel %vm582, %v532, 0
    %v686 = vsel %vm582, %v533, 0
    %v689 = vsel %vm582, %v534, 0
    %v692 = vsel %vm582, %v535, 0
    %v695 = vsel %vm582, %v536, 0
    %v698 = vsel %vm582, %v537, 0
    %v701 = vsel %vm582, %v538, 0
    %v704 = vsel %vm582, %v539, 0
    %v707 = vsel %vm582, %v540, 0
    %v710 = vsel %vm582, %v541, 0
    %v713 = vsel %vm582, %v542, 0
    %v716 = vsel %vm582, %v543, 0
    %v719 = vsel %vm582, %v544, 0
    %v722 = vsel %vm582, %v545, 0
    %v725 = vsel %vm582, %v546, 0
    %v728 = vsel %vm582, %v547, 0
    %v731 = vsel %vm582, %v548, 0
    %v734 = vsel %vm582, %v549, 0
    %v737 = vsel %vm582, %v550, 0
    %v740 = vsel %vm582, %v551, 0
    %v743 = vsel %vm582, %v552, 0
    %v746 = vsel %vm582, %v553, 0
    %v749 = vsel %vm582, %v554, 0
    %v752 = vsel %vm582, %v555, 0
    %v755 = vsel %vm582, %v556, 0
    %v758 = vsel %vm582, %v557, 0
    %v761 = vsel %vm582, %v558, 0
    %v764 = vsel %vm582, %v559, 0
    %v767 = vsel %vm582, %v560, 0
    %v770 = vsel %vm582, %v561, 0
    %v773 = vsel %vm582, %v562, 0
    %v776 = vsel %vm582, %v563, 0
    %v779 = vsel %vm582, %v564, 0
    %v782 = vsel %vm582, %v565, 0
    %v785 = vsel %vm582, %v566, 0
    %v788 = vsel %vm582, %v567, 0
    %v791 = vsel %vm582, %v568, 0
    %v794 = vsel %vm582, %v569, 0
    %v797 = vsel %vm582, %v570, 0
    %vm799 = vcmask 1043456
    %vm800 = vcmask 1044480
    %v801 = vsel %vm799, 4294967295, 65535
    %v802 = vsel %vm800, %v801, 0
    %v804 = vand.u32 %v580, %v802
    %806 = vmatprep.subr.bf16.mxu0 0
    %807 = vmatpush1.bf16.msra.mxu0 %v579
    %808 = vmatprep.subr.bf16.mxu0 0
    %809 = vmatpush1.bf16.msra.mxu0 %v804
    %810 = vmatprep.subr.bf16.mxu0 0
    %811 = vmatpush1.bf16.msra.mxu0 0
    %812 = vmatprep.subr.bf16.mxu0 0
    %813 = vmatpush1.bf16.msra.mxu0 0
    %814 = vmatprep.subr.bf16.mxu0 0
    %815 = vmatpush1.bf16.msra.mxu0 0
    %816 = vmatprep.subr.bf16.mxu0 0
    %817 = vmatpush1.bf16.msra.mxu0 0
    %818 = vmatprep.subr.bf16.mxu0 0
    %819 = vmatpush1.bf16.msra.mxu0 0
    %820 = vmatprep.subr.bf16.mxu0 0
    %821 = vmatpush1.bf16.msra.mxu0 0
    %822 = vmatprep.subr.bf16.mxu0 0
    %823 = vmatpush1.bf16.msra.mxu0 0
    %824 = vmatprep.subr.bf16.mxu0 0
    %825 = vmatpush1.bf16.msra.mxu0 0
    %826 = vmatprep.subr.bf16.mxu0 0
    %827 = vmatpush1.bf16.msra.mxu0 0
    %828 = vmatprep.subr.bf16.mxu0 0
    %829 = vmatpush1.bf16.msra.mxu0 0
    %830 = vmatprep.subr.bf16.mxu0 0
    %831 = vmatpush1.bf16.msra.mxu0 0
    %832 = vmatprep.subr.bf16.mxu0 0
    %833 = vmatpush1.bf16.msra.mxu0 0
    %834 = vmatprep.subr.bf16.mxu0 0
    %835 = vmatpush1.bf16.msra.mxu0 0
    %836 = vmatprep.subr.bf16.mxu0 0
    %837 = vmatpush1.bf16.msra.mxu0 0
    %838 = vmatprep.mubr.bf16.mxu0 0
    %839 = vmatmul.mubr.bf16.gmra.mrb[0].mxu0 %v584
    %v840 = vpop.f32.mrb[0].mxu0
    %v841 = vadd.f32 %v209, %v840
    %v842 = vpop.f32.mrb[0].mxu0
    %v843 = vpop.f32.mrb[0].mxu0
    %v844 = vadd.f32 %v209, %v843
    %v845 = vpop.f32.mrb[0].mxu0
    %846 = vmatprep.mubr.bf16.mxu0 0
    %847 = vmatmul.mubr.bf16.gmra.mrb[0].mxu0 %v587
    %v848 = vpop.f32.mrb[0].mxu0
    %v849 = vadd.f32 %v209, %v848
    %v850 = vpop.f32.mrb[0].mxu0
    %v851 = vpop.f32.mrb[0].mxu0
    %v852 = vadd.f32 %v209, %v851
    %v853 = vpop.f32.mrb[0].mxu0
    %854 = vmatprep.mubr.bf16.mxu0 0
    %855 = vmatmul.mubr.bf16.gmra.mrb[0].mxu0 %v590
    %v856 = vpop.f32.mrb[0].mxu0
    %v857 = vadd.f32 %v209, %v856
    %v858 = vpop.f32.mrb[0].mxu0
    %v859 = vpop.f32.mrb[0].mxu0
    %v860 = vadd.f32 %v209, %v859
    %v861 = vpop.f32.mrb[0].mxu0
    %862 = vmatprep.mubr.bf16.mxu0 0
    %863 = vmatmul.mubr.bf16.gmra.mrb[0].mxu0 %v593
    %v864 = vpop.f32.mrb[0].mxu0
    %v865 = vadd.f32 %v209, %v864
    %v866 = vpop.f32.mrb[0].mxu0
    %v867 = vpop.f32.mrb[0].mxu0
    %v868 = vadd.f32 %v209, %v867
    %v869 = vpop.f32.mrb[0].mxu0
    %870 = vmatprep.mubr.bf16.mxu0 0
    %871 = vmatmul.mubr.bf16.gmra.mrb[0].mxu0 %v596
    %v872 = vpop.f32.mrb[0].mxu0
    %v873 = vadd.f32 %v209, %v872
    %v874 = vpop.f32.mrb[0].mxu0
    %v875 = vpop.f32.mrb[0].mxu0
    %v876 = vadd.f32 %v209, %v875
    %v877 = vpop.f32.mrb[0].mxu0
    %878 = vmatprep.mubr.bf16.mxu0 0
    %879 = vmatmul.mubr.bf16.gmra.mrb[0].mxu0 %v599
    %v880 = vpop.f32.mrb[0].mxu0
    %v881 = vadd.f32 %v209, %v880
    %v882 = vpop.f32.mrb[0].mxu0
    %v883 = vpop.f32.mrb[0].mxu0
    %v884 = vadd.f32 %v209, %v883
    %v885 = vpop.f32.mrb[0].mxu0
    %886 = vmatprep.mubr.bf16.mxu0 0
    %887 = vmatmul.mubr.bf16.gmra.mrb[0].mxu0 %v602
    %v888 = vpop.f32.mrb[0].mxu0
    %v889 = vadd.f32 %v209, %v888
    %v890 = vpop.f32.mrb[0].mxu0
    %v891 = vpop.f32.mrb[0].mxu0
    %v892 = vadd.f32 %v209, %v891
    %v893 = vpop.f32.mrb[0].mxu0
    %894 = vmatprep.mubr.bf16.mxu0 0
    %895 = vmatmul.mubr.bf16.gmra.mrb[0].mxu0 %v605
    %v896 = vpop.f32.mrb[0].mxu0
    %v897 = vadd.f32 %v209, %v896
    %v898 = vpop.f32.mrb[0].mxu0
    %v899 = vpop.f32.mrb[0].mxu0
    %v900 = vadd.f32 %v209, %v899
    %v901 = vpop.f32.mrb[0].mxu0
    %902 = vmatprep.mubr.bf16.mxu0 0
    %903 = vmatmul.mubr.bf16.gmra.mrb[0].mxu0 %v608
    %v904 = vpop.f32.mrb[0].mxu0
    %v905 = vadd.f32 %v209, %v904
    %v906 = vpop.f32.mrb[0].mxu0
    %v907 = vpop.f32.mrb[0].mxu0
    %v908 = vadd.f32 %v209, %v907
    %v909 = vpop.f32.mrb[0].mxu0
    %910 = vmatprep.mubr.bf16.mxu0 0
    %911 = vmatmul.mubr.bf16.gmra.mrb[0].mxu0 %v611
    %v912 = vpop.f32.mrb[0].mxu0
    %v913 = vadd.f32 %v209, %v912
    %v914 = vpop.f32.mrb[0].mxu0
    %v915 = vpop.f32.mrb[0].mxu0
    %v916 = vadd.f32 %v209, %v915
    %v917 = vpop.f32.mrb[0].mxu0
    %918 = vmatprep.mubr.bf16.mxu0 0
    %919 = vmatmul.mubr.bf16.gmra.mrb[0].mxu0 %v614
    %v920 = vpop.f32.mrb[0].mxu0
    %v921 = vadd.f32 %v209, %v920
    %v922 = vpop.f32.mrb[0].mxu0
    %v923 = vpop.f32.mrb[0].mxu0
    %v924 = vadd.f32 %v209, %v923
    %v925 = vpop.f32.mrb[0].mxu0
    %926 = vmatprep.mubr.bf16.mxu0 0
    %927 = vmatmul.mubr.bf16.gmra.mrb[0].mxu0 %v617
    %v928 = vpop.f32.mrb[0].mxu0
    %v929 = vadd.f32 %v209, %v928
    %v930 = vpop.f32.mrb[0].mxu0
    %v931 = vpop.f32.mrb[0].mxu0
    %v932 = vadd.f32 %v209, %v931
    %v933 = vpop.f32.mrb[0].mxu0
    %934 = vmatprep.mubr.bf16.mxu0 0
    %935 = vmatmul.mubr.bf16.gmra.mrb[0].mxu0 %v620
    %v936 = vpop.f32.mrb[0].mxu0
    %v937 = vadd.f32 %v209, %v936
    %v938 = vpop.f32.mrb[0].mxu0
    %v939 = vpop.f32.mrb[0].mxu0
    %v940 = vadd.f32 %v209, %v939
    %v941 = vpop.f32.mrb[0].mxu0
    %942 = vmatprep.mubr.bf16.mxu0 0
    %943 = vmatmul.mubr.bf16.gmra.mrb[0].mxu0 %v623
    %v944 = vpop.f32.mrb[0].mxu0
    %v945 = vadd.f32 %v209, %v944
    %v946 = vpop.f32.mrb[0].mxu0
    %v947 = vpop.f32.mrb[0].mxu0
    %v948 = vadd.f32 %v209, %v947
    %v949 = vpop.f32.mrb[0].mxu0
    %950 = vmatprep.mubr.bf16.mxu0 0
    %951 = vmatmul.mubr.bf16.gmra.mrb[0].mxu0 %v626
    %v952 = vpop.f32.mrb[0].mxu0
    %v953 = vadd.f32 %v209, %v952
    %v954 = vpop.f32.mrb[0].mxu0
    %v955 = vpop.f32.mrb[0].mxu0
    %v956 = vadd.f32 %v209, %v955
    %v957 = vpop.f32.mrb[0].mxu0
    %958 = vmatprep.mubr.bf16.mxu0 0
    %959 = vmatmul.mubr.bf16.gmra.mrb[0].mxu0 %v629
    %v960 = vpop.f32.mrb[0].mxu0
    %v961 = vadd.f32 %v209, %v960
    %v962 = vpop.f32.mrb[0].mxu0
    %v963 = vpop.f32.mrb[0].mxu0
    %v964 = vadd.f32 %v209, %v963
    %v965 = vpop.f32.mrb[0].mxu0
    %966 = vmatprep.mubr.bf16.mxu0 0
    %967 = vmatmul.mubr.bf16.gmra.mrb[0].mxu0 %v632
    %v968 = vpop.f32.mrb[0].mxu0
    %v969 = vadd.f32 %v209, %v968
    %v970 = vpop.f32.mrb[0].mxu0
    %v971 = vpop.f32.mrb[0].mxu0
    %v972 = vadd.f32 %v209, %v971
    %v973 = vpop.f32.mrb[0].mxu0
    %974 = vmatprep.mubr.bf16.mxu0 0
    %975 = vmatmul.mubr.bf16.gmra.mrb[0].mxu0 %v635
    %v976 = vpop.f32.mrb[0].mxu0
    %v977 = vadd.f32 %v209, %v976
    %v978 = vpop.f32.mrb[0].mxu0
    %v979 = vpop.f32.mrb[0].mxu0
    %v980 = vadd.f32 %v209, %v979
    %v981 = vpop.f32.mrb[0].mxu0
    %982 = vmatprep.mubr.bf16.mxu0 0
    %983 = vmatmul.mubr.bf16.gmra.mrb[0].mxu0 %v638
    %v984 = vpop.f32.mrb[0].mxu0
    %v985 = vadd.f32 %v209, %v984
    %v986 = vpop.f32.mrb[0].mxu0
    %v987 = vpop.f32.mrb[0].mxu0
    %v988 = vadd.f32 %v209, %v987
    %v989 = vpop.f32.mrb[0].mxu0
    %990 = vmatprep.mubr.bf16.mxu0 0
    %991 = vmatmul.mubr.bf16.gmra.mrb[0].mxu0 %v641
    %v992 = vpop.f32.mrb[0].mxu0
    %v993 = vadd.f32 %v209, %v992
    %v994 = vpop.f32.mrb[0].mxu0
    %v995 = vpop.f32.mrb[0].mxu0
    %v996 = vadd.f32 %v209, %v995
    %v997 = vpop.f32.mrb[0].mxu0
    %998 = vmatprep.mubr.bf16.mxu0 0
    %999 = vmatmul.mubr.bf16.gmra.mrb[0].mxu0 %v644
    %v1000 = vpop.f32.mrb[0].mxu0
    %v1001 = vadd.f32 %v209, %v1000
    %v1002 = vpop.f32.mrb[0].mxu0
    %v1003 = vpop.f32.mrb[0].mxu0
    %v1004 = vadd.f32 %v209, %v1003
    %v1005 = vpop.f32.mrb[0].mxu0
    %1006 = vmatprep.mubr.bf16.mxu0 0
    %1007 = vmatmul.mubr.bf16.gmra.mrb[0].mxu0 %v647
    %v1008 = vpop.f32.mrb[0].mxu0
    %v1009 = vadd.f32 %v209, %v1008
    %v1010 = vpop.f32.mrb[0].mxu0
    %v1011 = vpop.f32.mrb[0].mxu0
    %v1012 = vadd.f32 %v209, %v1011
    %v1013 = vpop.f32.mrb[0].mxu0
    %1014 = vmatprep.mubr.bf16.mxu0 0
    %1015 = vmatmul.mubr.bf16.gmra.mrb[0].mxu0 %v650
    %v1016 = vpop.f32.mrb[0].mxu0
    %v1017 = vadd.f32 %v209, %v1016
    %v1018 = vpop.f32.mrb[0].mxu0
    %v1019 = vpop.f32.mrb[0].mxu0
    %v1020 = vadd.f32 %v209, %v1019
    %v1021 = vpop.f32.mrb[0].mxu0
    %1022 = vmatprep.mubr.bf16.mxu0 0
    %1023 = vmatmul.mubr.bf16.gmra.mrb[0].mxu0 %v653
    %v1024 = vpop.f32.mrb[0].mxu0
    %v1025 = vadd.f32 %v209, %v1024
    %v1026 = vpop.f32.mrb[0].mxu0
    %v1027 = vpop.f32.mrb[0].mxu0
    %v1028 = vadd.f32 %v209, %v1027
    %v1029 = vpop.f32.mrb[0].mxu0
    %1030 = vmatprep.mubr.bf16.mxu0 0
    %1031 = vmatmul.mubr.bf16.gmra.mrb[0].mxu0 %v656
    %v1032 = vpop.f32.mrb[0].mxu0
    %v1033 = vadd.f32 %v209, %v1032
    %v1034 = vpop.f32.mrb[0].mxu0
    %v1035 = vpop.f32.mrb[0].mxu0
    %v1036 = vadd.f32 %v209, %v1035
    %v1037 = vpop.f32.mrb[0].mxu0
    %1038 = vmatprep.mubr.bf16.mxu0 0
    %1039 = vmatmul.mubr.bf16.gmra.mrb[0].mxu0 %v659
    %v1040 = vpop.f32.mrb[0].mxu0
    %v1041 = vadd.f32 %v209, %v1040
    %v1042 = vpop.f32.mrb[0].mxu0
    %v1043 = vpop.f32.mrb[0].mxu0
    %v1044 = vadd.f32 %v209, %v1043
    %v1045 = vpop.f32.mrb[0].mxu0
    %1046 = vmatprep.mubr.bf16.mxu0 0
    %1047 = vmatmul.mubr.bf16.gmra.mrb[0].mxu0 %v662
    %v1048 = vpop.f32.mrb[0].mxu0
    %v1049 = vadd.f32 %v209, %v1048
    %v1050 = vpop.f32.mrb[0].mxu0
    %v1051 = vpop.f32.mrb[0].mxu0
    %v1052 = vadd.f32 %v209, %v1051
    %v1053 = vpop.f32.mrb[0].mxu0
    %1054 = vmatprep.mubr.bf16.mxu0 0
    %1055 = vmatmul.mubr.bf16.gmra.mrb[0].mxu0 %v665
    %v1056 = vpop.f32.mrb[0].mxu0
    %v1057 = vadd.f32 %v209, %v1056
    %v1058 = vpop.f32.mrb[0].mxu0
    %v1059 = vpop.f32.mrb[0].mxu0
    %v1060 = vadd.f32 %v209, %v1059
    %v1061 = vpop.f32.mrb[0].mxu0
    %1062 = vmatprep.mubr.bf16.mxu0 0
    %1063 = vmatmul.mubr.bf16.gmra.mrb[0].mxu0 %v668
    %v1064 = vpop.f32.mrb[0].mxu0
    %v1065 = vadd.f32 %v209, %v1064
    %v1066 = vpop.f32.mrb[0].mxu0
    %v1067 = vpop.f32.mrb[0].mxu0
    %v1068 = vadd.f32 %v209, %v1067
    %v1069 = vpop.f32.mrb[0].mxu0
    %1070 = vmatprep.mubr.bf16.mxu0 0
    %1071 = vmatmul.mubr.bf16.gmra.mrb[0].mxu0 %v671
    %v1072 = vpop.f32.mrb[0].mxu0
    %v1073 = vadd.f32 %v209, %v1072
    %v1074 = vpop.f32.mrb[0].mxu0
    %v1075 = vpop.f32.mrb[0].mxu0
    %v1076 = vadd.f32 %v209, %v1075
    %v1077 = vpop.f32.mrb[0].mxu0
    %1078 = vmatprep.mubr.bf16.mxu0 0
    %1079 = vmatmul.mubr.bf16.gmra.mrb[0].mxu0 %v674
    %v1080 = vpop.f32.mrb[0].mxu0
    %v1081 = vadd.f32 %v209, %v1080
    %v1082 = vpop.f32.mrb[0].mxu0
    %v1083 = vpop.f32.mrb[0].mxu0
    %v1084 = vadd.f32 %v209, %v1083
    %v1085 = vpop.f32.mrb[0].mxu0
    %1086 = vmatprep.mubr.bf16.mxu0 0
    %1087 = vmatmul.mubr.bf16.gmra.mrb[0].mxu0 %v677
    %v1088 = vpop.f32.mrb[0].mxu0
    %v1089 = vadd.f32 %v209, %v1088
    %v1090 = vpop.f32.mrb[0].mxu0
    %v1091 = vpop.f32.mrb[0].mxu0
    %v1092 = vadd.f32 %v209, %v1091
    %v1093 = vpop.f32.mrb[0].mxu0
    %1094 = vmatprep.mubr.bf16.mxu0 0
    %1095 = vmatmul.mubr.bf16.gmra.mrb[0].mxu0 %v680
    %v1096 = vpop.f32.mrb[0].mxu0
    %v1097 = vadd.f32 %v209, %v1096
    %v1098 = vpop.f32.mrb[0].mxu0
    %v1099 = vpop.f32.mrb[0].mxu0
    %v1100 = vadd.f32 %v209, %v1099
    %v1101 = vpop.f32.mrb[0].mxu0
    %1102 = vmatprep.mubr.bf16.mxu0 0
    %1103 = vmatmul.mubr.bf16.gmra.mrb[0].mxu0 %v683
    %v1104 = vpop.f32.mrb[0].mxu0
    %v1105 = vadd.f32 %v209, %v1104
    %v1106 = vpop.f32.mrb[0].mxu0
    %v1107 = vpop.f32.mrb[0].mxu0
    %v1108 = vadd.f32 %v209, %v1107
    %v1109 = vpop.f32.mrb[0].mxu0
    %1110 = vmatprep.mubr.bf16.mxu0 0
    %1111 = vmatmul.mubr.bf16.gmra.mrb[0].mxu0 %v686
    %v1112 = vpop.f32.mrb[0].mxu0
    %v1113 = vadd.f32 %v209, %v1112
    %v1114 = vpop.f32.mrb[0].mxu0
    %v1115 = vpop.f32.mrb[0].mxu0
    %v1116 = vadd.f32 %v209, %v1115
    %v1117 = vpop.f32.mrb[0].mxu0
    %1118 = vmatprep.mubr.bf16.mxu0 0
    %1119 = vmatmul.mubr.bf16.gmra.mrb[0].mxu0 %v689
    %v1120 = vpop.f32.mrb[0].mxu0
    %v1121 = vadd.f32 %v209, %v1120
    %v1122 = vpop.f32.mrb[0].mxu0
    %v1123 = vpop.f32.mrb[0].mxu0
    %v1124 = vadd.f32 %v209, %v1123
    %v1125 = vpop.f32.mrb[0].mxu0
    %1126 = vmatprep.mubr.bf16.mxu0 0
    %1127 = vmatmul.mubr.bf16.gmra.mrb[0].mxu0 %v692
    %v1128 = vpop.f32.mrb[0].mxu0
    %v1129 = vadd.f32 %v209, %v1128
    %v1130 = vpop.f32.mrb[0].mxu0
    %v1131 = vpop.f32.mrb[0].mxu0
    %v1132 = vadd.f32 %v209, %v1131
    %v1133 = vpop.f32.mrb[0].mxu0
    %1134 = vmatprep.mubr.bf16.mxu0 0
    %1135 = vmatmul.mubr.bf16.gmra.mrb[0].mxu0 %v695
    %v1136 = vpop.f32.mrb[0].mxu0
    %v1137 = vadd.f32 %v209, %v1136
    %v1138 = vpop.f32.mrb[0].mxu0
    %v1139 = vpop.f32.mrb[0].mxu0
    %v1140 = vadd.f32 %v209, %v1139
    %v1141 = vpop.f32.mrb[0].mxu0
    %1142 = vmatprep.mubr.bf16.mxu0 0
    %1143 = vmatmul.mubr.bf16.gmra.mrb[0].mxu0 %v698
    %v1144 = vpop.f32.mrb[0].mxu0
    %v1145 = vadd.f32 %v209, %v1144
    %v1146 = vpop.f32.mrb[0].mxu0
    %v1147 = vpop.f32.mrb[0].mxu0
    %v1148 = vadd.f32 %v209, %v1147
    %v1149 = vpop.f32.mrb[0].mxu0
    %1150 = vmatprep.mubr.bf16.mxu0 0
    %1151 = vmatmul.mubr.bf16.gmra.mrb[0].mxu0 %v701
    %v1152 = vpop.f32.mrb[0].mxu0
    %v1153 = vadd.f32 %v209, %v1152
    %v1154 = vpop.f32.mrb[0].mxu0
    %v1155 = vpop.f32.mrb[0].mxu0
    %v1156 = vadd.f32 %v209, %v1155
    %v1157 = vpop.f32.mrb[0].mxu0
    %1158 = vmatprep.mubr.bf16.mxu0 0
    %1159 = vmatmul.mubr.bf16.gmra.mrb[0].mxu0 %v704
    %v1160 = vpop.f32.mrb[0].mxu0
    %v1161 = vadd.f32 %v209, %v1160
    %v1162 = vpop.f32.mrb[0].mxu0
    %v1163 = vpop.f32.mrb[0].mxu0
    %v1164 = vadd.f32 %v209, %v1163
    %v1165 = vpop.f32.mrb[0].mxu0
    %1166 = vmatprep.mubr.bf16.mxu0 0
    %1167 = vmatmul.mubr.bf16.gmra.mrb[0].mxu0 %v707
    %v1168 = vpop.f32.mrb[0].mxu0
    %v1169 = vadd.f32 %v209, %v1168
    %v1170 = vpop.f32.mrb[0].mxu0
    %v1171 = vpop.f32.mrb[0].mxu0
    %v1172 = vadd.f32 %v209, %v1171
    %v1173 = vpop.f32.mrb[0].mxu0
    %1174 = vmatprep.mubr.bf16.mxu0 0
    %1175 = vmatmul.mubr.bf16.gmra.mrb[0].mxu0 %v710
    %v1176 = vpop.f32.mrb[0].mxu0
    %v1177 = vadd.f32 %v209, %v1176
    %v1178 = vpop.f32.mrb[0].mxu0
    %v1179 = vpop.f32.mrb[0].mxu0
    %v1180 = vadd.f32 %v209, %v1179
    %v1181 = vpop.f32.mrb[0].mxu0
    %1182 = vmatprep.mubr.bf16.mxu0 0
    %1183 = vmatmul.mubr.bf16.gmra.mrb[0].mxu0 %v713
    %v1184 = vpop.f32.mrb[0].mxu0
    %v1185 = vadd.f32 %v209, %v1184
    %v1186 = vpop.f32.mrb[0].mxu0
    %v1187 = vpop.f32.mrb[0].mxu0
    %v1188 = vadd.f32 %v209, %v1187
    %v1189 = vpop.f32.mrb[0].mxu0
    %1190 = vmatprep.mubr.bf16.mxu0 0
    %1191 = vmatmul.mubr.bf16.gmra.mrb[0].mxu0 %v716
    %v1192 = vpop.f32.mrb[0].mxu0
    %v1193 = vadd.f32 %v209, %v1192
    %v1194 = vpop.f32.mrb[0].mxu0
    %v1195 = vpop.f32.mrb[0].mxu0
    %v1196 = vadd.f32 %v209, %v1195
    %v1197 = vpop.f32.mrb[0].mxu0
    %1198 = vmatprep.mubr.bf16.mxu0 0
    %1199 = vmatmul.mubr.bf16.gmra.mrb[0].mxu0 %v719
    %v1200 = vpop.f32.mrb[0].mxu0
    %v1201 = vadd.f32 %v209, %v1200
    %v1202 = vpop.f32.mrb[0].mxu0
    %v1203 = vpop.f32.mrb[0].mxu0
    %v1204 = vadd.f32 %v209, %v1203
    %v1205 = vpop.f32.mrb[0].mxu0
    %1206 = vmatprep.mubr.bf16.mxu0 0
    %1207 = vmatmul.mubr.bf16.gmra.mrb[0].mxu0 %v722
    %v1208 = vpop.f32.mrb[0].mxu0
    %v1209 = vadd.f32 %v209, %v1208
    %v1210 = vpop.f32.mrb[0].mxu0
    %v1211 = vpop.f32.mrb[0].mxu0
    %v1212 = vadd.f32 %v209, %v1211
    %v1213 = vpop.f32.mrb[0].mxu0
    %1214 = vmatprep.mubr.bf16.mxu0 0
    %1215 = vmatmul.mubr.bf16.gmra.mrb[0].mxu0 %v725
    %v1216 = vpop.f32.mrb[0].mxu0
    %v1217 = vadd.f32 %v209, %v1216
    %v1218 = vpop.f32.mrb[0].mxu0
    %v1219 = vpop.f32.mrb[0].mxu0
    %v1220 = vadd.f32 %v209, %v1219
    %v1221 = vpop.f32.mrb[0].mxu0
    %1222 = vmatprep.mubr.bf16.mxu0 0
    %1223 = vmatmul.mubr.bf16.gmra.mrb[0].mxu0 %v728
    %v1224 = vpop.f32.mrb[0].mxu0
    %v1225 = vadd.f32 %v209, %v1224
    %v1226 = vpop.f32.mrb[0].mxu0
    %v1227 = vpop.f32.mrb[0].mxu0
    %v1228 = vadd.f32 %v209, %v1227
    %v1229 = vpop.f32.mrb[0].mxu0
    %1230 = vmatprep.mubr.bf16.mxu0 0
    %1231 = vmatmul.mubr.bf16.gmra.mrb[0].mxu0 %v731
    %v1232 = vpop.f32.mrb[0].mxu0
    %v1233 = vadd.f32 %v209, %v1232
    %v1234 = vpop.f32.mrb[0].mxu0
    %v1235 = vpop.f32.mrb[0].mxu0
    %v1236 = vadd.f32 %v209, %v1235
    %v1237 = vpop.f32.mrb[0].mxu0
    %1238 = vmatprep.mubr.bf16.mxu0 0
    %1239 = vmatmul.mubr.bf16.gmra.mrb[0].mxu0 %v734
    %v1240 = vpop.f32.mrb[0].mxu0
    %v1241 = vadd.f32 %v209, %v1240
    %v1242 = vpop.f32.mrb[0].mxu0
    %v1243 = vpop.f32.mrb[0].mxu0
    %v1244 = vadd.f32 %v209, %v1243
    %v1245 = vpop.f32.mrb[0].mxu0
    %1246 = vmatprep.mubr.bf16.mxu0 0
    %1247 = vmatmul.mubr.bf16.gmra.mrb[0].mxu0 %v737
    %v1248 = vpop.f32.mrb[0].mxu0
    %v1249 = vadd.f32 %v209, %v1248
    %v1250 = vpop.f32.mrb[0].mxu0
    %v1251 = vpop.f32.mrb[0].mxu0
    %v1252 = vadd.f32 %v209, %v1251
    %v1253 = vpop.f32.mrb[0].mxu0
    %1254 = vmatprep.mubr.bf16.mxu0 0
    %1255 = vmatmul.mubr.bf16.gmra.mrb[0].mxu0 %v740
    %v1256 = vpop.f32.mrb[0].mxu0
    %v1257 = vadd.f32 %v209, %v1256
    %v1258 = vpop.f32.mrb[0].mxu0
    %v1259 = vpop.f32.mrb[0].mxu0
    %v1260 = vadd.f32 %v209, %v1259
    %v1261 = vpop.f32.mrb[0].mxu0
    %1262 = vmatprep.mubr.bf16.mxu0 0
    %1263 = vmatmul.mubr.bf16.gmra.mrb[0].mxu0 %v743
    %v1264 = vpop.f32.mrb[0].mxu0
    %v1265 = vadd.f32 %v209, %v1264
    %v1266 = vpop.f32.mrb[0].mxu0
    %v1267 = vpop.f32.mrb[0].mxu0
    %v1268 = vadd.f32 %v209, %v1267
    %v1269 = vpop.f32.mrb[0].mxu0
    %1270 = vmatprep.mubr.bf16.mxu0 0
    %1271 = vmatmul.mubr.bf16.gmra.mrb[0].mxu0 %v746
    %v1272 = vpop.f32.mrb[0].mxu0
    %v1273 = vadd.f32 %v209, %v1272
    %v1274 = vpop.f32.mrb[0].mxu0
    %v1275 = vpop.f32.mrb[0].mxu0
    %v1276 = vadd.f32 %v209, %v1275
    %v1277 = vpop.f32.mrb[0].mxu0
    %1278 = vmatprep.mubr.bf16.mxu0 0
    %1279 = vmatmul.mubr.bf16.gmra.mrb[0].mxu0 %v749
    %v1280 = vpop.f32.mrb[0].mxu0
    %v1281 = vadd.f32 %v209, %v1280
    %v1282 = vpop.f32.mrb[0].mxu0
    %v1283 = vpop.f32.mrb[0].mxu0
    %v1284 = vadd.f32 %v209, %v1283
    %v1285 = vpop.f32.mrb[0].mxu0
    %1286 = vmatprep.mubr.bf16.mxu0 0
    %1287 = vmatmul.mubr.bf16.gmra.mrb[0].mxu0 %v752
    %v1288 = vpop.f32.mrb[0].mxu0
    %v1289 = vadd.f32 %v209, %v1288
    %v1290 = vpop.f32.mrb[0].mxu0
    %v1291 = vpop.f32.mrb[0].mxu0
    %v1292 = vadd.f32 %v209, %v1291
    %v1293 = vpop.f32.mrb[0].mxu0
    %1294 = vmatprep.mubr.bf16.mxu0 0
    %1295 = vmatmul.mubr.bf16.gmra.mrb[0].mxu0 %v755
    %v1296 = vpop.f32.mrb[0].mxu0
    %v1297 = vadd.f32 %v209, %v1296
    %v1298 = vpop.f32.mrb[0].mxu0
    %v1299 = vpop.f32.mrb[0].mxu0
    %v1300 = vadd.f32 %v209, %v1299
    %v1301 = vpop.f32.mrb[0].mxu0
    %1302 = vmatprep.mubr.bf16.mxu0 0
    %1303 = vmatmul.mubr.bf16.gmra.mrb[0].mxu0 %v758
    %v1304 = vpop.f32.mrb[0].mxu0
    %v1305 = vadd.f32 %v209, %v1304
    %v1306 = vpop.f32.mrb[0].mxu0
    %v1307 = vpop.f32.mrb[0].mxu0
    %v1308 = vadd.f32 %v209, %v1307
    %v1309 = vpop.f32.mrb[0].mxu0
    %1310 = vmatprep.mubr.bf16.mxu0 0
    %1311 = vmatmul.mubr.bf16.gmra.mrb[0].mxu0 %v761
    %v1312 = vpop.f32.mrb[0].mxu0
    %v1313 = vadd.f32 %v209, %v1312
    %v1314 = vpop.f32.mrb[0].mxu0
    %v1315 = vpop.f32.mrb[0].mxu0
    %v1316 = vadd.f32 %v209, %v1315
    %v1317 = vpop.f32.mrb[0].mxu0
    %1318 = vmatprep.mubr.bf16.mxu0 0
    %1319 = vmatmul.mubr.bf16.gmra.mrb[0].mxu0 %v764
    %v1320 = vpop.f32.mrb[0].mxu0
    %v1321 = vadd.f32 %v209, %v1320
    %v1322 = vpop.f32.mrb[0].mxu0
    %v1323 = vpop.f32.mrb[0].mxu0
    %v1324 = vadd.f32 %v209, %v1323
    %v1325 = vpop.f32.mrb[0].mxu0
    %1326 = vmatprep.mubr.bf16.mxu0 0
    %1327 = vmatmul.mubr.bf16.gmra.mrb[0].mxu0 %v767
    %v1328 = vpop.f32.mrb[0].mxu0
    %v1329 = vadd.f32 %v209, %v1328
    %v1330 = vpop.f32.mrb[0].mxu0
    %v1331 = vpop.f32.mrb[0].mxu0
    %v1332 = vadd.f32 %v209, %v1331
    %v1333 = vpop.f32.mrb[0].mxu0
    %1334 = vmatprep.mubr.bf16.mxu0 0
    %1335 = vmatmul.mubr.bf16.gmra.mrb[0].mxu0 %v770
    %v1336 = vpop.f32.mrb[0].mxu0
    %v1337 = vadd.f32 %v209, %v1336
    %v1338 = vpop.f32.mrb[0].mxu0
    %v1339 = vpop.f32.mrb[0].mxu0
    %v1340 = vadd.f32 %v209, %v1339
    %v1341 = vpop.f32.mrb[0].mxu0
    %1342 = vmatprep.mubr.bf16.mxu0 0
    %1343 = vmatmul.mubr.bf16.gmra.mrb[0].mxu0 %v773
    %v1344 = vpop.f32.mrb[0].mxu0
    %v1345 = vadd.f32 %v209, %v1344
    %v1346 = vpop.f32.mrb[0].mxu0
    %v1347 = vpop.f32.mrb[0].mxu0
    %v1348 = vadd.f32 %v209, %v1347
    %v1349 = vpop.f32.mrb[0].mxu0
    %1350 = vmatprep.mubr.bf16.mxu0 0
    %1351 = vmatmul.mubr.bf16.gmra.mrb[0].mxu0 %v776
    %v1352 = vpop.f32.mrb[0].mxu0
    %v1353 = vadd.f32 %v209, %v1352
    %v1354 = vpop.f32.mrb[0].mxu0
    %v1355 = vpop.f32.mrb[0].mxu0
    %v1356 = vadd.f32 %v209, %v1355
    %v1357 = vpop.f32.mrb[0].mxu0
    %1358 = vmatprep.mubr.bf16.mxu0 0
    %1359 = vmatmul.mubr.bf16.gmra.mrb[0].mxu0 %v779
    %v1360 = vpop.f32.mrb[0].mxu0
    %v1361 = vadd.f32 %v209, %v1360
    %v1362 = vpop.f32.mrb[0].mxu0
    %v1363 = vpop.f32.mrb[0].mxu0
    %v1364 = vadd.f32 %v209, %v1363
    %v1365 = vpop.f32.mrb[0].mxu0
    %1366 = vmatprep.mubr.bf16.mxu0 0
    %1367 = vmatmul.mubr.bf16.gmra.mrb[0].mxu0 %v782
    %v1368 = vpop.f32.mrb[0].mxu0
    %v1369 = vadd.f32 %v209, %v1368
    %v1370 = vpop.f32.mrb[0].mxu0
    %v1371 = vpop.f32.mrb[0].mxu0
    %v1372 = vadd.f32 %v209, %v1371
    %v1373 = vpop.f32.mrb[0].mxu0
    %1374 = vmatprep.mubr.bf16.mxu0 0
    %1375 = vmatmul.mubr.bf16.gmra.mrb[0].mxu0 %v785
    %v1376 = vpop.f32.mrb[0].mxu0
    %v1377 = vadd.f32 %v209, %v1376
    %v1378 = vpop.f32.mrb[0].mxu0
    %v1379 = vpop.f32.mrb[0].mxu0
    %v1380 = vadd.f32 %v209, %v1379
    %v1381 = vpop.f32.mrb[0].mxu0
    %1382 = vmatprep.mubr.bf16.mxu0 0
    %1383 = vmatmul.mubr.bf16.gmra.mrb[0].mxu0 %v788
    %v1384 = vpop.f32.mrb[0].mxu0
    %v1385 = vadd.f32 %v209, %v1384
    %v1386 = vpop.f32.mrb[0].mxu0
    %v1387 = vpop.f32.mrb[0].mxu0
    %v1388 = vadd.f32 %v209, %v1387
    %v1389 = vpop.f32.mrb[0].mxu0
    %1390 = vmatprep.mubr.bf16.mxu0 0
    %1391 = vmatmul.mubr.bf16.gmra.mrb[0].mxu0 %v791
    %v1392 = vpop.f32.mrb[0].mxu0
    %v1393 = vadd.f32 %v209, %v1392
    %v1394 = vpop.f32.mrb[0].mxu0
    %v1395 = vpop.f32.mrb[0].mxu0
    %v1396 = vadd.f32 %v209, %v1395
    %v1397 = vpop.f32.mrb[0].mxu0
    %1398 = vmatprep.mubr.bf16.mxu0 0
    %1399 = vmatmul.mubr.bf16.gmra.mrb[0].mxu0 %v794
    %v1400 = vpop.f32.mrb[0].mxu0
    %v1401 = vadd.f32 %v209, %v1400
    %v1402 = vpop.f32.mrb[0].mxu0
    %v1403 = vpop.f32.mrb[0].mxu0
    %v1404 = vadd.f32 %v209, %v1403
    %v1405 = vpop.f32.mrb[0].mxu0
    %1406 = vmatprep.mubr.bf16.mxu0 0
    %1407 = vmatmul.mubr.bf16.gmra.mrb[0].mxu0 %v797
    %v1408 = vpop.f32.mrb[0].mxu0
    %v1409 = vadd.f32 %v209, %v1408
    %v1410 = vpop.f32.mrb[0].mxu0
    %v1411 = vpop.f32.mrb[0].mxu0
    %v1412 = vadd.f32 %v209, %v1411
    %v1413 = vpop.f32.mrb[0].mxu0
    %1414 = vdwg.mxu0
    %v1415 = vmax.f32 %v841, 0.0
    %v1416 = vmax.f32 %v844, 0.0
    %v1417 = vmax.f32 %v849, 0.0
    %v1418 = vmax.f32 %v852, 0.0
    %v1419 = vmax.f32 %v857, 0.0
    %v1420 = vmax.f32 %v860, 0.0
    %v1421 = vmax.f32 %v865, 0.0
    %v1422 = vmax.f32 %v868, 0.0
    %v1423 = vmax.f32 %v873, 0.0
    %v1424 = vmax.f32 %v876, 0.0
    %v1425 = vmax.f32 %v881, 0.0
    %v1426 = vmax.f32 %v884, 0.0
    %v1427 = vmax.f32 %v889, 0.0
    %v1428 = vmax.f32 %v892, 0.0
    %v1429 = vmax.f32 %v897, 0.0
    %v1430 = vmax.f32 %v900, 0.0
    %v1431 = vmax.f32 %v905, 0.0
    %v1432 = vmax.f32 %v908, 0.0
    %v1433 = vmax.f32 %v913, 0.0
    %v1434 = vmax.f32 %v916, 0.0
    %v1435 = vmax.f32 %v921, 0.0
    %v1436 = vmax.f32 %v924, 0.0
    %v1437 = vmax.f32 %v929, 0.0
    %v1438 = vmax.f32 %v932, 0.0
    %v1439 = vmax.f32 %v937, 0.0
    %v1440 = vmax.f32 %v940, 0.0
    %v1441 = vmax.f32 %v945, 0.0
    %v1442 = vmax.f32 %v948, 0.0
    %v1443 = vmax.f32 %v953, 0.0
    %v1444 = vmax.f32 %v956, 0.0
    %v1445 = vmax.f32 %v961, 0.0
    %v1446 = vmax.f32 %v964, 0.0
    %v1447 = vmax.f32 %v969, 0.0
    %v1448 = vmax.f32 %v972, 0.0
    %v1449 = vmax.f32 %v977, 0.0
    %v1450 = vmax.f32 %v980, 0.0
    %v1451 = vmax.f32 %v985, 0.0
    %v1452 = vmax.f32 %v988, 0.0
    %v1453 = vmax.f32 %v993, 0.0
    %v1454 = vmax.f32 %v996, 0.0
    %v1455 = vmax.f32 %v1001, 0.0
    %v1456 = vmax.f32 %v1004, 0.0
    %v1457 = vmax.f32 %v1009, 0.0
    %v1458 = vmax.f32 %v1012, 0.0
    %v1459 = vmax.f32 %v1017, 0.0
    %v1460 = vmax.f32 %v1020, 0.0
    %v1461 = vmax.f32 %v1025, 0.0
    %v1462 = vmax.f32 %v1028, 0.0
    %v1463 = vmax.f32 %v1033, 0.0
    %v1464 = vmax.f32 %v1036, 0.0
    %v1465 = vmax.f32 %v1041, 0.0
    %v1466 = vmax.f32 %v1044, 0.0
    %v1467 = vmax.f32 %v1049, 0.0
    %v1468 = vmax.f32 %v1052, 0.0
    %v1469 = vmax.f32 %v1057, 0.0
    %v1470 = vmax.f32 %v1060, 0.0
    %v1471 = vmax.f32 %v1065, 0.0
    %v1472 = vmax.f32 %v1068, 0.0
    %v1473 = vmax.f32 %v1073, 0.0
    %v1474 = vmax.f32 %v1076, 0.0
    %v1475 = vmax.f32 %v1081, 0.0
    %v1476 = vmax.f32 %v1084, 0.0
    %v1477 = vmax.f32 %v1089, 0.0
    %v1478 = vmax.f32 %v1092, 0.0
    %v1479 = vmax.f32 %v1097, 0.0
    %v1480 = vmax.f32 %v1100, 0.0
    %v1481 = vmax.f32 %v1105, 0.0
    %v1482 = vmax.f32 %v1108, 0.0
    %v1483 = vmax.f32 %v1113, 0.0
    %v1484 = vmax.f32 %v1116, 0.0
    %v1485 = vmax.f32 %v1121, 0.0
    %v1486 = vmax.f32 %v1124, 0.0
    %v1487 = vmax.f32 %v1129, 0.0
    %v1488 = vmax.f32 %v1132, 0.0
    %v1489 = vmax.f32 %v1137, 0.0
    %v1490 = vmax.f32 %v1140, 0.0
    %v1491 = vmax.f32 %v1145, 0.0
    %v1492 = vmax.f32 %v1148, 0.0
    %v1493 = vmax.f32 %v1153, 0.0
    %v1494 = vmax.f32 %v1156, 0.0
    %v1495 = vmax.f32 %v1161, 0.0
    %v1496 = vmax.f32 %v1164, 0.0
    %v1497 = vmax.f32 %v1169, 0.0
    %v1498 = vmax.f32 %v1172, 0.0
    %v1499 = vmax.f32 %v1177, 0.0
    %v1500 = vmax.f32 %v1180, 0.0
    %v1501 = vmax.f32 %v1185, 0.0
    %v1502 = vmax.f32 %v1188, 0.0
    %v1503 = vmax.f32 %v1193, 0.0
    %v1504 = vmax.f32 %v1196, 0.0
    %v1505 = vmax.f32 %v1201, 0.0
    %v1506 = vmax.f32 %v1204, 0.0
    %v1507 = vmax.f32 %v1209, 0.0
    %v1508 = vmax.f32 %v1212, 0.0
    %v1509 = vmax.f32 %v1217, 0.0
    %v1510 = vmax.f32 %v1220, 0.0
    %v1511 = vmax.f32 %v1225, 0.0
    %v1512 = vmax.f32 %v1228, 0.0
    %v1513 = vmax.f32 %v1233, 0.0
    %v1514 = vmax.f32 %v1236, 0.0
    %v1515 = vmax.f32 %v1241, 0.0
    %v1516 = vmax.f32 %v1244, 0.0
    %v1517 = vmax.f32 %v1249, 0.0
    %v1518 = vmax.f32 %v1252, 0.0
    %v1519 = vmax.f32 %v1257, 0.0
    %v1520 = vmax.f32 %v1260, 0.0
    %v1521 = vmax.f32 %v1265, 0.0
    %v1522 = vmax.f32 %v1268, 0.0
    %v1523 = vmax.f32 %v1273, 0.0
    %v1524 = vmax.f32 %v1276, 0.0
    %v1525 = vmax.f32 %v1281, 0.0
    %v1526 = vmax.f32 %v1284, 0.0
    %v1527 = vmax.f32 %v1289, 0.0
    %v1528 = vmax.f32 %v1292, 0.0
    %v1529 = vmax.f32 %v1297, 0.0
    %v1530 = vmax.f32 %v1300, 0.0
    %v1531 = vmax.f32 %v1305, 0.0
    %v1532 = vmax.f32 %v1308, 0.0
    %v1533 = vmax.f32 %v1313, 0.0
    %v1534 = vmax.f32 %v1316, 0.0
    %v1535 = vmax.f32 %v1321, 0.0
    %v1536 = vmax.f32 %v1324, 0.0
    %v1537 = vmax.f32 %v1329, 0.0
    %v1538 = vmax.f32 %v1332, 0.0
    %v1539 = vmax.f32 %v1337, 0.0
    %v1540 = vmax.f32 %v1340, 0.0
    %v1541 = vmax.f32 %v1345, 0.0
    %v1542 = vmax.f32 %v1348, 0.0
    %v1543 = vmax.f32 %v1353, 0.0
    %v1544 = vmax.f32 %v1356, 0.0
    %v1545 = vmax.f32 %v1361, 0.0
    %v1546 = vmax.f32 %v1364, 0.0
    %v1547 = vmax.f32 %v1369, 0.0
    %v1548 = vmax.f32 %v1372, 0.0
    %v1549 = vmax.f32 %v1377, 0.0
    %v1550 = vmax.f32 %v1380, 0.0
    %v1551 = vmax.f32 %v1385, 0.0
    %v1552 = vmax.f32 %v1388, 0.0
    %v1553 = vmax.f32 %v1393, 0.0
    %v1554 = vmax.f32 %v1396, 0.0
    %v1555 = vmax.f32 %v1401, 0.0
    %v1556 = vmax.f32 %v1404, 0.0
    %v1557 = vmax.f32 %v1409, 0.0
    %v1558 = vmax.f32 %v1412, 0.0
    %v1559 = vld [vmem:[#allocation4] sm:$0x1]
    %v1560 = vld [vmem:[#allocation6] sm:$0x1]
    %vm1561 = vcmask 261120
    %v1562 = vsel %vm1561, %v1415, 0.0
    %v1563 = vsel %vm1561, %v1416, 0.0
    %v1564 = vadd.f32 %v1562, %v1563
    %v1565 = vsel %vm1561, %v1417, 0.0
    %v1566 = vadd.f32 %v1564, %v1565
    %v1567 = vsel %vm1561, %v1418, 0.0
    %v1568 = vadd.f32 %v1566, %v1567
    %v1569 = vsel %vm1561, %v1419, 0.0
    %v1570 = vadd.f32 %v1568, %v1569
    %v1571 = vsel %vm1561, %v1420, 0.0
    %v1572 = vadd.f32 %v1570, %v1571
    %v1573 = vsel %vm1561, %v1421, 0.0
    %v1574 = vadd.f32 %v1572, %v1573
    %v1575 = vsel %vm1561, %v1422, 0.0
    %v1576 = vadd.f32 %v1574, %v1575
    %v1577 = vsel %vm1561, %v1423, 0.0
    %v1578 = vadd.f32 %v1576, %v1577
    %v1579 = vsel %vm1561, %v1424, 0.0
    %v1580 = vadd.f32 %v1578, %v1579
    %v1581 = vsel %vm1561, %v1425, 0.0
    %v1582 = vadd.f32 %v1580, %v1581
    %v1583 = vsel %vm1561, %v1426, 0.0
    %v1584 = vadd.f32 %v1582, %v1583
    %v1585 = vsel %vm1561, %v1427, 0.0
    %v1586 = vadd.f32 %v1584, %v1585
    %v1587 = vsel %vm1561, %v1428, 0.0
    %v1588 = vadd.f32 %v1586, %v1587
    %v1589 = vsel %vm1561, %v1429, 0.0
    %v1590 = vadd.f32 %v1588, %v1589
    %v1591 = vsel %vm1561, %v1430, 0.0
    %v1592 = vadd.f32 %v1590, %v1591
    %v1593 = vsel %vm1561, %v1431, 0.0
    %v1594 = vadd.f32 %v1592, %v1593
    %v1595 = vsel %vm1561, %v1432, 0.0
    %v1596 = vadd.f32 %v1594, %v1595
    %v1597 = vsel %vm1561, %v1433, 0.0
    %v1598 = vadd.f32 %v1596, %v1597
    %v1599 = vsel %vm1561, %v1434, 0.0
    %v1600 = vadd.f32 %v1598, %v1599
    %v1601 = vsel %vm1561, %v1435, 0.0
    %v1602 = vadd.f32 %v1600, %v1601
    %v1603 = vsel %vm1561, %v1436, 0.0
    %v1604 = vadd.f32 %v1602, %v1603
    %v1605 = vsel %vm1561, %v1437, 0.0
    %v1606 = vadd.f32 %v1604, %v1605
    %v1607 = vsel %vm1561, %v1438, 0.0
    %v1608 = vadd.f32 %v1606, %v1607
    %v1609 = vsel %vm1561, %v1439, 0.0
    %v1610 = vadd.f32 %v1608, %v1609
    %v1611 = vsel %vm1561, %v1440, 0.0
    %v1612 = vadd.f32 %v1610, %v1611
    %v1613 = vsel %vm1561, %v1441, 0.0
    %v1614 = vadd.f32 %v1612, %v1613
    %v1615 = vsel %vm1561, %v1442, 0.0
    %v1616 = vadd.f32 %v1614, %v1615
    %v1617 = vsel %vm1561, %v1443, 0.0
    %v1618 = vadd.f32 %v1616, %v1617
    %v1619 = vsel %vm1561, %v1444, 0.0
    %v1620 = vadd.f32 %v1618, %v1619
    %v1621 = vsel %vm1561, %v1445, 0.0
    %v1622 = vadd.f32 %v1620, %v1621
    %v1623 = vsel %vm1561, %v1446, 0.0
    %v1624 = vadd.f32 %v1622, %v1623
    %v1625 = vsel %vm1561, %v1447, 0.0
    %v1626 = vadd.f32 %v1624, %v1625
    %v1627 = vsel %vm1561, %v1448, 0.0
    %v1628 = vadd.f32 %v1626, %v1627
    %v1629 = vsel %vm1561, %v1449, 0.0
    %v1630 = vadd.f32 %v1628, %v1629
    %v1631 = vsel %vm1561, %v1450, 0.0
    %v1632 = vadd.f32 %v1630, %v1631
    %v1633 = vsel %vm1561, %v1451, 0.0
    %v1634 = vadd.f32 %v1632, %v1633
    %v1635 = vsel %vm1561, %v1452, 0.0
    %v1636 = vadd.f32 %v1634, %v1635
    %v1637 = vsel %vm1561, %v1453, 0.0
    %v1638 = vadd.f32 %v1636, %v1637
    %v1639 = vsel %vm1561, %v1454, 0.0
    %v1640 = vadd.f32 %v1638, %v1639
    %v1641 = vsel %vm1561, %v1455, 0.0
    %v1642 = vadd.f32 %v1640, %v1641
    %v1643 = vsel %vm1561, %v1456, 0.0
    %v1644 = vadd.f32 %v1642, %v1643
    %v1645 = vsel %vm1561, %v1457, 0.0
    %v1646 = vadd.f32 %v1644, %v1645
    %v1647 = vsel %vm1561, %v1458, 0.0
    %v1648 = vadd.f32 %v1646, %v1647
    %v1649 = vsel %vm1561, %v1459, 0.0
    %v1650 = vadd.f32 %v1648, %v1649
    %v1651 = vsel %vm1561, %v1460, 0.0
    %v1652 = vadd.f32 %v1650, %v1651
    %v1653 = vsel %vm1561, %v1461, 0.0
    %v1654 = vadd.f32 %v1652, %v1653
    %v1655 = vsel %vm1561, %v1462, 0.0
    %v1656 = vadd.f32 %v1654, %v1655
    %v1657 = vsel %vm1561, %v1463, 0.0
    %v1658 = vadd.f32 %v1656, %v1657
    %v1659 = vsel %vm1561, %v1464, 0.0
    %v1660 = vadd.f32 %v1658, %v1659
    %v1661 = vsel %vm1561, %v1465, 0.0
    %v1662 = vadd.f32 %v1660, %v1661
    %v1663 = vsel %vm1561, %v1466, 0.0
    %v1664 = vadd.f32 %v1662, %v1663
    %v1665 = vsel %vm1561, %v1467, 0.0
    %v1666 = vadd.f32 %v1664, %v1665
    %v1667 = vsel %vm1561, %v1468, 0.0
    %v1668 = vadd.f32 %v1666, %v1667
    %v1669 = vsel %vm1561, %v1469, 0.0
    %v1670 = vadd.f32 %v1668, %v1669
    %v1671 = vsel %vm1561, %v1470, 0.0
    %v1672 = vadd.f32 %v1670, %v1671
    %v1673 = vsel %vm1561, %v1471, 0.0
    %v1674 = vadd.f32 %v1672, %v1673
    %v1675 = vsel %vm1561, %v1472, 0.0
    %v1676 = vadd.f32 %v1674, %v1675
    %v1677 = vsel %vm1561, %v1473, 0.0
    %v1678 = vadd.f32 %v1676, %v1677
    %v1679 = vsel %vm1561, %v1474, 0.0
    %v1680 = vadd.f32 %v1678, %v1679
    %v1681 = vsel %vm1561, %v1475, 0.0
    %v1682 = vadd.f32 %v1680, %v1681
    %v1683 = vsel %vm1561, %v1476, 0.0
    %v1684 = vadd.f32 %v1682, %v1683
    %v1685 = vsel %vm1561, %v1477, 0.0
    %v1686 = vadd.f32 %v1684, %v1685
    %v1687 = vsel %vm1561, %v1478, 0.0
    %v1688 = vadd.f32 %v1686, %v1687
    %v1689 = vsel %vm1561, %v1479, 0.0
    %v1690 = vadd.f32 %v1688, %v1689
    %v1691 = vsel %vm1561, %v1480, 0.0
    %v1692 = vadd.f32 %v1690, %v1691
    %v1693 = vsel %vm1561, %v1481, 0.0
    %v1694 = vadd.f32 %v1692, %v1693
    %v1695 = vsel %vm1561, %v1482, 0.0
    %v1696 = vadd.f32 %v1694, %v1695
    %v1697 = vsel %vm1561, %v1483, 0.0
    %v1698 = vadd.f32 %v1696, %v1697
    %v1699 = vsel %vm1561, %v1484, 0.0
    %v1700 = vadd.f32 %v1698, %v1699
    %v1701 = vsel %vm1561, %v1485, 0.0
    %v1702 = vadd.f32 %v1700, %v1701
    %v1703 = vsel %vm1561, %v1486, 0.0
    %v1704 = vadd.f32 %v1702, %v1703
    %v1705 = vsel %vm1561, %v1487, 0.0
    %v1706 = vadd.f32 %v1704, %v1705
    %v1707 = vsel %vm1561, %v1488, 0.0
    %v1708 = vadd.f32 %v1706, %v1707
    %v1709 = vsel %vm1561, %v1489, 0.0
    %v1710 = vadd.f32 %v1708, %v1709
    %v1711 = vsel %vm1561, %v1490, 0.0
    %v1712 = vadd.f32 %v1710, %v1711
    %v1713 = vsel %vm1561, %v1491, 0.0
    %v1714 = vadd.f32 %v1712, %v1713
    %v1715 = vsel %vm1561, %v1492, 0.0
    %v1716 = vadd.f32 %v1714, %v1715
    %v1717 = vsel %vm1561, %v1493, 0.0
    %v1718 = vadd.f32 %v1716, %v1717
    %v1719 = vsel %vm1561, %v1494, 0.0
    %v1720 = vadd.f32 %v1718, %v1719
    %v1721 = vsel %vm1561, %v1495, 0.0
    %v1722 = vadd.f32 %v1720, %v1721
    %v1723 = vsel %vm1561, %v1496, 0.0
    %v1724 = vadd.f32 %v1722, %v1723
    %v1725 = vsel %vm1561, %v1497, 0.0
    %v1726 = vadd.f32 %v1724, %v1725
    %v1727 = vsel %vm1561, %v1498, 0.0
    %v1728 = vadd.f32 %v1726, %v1727
    %v1729 = vsel %vm1561, %v1499, 0.0
    %v1730 = vadd.f32 %v1728, %v1729
    %v1731 = vsel %vm1561, %v1500, 0.0
    %v1732 = vadd.f32 %v1730, %v1731
    %v1733 = vsel %vm1561, %v1501, 0.0
    %v1734 = vadd.f32 %v1732, %v1733
    %v1735 = vsel %vm1561, %v1502, 0.0
    %v1736 = vadd.f32 %v1734, %v1735
    %v1737 = vsel %vm1561, %v1503, 0.0
    %v1738 = vadd.f32 %v1736, %v1737
    %v1739 = vsel %vm1561, %v1504, 0.0
    %v1740 = vadd.f32 %v1738, %v1739
    %v1741 = vsel %vm1561, %v1505, 0.0
    %v1742 = vadd.f32 %v1740, %v1741
    %v1743 = vsel %vm1561, %v1506, 0.0
    %v1744 = vadd.f32 %v1742, %v1743
    %v1745 = vsel %vm1561, %v1507, 0.0
    %v1746 = vadd.f32 %v1744, %v1745
    %v1747 = vsel %vm1561, %v1508, 0.0
    %v1748 = vadd.f32 %v1746, %v1747
    %v1749 = vsel %vm1561, %v1509, 0.0
    %v1750 = vadd.f32 %v1748, %v1749
    %v1751 = vsel %vm1561, %v1510, 0.0
    %v1752 = vadd.f32 %v1750, %v1751
    %v1753 = vsel %vm1561, %v1511, 0.0
    %v1754 = vadd.f32 %v1752, %v1753
    %v1755 = vsel %vm1561, %v1512, 0.0
    %v1756 = vadd.f32 %v1754, %v1755
    %v1757 = vsel %vm1561, %v1513, 0.0
    %v1758 = vadd.f32 %v1756, %v1757
    %v1759 = vsel %vm1561, %v1514, 0.0
    %v1760 = vadd.f32 %v1758, %v1759
    %v1761 = vsel %vm1561, %v1515, 0.0
    %v1762 = vadd.f32 %v1760, %v1761
    %v1763 = vsel %vm1561, %v1516, 0.0
    %v1764 = vadd.f32 %v1762, %v1763
    %v1765 = vsel %vm1561, %v1517, 0.0
    %v1766 = vadd.f32 %v1764, %v1765
    %v1767 = vsel %vm1561, %v1518, 0.0
    %v1768 = vadd.f32 %v1766, %v1767
    %v1769 = vsel %vm1561, %v1519, 0.0
    %v1770 = vadd.f32 %v1768, %v1769
    %v1771 = vsel %vm1561, %v1520, 0.0
    %v1772 = vadd.f32 %v1770, %v1771
    %v1773 = vsel %vm1561, %v1521, 0.0
    %v1774 = vadd.f32 %v1772, %v1773
    %v1775 = vsel %vm1561, %v1522, 0.0
    %v1776 = vadd.f32 %v1774, %v1775
    %v1777 = vsel %vm1561, %v1523, 0.0
    %v1778 = vadd.f32 %v1776, %v1777
    %v1779 = vsel %vm1561, %v1524, 0.0
    %v1780 = vadd.f32 %v1778, %v1779
    %v1781 = vsel %vm1561, %v1525, 0.0
    %v1782 = vadd.f32 %v1780, %v1781
    %v1783 = vsel %vm1561, %v1526, 0.0
    %v1784 = vadd.f32 %v1782, %v1783
    %v1785 = vsel %vm1561, %v1527, 0.0
    %v1786 = vadd.f32 %v1784, %v1785
    %v1787 = vsel %vm1561, %v1528, 0.0
    %v1788 = vadd.f32 %v1786, %v1787
    %v1789 = vsel %vm1561, %v1529, 0.0
    %v1790 = vadd.f32 %v1788, %v1789
    %v1791 = vsel %vm1561, %v1530, 0.0
    %v1792 = vadd.f32 %v1790, %v1791
    %v1793 = vsel %vm1561, %v1531, 0.0
    %v1794 = vadd.f32 %v1792, %v1793
    %v1795 = vsel %vm1561, %v1532, 0.0
    %v1796 = vadd.f32 %v1794, %v1795
    %v1797 = vsel %vm1561, %v1533, 0.0
    %v1798 = vadd.f32 %v1796, %v1797
    %v1799 = vsel %vm1561, %v1534, 0.0
    %v1800 = vadd.f32 %v1798, %v1799
    %v1801 = vsel %vm1561, %v1535, 0.0
    %v1802 = vadd.f32 %v1800, %v1801
    %v1803 = vsel %vm1561, %v1536, 0.0
    %v1804 = vadd.f32 %v1802, %v1803
    %v1805 = vsel %vm1561, %v1537, 0.0
    %v1806 = vadd.f32 %v1804, %v1805
    %v1807 = vsel %vm1561, %v1538, 0.0
    %v1808 = vadd.f32 %v1806, %v1807
    %v1809 = vsel %vm1561, %v1539, 0.0
    %v1810 = vadd.f32 %v1808, %v1809
    %v1811 = vsel %vm1561, %v1540, 0.0
    %v1812 = vadd.f32 %v1810, %v1811
    %v1813 = vsel %vm1561, %v1541, 0.0
    %v1814 = vadd.f32 %v1812, %v1813
    %v1815 = vsel %vm1561, %v1542, 0.0
    %v1816 = vadd.f32 %v1814, %v1815
    %v1817 = vsel %vm1561, %v1543, 0.0
    %v1818 = vadd.f32 %v1816, %v1817
    %v1819 = vsel %vm1561, %v1544, 0.0
    %v1820 = vadd.f32 %v1818, %v1819
    %v1821 = vsel %vm1561, %v1545, 0.0
    %v1822 = vadd.f32 %v1820, %v1821
    %v1823 = vsel %vm1561, %v1546, 0.0
    %v1824 = vadd.f32 %v1822, %v1823
    %v1825 = vsel %vm1561, %v1547, 0.0
    %v1826 = vadd.f32 %v1824, %v1825
    %v1827 = vsel %vm1561, %v1548, 0.0
    %v1828 = vadd.f32 %v1826, %v1827
    %v1829 = vsel %vm1561, %v1549, 0.0
    %v1830 = vadd.f32 %v1828, %v1829
    %v1831 = vsel %vm1561, %v1550, 0.0
    %v1832 = vadd.f32 %v1830, %v1831
    %v1833 = vsel %vm1561, %v1551, 0.0
    %v1834 = vadd.f32 %v1832, %v1833
    %v1835 = vsel %vm1561, %v1552, 0.0
    %v1836 = vadd.f32 %v1834, %v1835
    %v1837 = vsel %vm1561, %v1553, 0.0
    %v1838 = vadd.f32 %v1836, %v1837
    %v1839 = vsel %vm1561, %v1554, 0.0
    %v1840 = vadd.f32 %v1838, %v1839
    %v1841 = vsel %vm1561, %v1555, 0.0
    %v1842 = vadd.f32 %v1840, %v1841
    %v1843 = vsel %vm1561, %v1556, 0.0
    %v1844 = vadd.f32 %v1842, %v1843
    %v1845 = vsel %vm1561, %v1557, 0.0
    %v1846 = vadd.f32 %v1844, %v1845
    %v1847 = vsel %vm1561, %v1558, 0.0
    %v1848 = vadd.f32 %v1846, %v1847
    %v1849 = vrot.slane %v1848, 4
    %v1850 = vadd.f32 %v1848, %v1849
    %v1851 = vrot.slane %v1850, 2
    %v1852 = vadd.f32 %v1850, %v1851
    %v1853 = vrot.slane %v1852, 1
    %v1854 = vadd.f32 %v1852, %v1853
    %v1855 = vmul.f32 %v1415, %v1415
    %v1856 = vmul.f32 %v1416, %v1416
    %v1857 = vmul.f32 %v1417, %v1417
    %v1858 = vmul.f32 %v1418, %v1418
    %v1859 = vmul.f32 %v1419, %v1419
    %v1860 = vmul.f32 %v1420, %v1420
    %v1861 = vmul.f32 %v1421, %v1421
    %v1862 = vmul.f32 %v1422, %v1422
    %v1863 = vmul.f32 %v1423, %v1423
    %v1864 = vmul.f32 %v1424, %v1424
    %v1865 = vmul.f32 %v1425, %v1425
    %v1866 = vmul.f32 %v1426, %v1426
    %v1867 = vmul.f32 %v1427, %v1427
    %v1868 = vmul.f32 %v1428, %v1428
    %v1869 = vmul.f32 %v1429, %v1429
    %v1870 = vmul.f32 %v1430, %v1430
    %v1871 = vmul.f32 %v1431, %v1431
    %v1872 = vmul.f32 %v1432, %v1432
    %v1873 = vmul.f32 %v1433, %v1433
    %v1874 = vmul.f32 %v1434, %v1434
    %v1875 = vmul.f32 %v1435, %v1435
    %v1876 = vmul.f32 %v1436, %v1436
    %v1877 = vmul.f32 %v1437, %v1437
    %v1878 = vmul.f32 %v1438, %v1438
    %v1879 = vmul.f32 %v1439, %v1439
    %v1880 = vmul.f32 %v1440, %v1440
    %v1881 = vmul.f32 %v1441, %v1441
    %v1882 = vmul.f32 %v1442, %v1442
    %v1883 = vmul.f32 %v1443, %v1443
    %v1884 = vmul.f32 %v1444, %v1444
    %v1885 = vmul.f32 %v1445, %v1445
    %v1886 = vmul.f32 %v1446, %v1446
    %v1887 = vmul.f32 %v1447, %v1447
    %v1888 = vmul.f32 %v1448, %v1448
    %v1889 = vmul.f32 %v1449, %v1449
    %v1890 = vmul.f32 %v1450, %v1450
    %v1891 = vmul.f32 %v1451, %v1451
    %v1892 = vmul.f32 %v1452, %v1452
    %v1893 = vmul.f32 %v1453, %v1453
    %v1894 = vmul.f32 %v1454, %v1454
    %v1895 = vmul.f32 %v1455, %v1455
    %v1896 = vmul.f32 %v1456, %v1456
    %v1897 = vmul.f32 %v1457, %v1457
    %v1898 = vmul.f32 %v1458, %v1458
    %v1899 = vmul.f32 %v1459, %v1459
    %v1900 = vmul.f32 %v1460, %v1460
    %v1901 = vmul.f32 %v1461, %v1461
    %v1902 = vmul.f32 %v1462, %v1462
    %v1903 = vmul.f32 %v1463, %v1463
    %v1904 = vmul.f32 %v1464, %v1464
    %v1905 = vmul.f32 %v1465, %v1465
    %v1906 = vmul.f32 %v1466, %v1466
    %v1907 = vmul.f32 %v1467, %v1467
    %v1908 = vmul.f32 %v1468, %v1468
    %v1909 = vmul.f32 %v1469, %v1469
    %v1910 = vmul.f32 %v1470, %v1470
    %v1911 = vmul.f32 %v1471, %v1471
    %v1912 = vmul.f32 %v1472, %v1472
    %v1913 = vmul.f32 %v1473, %v1473
    %v1914 = vmul.f32 %v1474, %v1474
    %v1915 = vmul.f32 %v1475, %v1475
    %v1916 = vmul.f32 %v1476, %v1476
    %v1917 = vmul.f32 %v1477, %v1477
    %v1918 = vmul.f32 %v1478, %v1478
    %v1919 = vmul.f32 %v1479, %v1479
    %v1920 = vmul.f32 %v1480, %v1480
    %v1921 = vmul.f32 %v1481, %v1481
    %v1922 = vmul.f32 %v1482, %v1482
    %v1923 = vmul.f32 %v1483, %v1483
    %v1924 = vmul.f32 %v1484, %v1484
    %v1925 = vmul.f32 %v1485, %v1485
    %v1926 = vmul.f32 %v1486, %v1486
    %v1927 = vmul.f32 %v1487, %v1487
    %v1928 = vmul.f32 %v1488, %v1488
    %v1929 = vmul.f32 %v1489, %v1489
    %v1930 = vmul.f32 %v1490, %v1490
    %v1931 = vmul.f32 %v1491, %v1491
    %v1932 = vmul.f32 %v1492, %v1492
    %v1933 = vmul.f32 %v1493, %v1493
    %v1934 = vmul.f32 %v1494, %v1494
    %v1935 = vmul.f32 %v1495, %v1495
    %v1936 = vmul.f32 %v1496, %v1496
    %v1937 = vmul.f32 %v1497, %v1497
    %v1938 = vmul.f32 %v1498, %v1498
    %v1939 = vmul.f32 %v1499, %v1499
    %v1940 = vmul.f32 %v1500, %v1500
    %v1941 = vmul.f32 %v1501, %v1501
    %v1942 = vmul.f32 %v1502, %v1502
    %v1943 = vmul.f32 %v1503, %v1503
    %v1944 = vmul.f32 %v1504, %v1504
    %v1945 = vmul.f32 %v1505, %v1505
    %v1946 = vmul.f32 %v1506, %v1506
    %v1947 = vmul.f32 %v1507, %v1507
    %v1948 = vmul.f32 %v1508, %v1508
    %v1949 = vmul.f32 %v1509, %v1509
    %v1950 = vmul.f32 %v1510, %v1510
    %v1951 = vmul.f32 %v1511, %v1511
    %v1952 = vmul.f32 %v1512, %v1512
    %v1953 = vmul.f32 %v1513, %v1513
    %v1954 = vmul.f32 %v1514, %v1514
    %v1955 = vmul.f32 %v1515, %v1515
    %v1956 = vmul.f32 %v1516, %v1516
    %v1957 = vmul.f32 %v1517, %v1517
    %v1958 = vmul.f32 %v1518, %v1518
    %v1959 = vmul.f32 %v1519, %v1519
    %v1960 = vmul.f32 %v1520, %v1520
    %v1961 = vmul.f32 %v1521, %v1521
    %v1962 = vmul.f32 %v1522, %v1522
    %v1963 = vmul.f32 %v1523, %v1523
    %v1964 = vmul.f32 %v1524, %v1524
    %v1965 = vmul.f32 %v1525, %v1525
    %v1966 = vmul.f32 %v1526, %v1526
    %v1967 = vmul.f32 %v1527, %v1527
    %v1968 = vmul.f32 %v1528, %v1528
    %v1969 = vmul.f32 %v1529, %v1529
    %v1970 = vmul.f32 %v1530, %v1530
    %v1971 = vmul.f32 %v1531, %v1531
    %v1972 = vmul.f32 %v1532, %v1532
    %v1973 = vmul.f32 %v1533, %v1533
    %v1974 = vmul.f32 %v1534, %v1534
    %v1975 = vmul.f32 %v1535, %v1535
    %v1976 = vmul.f32 %v1536, %v1536
    %v1977 = vmul.f32 %v1537, %v1537
    %v1978 = vmul.f32 %v1538, %v1538
    %v1979 = vmul.f32 %v1539, %v1539
    %v1980 = vmul.f32 %v1540, %v1540
    %v1981 = vmul.f32 %v1541, %v1541
    %v1982 = vmul.f32 %v1542, %v1542
    %v1983 = vmul.f32 %v1543, %v1543
    %v1984 = vmul.f32 %v1544, %v1544
    %v1985 = vmul.f32 %v1545, %v1545
    %v1986 = vmul.f32 %v1546, %v1546
    %v1987 = vmul.f32 %v1547, %v1547
    %v1988 = vmul.f32 %v1548, %v1548
    %v1989 = vmul.f32 %v1549, %v1549
    %v1990 = vmul.f32 %v1550, %v1550
    %v1991 = vmul.f32 %v1551, %v1551
    %v1992 = vmul.f32 %v1552, %v1552
    %v1993 = vmul.f32 %v1553, %v1553
    %v1994 = vmul.f32 %v1554, %v1554
    %v1995 = vmul.f32 %v1555, %v1555
    %v1996 = vmul.f32 %v1556, %v1556
    %v1997 = vmul.f32 %v1557, %v1557
    %v1998 = vmul.f32 %v1558, %v1558
    %v1999 = vsel %vm1561, %v1855, 0.0
    %v2000 = vsel %vm1561, %v1856, 0.0
    %v2001 = vadd.f32 %v1999, %v2000
    %v2002 = vsel %vm1561, %v1857, 0.0
    %v2003 = vadd.f32 %v2001, %v2002
    %v2004 = vsel %vm1561, %v1858, 0.0
    %v2005 = vadd.f32 %v2003, %v2004
    %v2006 = vsel %vm1561, %v1859, 0.0
    %v2007 = vadd.f32 %v2005, %v2006
    %v2008 = vsel %vm1561, %v1860, 0.0
    %v2009 = vadd.f32 %v2007, %v2008
    %v2010 = vsel %vm1561, %v1861, 0.0
    %v2011 = vadd.f32 %v2009, %v2010
    %v2012 = vsel %vm1561, %v1862, 0.0
    %v2013 = vadd.f32 %v2011, %v2012
    %v2014 = vsel %vm1561, %v1863, 0.0
    %v2015 = vadd.f32 %v2013, %v2014
    %v2016 = vsel %vm1561, %v1864, 0.0
    %v2017 = vadd.f32 %v2015, %v2016
    %v2018 = vsel %vm1561, %v1865, 0.0
    %v2019 = vadd.f32 %v2017, %v2018
    %v2020 = vsel %vm1561, %v1866, 0.0
    %v2021 = vadd.f32 %v2019, %v2020
    %v2022 = vsel %vm1561, %v1867, 0.0
    %v2023 = vadd.f32 %v2021, %v2022
    %v2024 = vsel %vm1561, %v1868, 0.0
    %v2025 = vadd.f32 %v2023, %v2024
    %v2026 = vsel %vm1561, %v1869, 0.0
    %v2027 = vadd.f32 %v2025, %v2026
    %v2028 = vsel %vm1561, %v1870, 0.0
    %v2029 = vadd.f32 %v2027, %v2028
    %v2030 = vsel %vm1561, %v1871, 0.0
    %v2031 = vadd.f32 %v2029, %v2030
    %v2032 = vsel %vm1561, %v1872, 0.0
    %v2033 = vadd.f32 %v2031, %v2032
    %v2034 = vsel %vm1561, %v1873, 0.0
    %v2035 = vadd.f32 %v2033, %v2034
    %v2036 = vsel %vm1561, %v1874, 0.0
    %v2037 = vadd.f32 %v2035, %v2036
    %v2038 = vsel %vm1561, %v1875, 0.0
    %v2039 = vadd.f32 %v2037, %v2038
    %v2040 = vsel %vm1561, %v1876, 0.0
    %v2041 = vadd.f32 %v2039, %v2040
    %v2042 = vsel %vm1561, %v1877, 0.0
    %v2043 = vadd.f32 %v2041, %v2042
    %v2044 = vsel %vm1561, %v1878, 0.0
    %v2045 = vadd.f32 %v2043, %v2044
    %v2046 = vsel %vm1561, %v1879, 0.0
    %v2047 = vadd.f32 %v2045, %v2046
    %v2048 = vsel %vm1561, %v1880, 0.0
    %v2049 = vadd.f32 %v2047, %v2048
    %v2050 = vsel %vm1561, %v1881, 0.0
    %v2051 = vadd.f32 %v2049, %v2050
    %v2052 = vsel %vm1561, %v1882, 0.0
    %v2053 = vadd.f32 %v2051, %v2052
    %v2054 = vsel %vm1561, %v1883, 0.0
    %v2055 = vadd.f32 %v2053, %v2054
    %v2056 = vsel %vm1561, %v1884, 0.0
    %v2057 = vadd.f32 %v2055, %v2056
    %v2058 = vsel %vm1561, %v1885, 0.0
    %v2059 = vadd.f32 %v2057, %v2058
    %v2060 = vsel %vm1561, %v1886, 0.0
    %v2061 = vadd.f32 %v2059, %v2060
    %v2062 = vsel %vm1561, %v1887, 0.0
    %v2063 = vadd.f32 %v2061, %v2062
    %v2064 = vsel %vm1561, %v1888, 0.0
    %v2065 = vadd.f32 %v2063, %v2064
    %v2066 = vsel %vm1561, %v1889, 0.0
    %v2067 = vadd.f32 %v2065, %v2066
    %v2068 = vsel %vm1561, %v1890, 0.0
    %v2069 = vadd.f32 %v2067, %v2068
    %v2070 = vsel %vm1561, %v1891, 0.0
    %v2071 = vadd.f32 %v2069, %v2070
    %v2072 = vsel %vm1561, %v1892, 0.0
    %v2073 = vadd.f32 %v2071, %v2072
    %v2074 = vsel %vm1561, %v1893, 0.0
    %v2075 = vadd.f32 %v2073, %v2074
    %v2076 = vsel %vm1561, %v1894, 0.0
    %v2077 = vadd.f32 %v2075, %v2076
    %v2078 = vsel %vm1561, %v1895, 0.0
    %v2079 = vadd.f32 %v2077, %v2078
    %v2080 = vsel %vm1561, %v1896, 0.0
    %v2081 = vadd.f32 %v2079, %v2080
    %v2082 = vsel %vm1561, %v1897, 0.0
    %v2083 = vadd.f32 %v2081, %v2082
    %v2084 = vsel %vm1561, %v1898, 0.0
    %v2085 = vadd.f32 %v2083, %v2084
    %v2086 = vsel %vm1561, %v1899, 0.0
    %v2087 = vadd.f32 %v2085, %v2086
    %v2088 = vsel %vm1561, %v1900, 0.0
    %v2089 = vadd.f32 %v2087, %v2088
    %v2090 = vsel %vm1561, %v1901, 0.0
    %v2091 = vadd.f32 %v2089, %v2090
    %v2092 = vsel %vm1561, %v1902, 0.0
    %v2093 = vadd.f32 %v2091, %v2092
    %v2094 = vsel %vm1561, %v1903, 0.0
    %v2095 = vadd.f32 %v2093, %v2094
    %v2096 = vsel %vm1561, %v1904, 0.0
    %v2097 = vadd.f32 %v2095, %v2096
    %v2098 = vsel %vm1561, %v1905, 0.0
    %v2099 = vadd.f32 %v2097, %v2098
    %v2100 = vsel %vm1561, %v1906, 0.0
    %v2101 = vadd.f32 %v2099, %v2100
    %v2102 = vsel %vm1561, %v1907, 0.0
    %v2103 = vadd.f32 %v2101, %v2102
    %v2104 = vsel %vm1561, %v1908, 0.0
    %v2105 = vadd.f32 %v2103, %v2104
    %v2106 = vsel %vm1561, %v1909, 0.0
    %v2107 = vadd.f32 %v2105, %v2106
    %v2108 = vsel %vm1561, %v1910, 0.0
    %v2109 = vadd.f32 %v2107, %v2108
    %v2110 = vsel %vm1561, %v1911, 0.0
    %v2111 = vadd.f32 %v2109, %v2110
    %v2112 = vsel %vm1561, %v1912, 0.0
    %v2113 = vadd.f32 %v2111, %v2112
    %v2114 = vsel %vm1561, %v1913, 0.0
    %v2115 = vadd.f32 %v2113, %v2114
    %v2116 = vsel %vm1561, %v1914, 0.0
    %v2117 = vadd.f32 %v2115, %v2116
    %v2118 = vsel %vm1561, %v1915, 0.0
    %v2119 = vadd.f32 %v2117, %v2118
    %v2120 = vsel %vm1561, %v1916, 0.0
    %v2121 = vadd.f32 %v2119, %v2120
    %v2122 = vsel %vm1561, %v1917, 0.0
    %v2123 = vadd.f32 %v2121, %v2122
    %v2124 = vsel %vm1561, %v1918, 0.0
    %v2125 = vadd.f32 %v2123, %v2124
    %v2126 = vsel %vm1561, %v1919, 0.0
    %v2127 = vadd.f32 %v2125, %v2126
    %v2128 = vsel %vm1561, %v1920, 0.0
    %v2129 = vadd.f32 %v2127, %v2128
    %v2130 = vsel %vm1561, %v1921, 0.0
    %v2131 = vadd.f32 %v2129, %v2130
    %v2132 = vsel %vm1561, %v1922, 0.0
    %v2133 = vadd.f32 %v2131, %v2132
    %v2134 = vsel %vm1561, %v1923, 0.0
    %v2135 = vadd.f32 %v2133, %v2134
    %v2136 = vsel %vm1561, %v1924, 0.0
    %v2137 = vadd.f32 %v2135, %v2136
    %v2138 = vsel %vm1561, %v1925, 0.0
    %v2139 = vadd.f32 %v2137, %v2138
    %v2140 = vsel %vm1561, %v1926, 0.0
    %v2141 = vadd.f32 %v2139, %v2140
    %v2142 = vsel %vm1561, %v1927, 0.0
    %v2143 = vadd.f32 %v2141, %v2142
    %v2144 = vsel %vm1561, %v1928, 0.0
    %v2145 = vadd.f32 %v2143, %v2144
    %v2146 = vsel %vm1561, %v1929, 0.0
    %v2147 = vadd.f32 %v2145, %v2146
    %v2148 = vsel %vm1561, %v1930, 0.0
    %v2149 = vadd.f32 %v2147, %v2148
    %v2150 = vsel %vm1561, %v1931, 0.0
    %v2151 = vadd.f32 %v2149, %v2150
    %v2152 = vsel %vm1561, %v1932, 0.0
    %v2153 = vadd.f32 %v2151, %v2152
    %v2154 = vsel %vm1561, %v1933, 0.0
    %v2155 = vadd.f32 %v2153, %v2154
    %v2156 = vsel %vm1561, %v1934, 0.0
    %v2157 = vadd.f32 %v2155, %v2156
    %v2158 = vsel %vm1561, %v1935, 0.0
    %v2159 = vadd.f32 %v2157, %v2158
    %v2160 = vsel %vm1561, %v1936, 0.0
    %v2161 = vadd.f32 %v2159, %v2160
    %v2162 = vsel %vm1561, %v1937, 0.0
    %v2163 = vadd.f32 %v2161, %v2162
    %v2164 = vsel %vm1561, %v1938, 0.0
    %v2165 = vadd.f32 %v2163, %v2164
    %v2166 = vsel %vm1561, %v1939, 0.0
    %v2167 = vadd.f32 %v2165, %v2166
    %v2168 = vsel %vm1561, %v1940, 0.0
    %v2169 = vadd.f32 %v2167, %v2168
    %v2170 = vsel %vm1561, %v1941, 0.0
    %v2171 = vadd.f32 %v2169, %v2170
    %v2172 = vsel %vm1561, %v1942, 0.0
    %v2173 = vadd.f32 %v2171, %v2172
    %v2174 = vsel %vm1561, %v1943, 0.0
    %v2175 = vadd.f32 %v2173, %v2174
    %v2176 = vsel %vm1561, %v1944, 0.0
    %v2177 = vadd.f32 %v2175, %v2176
    %v2178 = vsel %vm1561, %v1945, 0.0
    %v2179 = vadd.f32 %v2177, %v2178
    %v2180 = vsel %vm1561, %v1946, 0.0
    %v2181 = vadd.f32 %v2179, %v2180
    %v2182 = vsel %vm1561, %v1947, 0.0
    %v2183 = vadd.f32 %v2181, %v2182
    %v2184 = vsel %vm1561, %v1948, 0.0
    %v2185 = vadd.f32 %v2183, %v2184
    %v2186 = vsel %vm1561, %v1949, 0.0
    %v2187 = vadd.f32 %v2185, %v2186
    %v2188 = vsel %vm1561, %v1950, 0.0
    %v2189 = vadd.f32 %v2187, %v2188
    %v2190 = vsel %vm1561, %v1951, 0.0
    %v2191 = vadd.f32 %v2189, %v2190
    %v2192 = vsel %vm1561, %v1952, 0.0
    %v2193 = vadd.f32 %v2191, %v2192
    %v2194 = vsel %vm1561, %v1953, 0.0
    %v2195 = vadd.f32 %v2193, %v2194
    %v2196 = vsel %vm1561, %v1954, 0.0
    %v2197 = vadd.f32 %v2195, %v2196
    %v2198 = vsel %vm1561, %v1955, 0.0
    %v2199 = vadd.f32 %v2197, %v2198
    %v2200 = vsel %vm1561, %v1956, 0.0
    %v2201 = vadd.f32 %v2199, %v2200
    %v2202 = vsel %vm1561, %v1957, 0.0
    %v2203 = vadd.f32 %v2201, %v2202
    %v2204 = vsel %vm1561, %v1958, 0.0
    %v2205 = vadd.f32 %v2203, %v2204
    %v2206 = vsel %vm1561, %v1959, 0.0
    %v2207 = vadd.f32 %v2205, %v2206
    %v2208 = vsel %vm1561, %v1960, 0.0
    %v2209 = vadd.f32 %v2207, %v2208
    %v2210 = vsel %vm1561, %v1961, 0.0
    %v2211 = vadd.f32 %v2209, %v2210
    %v2212 = vsel %vm1561, %v1962, 0.0
    %v2213 = vadd.f32 %v2211, %v2212
    %v2214 = vsel %vm1561, %v1963, 0.0
    %v2215 = vadd.f32 %v2213, %v2214
    %v2216 = vsel %vm1561, %v1964, 0.0
    %v2217 = vadd.f32 %v2215, %v2216
    %v2218 = vsel %vm1561, %v1965, 0.0
    %v2219 = vadd.f32 %v2217, %v2218
    %v2220 = vsel %vm1561, %v1966, 0.0
    %v2221 = vadd.f32 %v2219, %v2220
    %v2222 = vsel %vm1561, %v1967, 0.0
    %v2223 = vadd.f32 %v2221, %v2222
    %v2224 = vsel %vm1561, %v1968, 0.0
    %v2225 = vadd.f32 %v2223, %v2224
    %v2226 = vsel %vm1561, %v1969, 0.0
    %v2227 = vadd.f32 %v2225, %v2226
    %v2228 = vsel %vm1561, %v1970, 0.0
    %v2229 = vadd.f32 %v2227, %v2228
    %v2230 = vsel %vm1561, %v1971, 0.0
    %v2231 = vadd.f32 %v2229, %v2230
    %v2232 = vsel %vm1561, %v1972, 0.0
    %v2233 = vadd.f32 %v2231, %v2232
    %v2234 = vsel %vm1561, %v1973, 0.0
    %v2235 = vadd.f32 %v2233, %v2234
    %v2236 = vsel %vm1561, %v1974, 0.0
    %v2237 = vadd.f32 %v2235, %v2236
    %v2238 = vsel %vm1561, %v1975, 0.0
    %v2239 = vadd.f32 %v2237, %v2238
    %v2240 = vsel %vm1561, %v1976, 0.0
    %v2241 = vadd.f32 %v2239, %v2240
    %v2242 = vsel %vm1561, %v1977, 0.0
    %v2243 = vadd.f32 %v2241, %v2242
    %v2244 = vsel %vm1561, %v1978, 0.0
    %v2245 = vadd.f32 %v2243, %v2244
    %v2246 = vsel %vm1561, %v1979, 0.0
    %v2247 = vadd.f32 %v2245, %v2246
    %v2248 = vsel %vm1561, %v1980, 0.0
    %v2249 = vadd.f32 %v2247, %v2248
    %v2250 = vsel %vm1561, %v1981, 0.0
    %v2251 = vadd.f32 %v2249, %v2250
    %v2252 = vsel %vm1561, %v1982, 0.0
    %v2253 = vadd.f32 %v2251, %v2252
    %v2254 = vsel %vm1561, %v1983, 0.0
    %v2255 = vadd.f32 %v2253, %v2254
    %v2256 = vsel %vm1561, %v1984, 0.0
    %v2257 = vadd.f32 %v2255, %v2256
    %v2258 = vsel %vm1561, %v1985, 0.0
    %v2259 = vadd.f32 %v2257, %v2258
    %v2260 = vsel %vm1561, %v1986, 0.0
    %v2261 = vadd.f32 %v2259, %v2260
    %v2262 = vsel %vm1561, %v1987, 0.0
    %v2263 = vadd.f32 %v2261, %v2262
    %v2264 = vsel %vm1561, %v1988, 0.0
    %v2265 = vadd.f32 %v2263, %v2264
    %v2266 = vsel %vm1561, %v1989, 0.0
    %v2267 = vadd.f32 %v2265, %v2266
    %v2268 = vsel %vm1561, %v1990, 0.0
    %v2269 = vadd.f32 %v2267, %v2268
    %v2270 = vsel %vm1561, %v1991, 0.0
    %v2271 = vadd.f32 %v2269, %v2270
    %v2272 = vsel %vm1561, %v1992, 0.0
    %v2273 = vadd.f32 %v2271, %v2272
    %v2274 = vsel %vm1561, %v1993, 0.0
    %v2275 = vadd.f32 %v2273, %v2274
    %v2276 = vsel %vm1561, %v1994, 0.0
    %v2277 = vadd.f32 %v2275, %v2276
    %v2278 = vsel %vm1561, %v1995, 0.0
    %v2279 = vadd.f32 %v2277, %v2278
    %v2280 = vsel %vm1561, %v1996, 0.0
    %v2281 = vadd.f32 %v2279, %v2280
    %v2282 = vsel %vm1561, %v1997, 0.0
    %v2283 = vadd.f32 %v2281, %v2282
    %v2284 = vsel %vm1561, %v1998, 0.0
    %v2285 = vadd.f32 %v2283, %v2284
    %v2286 = vrot.slane %v2285, 4
    %v2287 = vadd.f32 %v2285, %v2286
    %v2288 = vrot.slane %v2287, 2
    %v2289 = vadd.f32 %v2287, %v2288
    %v2290 = vrot.slane %v2289, 1
    %v2291 = vadd.f32 %v2289, %v2290
    %v2292 = vrcp.pop 1152.0
    %v2293 = vmul.f32 %v1854, %v2292
    %v2294 = vmul.f32 %v2291, %v2292
    %v2295 = vmul.f32 %v2293, %v2293
    %v2296 = vsub.f32 %v2294, %v2295
    %v2297 = vsub.f32 %v1415, %v2293
    %v2298 = vsub.f32 %v1416, %v2293
    %v2299 = vsub.f32 %v1417, %v2293
    %v2300 = vsub.f32 %v1418, %v2293
    %v2301 = vsub.f32 %v1419, %v2293
    %v2302 = vsub.f32 %v1420, %v2293
    %v2303 = vsub.f32 %v1421, %v2293
    %v2304 = vsub.f32 %v1422, %v2293
    %v2305 = vsub.f32 %v1423, %v2293
    %v2306 = vsub.f32 %v1424, %v2293
    %v2307 = vsub.f32 %v1425, %v2293
    %v2308 = vsub.f32 %v1426, %v2293
    %v2309 = vsub.f32 %v1427, %v2293
    %v2310 = vsub.f32 %v1428, %v2293
    %v2311 = vsub.f32 %v1429, %v2293
    %v2312 = vsub.f32 %v1430, %v2293
    %v2313 = vsub.f32 %v1431, %v2293
    %v2314 = vsub.f32 %v1432, %v2293
    %v2315 = vsub.f32 %v1433, %v2293
    %v2316 = vsub.f32 %v1434, %v2293
    %v2317 = vsub.f32 %v1435, %v2293
    %v2318 = vsub.f32 %v1436, %v2293
    %v2319 = vsub.f32 %v1437, %v2293
    %v2320 = vsub.f32 %v1438, %v2293
    %v2321 = vsub.f32 %v1439, %v2293
    %v2322 = vsub.f32 %v1440, %v2293
    %v2323 = vsub.f32 %v1441, %v2293
    %v2324 = vsub.f32 %v1442, %v2293
    %v2325 = vsub.f32 %v1443, %v2293
    %v2326 = vsub.f32 %v1444, %v2293
    %v2327 = vsub.f32 %v1445, %v2293
    %v2328 = vsub.f32 %v1446, %v2293
    %v2329 = vsub.f32 %v1447, %v2293
    %v2330 = vsub.f32 %v1448, %v2293
    %v2331 = vsub.f32 %v1449, %v2293
    %v2332 = vsub.f32 %v1450, %v2293
    %v2333 = vsub.f32 %v1451, %v2293
    %v2334 = vsub.f32 %v1452, %v2293
    %v2335 = vsub.f32 %v1453, %v2293
    %v2336 = vsub.f32 %v1454, %v2293
    %v2337 = vsub.f32 %v1455, %v2293
    %v2338 = vsub.f32 %v1456, %v2293
    %v2339 = vsub.f32 %v1457, %v2293
    %v2340 = vsub.f32 %v1458, %v2293
    %v2341 = vsub.f32 %v1459, %v2293
    %v2342 = vsub.f32 %v1460, %v2293
    %v2343 = vsub.f32 %v1461, %v2293
    %v2344 = vsub.f32 %v1462, %v2293
    %v2345 = vsub.f32 %v1463, %v2293
    %v2346 = vsub.f32 %v1464, %v2293
    %v2347 = vsub.f32 %v1465, %v2293
    %v2348 = vsub.f32 %v1466, %v2293
    %v2349 = vsub.f32 %v1467, %v2293
    %v2350 = vsub.f32 %v1468, %v2293
    %v2351 = vsub.f32 %v1469, %v2293
    %v2352 = vsub.f32 %v1470, %v2293
    %v2353 = vsub.f32 %v1471, %v2293
    %v2354 = vsub.f32 %v1472, %v2293
    %v2355 = vsub.f32 %v1473, %v2293
    %v2356 = vsub.f32 %v1474, %v2293
    %v2357 = vsub.f32 %v1475, %v2293
    %v2358 = vsub.f32 %v1476, %v2293
    %v2359 = vsub.f32 %v1477, %v2293
    %v2360 = vsub.f32 %v1478, %v2293
    %v2361 = vsub.f32 %v1479, %v2293
    %v2362 = vsub.f32 %v1480, %v2293
    %v2363 = vsub.f32 %v1481, %v2293
    %v2364 = vsub.f32 %v1482, %v2293
    %v2365 = vsub.f32 %v1483, %v2293
    %v2366 = vsub.f32 %v1484, %v2293
    %v2367 = vsub.f32 %v1485, %v2293
    %v2368 = vsub.f32 %v1486, %v2293
    %v2369 = vsub.f32 %v1487, %v2293
    %v2370 = vsub.f32 %v1488, %v2293
    %v2371 = vsub.f32 %v1489, %v2293
    %v2372 = vsub.f32 %v1490, %v2293
    %v2373 = vsub.f32 %v1491, %v2293
    %v2374 = vsub.f32 %v1492, %v2293
    %v2375 = vsub.f32 %v1493, %v2293
    %v2376 = vsub.f32 %v1494, %v2293
    %v2377 = vsub.f32 %v1495, %v2293
    %v2378 = vsub.f32 %v1496, %v2293
    %v2379 = vsub.f32 %v1497, %v2293
    %v2380 = vsub.f32 %v1498, %v2293
    %v2381 = vsub.f32 %v1499, %v2293
    %v2382 = vsub.f32 %v1500, %v2293
    %v2383 = vsub.f32 %v1501, %v2293
    %v2384 = vsub.f32 %v1502, %v2293
    %v2385 = vsub.f32 %v1503, %v2293
    %v2386 = vsub.f32 %v1504, %v2293
    %v2387 = vsub.f32 %v1505, %v2293
    %v2388 = vsub.f32 %v1506, %v2293
    %v2389 = vsub.f32 %v1507, %v2293
    %v2390 = vsub.f32 %v1508, %v2293
    %v2391 = vsub.f32 %v1509, %v2293
    %v2392 = vsub.f32 %v1510, %v2293
    %v2393 = vsub.f32 %v1511, %v2293
    %v2394 = vsub.f32 %v1512, %v2293
    %v2395 = vsub.f32 %v1513, %v2293
    %v2396 = vsub.f32 %v1514, %v2293
    %v2397 = vsub.f32 %v1515, %v2293
    %v2398 = vsub.f32 %v1516, %v2293
    %v2399 = vsub.f32 %v1517, %v2293
    %v2400 = vsub.f32 %v1518, %v2293
    %v2401 = vsub.f32 %v1519, %v2293
    %v2402 = vsub.f32 %v1520, %v2293
    %v2403 = vsub.f32 %v1521, %v2293
    %v2404 = vsub.f32 %v1522, %v2293
    %v2405 = vsub.f32 %v1523, %v2293
    %v2406 = vsub.f32 %v1524, %v2293
    %v2407 = vsub.f32 %v1525, %v2293
    %v2408 = vsub.f32 %v1526, %v2293
    %v2409 = vsub.f32 %v1527, %v2293
    %v2410 = vsub.f32 %v1528, %v2293
    %v2411 = vsub.f32 %v1529, %v2293
    %v2412 = vsub.f32 %v1530, %v2293
    %v2413 = vsub.f32 %v1531, %v2293
    %v2414 = vsub.f32 %v1532, %v2293
    %v2415 = vsub.f32 %v1533, %v2293
    %v2416 = vsub.f32 %v1534, %v2293
    %v2417 = vsub.f32 %v1535, %v2293
    %v2418 = vsub.f32 %v1536, %v2293
    %v2419 = vsub.f32 %v1537, %v2293
    %v2420 = vsub.f32 %v1538, %v2293
    %v2421 = vsub.f32 %v1539, %v2293
    %v2422 = vsub.f32 %v1540, %v2293
    %v2423 = vsub.f32 %v1541, %v2293
    %v2424 = vsub.f32 %v1542, %v2293
    %v2425 = vsub.f32 %v1543, %v2293
    %v2426 = vsub.f32 %v1544, %v2293
    %v2427 = vsub.f32 %v1545, %v2293
    %v2428 = vsub.f32 %v1546, %v2293
    %v2429 = vsub.f32 %v1547, %v2293
    %v2430 = vsub.f32 %v1548, %v2293
    %v2431 = vsub.f32 %v1549, %v2293
    %v2432 = vsub.f32 %v1550, %v2293
    %v2433 = vsub.f32 %v1551, %v2293
    %v2434 = vsub.f32 %v1552, %v2293
    %v2435 = vsub.f32 %v1553, %v2293
    %v2436 = vsub.f32 %v1554, %v2293
    %v2437 = vsub.f32 %v1555, %v2293
    %v2438 = vsub.f32 %v1556, %v2293
    %v2439 = vsub.f32 %v1557, %v2293
    %v2440 = vsub.f32 %v1558, %v2293
    %v2441 = vadd.f32 %v2296, 1e-05
    %v2442 = vrsqrt.pop %v2441
    %v2443 = vmul.f32 %v2297, %v2442
    %v2444 = vmul.f32 %v2298, %v2442
    %v2445 = vmul.f32 %v2299, %v2442
    %v2446 = vmul.f32 %v2300, %v2442
    %v2447 = vmul.f32 %v2301, %v2442
    %v2448 = vmul.f32 %v2302, %v2442
    %v2449 = vmul.f32 %v2303, %v2442
    %v2450 = vmul.f32 %v2304, %v2442
    %v2451 = vmul.f32 %v2305, %v2442
    %v2452 = vmul.f32 %v2306, %v2442
    %v2453 = vmul.f32 %v2307, %v2442
    %v2454 = vmul.f32 %v2308, %v2442
    %v2455 = vmul.f32 %v2309, %v2442
    %v2456 = vmul.f32 %v2310, %v2442
    %v2457 = vmul.f32 %v2311, %v2442
    %v2458 = vmul.f32 %v2312, %v2442
    %v2459 = vmul.f32 %v2313, %v2442
    %v2460 = vmul.f32 %v2314, %v2442
    %v2461 = vmul.f32 %v2315, %v2442
    %v2462 = vmul.f32 %v2316, %v2442
    %v2463 = vmul.f32 %v2317, %v2442
    %v2464 = vmul.f32 %v2318, %v2442
    %v2465 = vmul.f32 %v2319, %v2442
    %v2466 = vmul.f32 %v2320, %v2442
    %v2467 = vmul.f32 %v2321, %v2442
    %v2468 = vmul.f32 %v2322, %v2442
    %v2469 = vmul.f32 %v2323, %v2442
    %v2470 = vmul.f32 %v2324, %v2442
    %v2471 = vmul.f32 %v2325, %v2442
    %v2472 = vmul.f32 %v2326, %v2442
    %v2473 = vmul.f32 %v2327, %v2442
    %v2474 = vmul.f32 %v2328, %v2442
    %v2475 = vmul.f32 %v2329, %v2442
    %v2476 = vmul.f32 %v2330, %v2442
    %v2477 = vmul.f32 %v2331, %v2442
    %v2478 = vmul.f32 %v2332, %v2442
    %v2479 = vmul.f32 %v2333, %v2442
    %v2480 = vmul.f32 %v2334, %v2442
    %v2481 = vmul.f32 %v2335, %v2442
    %v2482 = vmul.f32 %v2336, %v2442
    %v2483 = vmul.f32 %v2337, %v2442
    %v2484 = vmul.f32 %v2338, %v2442
    %v2485 = vmul.f32 %v2339, %v2442
    %v2486 = vmul.f32 %v2340, %v2442
    %v2487 = vmul.f32 %v2341, %v2442
    %v2488 = vmul.f32 %v2342, %v2442
    %v2489 = vmul.f32 %v2343, %v2442
    %v2490 = vmul.f32 %v2344, %v2442
    %v2491 = vmul.f32 %v2345, %v2442
    %v2492 = vmul.f32 %v2346, %v2442
    %v2493 = vmul.f32 %v2347, %v2442
    %v2494 = vmul.f32 %v2348, %v2442
    %v2495 = vmul.f32 %v2349, %v2442
    %v2496 = vmul.f32 %v2350, %v2442
    %v2497 = vmul.f32 %v2351, %v2442
    %v2498 = vmul.f32 %v2352, %v2442
    %v2499 = vmul.f32 %v2353, %v2442
    %v2500 = vmul.f32 %v2354, %v2442
    %v2501 = vmul.f32 %v2355, %v2442
    %v2502 = vmul.f32 %v2356, %v2442
    %v2503 = vmul.f32 %v2357, %v2442
    %v2504 = vmul.f32 %v2358, %v2442
    %v2505 = vmul.f32 %v2359, %v2442
    %v2506 = vmul.f32 %v2360, %v2442
    %v2507 = vmul.f32 %v2361, %v2442
    %v2508 = vmul.f32 %v2362, %v2442
    %v2509 = vmul.f32 %v2363, %v2442
    %v2510 = vmul.f32 %v2364, %v2442
    %v2511 = vmul.f32 %v2365, %v2442
    %v2512 = vmul.f32 %v2366, %v2442
    %v2513 = vmul.f32 %v2367, %v2442
    %v2514 = vmul.f32 %v2368, %v2442
    %v2515 = vmul.f32 %v2369, %v2442
    %v2516 = vmul.f32 %v2370, %v2442
    %v2517 = vmul.f32 %v2371, %v2442
    %v2518 = vmul.f32 %v2372, %v2442
    %v2519 = vmul.f32 %v2373, %v2442
    %v2520 = vmul.f32 %v2374, %v2442
    %v2521 = vmul.f32 %v2375, %v2442
    %v2522 = vmul.f32 %v2376, %v2442
    %v2523 = vmul.f32 %v2377, %v2442
    %v2524 = vmul.f32 %v2378, %v2442
    %v2525 = vmul.f32 %v2379, %v2442
    %v2526 = vmul.f32 %v2380, %v2442
    %v2527 = vmul.f32 %v2381, %v2442
    %v2528 = vmul.f32 %v2382, %v2442
    %v2529 = vmul.f32 %v2383, %v2442
    %v2530 = vmul.f32 %v2384, %v2442
    %v2531 = vmul.f32 %v2385, %v2442
    %v2532 = vmul.f32 %v2386, %v2442
    %v2533 = vmul.f32 %v2387, %v2442
    %v2534 = vmul.f32 %v2388, %v2442
    %v2535 = vmul.f32 %v2389, %v2442
    %v2536 = vmul.f32 %v2390, %v2442
    %v2537 = vmul.f32 %v2391, %v2442
    %v2538 = vmul.f32 %v2392, %v2442
    %v2539 = vmul.f32 %v2393, %v2442
    %v2540 = vmul.f32 %v2394, %v2442
    %v2541 = vmul.f32 %v2395, %v2442
    %v2542 = vmul.f32 %v2396, %v2442
    %v2543 = vmul.f32 %v2397, %v2442
    %v2544 = vmul.f32 %v2398, %v2442
    %v2545 = vmul.f32 %v2399, %v2442
    %v2546 = vmul.f32 %v2400, %v2442
    %v2547 = vmul.f32 %v2401, %v2442
    %v2548 = vmul.f32 %v2402, %v2442
    %v2549 = vmul.f32 %v2403, %v2442
    %v2550 = vmul.f32 %v2404, %v2442
    %v2551 = vmul.f32 %v2405, %v2442
    %v2552 = vmul.f32 %v2406, %v2442
    %v2553 = vmul.f32 %v2407, %v2442
    %v2554 = vmul.f32 %v2408, %v2442
    %v2555 = vmul.f32 %v2409, %v2442
    %v2556 = vmul.f32 %v2410, %v2442
    %v2557 = vmul.f32 %v2411, %v2442
    %v2558 = vmul.f32 %v2412, %v2442
    %v2559 = vmul.f32 %v2413, %v2442
    %v2560 = vmul.f32 %v2414, %v2442
    %v2561 = vmul.f32 %v2415, %v2442
    %v2562 = vmul.f32 %v2416, %v2442
    %v2563 = vmul.f32 %v2417, %v2442
    %v2564 = vmul.f32 %v2418, %v2442
    %v2565 = vmul.f32 %v2419, %v2442
    %v2566 = vmul.f32 %v2420, %v2442
    %v2567 = vmul.f32 %v2421, %v2442
    %v2568 = vmul.f32 %v2422, %v2442
    %v2569 = vmul.f32 %v2423, %v2442
    %v2570 = vmul.f32 %v2424, %v2442
    %v2571 = vmul.f32 %v2425, %v2442
    %v2572 = vmul.f32 %v2426, %v2442
    %v2573 = vmul.f32 %v2427, %v2442
    %v2574 = vmul.f32 %v2428, %v2442
    %v2575 = vmul.f32 %v2429, %v2442
    %v2576 = vmul.f32 %v2430, %v2442
    %v2577 = vmul.f32 %v2431, %v2442
    %v2578 = vmul.f32 %v2432, %v2442
    %v2579 = vmul.f32 %v2433, %v2442
    %v2580 = vmul.f32 %v2434, %v2442
    %v2581 = vmul.f32 %v2435, %v2442
    %v2582 = vmul.f32 %v2436, %v2442
    %v2583 = vmul.f32 %v2437, %v2442
    %v2584 = vmul.f32 %v2438, %v2442
    %v2585 = vmul.f32 %v2439, %v2442
    %v2586 = vmul.f32 %v2440, %v2442
    %v2588 = vlaneseq
    %v2589 = vshrl.u32 %v2588, 7
    %v2590 = vsub.s32 0, %v2589
    %v2591 = vrot.slane %v1559, %v2590
    %v2593 = vmul.f32 %v2443, %v2591
    %v2594 = vmul.f32 %v2444, %v2591
    %v2595 = vmul.f32 %v2445, %v2591
    %v2596 = vmul.f32 %v2446, %v2591
    %v2597 = vmul.f32 %v2447, %v2591
    %v2598 = vmul.f32 %v2448, %v2591
    %v2599 = vmul.f32 %v2449, %v2591
    %v2600 = vmul.f32 %v2450, %v2591
    %v2601 = vmul.f32 %v2451, %v2591
    %v2602 = vmul.f32 %v2452, %v2591
    %v2603 = vmul.f32 %v2453, %v2591
    %v2604 = vmul.f32 %v2454, %v2591
    %v2605 = vmul.f32 %v2455, %v2591
    %v2606 = vmul.f32 %v2456, %v2591
    %v2607 = vmul.f32 %v2457, %v2591
    %v2608 = vmul.f32 %v2458, %v2591
    %v2609 = vmul.f32 %v2459, %v2591
    %v2610 = vmul.f32 %v2460, %v2591
    %v2611 = vmul.f32 %v2461, %v2591
    %v2612 = vmul.f32 %v2462, %v2591
    %v2613 = vmul.f32 %v2463, %v2591
    %v2614 = vmul.f32 %v2464, %v2591
    %v2615 = vmul.f32 %v2465, %v2591
    %v2616 = vmul.f32 %v2466, %v2591
    %v2617 = vmul.f32 %v2467, %v2591
    %v2618 = vmul.f32 %v2468, %v2591
    %v2619 = vmul.f32 %v2469, %v2591
    %v2620 = vmul.f32 %v2470, %v2591
    %v2621 = vmul.f32 %v2471, %v2591
    %v2622 = vmul.f32 %v2472, %v2591
    %v2623 = vmul.f32 %v2473, %v2591
    %v2624 = vmul.f32 %v2474, %v2591
    %v2625 = vmul.f32 %v2475, %v2591
    %v2626 = vmul.f32 %v2476, %v2591
    %v2627 = vmul.f32 %v2477, %v2591
    %v2628 = vmul.f32 %v2478, %v2591
    %v2629 = vmul.f32 %v2479, %v2591
    %v2630 = vmul.f32 %v2480, %v2591
    %v2631 = vmul.f32 %v2481, %v2591
    %v2632 = vmul.f32 %v2482, %v2591
    %v2633 = vmul.f32 %v2483, %v2591
    %v2634 = vmul.f32 %v2484, %v2591
    %v2635 = vmul.f32 %v2485, %v2591
    %v2636 = vmul.f32 %v2486, %v2591
    %v2637 = vmul.f32 %v2487, %v2591
    %v2638 = vmul.f32 %v2488, %v2591
    %v2639 = vmul.f32 %v2489, %v2591
    %v2640 = vmul.f32 %v2490, %v2591
    %v2641 = vmul.f32 %v2491, %v2591
    %v2642 = vmul.f32 %v2492, %v2591
    %v2643 = vmul.f32 %v2493, %v2591
    %v2644 = vmul.f32 %v2494, %v2591
    %v2645 = vmul.f32 %v2495, %v2591
    %v2646 = vmul.f32 %v2496, %v2591
    %v2647 = vmul.f32 %v2497, %v2591
    %v2648 = vmul.f32 %v2498, %v2591
    %v2649 = vmul.f32 %v2499, %v2591
    %v2650 = vmul.f32 %v2500, %v2591
    %v2651 = vmul.f32 %v2501, %v2591
    %v2652 = vmul.f32 %v2502, %v2591
    %v2653 = vmul.f32 %v2503, %v2591
    %v2654 = vmul.f32 %v2504, %v2591
    %v2655 = vmul.f32 %v2505, %v2591
    %v2656 = vmul.f32 %v2506, %v2591
    %v2657 = vmul.f32 %v2507, %v2591
    %v2658 = vmul.f32 %v2508, %v2591
    %v2659 = vmul.f32 %v2509, %v2591
    %v2660 = vmul.f32 %v2510, %v2591
    %v2661 = vmul.f32 %v2511, %v2591
    %v2662 = vmul.f32 %v2512, %v2591
    %v2663 = vmul.f32 %v2513, %v2591
    %v2664 = vmul.f32 %v2514, %v2591
    %v2665 = vmul.f32 %v2515, %v2591
    %v2666 = vmul.f32 %v2516, %v2591
    %v2667 = vmul.f32 %v2517, %v2591
    %v2668 = vmul.f32 %v2518, %v2591
    %v2669 = vmul.f32 %v2519, %v2591
    %v2670 = vmul.f32 %v2520, %v2591
    %v2671 = vmul.f32 %v2521, %v2591
    %v2672 = vmul.f32 %v2522, %v2591
    %v2673 = vmul.f32 %v2523, %v2591
    %v2674 = vmul.f32 %v2524, %v2591
    %v2675 = vmul.f32 %v2525, %v2591
    %v2676 = vmul.f32 %v2526, %v2591
    %v2677 = vmul.f32 %v2527, %v2591
    %v2678 = vmul.f32 %v2528, %v2591
    %v2679 = vmul.f32 %v2529, %v2591
    %v2680 = vmul.f32 %v2530, %v2591
    %v2681 = vmul.f32 %v2531, %v2591
    %v2682 = vmul.f32 %v2532, %v2591
    %v2683 = vmul.f32 %v2533, %v2591
    %v2684 = vmul.f32 %v2534, %v2591
    %v2685 = vmul.f32 %v2535, %v2591
    %v2686 = vmul.f32 %v2536, %v2591
    %v2687 = vmul.f32 %v2537, %v2591
    %v2688 = vmul.f32 %v2538, %v2591
    %v2689 = vmul.f32 %v2539, %v2591
    %v2690 = vmul.f32 %v2540, %v2591
    %v2691 = vmul.f32 %v2541, %v2591
    %v2692 = vmul.f32 %v2542, %v2591
    %v2693 = vmul.f32 %v2543, %v2591
    %v2694 = vmul.f32 %v2544, %v2591
    %v2695 = vmul.f32 %v2545, %v2591
    %v2696 = vmul.f32 %v2546, %v2591
    %v2697 = vmul.f32 %v2547, %v2591
    %v2698 = vmul.f32 %v2548, %v2591
    %v2699 = vmul.f32 %v2549, %v2591
    %v2700 = vmul.f32 %v2550, %v2591
    %v2701 = vmul.f32 %v2551, %v2591
    %v2702 = vmul.f32 %v2552, %v2591
    %v2703 = vmul.f32 %v2553, %v2591
    %v2704 = vmul.f32 %v2554, %v2591
    %v2705 = vmul.f32 %v2555, %v2591
    %v2706 = vmul.f32 %v2556, %v2591
    %v2707 = vmul.f32 %v2557, %v2591
    %v2708 = vmul.f32 %v2558, %v2591
    %v2709 = vmul.f32 %v2559, %v2591
    %v2710 = vmul.f32 %v2560, %v2591
    %v2711 = vmul.f32 %v2561, %v2591
    %v2712 = vmul.f32 %v2562, %v2591
    %v2713 = vmul.f32 %v2563, %v2591
    %v2714 = vmul.f32 %v2564, %v2591
    %v2715 = vmul.f32 %v2565, %v2591
    %v2716 = vmul.f32 %v2566, %v2591
    %v2717 = vmul.f32 %v2567, %v2591
    %v2718 = vmul.f32 %v2568, %v2591
    %v2719 = vmul.f32 %v2569, %v2591
    %v2720 = vmul.f32 %v2570, %v2591
    %v2721 = vmul.f32 %v2571, %v2591
    %v2722 = vmul.f32 %v2572, %v2591
    %v2723 = vmul.f32 %v2573, %v2591
    %v2724 = vmul.f32 %v2574, %v2591
    %v2725 = vmul.f32 %v2575, %v2591
    %v2726 = vmul.f32 %v2576, %v2591
    %v2727 = vmul.f32 %v2577, %v2591
    %v2728 = vmul.f32 %v2578, %v2591
    %v2729 = vmul.f32 %v2579, %v2591
    %v2730 = vmul.f32 %v2580, %v2591
    %v2731 = vmul.f32 %v2581, %v2591
    %v2732 = vmul.f32 %v2582, %v2591
    %v2733 = vmul.f32 %v2583, %v2591
    %v2734 = vmul.f32 %v2584, %v2591
    %v2735 = vmul.f32 %v2585, %v2591
    %v2736 = vmul.f32 %v2586, %v2591
    %v2738 = vlaneseq
    %v2739 = vshrl.u32 %v2738, 7
    %v2740 = vsub.s32 0, %v2739
    %v2741 = vrot.slane %v1560, %v2740
    %v2743 = vadd.f32 %v2593, %v2741
    %v2744 = vadd.f32 %v2594, %v2741
    %v2745 = vadd.f32 %v2595, %v2741
    %v2746 = vadd.f32 %v2596, %v2741
    %v2747 = vadd.f32 %v2597, %v2741
    %v2748 = vadd.f32 %v2598, %v2741
    %v2749 = vadd.f32 %v2599, %v2741
    %v2750 = vadd.f32 %v2600, %v2741
    %v2751 = vadd.f32 %v2601, %v2741
    %v2752 = vadd.f32 %v2602, %v2741
    %v2753 = vadd.f32 %v2603, %v2741
    %v2754 = vadd.f32 %v2604, %v2741
    %v2755 = vadd.f32 %v2605, %v2741
    %v2756 = vadd.f32 %v2606, %v2741
    %v2757 = vadd.f32 %v2607, %v2741
    %v2758 = vadd.f32 %v2608, %v2741
    %v2759 = vadd.f32 %v2609, %v2741
    %v2760 = vadd.f32 %v2610, %v2741
    %v2761 = vadd.f32 %v2611, %v2741
    %v2762 = vadd.f32 %v2612, %v2741
    %v2763 = vadd.f32 %v2613, %v2741
    %v2764 = vadd.f32 %v2614, %v2741
    %v2765 = vadd.f32 %v2615, %v2741
    %v2766 = vadd.f32 %v2616, %v2741
    %v2767 = vadd.f32 %v2617, %v2741
    %v2768 = vadd.f32 %v2618, %v2741
    %v2769 = vadd.f32 %v2619, %v2741
    %v2770 = vadd.f32 %v2620, %v2741
    %v2771 = vadd.f32 %v2621, %v2741
    %v2772 = vadd.f32 %v2622, %v2741
    %v2773 = vadd.f32 %v2623, %v2741
    %v2774 = vadd.f32 %v2624, %v2741
    %v2775 = vadd.f32 %v2625, %v2741
    %v2776 = vadd.f32 %v2626, %v2741
    %v2777 = vadd.f32 %v2627, %v2741
    %v2778 = vadd.f32 %v2628, %v2741
    %v2779 = vadd.f32 %v2629, %v2741
    %v2780 = vadd.f32 %v2630, %v2741
    %v2781 = vadd.f32 %v2631, %v2741
    %v2782 = vadd.f32 %v2632, %v2741
    %v2783 = vadd.f32 %v2633, %v2741
    %v2784 = vadd.f32 %v2634, %v2741
    %v2785 = vadd.f32 %v2635, %v2741
    %v2786 = vadd.f32 %v2636, %v2741
    %v2787 = vadd.f32 %v2637, %v2741
    %v2788 = vadd.f32 %v2638, %v2741
    %v2789 = vadd.f32 %v2639, %v2741
    %v2790 = vadd.f32 %v2640, %v2741
    %v2791 = vadd.f32 %v2641, %v2741
    %v2792 = vadd.f32 %v2642, %v2741
    %v2793 = vadd.f32 %v2643, %v2741
    %v2794 = vadd.f32 %v2644, %v2741
    %v2795 = vadd.f32 %v2645, %v2741
    %v2796 = vadd.f32 %v2646, %v2741
    %v2797 = vadd.f32 %v2647, %v2741
    %v2798 = vadd.f32 %v2648, %v2741
    %v2799 = vadd.f32 %v2649, %v2741
    %v2800 = vadd.f32 %v2650, %v2741
    %v2801 = vadd.f32 %v2651, %v2741
    %v2802 = vadd.f32 %v2652, %v2741
    %v2803 = vadd.f32 %v2653, %v2741
    %v2804 = vadd.f32 %v2654, %v2741
    %v2805 = vadd.f32 %v2655, %v2741
    %v2806 = vadd.f32 %v2656, %v2741
    %v2807 = vadd.f32 %v2657, %v2741
    %v2808 = vadd.f32 %v2658, %v2741
    %v2809 = vadd.f32 %v2659, %v2741
    %v2810 = vadd.f32 %v2660, %v2741
    %v2811 = vadd.f32 %v2661, %v2741
    %v2812 = vadd.f32 %v2662, %v2741
    %v2813 = vadd.f32 %v2663, %v2741
    %v2814 = vadd.f32 %v2664, %v2741
    %v2815 = vadd.f32 %v2665, %v2741
    %v2816 = vadd.f32 %v2666, %v2741
    %v2817 = vadd.f32 %v2667, %v2741
    %v2818 = vadd.f32 %v2668, %v2741
    %v2819 = vadd.f32 %v2669, %v2741
    %v2820 = vadd.f32 %v2670, %v2741
    %v2821 = vadd.f32 %v2671, %v2741
    %v2822 = vadd.f32 %v2672, %v2741
    %v2823 = vadd.f32 %v2673, %v2741
    %v2824 = vadd.f32 %v2674, %v2741
    %v2825 = vadd.f32 %v2675, %v2741
    %v2826 = vadd.f32 %v2676, %v2741
    %v2827 = vadd.f32 %v2677, %v2741
    %v2828 = vadd.f32 %v2678, %v2741
    %v2829 = vadd.f32 %v2679, %v2741
    %v2830 = vadd.f32 %v2680, %v2741
    %v2831 = vadd.f32 %v2681, %v2741
    %v2832 = vadd.f32 %v2682, %v2741
    %v2833 = vadd.f32 %v2683, %v2741
    %v2834 = vadd.f32 %v2684, %v2741
    %v2835 = vadd.f32 %v2685, %v2741
    %v2836 = vadd.f32 %v2686, %v2741
    %v2837 = vadd.f32 %v2687, %v2741
    %v2838 = vadd.f32 %v2688, %v2741
    %v2839 = vadd.f32 %v2689, %v2741
    %v2840 = vadd.f32 %v2690, %v2741
    %v2841 = vadd.f32 %v2691, %v2741
    %v2842 = vadd.f32 %v2692, %v2741
    %v2843 = vadd.f32 %v2693, %v2741
    %v2844 = vadd.f32 %v2694, %v2741
    %v2845 = vadd.f32 %v2695, %v2741
    %v2846 = vadd.f32 %v2696, %v2741
    %v2847 = vadd.f32 %v2697, %v2741
    %v2848 = vadd.f32 %v2698, %v2741
    %v2849 = vadd.f32 %v2699, %v2741
    %v2850 = vadd.f32 %v2700, %v2741
    %v2851 = vadd.f32 %v2701, %v2741
    %v2852 = vadd.f32 %v2702, %v2741
    %v2853 = vadd.f32 %v2703, %v2741
    %v2854 = vadd.f32 %v2704, %v2741
    %v2855 = vadd.f32 %v2705, %v2741
    %v2856 = vadd.f32 %v2706, %v2741
    %v2857 = vadd.f32 %v2707, %v2741
    %v2858 = vadd.f32 %v2708, %v2741
    %v2859 = vadd.f32 %v2709, %v2741
    %v2860 = vadd.f32 %v2710, %v2741
    %v2861 = vadd.f32 %v2711, %v2741
    %v2862 = vadd.f32 %v2712, %v2741
    %v2863 = vadd.f32 %v2713, %v2741
    %v2864 = vadd.f32 %v2714, %v2741
    %v2865 = vadd.f32 %v2715, %v2741
    %v2866 = vadd.f32 %v2716, %v2741
    %v2867 = vadd.f32 %v2717, %v2741
    %v2868 = vadd.f32 %v2718, %v2741
    %v2869 = vadd.f32 %v2719, %v2741
    %v2870 = vadd.f32 %v2720, %v2741
    %v2871 = vadd.f32 %v2721, %v2741
    %v2872 = vadd.f32 %v2722, %v2741
    %v2873 = vadd.f32 %v2723, %v2741
    %v2874 = vadd.f32 %v2724, %v2741
    %v2875 = vadd.f32 %v2725, %v2741
    %v2876 = vadd.f32 %v2726, %v2741
    %v2877 = vadd.f32 %v2727, %v2741
    %v2878 = vadd.f32 %v2728, %v2741
    %v2879 = vadd.f32 %v2729, %v2741
    %v2880 = vadd.f32 %v2730, %v2741
    %v2881 = vadd.f32 %v2731, %v2741
    %v2882 = vadd.f32 %v2732, %v2741
    %v2883 = vadd.f32 %v2733, %v2741
    %v2884 = vadd.f32 %v2734, %v2741
    %v2885 = vadd.f32 %v2735, %v2741
    %v2886 = vadd.f32 %v2736, %v2741
    %2887 = vst.msk [vmem:[%s5] sm:$0xff] %vm1561, %v2743
    %2888 = vst.msk [vmem:[%s5 + $0x8] sm:$0xff] %vm1561, %v2744
    %2889 = vst.msk [vmem:[%s5 + $0x10] sm:$0xff] %vm1561, %v2745
    %2890 = vst.msk [vmem:[%s5 + $0x18] sm:$0xff] %vm1561, %v2746
    %2891 = vst.msk [vmem:[%s5 + $0x20] sm:$0xff] %vm1561, %v2747
    %2892 = vst.msk [vmem:[%s5 + $0x28] sm:$0xff] %vm1561, %v2748
    %2893 = vst.msk [vmem:[%s5 + $0x30] sm:$0xff] %vm1561, %v2749
    %2894 = vst.msk [vmem:[%s5 + $0x38] sm:$0xff] %vm1561, %v2750
    %2895 = vst.msk [vmem:[%s5 + $0x40] sm:$0xff] %vm1561, %v2751
    %2896 = vst.msk [vmem:[%s5 + $0x48] sm:$0xff] %vm1561, %v2752
    %2897 = vst.msk [vmem:[%s5 + $0x50] sm:$0xff] %vm1561, %v2753
    %2898 = vst.msk [vmem:[%s5 + $0x58] sm:$0xff] %vm1561, %v2754
    %2899 = vst.msk [vmem:[%s5 + $0x60] sm:$0xff] %vm1561, %v2755
    %2900 = vst.msk [vmem:[%s5 + $0x68] sm:$0xff] %vm1561, %v2756
    %2901 = vst.msk [vmem:[%s5 + $0x70] sm:$0xff] %vm1561, %v2757
    %2902 = vst.msk [vmem:[%s5 + $0x78] sm:$0xff] %vm1561, %v2758
    %2903 = vst.msk [vmem:[%s5 + $0x80] sm:$0xff] %vm1561, %v2759
    %2904 = vst.msk [vmem:[%s5 + $0x88] sm:$0xff] %vm1561, %v2760
    %2905 = vst.msk [vmem:[%s5 + $0x90] sm:$0xff] %vm1561, %v2761
    %2906 = vst.msk [vmem:[%s5 + $0x98] sm:$0xff] %vm1561, %v2762
    %2907 = vst.msk [vmem:[%s5 + $0xa0] sm:$0xff] %vm1561, %v2763
    %2908 = vst.msk [vmem:[%s5 + $0xa8] sm:$0xff] %vm1561, %v2764
    %2909 = vst.msk [vmem:[%s5 + $0xb0] sm:$0xff] %vm1561, %v2765
    %2910 = vst.msk [vmem:[%s5 + $0xb8] sm:$0xff] %vm1561, %v2766
    %2911 = vst.msk [vmem:[%s5 + $0xc0] sm:$0xff] %vm1561, %v2767
    %2912 = vst.msk [vmem:[%s5 + $0xc8] sm:$0xff] %vm1561, %v2768
    %2913 = vst.msk [vmem:[%s5 + $0xd0] sm:$0xff] %vm1561, %v2769
    %2914 = vst.msk [vmem:[%s5 + $0xd8] sm:$0xff] %vm1561, %v2770
    %2915 = vst.msk [vmem:[%s5 + $0xe0] sm:$0xff] %vm1561, %v2771
    %2916 = vst.msk [vmem:[%s5 + $0xe8] sm:$0xff] %vm1561, %v2772
    %2917 = vst.msk [vmem:[%s5 + $0xf0] sm:$0xff] %vm1561, %v2773
    %2918 = vst.msk [vmem:[%s5 + $0xf8] sm:$0xff] %vm1561, %v2774
    %2919 = vst.msk [vmem:[%s5 + $0x100] sm:$0xff] %vm1561, %v2775
    %2920 = vst.msk [vmem:[%s5 + $0x108] sm:$0xff] %vm1561, %v2776
    %2921 = vst.msk [vmem:[%s5 + $0x110] sm:$0xff] %vm1561, %v2777
    %2922 = vst.msk [vmem:[%s5 + $0x118] sm:$0xff] %vm1561, %v2778
    %2923 = vst.msk [vmem:[%s5 + $0x120] sm:$0xff] %vm1561, %v2779
    %2924 = vst.msk [vmem:[%s5 + $0x128] sm:$0xff] %vm1561, %v2780
    %2925 = vst.msk [vmem:[%s5 + $0x130] sm:$0xff] %vm1561, %v2781
    %2926 = vst.msk [vmem:[%s5 + $0x138] sm:$0xff] %vm1561, %v2782
    %2927 = vst.msk [vmem:[%s5 + $0x140] sm:$0xff] %vm1561, %v2783
    %2928 = vst.msk [vmem:[%s5 + $0x148] sm:$0xff] %vm1561, %v2784
    %2929 = vst.msk [vmem:[%s5 + $0x150] sm:$0xff] %vm1561, %v2785
    %2930 = vst.msk [vmem:[%s5 + $0x158] sm:$0xff] %vm1561, %v2786
    %2931 = vst.msk [vmem:[%s5 + $0x160] sm:$0xff] %vm1561, %v2787
    %2932 = vst.msk [vmem:[%s5 + $0x168] sm:$0xff] %vm1561, %v2788
    %2933 = vst.msk [vmem:[%s5 + $0x170] sm:$0xff] %vm1561, %v2789
    %2934 = vst.msk [vmem:[%s5 + $0x178] sm:$0xff] %vm1561, %v2790
    %2935 = vst.msk [vmem:[%s5 + $0x180] sm:$0xff] %vm1561, %v2791
    %2936 = vst.msk [vmem:[%s5 + $0x188] sm:$0xff] %vm1561, %v2792
    %2937 = vst.msk [vmem:[%s5 + $0x190] sm:$0xff] %vm1561, %v2793
    %2938 = vst.msk [vmem:[%s5 + $0x198] sm:$0xff] %vm1561, %v2794
    %2939 = vst.msk [vmem:[%s5 + $0x1a0] sm:$0xff] %vm1561, %v2795
    %2940 = vst.msk [vmem:[%s5 + $0x1a8] sm:$0xff] %vm1561, %v2796
    %2941 = vst.msk [vmem:[%s5 + $0x1b0] sm:$0xff] %vm1561, %v2797
    %2942 = vst.msk [vmem:[%s5 + $0x1b8] sm:$0xff] %vm1561, %v2798
    %2943 = vst.msk [vmem:[%s5 + $0x1c0] sm:$0xff] %vm1561, %v2799
    %2944 = vst.msk [vmem:[%s5 + $0x1c8] sm:$0xff] %vm1561, %v2800
    %2945 = vst.msk [vmem:[%s5 + $0x1d0] sm:$0xff] %vm1561, %v2801
    %2946 = vst.msk [vmem:[%s5 + $0x1d8] sm:$0xff] %vm1561, %v2802
    %2947 = vst.msk [vmem:[%s5 + $0x1e0] sm:$0xff] %vm1561, %v2803
    %2948 = vst.msk [vmem:[%s5 + $0x1e8] sm:$0xff] %vm1561, %v2804
    %2949 = vst.msk [vmem:[%s5 + $0x1f0] sm:$0xff] %vm1561, %v2805
    %2950 = vst.msk [vmem:[%s5 + $0x1f8] sm:$0xff] %vm1561, %v2806
    %2951 = vst.msk [vmem:[%s5 + $0x200] sm:$0xff] %vm1561, %v2807
    %2952 = vst.msk [vmem:[%s5 + $0x208] sm:$0xff] %vm1561, %v2808
    %2953 = vst.msk [vmem:[%s5 + $0x210] sm:$0xff] %vm1561, %v2809
    %2954 = vst.msk [vmem:[%s5 + $0x218] sm:$0xff] %vm1561, %v2810
    %2955 = vst.msk [vmem:[%s5 + $0x220] sm:$0xff] %vm1561, %v2811
    %2956 = vst.msk [vmem:[%s5 + $0x228] sm:$0xff] %vm1561, %v2812
    %2957 = vst.msk [vmem:[%s5 + $0x230] sm:$0xff] %vm1561, %v2813
    %2958 = vst.msk [vmem:[%s5 + $0x238] sm:$0xff] %vm1561, %v2814
    %2959 = vst.msk [vmem:[%s5 + $0x240] sm:$0xff] %vm1561, %v2815
    %2960 = vst.msk [vmem:[%s5 + $0x248] sm:$0xff] %vm1561, %v2816
    %2961 = vst.msk [vmem:[%s5 + $0x250] sm:$0xff] %vm1561, %v2817
    %2962 = vst.msk [vmem:[%s5 + $0x258] sm:$0xff] %vm1561, %v2818
    %2963 = vst.msk [vmem:[%s5 + $0x260] sm:$0xff] %vm1561, %v2819
    %2964 = vst.msk [vmem:[%s5 + $0x268] sm:$0xff] %vm1561, %v2820
    %2965 = vst.msk [vmem:[%s5 + $0x270] sm:$0xff] %vm1561, %v2821
    %2966 = vst.msk [vmem:[%s5 + $0x278] sm:$0xff] %vm1561, %v2822
    %2967 = vst.msk [vmem:[%s5 + $0x280] sm:$0xff] %vm1561, %v2823
    %2968 = vst.msk [vmem:[%s5 + $0x288] sm:$0xff] %vm1561, %v2824
    %2969 = vst.msk [vmem:[%s5 + $0x290] sm:$0xff] %vm1561, %v2825
    %2970 = vst.msk [vmem:[%s5 + $0x298] sm:$0xff] %vm1561, %v2826
    %2971 = vst.msk [vmem:[%s5 + $0x2a0] sm:$0xff] %vm1561, %v2827
    %2972 = vst.msk [vmem:[%s5 + $0x2a8] sm:$0xff] %vm1561, %v2828
    %2973 = vst.msk [vmem:[%s5 + $0x2b0] sm:$0xff] %vm1561, %v2829
    %2974 = vst.msk [vmem:[%s5 + $0x2b8] sm:$0xff] %vm1561, %v2830
    %2975 = vst.msk [vmem:[%s5 + $0x2c0] sm:$0xff] %vm1561, %v2831
    %2976 = vst.msk [vmem:[%s5 + $0x2c8] sm:$0xff] %vm1561, %v2832
    %2977 = vst.msk [vmem:[%s5 + $0x2d0] sm:$0xff] %vm1561, %v2833
    %2978 = vst.msk [vmem:[%s5 + $0x2d8] sm:$0xff] %vm1561, %v2834
    %2979 = vst.msk [vmem:[%s5 + $0x2e0] sm:$0xff] %vm1561, %v2835
    %2980 = vst.msk [vmem:[%s5 + $0x2e8] sm:$0xff] %vm1561, %v2836
    %2981 = vst.msk [vmem:[%s5 + $0x2f0] sm:$0xff] %vm1561, %v2837
    %2982 = vst.msk [vmem:[%s5 + $0x2f8] sm:$0xff] %vm1561, %v2838
    %2983 = vst.msk [vmem:[%s5 + $0x300] sm:$0xff] %vm1561, %v2839
    %2984 = vst.msk [vmem:[%s5 + $0x308] sm:$0xff] %vm1561, %v2840
    %2985 = vst.msk [vmem:[%s5 + $0x310] sm:$0xff] %vm1561, %v2841
    %2986 = vst.msk [vmem:[%s5 + $0x318] sm:$0xff] %vm1561, %v2842
    %2987 = vst.msk [vmem:[%s5 + $0x320] sm:$0xff] %vm1561, %v2843
    %2988 = vst.msk [vmem:[%s5 + $0x328] sm:$0xff] %vm1561, %v2844
    %2989 = vst.msk [vmem:[%s5 + $0x330] sm:$0xff] %vm1561, %v2845
    %2990 = vst.msk [vmem:[%s5 + $0x338] sm:$0xff] %vm1561, %v2846
    %2991 = vst.msk [vmem:[%s5 + $0x340] sm:$0xff] %vm1561, %v2847
    %2992 = vst.msk [vmem:[%s5 + $0x348] sm:$0xff] %vm1561, %v2848
    %2993 = vst.msk [vmem:[%s5 + $0x350] sm:$0xff] %vm1561, %v2849
    %2994 = vst.msk [vmem:[%s5 + $0x358] sm:$0xff] %vm1561, %v2850
    %2995 = vst.msk [vmem:[%s5 + $0x360] sm:$0xff] %vm1561, %v2851
    %2996 = vst.msk [vmem:[%s5 + $0x368] sm:$0xff] %vm1561, %v2852
    %2997 = vst.msk [vmem:[%s5 + $0x370] sm:$0xff] %vm1561, %v2853
    %2998 = vst.msk [vmem:[%s5 + $0x378] sm:$0xff] %vm1561, %v2854
    %2999 = vst.msk [vmem:[%s5 + $0x380] sm:$0xff] %vm1561, %v2855
    %3000 = vst.msk [vmem:[%s5 + $0x388] sm:$0xff] %vm1561, %v2856
    %3001 = vst.msk [vmem:[%s5 + $0x390] sm:$0xff] %vm1561, %v2857
    %3002 = vst.msk [vmem:[%s5 + $0x398] sm:$0xff] %vm1561, %v2858
    %3003 = vst.msk [vmem:[%s5 + $0x3a0] sm:$0xff] %vm1561, %v2859
    %3004 = vst.msk [vmem:[%s5 + $0x3a8] sm:$0xff] %vm1561, %v2860
    %3005 = vst.msk [vmem:[%s5 + $0x3b0] sm:$0xff] %vm1561, %v2861
    %3006 = vst.msk [vmem:[%s5 + $0x3b8] sm:$0xff] %vm1561, %v2862
    %3007 = vst.msk [vmem:[%s5 + $0x3c0] sm:$0xff] %vm1561, %v2863
    %3008 = vst.msk [vmem:[%s5 + $0x3c8] sm:$0xff] %vm1561, %v2864
    %3009 = vst.msk [vmem:[%s5 + $0x3d0] sm:$0xff] %vm1561, %v2865
    %3010 = vst.msk [vmem:[%s5 + $0x3d8] sm:$0xff] %vm1561, %v2866
    %3011 = vst.msk [vmem:[%s5 + $0x3e0] sm:$0xff] %vm1561, %v2867
    %3012 = vst.msk [vmem:[%s5 + $0x3e8] sm:$0xff] %vm1561, %v2868
    %3013 = vst.msk [vmem:[%s5 + $0x3f0] sm:$0xff] %vm1561, %v2869
    %3014 = vst.msk [vmem:[%s5 + $0x3f8] sm:$0xff] %vm1561, %v2870
    %3015 = vst.msk [vmem:[%s5 + $0x400] sm:$0xff] %vm1561, %v2871
    %3016 = vst.msk [vmem:[%s5 + $0x408] sm:$0xff] %vm1561, %v2872
    %3017 = vst.msk [vmem:[%s5 + $0x410] sm:$0xff] %vm1561, %v2873
    %3018 = vst.msk [vmem:[%s5 + $0x418] sm:$0xff] %vm1561, %v2874
    %3019 = vst.msk [vmem:[%s5 + $0x420] sm:$0xff] %vm1561, %v2875
    %3020 = vst.msk [vmem:[%s5 + $0x428] sm:$0xff] %vm1561, %v2876
    %3021 = vst.msk [vmem:[%s5 + $0x430] sm:$0xff] %vm1561, %v2877
    %3022 = vst.msk [vmem:[%s5 + $0x438] sm:$0xff] %vm1561, %v2878
    %3023 = vst.msk [vmem:[%s5 + $0x440] sm:$0xff] %vm1561, %v2879
    %3024 = vst.msk [vmem:[%s5 + $0x448] sm:$0xff] %vm1561, %v2880
    %3025 = vst.msk [vmem:[%s5 + $0x450] sm:$0xff] %vm1561, %v2881
    %3026 = vst.msk [vmem:[%s5 + $0x458] sm:$0xff] %vm1561, %v2882
    %3027 = vst.msk [vmem:[%s5 + $0x460] sm:$0xff] %vm1561, %v2883
    %3028 = vst.msk [vmem:[%s5 + $0x468] sm:$0xff] %vm1561, %v2884
    %3029 = vst.msk [vmem:[%s5 + $0x470] sm:$0xff] %vm1561, %v2885
    %3030 = vst.msk [vmem:[%s5 + $0x478] sm:$0xff] %vm1561, %v2886
    // Predicated region
    $region34: #{mnistnet_forward.7} parent=1 // pred_check
      _
    $region35: #{mnistnet_forward.7} parent=1 // pred_check_branch
      %3032 = sbr.rel (0) target = $region37
    $region36: #{mnistnet_forward.7} parent=1 // pred_region
      _
    $region37: #{mnistnet_forward.7} parent=1 // pred_fallthru
      _
    // Predicated region
    $region38: #{mnistnet_forward.7} parent=1 // pred_check
      _
    $region39: #{mnistnet_forward.7} parent=1 // pred_check_branch
      %3034 = sbr.rel (0) target = $region41
    $region40: #{mnistnet_forward.7} parent=1 // pred_region
      _
    $region41: #{mnistnet_forward.7} parent=1 // pred_fallthru
      _
    %3035 = vsyncpa [#allocation3], 1
    %3036 = vsyncpa [#allocation5], 1

// kernel: mnistnet_forward.9
$region0: #{mnistnet_forward.9}
  #allocation0 [shape = 'u32[]', space=smem, size = 0x4, offset = 0x4, fixed_abs, tag = 'smem constant byte address 0x4 - core index']
  #allocation1 [shape = 'u32[144,128]{1,0:T(1,128)}', space=vmem, size = 0x12000, scoped, tag = 'internal scratch']
  %s0 = inlined_call_operand.vmem [shape: f32[200,32], index: 0, kind: input, shape index: {}]
  %s1 = inlined_call_operand.vmem [shape: f32[200,32], index: 1, kind: input, shape index: {}]
  %s2 = inlined_call_operand.vmem [shape: f32[200,32], index: 2, kind: input, shape index: {}]
  %s3 = inlined_call_operand.vmem [shape: f32[200,32], index: 3, kind: input, shape index: {}]
  %s4 = inlined_call_operand.vmem [shape: f32[200,32], index: 4, kind: output, shape index: {}]
  %s5 = sld [smem:[#allocation0]]
  $region26: #{mnistnet_forward.9} parent=0
    _
  %s7 = ssub.s32 1, %s5
  %s8 = scalar_select 0, %s7, %s5
  // Predicated region
  $region2: #{mnistnet_forward.9} parent=0 // pred_check
    _
  $region3: #{mnistnet_forward.9} parent=0 // pred_check_branch
    %10 = sbr.rel (0) target = $region5
  $region4: #{mnistnet_forward.9} parent=0 // pred_region
    _
  $region5: #{mnistnet_forward.9} parent=0 // pred_fallthru
    _
  // Predicated region
  $region6: #{mnistnet_forward.9} parent=0 // pred_check
    _
  $region7: #{mnistnet_forward.9} parent=0 // pred_check_branch
    %12 = sbr.rel (0) target = $region9
  $region8: #{mnistnet_forward.9} parent=0 // pred_region
    _
  $region9: #{mnistnet_forward.9} parent=0 // pred_fallthru
    _
  // Predicated region
  $region10: #{mnistnet_forward.9} parent=0 // pred_check
    _
  $region11: #{mnistnet_forward.9} parent=0 // pred_check_branch
    %14 = sbr.rel (0) target = $region13
  $region12: #{mnistnet_forward.9} parent=0 // pred_region
    _
  $region13: #{mnistnet_forward.9} parent=0 // pred_fallthru
    _
  // Predicated region
  $region14: #{mnistnet_forward.9} parent=0 // pred_check
    _
  $region15: #{mnistnet_forward.9} parent=0 // pred_check_branch
    %16 = sbr.rel (0) target = $region17
  $region16: #{mnistnet_forward.9} parent=0 // pred_region
    _
  $region17: #{mnistnet_forward.9} parent=0 // pred_fallthru
    _
  %v17 = vld [vmem:[%s0] sm:$0xff]
  %v18 = vld [vmem:[%s0 + $0x8] sm:$0xff]
  %v19 = vld [vmem:[%s0 + $0x10] sm:$0xff]
  %v20 = vld [vmem:[%s0 + $0x18] sm:$0xff]
  %v21 = vld [vmem:[%s0 + $0x20] sm:$0xff]
  %v22 = vld [vmem:[%s0 + $0x28] sm:$0xff]
  %v23 = vld [vmem:[%s0 + $0x30] sm:$0xff]
  %v24 = vld [vmem:[%s0 + $0x38] sm:$0xff]
  %v25 = vld [vmem:[%s0 + $0x40] sm:$0xff]
  %v26 = vld [vmem:[%s0 + $0x48] sm:$0xff]
  %v27 = vld [vmem:[%s0 + $0x50] sm:$0xff]
  %v28 = vld [vmem:[%s0 + $0x58] sm:$0xff]
  %v29 = vld [vmem:[%s0 + $0x60] sm:$0xff]
  %v30 = vld [vmem:[%s0 + $0x68] sm:$0xff]
  %v31 = vld [vmem:[%s0 + $0x70] sm:$0xff]
  %v32 = vld [vmem:[%s0 + $0x78] sm:$0xff]
  %v33 = vld [vmem:[%s0 + $0x80] sm:$0xff]
  %v34 = vld [vmem:[%s0 + $0x88] sm:$0xff]
  %v35 = vld [vmem:[%s0 + $0x90] sm:$0xff]
  %v36 = vld [vmem:[%s0 + $0x98] sm:$0xff]
  %v37 = vld [vmem:[%s0 + $0xa0] sm:$0xff]
  %v38 = vld [vmem:[%s0 + $0xa8] sm:$0xff]
  %v39 = vld [vmem:[%s0 + $0xb0] sm:$0xff]
  %v40 = vld [vmem:[%s0 + $0xb8] sm:$0xff]
  %v41 = vld [vmem:[%s0 + $0xc0] sm:$0xff]
  %v42 = vld [vmem:[%s1] sm:$0xff]
  %v43 = vld [vmem:[%s1 + $0x8] sm:$0xff]
  %v44 = vld [vmem:[%s1 + $0x10] sm:$0xff]
  %v45 = vld [vmem:[%s1 + $0x18] sm:$0xff]
  %v46 = vld [vmem:[%s1 + $0x20] sm:$0xff]
  %v47 = vld [vmem:[%s1 + $0x28] sm:$0xff]
  %v48 = vld [vmem:[%s1 + $0x30] sm:$0xff]
  %v49 = vld [vmem:[%s1 + $0x38] sm:$0xff]
  %v50 = vld [vmem:[%s1 + $0x40] sm:$0xff]
  %v51 = vld [vmem:[%s1 + $0x48] sm:$0xff]
  %v52 = vld [vmem:[%s1 + $0x50] sm:$0xff]
  %v53 = vld [vmem:[%s1 + $0x58] sm:$0xff]
  %v54 = vld [vmem:[%s1 + $0x60] sm:$0xff]
  %v55 = vld [vmem:[%s1 + $0x68] sm:$0xff]
  %v56 = vld [vmem:[%s1 + $0x70] sm:$0xff]
  %v57 = vld [vmem:[%s1 + $0x78] sm:$0xff]
  %v58 = vld [vmem:[%s1 + $0x80] sm:$0xff]
  %v59 = vld [vmem:[%s1 + $0x88] sm:$0xff]
  %v60 = vld [vmem:[%s1 + $0x90] sm:$0xff]
  %v61 = vld [vmem:[%s1 + $0x98] sm:$0xff]
  %v62 = vld [vmem:[%s1 + $0xa0] sm:$0xff]
  %v63 = vld [vmem:[%s1 + $0xa8] sm:$0xff]
  %v64 = vld [vmem:[%s1 + $0xb0] sm:$0xff]
  %v65 = vld [vmem:[%s1 + $0xb8] sm:$0xff]
  %v66 = vld [vmem:[%s1 + $0xc0] sm:$0xff]
  %v67 = vmax.f32 %v17, %v42
  %v68 = vmax.f32 %v18, %v43
  %v69 = vmax.f32 %v19, %v44
  %v70 = vmax.f32 %v20, %v45
  %v71 = vmax.f32 %v21, %v46
  %v72 = vmax.f32 %v22, %v47
  %v73 = vmax.f32 %v23, %v48
  %v74 = vmax.f32 %v24, %v49
  %v75 = vmax.f32 %v25, %v50
  %v76 = vmax.f32 %v26, %v51
  %v77 = vmax.f32 %v27, %v52
  %v78 = vmax.f32 %v28, %v53
  %v79 = vmax.f32 %v29, %v54
  %v80 = vmax.f32 %v30, %v55
  %v81 = vmax.f32 %v31, %v56
  %v82 = vmax.f32 %v32, %v57
  %v83 = vmax.f32 %v33, %v58
  %v84 = vmax.f32 %v34, %v59
  %v85 = vmax.f32 %v35, %v60
  %v86 = vmax.f32 %v36, %v61
  %v87 = vmax.f32 %v37, %v62
  %v88 = vmax.f32 %v38, %v63
  %v89 = vmax.f32 %v39, %v64
  %v90 = vmax.f32 %v40, %v65
  %v91 = vmax.f32 %v41, %v66
  %v92 = vld [vmem:[%s2] sm:$0xff]
  %v93 = vld [vmem:[%s2 + $0x8] sm:$0xff]
  %v94 = vld [vmem:[%s2 + $0x10] sm:$0xff]
  %v95 = vld [vmem:[%s2 + $0x18] sm:$0xff]
  %v96 = vld [vmem:[%s2 + $0x20] sm:$0xff]
  %v97 = vld [vmem:[%s2 + $0x28] sm:$0xff]
  %v98 = vld [vmem:[%s2 + $0x30] sm:$0xff]
  %v99 = vld [vmem:[%s2 + $0x38] sm:$0xff]
  %v100 = vld [vmem:[%s2 + $0x40] sm:$0xff]
  %v101 = vld [vmem:[%s2 + $0x48] sm:$0xff]
  %v102 = vld [vmem:[%s2 + $0x50] sm:$0xff]
  %v103 = vld [vmem:[%s2 + $0x58] sm:$0xff]
  %v104 = vld [vmem:[%s2 + $0x60] sm:$0xff]
  %v105 = vld [vmem:[%s2 + $0x68] sm:$0xff]
  %v106 = vld [vmem:[%s2 + $0x70] sm:$0xff]
  %v107 = vld [vmem:[%s2 + $0x78] sm:$0xff]
  %v108 = vld [vmem:[%s2 + $0x80] sm:$0xff]
  %v109 = vld [vmem:[%s2 + $0x88] sm:$0xff]
  %v110 = vld [vmem:[%s2 + $0x90] sm:$0xff]
  %v111 = vld [vmem:[%s2 + $0x98] sm:$0xff]
  %v112 = vld [vmem:[%s2 + $0xa0] sm:$0xff]
  %v113 = vld [vmem:[%s2 + $0xa8] sm:$0xff]
  %v114 = vld [vmem:[%s2 + $0xb0] sm:$0xff]
  %v115 = vld [vmem:[%s2 + $0xb8] sm:$0xff]
  %v116 = vld [vmem:[%s2 + $0xc0] sm:$0xff]
  %v117 = vld [vmem:[%s3] sm:$0xff]
  %v118 = vld [vmem:[%s3 + $0x8] sm:$0xff]
  %v119 = vld [vmem:[%s3 + $0x10] sm:$0xff]
  %v120 = vld [vmem:[%s3 + $0x18] sm:$0xff]
  %v121 = vld [vmem:[%s3 + $0x20] sm:$0xff]
  %v122 = vld [vmem:[%s3 + $0x28] sm:$0xff]
  %v123 = vld [vmem:[%s3 + $0x30] sm:$0xff]
  %v124 = vld [vmem:[%s3 + $0x38] sm:$0xff]
  %v125 = vld [vmem:[%s3 + $0x40] sm:$0xff]
  %v126 = vld [vmem:[%s3 + $0x48] sm:$0xff]
  %v127 = vld [vmem:[%s3 + $0x50] sm:$0xff]
  %v128 = vld [vmem:[%s3 + $0x58] sm:$0xff]
  %v129 = vld [vmem:[%s3 + $0x60] sm:$0xff]
  %v130 = vld [vmem:[%s3 + $0x68] sm:$0xff]
  %v131 = vld [vmem:[%s3 + $0x70] sm:$0xff]
  %v132 = vld [vmem:[%s3 + $0x78] sm:$0xff]
  %v133 = vld [vmem:[%s3 + $0x80] sm:$0xff]
  %v134 = vld [vmem:[%s3 + $0x88] sm:$0xff]
  %v135 = vld [vmem:[%s3 + $0x90] sm:$0xff]
  %v136 = vld [vmem:[%s3 + $0x98] sm:$0xff]
  %v137 = vld [vmem:[%s3 + $0xa0] sm:$0xff]
  %v138 = vld [vmem:[%s3 + $0xa8] sm:$0xff]
  %v139 = vld [vmem:[%s3 + $0xb0] sm:$0xff]
  %v140 = vld [vmem:[%s3 + $0xb8] sm:$0xff]
  %v141 = vld [vmem:[%s3 + $0xc0] sm:$0xff]
  %v142 = vmax.f32 %v92, %v117
  %v143 = vmax.f32 %v93, %v118
  %v144 = vmax.f32 %v94, %v119
  %v145 = vmax.f32 %v95, %v120
  %v146 = vmax.f32 %v96, %v121
  %v147 = vmax.f32 %v97, %v122
  %v148 = vmax.f32 %v98, %v123
  %v149 = vmax.f32 %v99, %v124
  %v150 = vmax.f32 %v100, %v125
  %v151 = vmax.f32 %v101, %v126
  %v152 = vmax.f32 %v102, %v127
  %v153 = vmax.f32 %v103, %v128
  %v154 = vmax.f32 %v104, %v129
  %v155 = vmax.f32 %v105, %v130
  %v156 = vmax.f32 %v106, %v131
  %v157 = vmax.f32 %v107, %v132
  %v158 = vmax.f32 %v108, %v133
  %v159 = vmax.f32 %v109, %v134
  %v160 = vmax.f32 %v110, %v135
  %v161 = vmax.f32 %v111, %v136
  %v162 = vmax.f32 %v112, %v137
  %v163 = vmax.f32 %v113, %v138
  %v164 = vmax.f32 %v114, %v139
  %v165 = vmax.f32 %v115, %v140
  %v166 = vmax.f32 %v116, %v141
  %v167 = vmax.f32 %v67, %v142
  %v168 = vmax.f32 %v68, %v143
  %v169 = vmax.f32 %v69, %v144
  %v170 = vmax.f32 %v70, %v145
  %v171 = vmax.f32 %v71, %v146
  %v172 = vmax.f32 %v72, %v147
  %v173 = vmax.f32 %v73, %v148
  %v174 = vmax.f32 %v74, %v149
  %v175 = vmax.f32 %v75, %v150
  %v176 = vmax.f32 %v76, %v151
  %v177 = vmax.f32 %v77, %v152
  %v178 = vmax.f32 %v78, %v153
  %v179 = vmax.f32 %v79, %v154
  %v180 = vmax.f32 %v80, %v155
  %v181 = vmax.f32 %v81, %v156
  %v182 = vmax.f32 %v82, %v157
  %v183 = vmax.f32 %v83, %v158
  %v184 = vmax.f32 %v84, %v159
  %v185 = vmax.f32 %v85, %v160
  %v186 = vmax.f32 %v86, %v161
  %v187 = vmax.f32 %v87, %v162
  %v188 = vmax.f32 %v88, %v163
  %v189 = vmax.f32 %v89, %v164
  %v190 = vmax.f32 %v90, %v165
  %v191 = vmax.f32 %v91, %v166
  %vm192 = vcmask 261120
  %193 = vst.msk [vmem:[%s4] sm:$0xff] %vm192, %v167
  %194 = vst.msk [vmem:[%s4 + $0x8] sm:$0xff] %vm192, %v168
  %195 = vst.msk [vmem:[%s4 + $0x10] sm:$0xff] %vm192, %v169
  %196 = vst.msk [vmem:[%s4 + $0x18] sm:$0xff] %vm192, %v170
  %197 = vst.msk [vmem:[%s4 + $0x20] sm:$0xff] %vm192, %v171
  %198 = vst.msk [vmem:[%s4 + $0x28] sm:$0xff] %vm192, %v172
  %199 = vst.msk [vmem:[%s4 + $0x30] sm:$0xff] %vm192, %v173
  %200 = vst.msk [vmem:[%s4 + $0x38] sm:$0xff] %vm192, %v174
  %201 = vst.msk [vmem:[%s4 + $0x40] sm:$0xff] %vm192, %v175
  %202 = vst.msk [vmem:[%s4 + $0x48] sm:$0xff] %vm192, %v176
  %203 = vst.msk [vmem:[%s4 + $0x50] sm:$0xff] %vm192, %v177
  %204 = vst.msk [vmem:[%s4 + $0x58] sm:$0xff] %vm192, %v178
  %205 = vst.msk [vmem:[%s4 + $0x60] sm:$0xff] %vm192, %v179
  %206 = vst.msk [vmem:[%s4 + $0x68] sm:$0xff] %vm192, %v180
  %207 = vst.msk [vmem:[%s4 + $0x70] sm:$0xff] %vm192, %v181
  %208 = vst.msk [vmem:[%s4 + $0x78] sm:$0xff] %vm192, %v182
  %209 = vst.msk [vmem:[%s4 + $0x80] sm:$0xff] %vm192, %v183
  %210 = vst.msk [vmem:[%s4 + $0x88] sm:$0xff] %vm192, %v184
  %211 = vst.msk [vmem:[%s4 + $0x90] sm:$0xff] %vm192, %v185
  %212 = vst.msk [vmem:[%s4 + $0x98] sm:$0xff] %vm192, %v186
  %213 = vst.msk [vmem:[%s4 + $0xa0] sm:$0xff] %vm192, %v187
  %214 = vst.msk [vmem:[%s4 + $0xa8] sm:$0xff] %vm192, %v188
  %215 = vst.msk [vmem:[%s4 + $0xb0] sm:$0xff] %vm192, %v189
  %216 = vst.msk [vmem:[%s4 + $0xb8] sm:$0xff] %vm192, %v190
  %217 = vst.msk [vmem:[%s4 + $0xc0] sm:$0xff] %vm192, %v191
  // Predicated region
  $region18: #{mnistnet_forward.9} parent=0 // pred_check
    _
  $region19: #{mnistnet_forward.9} parent=0 // pred_check_branch
    %219 = sbr.rel (0) target = $region21
  $region20: #{mnistnet_forward.9} parent=0 // pred_region
    _
  $region21: #{mnistnet_forward.9} parent=0 // pred_fallthru
    _
  // Predicated region
  $region22: #{mnistnet_forward.9} parent=0 // pred_check
    _
  $region23: #{mnistnet_forward.9} parent=0 // pred_check_branch
    %221 = sbr.rel (0) target = $region25
  $region24: #{mnistnet_forward.9} parent=0 // pred_region
    _
  $region25: #{mnistnet_forward.9} parent=0 // pred_fallthru
    _

// kernel: mnistnet_forward.8
$region0: #{mnistnet_forward.8}
  #allocation0 [shape = 'u32[]', space=smem, size = 0x4, offset = 0x4, fixed_abs, tag = 'smem constant byte address 0x4 - core index']
  #allocation1 [shape = 'u32[144,128]{1,0:T(1,128)}', space=vmem, size = 0x12000, scoped, tag = 'internal scratch']
  %s0 = inlined_call_operand.vmem [shape: bf16[800,800], index: 0, kind: input, shape index: {}]
  %s1 = inlined_call_operand.vmem [shape: bf16[800,32], index: 1, kind: input, shape index: {}]
  %s2 = inlined_call_operand.vmem [shape: f32[1,32], index: 2, kind: input, shape index: {}]
  %s3 = inlined_call_operand.vmem [shape: f32[1,32], index: 3, kind: input, shape index: {}]
  %s4 = inlined_call_operand.vmem [shape: f32[1,32], index: 4, kind: input, shape index: {}]
  %s5 = inlined_call_operand.vmem [shape: f32[800,32], index: 5, kind: output, shape index: {}]
  %s6 = sld [smem:[#allocation0]]
  $region30: #{mnistnet_forward.8} parent=0
    _
  %s8 = ssub.s32 1, %s6
  %s9 = scalar_select 0, %s8, %s6
  // Predicated region
  $region2: #{mnistnet_forward.8} parent=0 // pred_check
    _
  $region3: #{mnistnet_forward.8} parent=0 // pred_check_branch
    %11 = sbr.rel (0) target = $region5
  $region4: #{mnistnet_forward.8} parent=0 // pred_region
    _
  $region5: #{mnistnet_forward.8} parent=0 // pred_fallthru
    _
  // Predicated region
  $region6: #{mnistnet_forward.8} parent=0 // pred_check
    _
  $region7: #{mnistnet_forward.8} parent=0 // pred_check_branch
    %13 = sbr.rel (0) target = $region9
  $region8: #{mnistnet_forward.8} parent=0 // pred_region
    _
  $region9: #{mnistnet_forward.8} parent=0 // pred_fallthru
    _
  // Predicated region
  $region10: #{mnistnet_forward.8} parent=0 // pred_check
    _
  $region11: #{mnistnet_forward.8} parent=0 // pred_check_branch
    %15 = sbr.rel (0) target = $region13
  $region12: #{mnistnet_forward.8} parent=0 // pred_region
    _
  $region13: #{mnistnet_forward.8} parent=0 // pred_fallthru
    _
  // Predicated region
  $region14: #{mnistnet_forward.8} parent=0 // pred_check
    _
  $region15: #{mnistnet_forward.8} parent=0 // pred_check_branch
    %17 = sbr.rel (0) target = $region17
  $region16: #{mnistnet_forward.8} parent=0 // pred_region
    _
  $region17: #{mnistnet_forward.8} parent=0 // pred_fallthru
    _
  // Predicated region
  $region18: #{mnistnet_forward.8} parent=0 // pred_check
    _
  $region19: #{mnistnet_forward.8} parent=0 // pred_check_branch
    %19 = sbr.rel (0) target = $region21
  $region20: #{mnistnet_forward.8} parent=0 // pred_region
    _
  $region21: #{mnistnet_forward.8} parent=0 // pred_fallthru
    _
  %v21 = vld [vmem:[%s0] sm:$0xff]
  %v22 = vld [vmem:[%s0 + $0x8] sm:$0xff]
  %v23 = vld [vmem:[%s0 + $0x10] sm:$0xff]
  %v24 = vld [vmem:[%s0 + $0x18] sm:$0xf]
  %v25 = vld [vmem:[%s0 + $0x1c] sm:$0xff]
  %v26 = vld [vmem:[%s0 + $0x24] sm:$0xff]
  %v27 = vld [vmem:[%s0 + $0x2c] sm:$0xff]
  %v28 = vld [vmem:[%s0 + $0x34] sm:$0xf]
  %v29 = vld [vmem:[%s0 + $0x38] sm:$0xff]
  %v30 = vld [vmem:[%s0 + $0x40] sm:$0xff]
  %v31 = vld [vmem:[%s0 + $0x48] sm:$0xff]
  %v32 = vld [vmem:[%s0 + $0x50] sm:$0xf]
  %v33 = vld [vmem:[%s0 + $0x54] sm:$0xff]
  %v34 = vld [vmem:[%s0 + $0x5c] sm:$0xff]
  %v35 = vld [vmem:[%s0 + $0x64] sm:$0xff]
  %v36 = vld [vmem:[%s0 + $0x6c] sm:$0xf]
  %v37 = vld [vmem:[%s0 + $0x70] sm:$0xff]
  %v38 = vld [vmem:[%s0 + $0x78] sm:$0xff]
  %v39 = vld [vmem:[%s0 + $0x80] sm:$0xff]
  %v40 = vld [vmem:[%s0 + $0x88] sm:$0xf]
  %v41 = vld [vmem:[%s0 + $0x8c] sm:$0xff]
  %v42 = vld [vmem:[%s0 + $0x94] sm:$0xff]
  %v43 = vld [vmem:[%s0 + $0x9c] sm:$0xff]
  %v44 = vld [vmem:[%s0 + $0xa4] sm:$0xf]
  %v45 = vld [vmem:[%s0 + $0xa8] sm:$0xff]
  %v46 = vld [vmem:[%s0 + $0xb0] sm:$0xff]
  %v47 = vld [vmem:[%s0 + $0xb8] sm:$0xff]
  %v48 = vld [vmem:[%s0 + $0xc0] sm:$0xf]
  %v49 = vld [vmem:[%s0 + $0xc4] sm:$0xff]
  %v50 = vld [vmem:[%s0 + $0xcc] sm:$0xff]
  %v51 = vld [vmem:[%s0 + $0xd4] sm:$0xff]
  %v52 = vld [vmem:[%s0 + $0xdc] sm:$0xf]
  %v53 = vld [vmem:[%s0 + $0xe0] sm:$0xff]
  %v54 = vld [vmem:[%s0 + $0xe8] sm:$0xff]
  %v55 = vld [vmem:[%s0 + $0xf0] sm:$0xff]
  %v56 = vld [vmem:[%s0 + $0xf8] sm:$0xf]
  %v57 = vld [vmem:[%s0 + $0xfc] sm:$0xff]
  %v58 = vld [vmem:[%s0 + $0x104] sm:$0xff]
  %v59 = vld [vmem:[%s0 + $0x10c] sm:$0xff]
  %v60 = vld [vmem:[%s0 + $0x114] sm:$0xf]
  %v61 = vld [vmem:[%s0 + $0x118] sm:$0xff]
  %v62 = vld [vmem:[%s0 + $0x120] sm:$0xff]
  %v63 = vld [vmem:[%s0 + $0x128] sm:$0xff]
  %v64 = vld [vmem:[%s0 + $0x130] sm:$0xf]
  %v65 = vld [vmem:[%s0 + $0x134] sm:$0xff]
  %v66 = vld [vmem:[%s0 + $0x13c] sm:$0xff]
  %v67 = vld [vmem:[%s0 + $0x144] sm:$0xff]
  %v68 = vld [vmem:[%s0 + $0x14c] sm:$0xf]
  %v69 = vld [vmem:[%s0 + $0x150] sm:$0xff]
  %v70 = vld [vmem:[%s0 + $0x158] sm:$0xff]
  %v71 = vld [vmem:[%s0 + $0x160] sm:$0xff]
  %v72 = vld [vmem:[%s0 + $0x168] sm:$0xf]
  %v73 = vld [vmem:[%s0 + $0x16c] sm:$0xff]
  %v74 = vld [vmem:[%s0 + $0x174] sm:$0xff]
  %v75 = vld [vmem:[%s0 + $0x17c] sm:$0xff]
  %v76 = vld [vmem:[%s0 + $0x184] sm:$0xf]
  %v77 = vld [vmem:[%s0 + $0x188] sm:$0xff]
  %v78 = vld [vmem:[%s0 + $0x190] sm:$0xff]
  %v79 = vld [vmem:[%s0 + $0x198] sm:$0xff]
  %v80 = vld [vmem:[%s0 + $0x1a0] sm:$0xf]
  %v81 = vld [vmem:[%s0 + $0x1a4] sm:$0xff]
  %v82 = vld [vmem:[%s0 + $0x1ac] sm:$0xff]
  %v83 = vld [vmem:[%s0 + $0x1b4] sm:$0xff]
  %v84 = vld [vmem:[%s0 + $0x1bc] sm:$0xf]
  %v85 = vld [vmem:[%s0 + $0x1c0] sm:$0xff]
  %v86 = vld [vmem:[%s0 + $0x1c8] sm:$0xff]
  %v87 = vld [vmem:[%s0 + $0x1d0] sm:$0xff]
  %v88 = vld [vmem:[%s0 + $0x1d8] sm:$0xf]
  %v89 = vld [vmem:[%s0 + $0x1dc] sm:$0xff]
  %v90 = vld [vmem:[%s0 + $0x1e4] sm:$0xff]
  %v91 = vld [vmem:[%s0 + $0x1ec] sm:$0xff]
  %v92 = vld [vmem:[%s0 + $0x1f4] sm:$0xf]
  %v93 = vld [vmem:[%s0 + $0x1f8] sm:$0xff]
  %v94 = vld [vmem:[%s0 + $0x200] sm:$0xff]
  %v95 = vld [vmem:[%s0 + $0x208] sm:$0xff]
  %v96 = vld [vmem:[%s0 + $0x210] sm:$0xf]
  %v97 = vld [vmem:[%s0 + $0x214] sm:$0xff]
  %v98 = vld [vmem:[%s0 + $0x21c] sm:$0xff]
  %v99 = vld [vmem:[%s0 + $0x224] sm:$0xff]
  %v100 = vld [vmem:[%s0 + $0x22c] sm:$0xf]
  %v101 = vld [vmem:[%s0 + $0x230] sm:$0xff]
  %v102 = vld [vmem:[%s0 + $0x238] sm:$0xff]
  %v103 = vld [vmem:[%s0 + $0x240] sm:$0xff]
  %v104 = vld [vmem:[%s0 + $0x248] sm:$0xf]
  %v105 = vld [vmem:[%s0 + $0x24c] sm:$0xff]
  %v106 = vld [vmem:[%s0 + $0x254] sm:$0xff]
  %v107 = vld [vmem:[%s0 + $0x25c] sm:$0xff]
  %v108 = vld [vmem:[%s0 + $0x264] sm:$0xf]
  %v109 = vld [vmem:[%s0 + $0x268] sm:$0xff]
  %v110 = vld [vmem:[%s0 + $0x270] sm:$0xff]
  %v111 = vld [vmem:[%s0 + $0x278] sm:$0xff]
  %v112 = vld [vmem:[%s0 + $0x280] sm:$0xf]
  %v113 = vld [vmem:[%s0 + $0x284] sm:$0xff]
  %v114 = vld [vmem:[%s0 + $0x28c] sm:$0xff]
  %v115 = vld [vmem:[%s0 + $0x294] sm:$0xff]
  %v116 = vld [vmem:[%s0 + $0x29c] sm:$0xf]
  %v117 = vld [vmem:[%s0 + $0x2a0] sm:$0xff]
  %v118 = vld [vmem:[%s0 + $0x2a8] sm:$0xff]
  %v119 = vld [vmem:[%s0 + $0x2b0] sm:$0xff]
  %v120 = vld [vmem:[%s0 + $0x2b8] sm:$0xf]
  %v121 = vld [vmem:[%s0 + $0x2bc] sm:$0xff]
  %v122 = vld [vmem:[%s0 + $0x2c4] sm:$0xff]
  %v123 = vld [vmem:[%s0 + $0x2cc] sm:$0xff]
  %v124 = vld [vmem:[%s0 + $0x2d4] sm:$0xf]
  %v125 = vld [vmem:[%s0 + $0x2d8] sm:$0xff]
  %v126 = vld [vmem:[%s0 + $0x2e0] sm:$0xff]
  %v127 = vld [vmem:[%s0 + $0x2e8] sm:$0xff]
  %v128 = vld [vmem:[%s0 + $0x2f0] sm:$0xf]
  %v129 = vld [vmem:[%s0 + $0x2f4] sm:$0xff]
  %v130 = vld [vmem:[%s0 + $0x2fc] sm:$0xff]
  %v131 = vld [vmem:[%s0 + $0x304] sm:$0xff]
  %v132 = vld [vmem:[%s0 + $0x30c] sm:$0xf]
  %v133 = vld [vmem:[%s0 + $0x310] sm:$0xff]
  %v134 = vld [vmem:[%s0 + $0x318] sm:$0xff]
  %v135 = vld [vmem:[%s0 + $0x320] sm:$0xff]
  %v136 = vld [vmem:[%s0 + $0x328] sm:$0xf]
  %v137 = vld [vmem:[%s0 + $0x32c] sm:$0xff]
  %v138 = vld [vmem:[%s0 + $0x334] sm:$0xff]
  %v139 = vld [vmem:[%s0 + $0x33c] sm:$0xff]
  %v140 = vld [vmem:[%s0 + $0x344] sm:$0xf]
  %v141 = vld [vmem:[%s0 + $0x348] sm:$0xff]
  %v142 = vld [vmem:[%s0 + $0x350] sm:$0xff]
  %v143 = vld [vmem:[%s0 + $0x358] sm:$0xff]
  %v144 = vld [vmem:[%s0 + $0x360] sm:$0xf]
  %v145 = vld [vmem:[%s0 + $0x364] sm:$0xff]
  %v146 = vld [vmem:[%s0 + $0x36c] sm:$0xff]
  %v147 = vld [vmem:[%s0 + $0x374] sm:$0xff]
  %v148 = vld [vmem:[%s0 + $0x37c] sm:$0xf]
  %v149 = vld [vmem:[%s0 + $0x380] sm:$0xff]
  %v150 = vld [vmem:[%s0 + $0x388] sm:$0xff]
  %v151 = vld [vmem:[%s0 + $0x390] sm:$0xff]
  %v152 = vld [vmem:[%s0 + $0x398] sm:$0xf]
  %v153 = vld [vmem:[%s0 + $0x39c] sm:$0xff]
  %v154 = vld [vmem:[%s0 + $0x3a4] sm:$0xff]
  %v155 = vld [vmem:[%s0 + $0x3ac] sm:$0xff]
  %v156 = vld [vmem:[%s0 + $0x3b4] sm:$0xf]
  %v157 = vld [vmem:[%s0 + $0x3b8] sm:$0xff]
  %v158 = vld [vmem:[%s0 + $0x3c0] sm:$0xff]
  %v159 = vld [vmem:[%s0 + $0x3c8] sm:$0xff]
  %v160 = vld [vmem:[%s0 + $0x3d0] sm:$0xf]
  %v161 = vld [vmem:[%s0 + $0x3d4] sm:$0xff]
  %v162 = vld [vmem:[%s0 + $0x3dc] sm:$0xff]
  %v163 = vld [vmem:[%s0 + $0x3e4] sm:$0xff]
  %v164 = vld [vmem:[%s0 + $0x3ec] sm:$0xf]
  %v165 = vld [vmem:[%s0 + $0x3f0] sm:$0xff]
  %v166 = vld [vmem:[%s0 + $0x3f8] sm:$0xff]
  %v167 = vld [vmem:[%s0 + $0x400] sm:$0xff]
  %v168 = vld [vmem:[%s0 + $0x408] sm:$0xf]
  %v169 = vld [vmem:[%s0 + $0x40c] sm:$0xff]
  %v170 = vld [vmem:[%s0 + $0x414] sm:$0xff]
  %v171 = vld [vmem:[%s0 + $0x41c] sm:$0xff]
  %v172 = vld [vmem:[%s0 + $0x424] sm:$0xf]
  %v173 = vld [vmem:[%s0 + $0x428] sm:$0xff]
  %v174 = vld [vmem:[%s0 + $0x430] sm:$0xff]
  %v175 = vld [vmem:[%s0 + $0x438] sm:$0xff]
  %v176 = vld [vmem:[%s0 + $0x440] sm:$0xf]
  %v177 = vld [vmem:[%s0 + $0x444] sm:$0xff]
  %v178 = vld [vmem:[%s0 + $0x44c] sm:$0xff]
  %v179 = vld [vmem:[%s0 + $0x454] sm:$0xff]
  %v180 = vld [vmem:[%s0 + $0x45c] sm:$0xf]
  %v181 = vld [vmem:[%s0 + $0x460] sm:$0xff]
  %v182 = vld [vmem:[%s0 + $0x468] sm:$0xff]
  %v183 = vld [vmem:[%s0 + $0x470] sm:$0xff]
  %v184 = vld [vmem:[%s0 + $0x478] sm:$0xf]
  %v185 = vld [vmem:[%s0 + $0x47c] sm:$0xff]
  %v186 = vld [vmem:[%s0 + $0x484] sm:$0xff]
  %v187 = vld [vmem:[%s0 + $0x48c] sm:$0xff]
  %v188 = vld [vmem:[%s0 + $0x494] sm:$0xf]
  %v189 = vld [vmem:[%s0 + $0x498] sm:$0xff]
  %v190 = vld [vmem:[%s0 + $0x4a0] sm:$0xff]
  %v191 = vld [vmem:[%s0 + $0x4a8] sm:$0xff]
  %v192 = vld [vmem:[%s0 + $0x4b0] sm:$0xf]
  %v193 = vld [vmem:[%s0 + $0x4b4] sm:$0xff]
  %v194 = vld [vmem:[%s0 + $0x4bc] sm:$0xff]
  %v195 = vld [vmem:[%s0 + $0x4c4] sm:$0xff]
  %v196 = vld [vmem:[%s0 + $0x4cc] sm:$0xf]
  %v197 = vld [vmem:[%s0 + $0x4d0] sm:$0xff]
  %v198 = vld [vmem:[%s0 + $0x4d8] sm:$0xff]
  %v199 = vld [vmem:[%s0 + $0x4e0] sm:$0xff]
  %v200 = vld [vmem:[%s0 + $0x4e8] sm:$0xf]
  %v201 = vld [vmem:[%s0 + $0x4ec] sm:$0xff]
  %v202 = vld [vmem:[%s0 + $0x4f4] sm:$0xff]
  %v203 = vld [vmem:[%s0 + $0x4fc] sm:$0xff]
  %v204 = vld [vmem:[%s0 + $0x504] sm:$0xf]
  %v205 = vld [vmem:[%s0 + $0x508] sm:$0xff]
  %v206 = vld [vmem:[%s0 + $0x510] sm:$0xff]
  %v207 = vld [vmem:[%s0 + $0x518] sm:$0xff]
  %v208 = vld [vmem:[%s0 + $0x520] sm:$0xf]
  %v209 = vld [vmem:[%s0 + $0x524] sm:$0xff]
  %v210 = vld [vmem:[%s0 + $0x52c] sm:$0xff]
  %v211 = vld [vmem:[%s0 + $0x534] sm:$0xff]
  %v212 = vld [vmem:[%s0 + $0x53c] sm:$0xf]
  %v213 = vld [vmem:[%s0 + $0x540] sm:$0xff]
  %v214 = vld [vmem:[%s0 + $0x548] sm:$0xff]
  %v215 = vld [vmem:[%s0 + $0x550] sm:$0xff]
  %v216 = vld [vmem:[%s0 + $0x558] sm:$0xf]
  %v217 = vld [vmem:[%s0 + $0x55c] sm:$0xff]
  %v218 = vld [vmem:[%s0 + $0x564] sm:$0xff]
  %v219 = vld [vmem:[%s0 + $0x56c] sm:$0xff]
  %v220 = vld [vmem:[%s0 + $0x574] sm:$0xf]
  %v221 = vld [vmem:[%s0 + $0x578] sm:$0xff]
  %v222 = vld [vmem:[%s0 + $0x580] sm:$0xff]
  %v223 = vld [vmem:[%s0 + $0x588] sm:$0xff]
  %v224 = vld [vmem:[%s0 + $0x590] sm:$0xf]
  %v225 = vld [vmem:[%s0 + $0x594] sm:$0xff]
  %v226 = vld [vmem:[%s0 + $0x59c] sm:$0xff]
  %v227 = vld [vmem:[%s0 + $0x5a4] sm:$0xff]
  %v228 = vld [vmem:[%s0 + $0x5ac] sm:$0xf]
  %v229 = vld [vmem:[%s0 + $0x5b0] sm:$0xff]
  %v230 = vld [vmem:[%s0 + $0x5b8] sm:$0xff]
  %v231 = vld [vmem:[%s0 + $0x5c0] sm:$0xff]
  %v232 = vld [vmem:[%s0 + $0x5c8] sm:$0xf]
  %v233 = vld [vmem:[%s0 + $0x5cc] sm:$0xff]
  %v234 = vld [vmem:[%s0 + $0x5d4] sm:$0xff]
  %v235 = vld [vmem:[%s0 + $0x5dc] sm:$0xff]
  %v236 = vld [vmem:[%s0 + $0x5e4] sm:$0xf]
  %v237 = vld [vmem:[%s0 + $0x5e8] sm:$0xff]
  %v238 = vld [vmem:[%s0 + $0x5f0] sm:$0xff]
  %v239 = vld [vmem:[%s0 + $0x5f8] sm:$0xff]
  %v240 = vld [vmem:[%s0 + $0x600] sm:$0xf]
  %v241 = vld [vmem:[%s0 + $0x604] sm:$0xff]
  %v242 = vld [vmem:[%s0 + $0x60c] sm:$0xff]
  %v243 = vld [vmem:[%s0 + $0x614] sm:$0xff]
  %v244 = vld [vmem:[%s0 + $0x61c] sm:$0xf]
  %v245 = vld [vmem:[%s0 + $0x620] sm:$0xff]
  %v246 = vld [vmem:[%s0 + $0x628] sm:$0xff]
  %v247 = vld [vmem:[%s0 + $0x630] sm:$0xff]
  %v248 = vld [vmem:[%s0 + $0x638] sm:$0xf]
  %v249 = vld [vmem:[%s0 + $0x63c] sm:$0xff]
  %v250 = vld [vmem:[%s0 + $0x644] sm:$0xff]
  %v251 = vld [vmem:[%s0 + $0x64c] sm:$0xff]
  %v252 = vld [vmem:[%s0 + $0x654] sm:$0xf]
  %v253 = vld [vmem:[%s0 + $0x658] sm:$0xff]
  %v254 = vld [vmem:[%s0 + $0x660] sm:$0xff]
  %v255 = vld [vmem:[%s0 + $0x668] sm:$0xff]
  %v256 = vld [vmem:[%s0 + $0x670] sm:$0xf]
  %v257 = vld [vmem:[%s0 + $0x674] sm:$0xff]
  %v258 = vld [vmem:[%s0 + $0x67c] sm:$0xff]
  %v259 = vld [vmem:[%s0 + $0x684] sm:$0xff]
  %v260 = vld [vmem:[%s0 + $0x68c] sm:$0xf]
  %v261 = vld [vmem:[%s0 + $0x690] sm:$0xff]
  %v262 = vld [vmem:[%s0 + $0x698] sm:$0xff]
  %v263 = vld [vmem:[%s0 + $0x6a0] sm:$0xff]
  %v264 = vld [vmem:[%s0 + $0x6a8] sm:$0xf]
  %v265 = vld [vmem:[%s0 + $0x6ac] sm:$0xff]
  %v266 = vld [vmem:[%s0 + $0x6b4] sm:$0xff]
  %v267 = vld [vmem:[%s0 + $0x6bc] sm:$0xff]
  %v268 = vld [vmem:[%s0 + $0x6c4] sm:$0xf]
  %v269 = vld [vmem:[%s0 + $0x6c8] sm:$0xff]
  %v270 = vld [vmem:[%s0 + $0x6d0] sm:$0xff]
  %v271 = vld [vmem:[%s0 + $0x6d8] sm:$0xff]
  %v272 = vld [vmem:[%s0 + $0x6e0] sm:$0xf]
  %v273 = vld [vmem:[%s0 + $0x6e4] sm:$0xff]
  %v274 = vld [vmem:[%s0 + $0x6ec] sm:$0xff]
  %v275 = vld [vmem:[%s0 + $0x6f4] sm:$0xff]
  %v276 = vld [vmem:[%s0 + $0x6fc] sm:$0xf]
  %v277 = vld [vmem:[%s0 + $0x700] sm:$0xff]
  %v278 = vld [vmem:[%s0 + $0x708] sm:$0xff]
  %v279 = vld [vmem:[%s0 + $0x710] sm:$0xff]
  %v280 = vld [vmem:[%s0 + $0x718] sm:$0xf]
  %v281 = vld [vmem:[%s0 + $0x71c] sm:$0xff]
  %v282 = vld [vmem:[%s0 + $0x724] sm:$0xff]
  %v283 = vld [vmem:[%s0 + $0x72c] sm:$0xff]
  %v284 = vld [vmem:[%s0 + $0x734] sm:$0xf]
  %v285 = vld [vmem:[%s0 + $0x738] sm:$0xff]
  %v286 = vld [vmem:[%s0 + $0x740] sm:$0xff]
  %v287 = vld [vmem:[%s0 + $0x748] sm:$0xff]
  %v288 = vld [vmem:[%s0 + $0x750] sm:$0xf]
  %v289 = vld [vmem:[%s0 + $0x754] sm:$0xff]
  %v290 = vld [vmem:[%s0 + $0x75c] sm:$0xff]
  %v291 = vld [vmem:[%s0 + $0x764] sm:$0xff]
  %v292 = vld [vmem:[%s0 + $0x76c] sm:$0xf]
  %v293 = vld [vmem:[%s0 + $0x770] sm:$0xff]
  %v294 = vld [vmem:[%s0 + $0x778] sm:$0xff]
  %v295 = vld [vmem:[%s0 + $0x780] sm:$0xff]
  %v296 = vld [vmem:[%s0 + $0x788] sm:$0xf]
  %v297 = vld [vmem:[%s0 + $0x78c] sm:$0xff]
  %v298 = vld [vmem:[%s0 + $0x794] sm:$0xff]
  %v299 = vld [vmem:[%s0 + $0x79c] sm:$0xff]
  %v300 = vld [vmem:[%s0 + $0x7a4] sm:$0xf]
  %v301 = vld [vmem:[%s0 + $0x7a8] sm:$0xff]
  %v302 = vld [vmem:[%s0 + $0x7b0] sm:$0xff]
  %v303 = vld [vmem:[%s0 + $0x7b8] sm:$0xff]
  %v304 = vld [vmem:[%s0 + $0x7c0] sm:$0xf]
  %v305 = vld [vmem:[%s0 + $0x7c4] sm:$0xff]
  %v306 = vld [vmem:[%s0 + $0x7cc] sm:$0xff]
  %v307 = vld [vmem:[%s0 + $0x7d4] sm:$0xff]
  %v308 = vld [vmem:[%s0 + $0x7dc] sm:$0xf]
  %v309 = vld [vmem:[%s0 + $0x7e0] sm:$0xff]
  %v310 = vld [vmem:[%s0 + $0x7e8] sm:$0xff]
  %v311 = vld [vmem:[%s0 + $0x7f0] sm:$0xff]
  %v312 = vld [vmem:[%s0 + $0x7f8] sm:$0xf]
  %v313 = vld [vmem:[%s0 + $0x7fc] sm:$0xff]
  %v314 = vld [vmem:[%s0 + $0x804] sm:$0xff]
  %v315 = vld [vmem:[%s0 + $0x80c] sm:$0xff]
  %v316 = vld [vmem:[%s0 + $0x814] sm:$0xf]
  %v317 = vld [vmem:[%s0 + $0x818] sm:$0xff]
  %v318 = vld [vmem:[%s0 + $0x820] sm:$0xff]
  %v319 = vld [vmem:[%s0 + $0x828] sm:$0xff]
  %v320 = vld [vmem:[%s0 + $0x830] sm:$0xf]
  %v321 = vld [vmem:[%s0 + $0x834] sm:$0xff]
  %v322 = vld [vmem:[%s0 + $0x83c] sm:$0xff]
  %v323 = vld [vmem:[%s0 + $0x844] sm:$0xff]
  %v324 = vld [vmem:[%s0 + $0x84c] sm:$0xf]
  %v325 = vld [vmem:[%s0 + $0x850] sm:$0xff]
  %v326 = vld [vmem:[%s0 + $0x858] sm:$0xff]
  %v327 = vld [vmem:[%s0 + $0x860] sm:$0xff]
  %v328 = vld [vmem:[%s0 + $0x868] sm:$0xf]
  %v329 = vld [vmem:[%s0 + $0x86c] sm:$0xff]
  %v330 = vld [vmem:[%s0 + $0x874] sm:$0xff]
  %v331 = vld [vmem:[%s0 + $0x87c] sm:$0xff]
  %v332 = vld [vmem:[%s0 + $0x884] sm:$0xf]
  %v333 = vld [vmem:[%s0 + $0x888] sm:$0xff]
  %v334 = vld [vmem:[%s0 + $0x890] sm:$0xff]
  %v335 = vld [vmem:[%s0 + $0x898] sm:$0xff]
  %v336 = vld [vmem:[%s0 + $0x8a0] sm:$0xf]
  %v337 = vld [vmem:[%s0 + $0x8a4] sm:$0xff]
  %v338 = vld [vmem:[%s0 + $0x8ac] sm:$0xff]
  %v339 = vld [vmem:[%s0 + $0x8b4] sm:$0xff]
  %v340 = vld [vmem:[%s0 + $0x8bc] sm:$0xf]
  %v341 = vld [vmem:[%s0 + $0x8c0] sm:$0xff]
  %v342 = vld [vmem:[%s0 + $0x8c8] sm:$0xff]
  %v343 = vld [vmem:[%s0 + $0x8d0] sm:$0xff]
  %v344 = vld [vmem:[%s0 + $0x8d8] sm:$0xf]
  %v345 = vld [vmem:[%s0 + $0x8dc] sm:$0xff]
  %v346 = vld [vmem:[%s0 + $0x8e4] sm:$0xff]
  %v347 = vld [vmem:[%s0 + $0x8ec] sm:$0xff]
  %v348 = vld [vmem:[%s0 + $0x8f4] sm:$0xf]
  %v349 = vld [vmem:[%s0 + $0x8f8] sm:$0xff]
  %v350 = vld [vmem:[%s0 + $0x900] sm:$0xff]
  %v351 = vld [vmem:[%s0 + $0x908] sm:$0xff]
  %v352 = vld [vmem:[%s0 + $0x910] sm:$0xf]
  %v353 = vld [vmem:[%s0 + $0x914] sm:$0xff]
  %v354 = vld [vmem:[%s0 + $0x91c] sm:$0xff]
  %v355 = vld [vmem:[%s0 + $0x924] sm:$0xff]
  %v356 = vld [vmem:[%s0 + $0x92c] sm:$0xf]
  %v357 = vld [vmem:[%s0 + $0x930] sm:$0xff]
  %v358 = vld [vmem:[%s0 + $0x938] sm:$0xff]
  %v359 = vld [vmem:[%s0 + $0x940] sm:$0xff]
  %v360 = vld [vmem:[%s0 + $0x948] sm:$0xf]
  %v361 = vld [vmem:[%s0 + $0x94c] sm:$0xff]
  %v362 = vld [vmem:[%s0 + $0x954] sm:$0xff]
  %v363 = vld [vmem:[%s0 + $0x95c] sm:$0xff]
  %v364 = vld [vmem:[%s0 + $0x964] sm:$0xf]
  %v365 = vld [vmem:[%s0 + $0x968] sm:$0xff]
  %v366 = vld [vmem:[%s0 + $0x970] sm:$0xff]
  %v367 = vld [vmem:[%s0 + $0x978] sm:$0xff]
  %v368 = vld [vmem:[%s0 + $0x980] sm:$0xf]
  %v369 = vld [vmem:[%s0 + $0x984] sm:$0xff]
  %v370 = vld [vmem:[%s0 + $0x98c] sm:$0xff]
  %v371 = vld [vmem:[%s0 + $0x994] sm:$0xff]
  %v372 = vld [vmem:[%s0 + $0x99c] sm:$0xf]
  %v373 = vld [vmem:[%s0 + $0x9a0] sm:$0xff]
  %v374 = vld [vmem:[%s0 + $0x9a8] sm:$0xff]
  %v375 = vld [vmem:[%s0 + $0x9b0] sm:$0xff]
  %v376 = vld [vmem:[%s0 + $0x9b8] sm:$0xf]
  %v377 = vld [vmem:[%s0 + $0x9bc] sm:$0xff]
  %v378 = vld [vmem:[%s0 + $0x9c4] sm:$0xff]
  %v379 = vld [vmem:[%s0 + $0x9cc] sm:$0xff]
  %v380 = vld [vmem:[%s0 + $0x9d4] sm:$0xf]
  %v381 = vld [vmem:[%s0 + $0x9d8] sm:$0xff]
  %v382 = vld [vmem:[%s0 + $0x9e0] sm:$0xff]
  %v383 = vld [vmem:[%s0 + $0x9e8] sm:$0xff]
  %v384 = vld [vmem:[%s0 + $0x9f0] sm:$0xf]
  %v385 = vld [vmem:[%s0 + $0x9f4] sm:$0xff]
  %v386 = vld [vmem:[%s0 + $0x9fc] sm:$0xff]
  %v387 = vld [vmem:[%s0 + $0xa04] sm:$0xff]
  %v388 = vld [vmem:[%s0 + $0xa0c] sm:$0xf]
  %v389 = vld [vmem:[%s0 + $0xa10] sm:$0xff]
  %v390 = vld [vmem:[%s0 + $0xa18] sm:$0xff]
  %v391 = vld [vmem:[%s0 + $0xa20] sm:$0xff]
  %v392 = vld [vmem:[%s0 + $0xa28] sm:$0xf]
  %v393 = vld [vmem:[%s0 + $0xa2c] sm:$0xff]
  %v394 = vld [vmem:[%s0 + $0xa34] sm:$0xff]
  %v395 = vld [vmem:[%s0 + $0xa3c] sm:$0xff]
  %v396 = vld [vmem:[%s0 + $0xa44] sm:$0xf]
  %v397 = vld [vmem:[%s0 + $0xa48] sm:$0xff]
  %v398 = vld [vmem:[%s0 + $0xa50] sm:$0xff]
  %v399 = vld [vmem:[%s0 + $0xa58] sm:$0xff]
  %v400 = vld [vmem:[%s0 + $0xa60] sm:$0xf]
  %v401 = vld [vmem:[%s0 + $0xa64] sm:$0xff]
  %v402 = vld [vmem:[%s0 + $0xa6c] sm:$0xff]
  %v403 = vld [vmem:[%s0 + $0xa74] sm:$0xff]
  %v404 = vld [vmem:[%s0 + $0xa7c] sm:$0xf]
  %v405 = vld [vmem:[%s0 + $0xa80] sm:$0xff]
  %v406 = vld [vmem:[%s0 + $0xa88] sm:$0xff]
  %v407 = vld [vmem:[%s0 + $0xa90] sm:$0xff]
  %v408 = vld [vmem:[%s0 + $0xa98] sm:$0xf]
  %v409 = vld [vmem:[%s0 + $0xa9c] sm:$0xff]
  %v410 = vld [vmem:[%s0 + $0xaa4] sm:$0xff]
  %v411 = vld [vmem:[%s0 + $0xaac] sm:$0xff]
  %v412 = vld [vmem:[%s0 + $0xab4] sm:$0xf]
  %v413 = vld [vmem:[%s0 + $0xab8] sm:$0xff]
  %v414 = vld [vmem:[%s0 + $0xac0] sm:$0xff]
  %v415 = vld [vmem:[%s0 + $0xac8] sm:$0xff]
  %v416 = vld [vmem:[%s0 + $0xad0] sm:$0xf]
  %v417 = vld [vmem:[%s0 + $0xad4] sm:$0xff]
  %v418 = vld [vmem:[%s0 + $0xadc] sm:$0xff]
  %v419 = vld [vmem:[%s0 + $0xae4] sm:$0xff]
  %v420 = vld [vmem:[%s0 + $0xaec] sm:$0xf]
  %v421 = vld [vmem:[%s1] sm:$0xf]
  %v422 = vld [vmem:[%s1 + $0x4] sm:$0xf]
  %v423 = vld [vmem:[%s1 + $0x8] sm:$0xf]
  %v424 = vld [vmem:[%s1 + $0xc] sm:$0xf]
  %v425 = vld [vmem:[%s1 + $0x10] sm:$0xf]
  %v426 = vld [vmem:[%s1 + $0x14] sm:$0xf]
  %v427 = vld [vmem:[%s1 + $0x18] sm:$0xf]
  %v428 = vld [vmem:[%s1 + $0x1c] sm:$0xf]
  %v429 = vld [vmem:[%s1 + $0x20] sm:$0xf]
  %v430 = vld [vmem:[%s1 + $0x24] sm:$0xf]
  %v431 = vld [vmem:[%s1 + $0x28] sm:$0xf]
  %v432 = vld [vmem:[%s1 + $0x2c] sm:$0xf]
  %v433 = vld [vmem:[%s1 + $0x30] sm:$0xf]
  %v434 = vld [vmem:[%s1 + $0x34] sm:$0xf]
  %v435 = vld [vmem:[%s1 + $0x38] sm:$0xf]
  %v436 = vld [vmem:[%s1 + $0x3c] sm:$0xf]
  %v437 = vld [vmem:[%s1 + $0x40] sm:$0xf]
  %v438 = vld [vmem:[%s1 + $0x44] sm:$0xf]
  %v439 = vld [vmem:[%s1 + $0x48] sm:$0xf]
  %v440 = vld [vmem:[%s1 + $0x4c] sm:$0xf]
  %v441 = vld [vmem:[%s1 + $0x50] sm:$0xf]
  %v442 = vld [vmem:[%s1 + $0x54] sm:$0xf]
  %v443 = vld [vmem:[%s1 + $0x58] sm:$0xf]
  %v444 = vld [vmem:[%s1 + $0x5c] sm:$0xf]
  %v445 = vld [vmem:[%s1 + $0x60] sm:$0xf]
  %v446 = vld [vmem:[%s1 + $0x64] sm:$0xf]
  %v447 = vld [vmem:[%s1 + $0x68] sm:$0xf]
  %v448 = vld [vmem:[%s1 + $0x6c] sm:$0xf]
  %v449 = vld [vmem:[%s1 + $0x70] sm:$0xf]
  %v450 = vld [vmem:[%s1 + $0x74] sm:$0xf]
  %v451 = vld [vmem:[%s1 + $0x78] sm:$0xf]
  %v452 = vld [vmem:[%s1 + $0x7c] sm:$0xf]
  %v453 = vld [vmem:[%s1 + $0x80] sm:$0xf]
  %v454 = vld [vmem:[%s1 + $0x84] sm:$0xf]
  %v455 = vld [vmem:[%s1 + $0x88] sm:$0xf]
  %v456 = vld [vmem:[%s1 + $0x8c] sm:$0xf]
  %v457 = vld [vmem:[%s1 + $0x90] sm:$0xf]
  %v458 = vld [vmem:[%s1 + $0x94] sm:$0xf]
  %v459 = vld [vmem:[%s1 + $0x98] sm:$0xf]
  %v460 = vld [vmem:[%s1 + $0x9c] sm:$0xf]
  %v461 = vld [vmem:[%s1 + $0xa0] sm:$0xf]
  %v462 = vld [vmem:[%s1 + $0xa4] sm:$0xf]
  %v463 = vld [vmem:[%s1 + $0xa8] sm:$0xf]
  %v464 = vld [vmem:[%s1 + $0xac] sm:$0xf]
  %v465 = vld [vmem:[%s1 + $0xb0] sm:$0xf]
  %v466 = vld [vmem:[%s1 + $0xb4] sm:$0xf]
  %v467 = vld [vmem:[%s1 + $0xb8] sm:$0xf]
  %v468 = vld [vmem:[%s1 + $0xbc] sm:$0xf]
  %v469 = vld [vmem:[%s1 + $0xc0] sm:$0xf]
  %v470 = vld [vmem:[%s1 + $0xc4] sm:$0xf]
  %v471 = vld [vmem:[%s1 + $0xc8] sm:$0xf]
  %v472 = vld [vmem:[%s1 + $0xcc] sm:$0xf]
  %v473 = vld [vmem:[%s1 + $0xd0] sm:$0xf]
  %v474 = vld [vmem:[%s1 + $0xd4] sm:$0xf]
  %v475 = vld [vmem:[%s1 + $0xd8] sm:$0xf]
  %v476 = vld [vmem:[%s1 + $0xdc] sm:$0xf]
  %v477 = vld [vmem:[%s1 + $0xe0] sm:$0xf]
  %v478 = vld [vmem:[%s1 + $0xe4] sm:$0xf]
  %v479 = vld [vmem:[%s1 + $0xe8] sm:$0xf]
  %v480 = vld [vmem:[%s1 + $0xec] sm:$0xf]
  %v481 = vld [vmem:[%s1 + $0xf0] sm:$0xf]
  %v482 = vld [vmem:[%s1 + $0xf4] sm:$0xf]
  %v483 = vld [vmem:[%s1 + $0xf8] sm:$0xf]
  %v484 = vld [vmem:[%s1 + $0xfc] sm:$0xf]
  %v485 = vld [vmem:[%s1 + $0x100] sm:$0xf]
  %v486 = vld [vmem:[%s1 + $0x104] sm:$0xf]
  %v487 = vld [vmem:[%s1 + $0x108] sm:$0xf]
  %v488 = vld [vmem:[%s1 + $0x10c] sm:$0xf]
  %v489 = vld [vmem:[%s1 + $0x110] sm:$0xf]
  %v490 = vld [vmem:[%s1 + $0x114] sm:$0xf]
  %v491 = vld [vmem:[%s1 + $0x118] sm:$0xf]
  %v492 = vld [vmem:[%s1 + $0x11c] sm:$0xf]
  %v493 = vld [vmem:[%s1 + $0x120] sm:$0xf]
  %v494 = vld [vmem:[%s1 + $0x124] sm:$0xf]
  %v495 = vld [vmem:[%s1 + $0x128] sm:$0xf]
  %v496 = vld [vmem:[%s1 + $0x12c] sm:$0xf]
  %v497 = vld [vmem:[%s1 + $0x130] sm:$0xf]
  %v498 = vld [vmem:[%s1 + $0x134] sm:$0xf]
  %v499 = vld [vmem:[%s1 + $0x138] sm:$0xf]
  %v500 = vld [vmem:[%s1 + $0x13c] sm:$0xf]
  %v501 = vld [vmem:[%s1 + $0x140] sm:$0xf]
  %v502 = vld [vmem:[%s1 + $0x144] sm:$0xf]
  %v503 = vld [vmem:[%s1 + $0x148] sm:$0xf]
  %v504 = vld [vmem:[%s1 + $0x14c] sm:$0xf]
  %v505 = vld [vmem:[%s1 + $0x150] sm:$0xf]
  %v506 = vld [vmem:[%s1 + $0x154] sm:$0xf]
  %v507 = vld [vmem:[%s1 + $0x158] sm:$0xf]
  %v508 = vld [vmem:[%s1 + $0x15c] sm:$0xf]
  %v509 = vld [vmem:[%s1 + $0x160] sm:$0xf]
  %v510 = vld [vmem:[%s1 + $0x164] sm:$0xf]
  %v511 = vld [vmem:[%s1 + $0x168] sm:$0xf]
  %v512 = vld [vmem:[%s1 + $0x16c] sm:$0xf]
  %v513 = vld [vmem:[%s1 + $0x170] sm:$0xf]
  %v514 = vld [vmem:[%s1 + $0x174] sm:$0xf]
  %v515 = vld [vmem:[%s1 + $0x178] sm:$0xf]
  %v516 = vld [vmem:[%s1 + $0x17c] sm:$0xf]
  %v517 = vld [vmem:[%s1 + $0x180] sm:$0xf]
  %v518 = vld [vmem:[%s1 + $0x184] sm:$0xf]
  %v519 = vld [vmem:[%s1 + $0x188] sm:$0xf]
  %v520 = vld [vmem:[%s1 + $0x18c] sm:$0xf]
  %v521 = vld [vmem:[%s2] sm:$0x1]
  %v523 = vlaneseq
  %v524 = vshrl.u32 %v523, 7
  %v525 = vsub.s32 0, %v524
  %v526 = vrot.slane %v521, %v525
  %v928 = vunpack.c.l.b16 %v21
  %v929 = vunpack.c.h.b16 %v21
  %v930 = vunpack.c.l.b16 %v22
  %v931 = vunpack.c.h.b16 %v22
  %v932 = vunpack.c.l.b16 %v23
  %v933 = vunpack.c.h.b16 %v23
  %v934 = vunpack.c.l.b16 %v24
  %v935 = vunpack.c.l.b16 %v25
  %v936 = vunpack.c.h.b16 %v25
  %v937 = vunpack.c.l.b16 %v26
  %v938 = vunpack.c.h.b16 %v26
  %v939 = vunpack.c.l.b16 %v27
  %v940 = vunpack.c.h.b16 %v27
  %v941 = vunpack.c.l.b16 %v28
  %v942 = vunpack.c.l.b16 %v29
  %v943 = vunpack.c.h.b16 %v29
  %v944 = vunpack.c.l.b16 %v30
  %v945 = vunpack.c.h.b16 %v30
  %v946 = vunpack.c.l.b16 %v31
  %v947 = vunpack.c.h.b16 %v31
  %v948 = vunpack.c.l.b16 %v32
  %v949 = vunpack.c.l.b16 %v33
  %v950 = vunpack.c.h.b16 %v33
  %v951 = vunpack.c.l.b16 %v34
  %v952 = vunpack.c.h.b16 %v34
  %v953 = vunpack.c.l.b16 %v35
  %v954 = vunpack.c.h.b16 %v35
  %v955 = vunpack.c.l.b16 %v36
  %v956 = vunpack.c.l.b16 %v37
  %v957 = vunpack.c.h.b16 %v37
  %v958 = vunpack.c.l.b16 %v38
  %v959 = vunpack.c.h.b16 %v38
  %v960 = vunpack.c.l.b16 %v39
  %v961 = vunpack.c.h.b16 %v39
  %v962 = vunpack.c.l.b16 %v40
  %v963 = vunpack.c.l.b16 %v41
  %v964 = vunpack.c.h.b16 %v41
  %v965 = vunpack.c.l.b16 %v42
  %v966 = vunpack.c.h.b16 %v42
  %v967 = vunpack.c.l.b16 %v43
  %v968 = vunpack.c.h.b16 %v43
  %v969 = vunpack.c.l.b16 %v44
  %v970 = vunpack.c.l.b16 %v45
  %v971 = vunpack.c.h.b16 %v45
  %v972 = vunpack.c.l.b16 %v46
  %v973 = vunpack.c.h.b16 %v46
  %v974 = vunpack.c.l.b16 %v47
  %v975 = vunpack.c.h.b16 %v47
  %v976 = vunpack.c.l.b16 %v48
  %v977 = vunpack.c.l.b16 %v49
  %v978 = vunpack.c.h.b16 %v49
  %v979 = vunpack.c.l.b16 %v50
  %v980 = vunpack.c.h.b16 %v50
  %v981 = vunpack.c.l.b16 %v51
  %v982 = vunpack.c.h.b16 %v51
  %v983 = vunpack.c.l.b16 %v52
  %v984 = vunpack.c.l.b16 %v53
  %v985 = vunpack.c.h.b16 %v53
  %v986 = vunpack.c.l.b16 %v54
  %v987 = vunpack.c.h.b16 %v54
  %v988 = vunpack.c.l.b16 %v55
  %v989 = vunpack.c.h.b16 %v55
  %v990 = vunpack.c.l.b16 %v56
  %v991 = vunpack.c.l.b16 %v57
  %v992 = vunpack.c.h.b16 %v57
  %v993 = vunpack.c.l.b16 %v58
  %v994 = vunpack.c.h.b16 %v58
  %v995 = vunpack.c.l.b16 %v59
  %v996 = vunpack.c.h.b16 %v59
  %v997 = vunpack.c.l.b16 %v60
  %v998 = vunpack.c.l.b16 %v61
  %v999 = vunpack.c.h.b16 %v61
  %v1000 = vunpack.c.l.b16 %v62
  %v1001 = vunpack.c.h.b16 %v62
  %v1002 = vunpack.c.l.b16 %v63
  %v1003 = vunpack.c.h.b16 %v63
  %v1004 = vunpack.c.l.b16 %v64
  %v1005 = vunpack.c.l.b16 %v65
  %v1006 = vunpack.c.h.b16 %v65
  %v1007 = vunpack.c.l.b16 %v66
  %v1008 = vunpack.c.h.b16 %v66
  %v1009 = vunpack.c.l.b16 %v67
  %v1010 = vunpack.c.h.b16 %v67
  %v1011 = vunpack.c.l.b16 %v68
  %v1012 = vunpack.c.l.b16 %v69
  %v1013 = vunpack.c.h.b16 %v69
  %v1014 = vunpack.c.l.b16 %v70
  %v1015 = vunpack.c.h.b16 %v70
  %v1016 = vunpack.c.l.b16 %v71
  %v1017 = vunpack.c.h.b16 %v71
  %v1018 = vunpack.c.l.b16 %v72
  %v1019 = vunpack.c.l.b16 %v73
  %v1020 = vunpack.c.h.b16 %v73
  %v1021 = vunpack.c.l.b16 %v74
  %v1022 = vunpack.c.h.b16 %v74
  %v1023 = vunpack.c.l.b16 %v75
  %v1024 = vunpack.c.h.b16 %v75
  %v1025 = vunpack.c.l.b16 %v76
  %v1026 = vunpack.c.l.b16 %v77
  %v1027 = vunpack.c.h.b16 %v77
  %v1028 = vunpack.c.l.b16 %v78
  %v1029 = vunpack.c.h.b16 %v78
  %v1030 = vunpack.c.l.b16 %v79
  %v1031 = vunpack.c.h.b16 %v79
  %v1032 = vunpack.c.l.b16 %v80
  %v1033 = vunpack.c.l.b16 %v81
  %v1034 = vunpack.c.h.b16 %v81
  %v1035 = vunpack.c.l.b16 %v82
  %v1036 = vunpack.c.h.b16 %v82
  %v1037 = vunpack.c.l.b16 %v83
  %v1038 = vunpack.c.h.b16 %v83
  %v1039 = vunpack.c.l.b16 %v84
  %v1040 = vunpack.c.l.b16 %v85
  %v1041 = vunpack.c.h.b16 %v85
  %v1042 = vunpack.c.l.b16 %v86
  %v1043 = vunpack.c.h.b16 %v86
  %v1044 = vunpack.c.l.b16 %v87
  %v1045 = vunpack.c.h.b16 %v87
  %v1046 = vunpack.c.l.b16 %v88
  %v1047 = vunpack.c.l.b16 %v89
  %v1048 = vunpack.c.h.b16 %v89
  %v1049 = vunpack.c.l.b16 %v90
  %v1050 = vunpack.c.h.b16 %v90
  %v1051 = vunpack.c.l.b16 %v91
  %v1052 = vunpack.c.h.b16 %v91
  %v1053 = vunpack.c.l.b16 %v92
  %v1054 = vunpack.c.l.b16 %v93
  %v1055 = vunpack.c.h.b16 %v93
  %v1056 = vunpack.c.l.b16 %v94
  %v1057 = vunpack.c.h.b16 %v94
  %v1058 = vunpack.c.l.b16 %v95
  %v1059 = vunpack.c.h.b16 %v95
  %v1060 = vunpack.c.l.b16 %v96
  %v1061 = vunpack.c.l.b16 %v97
  %v1062 = vunpack.c.h.b16 %v97
  %v1063 = vunpack.c.l.b16 %v98
  %v1064 = vunpack.c.h.b16 %v98
  %v1065 = vunpack.c.l.b16 %v99
  %v1066 = vunpack.c.h.b16 %v99
  %v1067 = vunpack.c.l.b16 %v100
  %v1068 = vunpack.c.l.b16 %v101
  %v1069 = vunpack.c.h.b16 %v101
  %v1070 = vunpack.c.l.b16 %v102
  %v1071 = vunpack.c.h.b16 %v102
  %v1072 = vunpack.c.l.b16 %v103
  %v1073 = vunpack.c.h.b16 %v103
  %v1074 = vunpack.c.l.b16 %v104
  %v1075 = vunpack.c.l.b16 %v105
  %v1076 = vunpack.c.h.b16 %v105
  %v1077 = vunpack.c.l.b16 %v106
  %v1078 = vunpack.c.h.b16 %v106
  %v1079 = vunpack.c.l.b16 %v107
  %v1080 = vunpack.c.h.b16 %v107
  %v1081 = vunpack.c.l.b16 %v108
  %v1082 = vunpack.c.l.b16 %v109
  %v1083 = vunpack.c.h.b16 %v109
  %v1084 = vunpack.c.l.b16 %v110
  %v1085 = vunpack.c.h.b16 %v110
  %v1086 = vunpack.c.l.b16 %v111
  %v1087 = vunpack.c.h.b16 %v111
  %v1088 = vunpack.c.l.b16 %v112
  %v1089 = vunpack.c.l.b16 %v113
  %v1090 = vunpack.c.h.b16 %v113
  %v1091 = vunpack.c.l.b16 %v114
  %v1092 = vunpack.c.h.b16 %v114
  %v1093 = vunpack.c.l.b16 %v115
  %v1094 = vunpack.c.h.b16 %v115
  %v1095 = vunpack.c.l.b16 %v116
  %v1096 = vunpack.c.l.b16 %v117
  %v1097 = vunpack.c.h.b16 %v117
  %v1098 = vunpack.c.l.b16 %v118
  %v1099 = vunpack.c.h.b16 %v118
  %v1100 = vunpack.c.l.b16 %v119
  %v1101 = vunpack.c.h.b16 %v119
  %v1102 = vunpack.c.l.b16 %v120
  %v1103 = vunpack.c.l.b16 %v121
  %v1104 = vunpack.c.h.b16 %v121
  %v1105 = vunpack.c.l.b16 %v122
  %v1106 = vunpack.c.h.b16 %v122
  %v1107 = vunpack.c.l.b16 %v123
  %v1108 = vunpack.c.h.b16 %v123
  %v1109 = vunpack.c.l.b16 %v124
  %v1110 = vunpack.c.l.b16 %v125
  %v1111 = vunpack.c.h.b16 %v125
  %v1112 = vunpack.c.l.b16 %v126
  %v1113 = vunpack.c.h.b16 %v126
  %v1114 = vunpack.c.l.b16 %v127
  %v1115 = vunpack.c.h.b16 %v127
  %v1116 = vunpack.c.l.b16 %v128
  %v1117 = vunpack.c.l.b16 %v129
  %v1118 = vunpack.c.h.b16 %v129
  %v1119 = vunpack.c.l.b16 %v130
  %v1120 = vunpack.c.h.b16 %v130
  %v1121 = vunpack.c.l.b16 %v131
  %v1122 = vunpack.c.h.b16 %v131
  %v1123 = vunpack.c.l.b16 %v132
  %v1124 = vunpack.c.l.b16 %v133
  %v1125 = vunpack.c.h.b16 %v133
  %v1126 = vunpack.c.l.b16 %v134
  %v1127 = vunpack.c.h.b16 %v134
  %v1128 = vunpack.c.l.b16 %v135
  %v1129 = vunpack.c.h.b16 %v135
  %v1130 = vunpack.c.l.b16 %v136
  %v1131 = vunpack.c.l.b16 %v137
  %v1132 = vunpack.c.h.b16 %v137
  %v1133 = vunpack.c.l.b16 %v138
  %v1134 = vunpack.c.h.b16 %v138
  %v1135 = vunpack.c.l.b16 %v139
  %v1136 = vunpack.c.h.b16 %v139
  %v1137 = vunpack.c.l.b16 %v140
  %v1138 = vunpack.c.l.b16 %v141
  %v1139 = vunpack.c.h.b16 %v141
  %v1140 = vunpack.c.l.b16 %v142
  %v1141 = vunpack.c.h.b16 %v142
  %v1142 = vunpack.c.l.b16 %v143
  %v1143 = vunpack.c.h.b16 %v143
  %v1144 = vunpack.c.l.b16 %v144
  %v1145 = vunpack.c.l.b16 %v145
  %v1146 = vunpack.c.h.b16 %v145
  %v1147 = vunpack.c.l.b16 %v146
  %v1148 = vunpack.c.h.b16 %v146
  %v1149 = vunpack.c.l.b16 %v147
  %v1150 = vunpack.c.h.b16 %v147
  %v1151 = vunpack.c.l.b16 %v148
  %v1152 = vunpack.c.l.b16 %v149
  %v1153 = vunpack.c.h.b16 %v149
  %v1154 = vunpack.c.l.b16 %v150
  %v1155 = vunpack.c.h.b16 %v150
  %v1156 = vunpack.c.l.b16 %v151
  %v1157 = vunpack.c.h.b16 %v151
  %v1158 = vunpack.c.l.b16 %v152
  %v1159 = vunpack.c.l.b16 %v153
  %v1160 = vunpack.c.h.b16 %v153
  %v1161 = vunpack.c.l.b16 %v154
  %v1162 = vunpack.c.h.b16 %v154
  %v1163 = vunpack.c.l.b16 %v155
  %v1164 = vunpack.c.h.b16 %v155
  %v1165 = vunpack.c.l.b16 %v156
  %v1166 = vunpack.c.l.b16 %v157
  %v1167 = vunpack.c.h.b16 %v157
  %v1168 = vunpack.c.l.b16 %v158
  %v1169 = vunpack.c.h.b16 %v158
  %v1170 = vunpack.c.l.b16 %v159
  %v1171 = vunpack.c.h.b16 %v159
  %v1172 = vunpack.c.l.b16 %v160
  %v1173 = vunpack.c.l.b16 %v161
  %v1174 = vunpack.c.h.b16 %v161
  %v1175 = vunpack.c.l.b16 %v162
  %v1176 = vunpack.c.h.b16 %v162
  %v1177 = vunpack.c.l.b16 %v163
  %v1178 = vunpack.c.h.b16 %v163
  %v1179 = vunpack.c.l.b16 %v164
  %v1180 = vunpack.c.l.b16 %v165
  %v1181 = vunpack.c.h.b16 %v165
  %v1182 = vunpack.c.l.b16 %v166
  %v1183 = vunpack.c.h.b16 %v166
  %v1184 = vunpack.c.l.b16 %v167
  %v1185 = vunpack.c.h.b16 %v167
  %v1186 = vunpack.c.l.b16 %v168
  %v1187 = vunpack.c.l.b16 %v169
  %v1188 = vunpack.c.h.b16 %v169
  %v1189 = vunpack.c.l.b16 %v170
  %v1190 = vunpack.c.h.b16 %v170
  %v1191 = vunpack.c.l.b16 %v171
  %v1192 = vunpack.c.h.b16 %v171
  %v1193 = vunpack.c.l.b16 %v172
  %v1194 = vunpack.c.l.b16 %v173
  %v1195 = vunpack.c.h.b16 %v173
  %v1196 = vunpack.c.l.b16 %v174
  %v1197 = vunpack.c.h.b16 %v174
  %v1198 = vunpack.c.l.b16 %v175
  %v1199 = vunpack.c.h.b16 %v175
  %v1200 = vunpack.c.l.b16 %v176
  %v1201 = vunpack.c.l.b16 %v177
  %v1202 = vunpack.c.h.b16 %v177
  %v1203 = vunpack.c.l.b16 %v178
  %v1204 = vunpack.c.h.b16 %v178
  %v1205 = vunpack.c.l.b16 %v179
  %v1206 = vunpack.c.h.b16 %v179
  %v1207 = vunpack.c.l.b16 %v180
  %v1208 = vunpack.c.l.b16 %v181
  %v1209 = vunpack.c.h.b16 %v181
  %v1210 = vunpack.c.l.b16 %v182
  %v1211 = vunpack.c.h.b16 %v182
  %v1212 = vunpack.c.l.b16 %v183
  %v1213 = vunpack.c.h.b16 %v183
  %v1214 = vunpack.c.l.b16 %v184
  %v1215 = vunpack.c.l.b16 %v185
  %v1216 = vunpack.c.h.b16 %v185
  %v1217 = vunpack.c.l.b16 %v186
  %v1218 = vunpack.c.h.b16 %v186
  %v1219 = vunpack.c.l.b16 %v187
  %v1220 = vunpack.c.h.b16 %v187
  %v1221 = vunpack.c.l.b16 %v188
  %v1222 = vunpack.c.l.b16 %v189
  %v1223 = vunpack.c.h.b16 %v189
  %v1224 = vunpack.c.l.b16 %v190
  %v1225 = vunpack.c.h.b16 %v190
  %v1226 = vunpack.c.l.b16 %v191
  %v1227 = vunpack.c.h.b16 %v191
  %v1228 = vunpack.c.l.b16 %v192
  %v1229 = vunpack.c.l.b16 %v193
  %v1230 = vunpack.c.h.b16 %v193
  %v1231 = vunpack.c.l.b16 %v194
  %v1232 = vunpack.c.h.b16 %v194
  %v1233 = vunpack.c.l.b16 %v195
  %v1234 = vunpack.c.h.b16 %v195
  %v1235 = vunpack.c.l.b16 %v196
  %v1236 = vunpack.c.l.b16 %v197
  %v1237 = vunpack.c.h.b16 %v197
  %v1238 = vunpack.c.l.b16 %v198
  %v1239 = vunpack.c.h.b16 %v198
  %v1240 = vunpack.c.l.b16 %v199
  %v1241 = vunpack.c.h.b16 %v199
  %v1242 = vunpack.c.l.b16 %v200
  %v1243 = vunpack.c.l.b16 %v201
  %v1244 = vunpack.c.h.b16 %v201
  %v1245 = vunpack.c.l.b16 %v202
  %v1246 = vunpack.c.h.b16 %v202
  %v1247 = vunpack.c.l.b16 %v203
  %v1248 = vunpack.c.h.b16 %v203
  %v1249 = vunpack.c.l.b16 %v204
  %v1250 = vunpack.c.l.b16 %v205
  %v1251 = vunpack.c.h.b16 %v205
  %v1252 = vunpack.c.l.b16 %v206
  %v1253 = vunpack.c.h.b16 %v206
  %v1254 = vunpack.c.l.b16 %v207
  %v1255 = vunpack.c.h.b16 %v207
  %v1256 = vunpack.c.l.b16 %v208
  %v1257 = vunpack.c.l.b16 %v209
  %v1258 = vunpack.c.h.b16 %v209
  %v1259 = vunpack.c.l.b16 %v210
  %v1260 = vunpack.c.h.b16 %v210
  %v1261 = vunpack.c.l.b16 %v211
  %v1262 = vunpack.c.h.b16 %v211
  %v1263 = vunpack.c.l.b16 %v212
  %v1264 = vunpack.c.l.b16 %v213
  %v1265 = vunpack.c.h.b16 %v213
  %v1266 = vunpack.c.l.b16 %v214
  %v1267 = vunpack.c.h.b16 %v214
  %v1268 = vunpack.c.l.b16 %v215
  %v1269 = vunpack.c.h.b16 %v215
  %v1270 = vunpack.c.l.b16 %v216
  %v1271 = vunpack.c.l.b16 %v217
  %v1272 = vunpack.c.h.b16 %v217
  %v1273 = vunpack.c.l.b16 %v218
  %v1274 = vunpack.c.h.b16 %v218
  %v1275 = vunpack.c.l.b16 %v219
  %v1276 = vunpack.c.h.b16 %v219
  %v1277 = vunpack.c.l.b16 %v220
  %v1278 = vunpack.c.l.b16 %v221
  %v1279 = vunpack.c.h.b16 %v221
  %v1280 = vunpack.c.l.b16 %v222
  %v1281 = vunpack.c.h.b16 %v222
  %v1282 = vunpack.c.l.b16 %v223
  %v1283 = vunpack.c.h.b16 %v223
  %v1284 = vunpack.c.l.b16 %v224
  %v1285 = vunpack.c.l.b16 %v225
  %v1286 = vunpack.c.h.b16 %v225
  %v1287 = vunpack.c.l.b16 %v226
  %v1288 = vunpack.c.h.b16 %v226
  %v1289 = vunpack.c.l.b16 %v227
  %v1290 = vunpack.c.h.b16 %v227
  %v1291 = vunpack.c.l.b16 %v228
  %v1292 = vunpack.c.l.b16 %v229
  %v1293 = vunpack.c.h.b16 %v229
  %v1294 = vunpack.c.l.b16 %v230
  %v1295 = vunpack.c.h.b16 %v230
  %v1296 = vunpack.c.l.b16 %v231
  %v1297 = vunpack.c.h.b16 %v231
  %v1298 = vunpack.c.l.b16 %v232
  %v1299 = vunpack.c.l.b16 %v233
  %v1300 = vunpack.c.h.b16 %v233
  %v1301 = vunpack.c.l.b16 %v234
  %v1302 = vunpack.c.h.b16 %v234
  %v1303 = vunpack.c.l.b16 %v235
  %v1304 = vunpack.c.h.b16 %v235
  %v1305 = vunpack.c.l.b16 %v236
  %v1306 = vunpack.c.l.b16 %v237
  %v1307 = vunpack.c.h.b16 %v237
  %v1308 = vunpack.c.l.b16 %v238
  %v1309 = vunpack.c.h.b16 %v238
  %v1310 = vunpack.c.l.b16 %v239
  %v1311 = vunpack.c.h.b16 %v239
  %v1312 = vunpack.c.l.b16 %v240
  %v1313 = vunpack.c.l.b16 %v241
  %v1314 = vunpack.c.h.b16 %v241
  %v1315 = vunpack.c.l.b16 %v242
  %v1316 = vunpack.c.h.b16 %v242
  %v1317 = vunpack.c.l.b16 %v243
  %v1318 = vunpack.c.h.b16 %v243
  %v1319 = vunpack.c.l.b16 %v244
  %v1320 = vunpack.c.l.b16 %v245
  %v1321 = vunpack.c.h.b16 %v245
  %v1322 = vunpack.c.l.b16 %v246
  %v1323 = vunpack.c.h.b16 %v246
  %v1324 = vunpack.c.l.b16 %v247
  %v1325 = vunpack.c.h.b16 %v247
  %v1326 = vunpack.c.l.b16 %v248
  %v1327 = vunpack.c.l.b16 %v249
  %v1328 = vunpack.c.h.b16 %v249
  %v1329 = vunpack.c.l.b16 %v250
  %v1330 = vunpack.c.h.b16 %v250
  %v1331 = vunpack.c.l.b16 %v251
  %v1332 = vunpack.c.h.b16 %v251
  %v1333 = vunpack.c.l.b16 %v252
  %v1334 = vunpack.c.l.b16 %v253
  %v1335 = vunpack.c.h.b16 %v253
  %v1336 = vunpack.c.l.b16 %v254
  %v1337 = vunpack.c.h.b16 %v254
  %v1338 = vunpack.c.l.b16 %v255
  %v1339 = vunpack.c.h.b16 %v255
  %v1340 = vunpack.c.l.b16 %v256
  %v1341 = vunpack.c.l.b16 %v257
  %v1342 = vunpack.c.h.b16 %v257
  %v1343 = vunpack.c.l.b16 %v258
  %v1344 = vunpack.c.h.b16 %v258
  %v1345 = vunpack.c.l.b16 %v259
  %v1346 = vunpack.c.h.b16 %v259
  %v1347 = vunpack.c.l.b16 %v260
  %v1348 = vunpack.c.l.b16 %v261
  %v1349 = vunpack.c.h.b16 %v261
  %v1350 = vunpack.c.l.b16 %v262
  %v1351 = vunpack.c.h.b16 %v262
  %v1352 = vunpack.c.l.b16 %v263
  %v1353 = vunpack.c.h.b16 %v263
  %v1354 = vunpack.c.l.b16 %v264
  %v1355 = vunpack.c.l.b16 %v265
  %v1356 = vunpack.c.h.b16 %v265
  %v1357 = vunpack.c.l.b16 %v266
  %v1358 = vunpack.c.h.b16 %v266
  %v1359 = vunpack.c.l.b16 %v267
  %v1360 = vunpack.c.h.b16 %v267
  %v1361 = vunpack.c.l.b16 %v268
  %v1362 = vunpack.c.l.b16 %v269
  %v1363 = vunpack.c.h.b16 %v269
  %v1364 = vunpack.c.l.b16 %v270
  %v1365 = vunpack.c.h.b16 %v270
  %v1366 = vunpack.c.l.b16 %v271
  %v1367 = vunpack.c.h.b16 %v271
  %v1368 = vunpack.c.l.b16 %v272
  %v1369 = vunpack.c.l.b16 %v273
  %v1370 = vunpack.c.h.b16 %v273
  %v1371 = vunpack.c.l.b16 %v274
  %v1372 = vunpack.c.h.b16 %v274
  %v1373 = vunpack.c.l.b16 %v275
  %v1374 = vunpack.c.h.b16 %v275
  %v1375 = vunpack.c.l.b16 %v276
  %v1376 = vunpack.c.l.b16 %v277
  %v1377 = vunpack.c.h.b16 %v277
  %v1378 = vunpack.c.l.b16 %v278
  %v1379 = vunpack.c.h.b16 %v278
  %v1380 = vunpack.c.l.b16 %v279
  %v1381 = vunpack.c.h.b16 %v279
  %v1382 = vunpack.c.l.b16 %v280
  %v1383 = vunpack.c.l.b16 %v281
  %v1384 = vunpack.c.h.b16 %v281
  %v1385 = vunpack.c.l.b16 %v282
  %v1386 = vunpack.c.h.b16 %v282
  %v1387 = vunpack.c.l.b16 %v283
  %v1388 = vunpack.c.h.b16 %v283
  %v1389 = vunpack.c.l.b16 %v284
  %v1390 = vunpack.c.l.b16 %v285
  %v1391 = vunpack.c.h.b16 %v285
  %v1392 = vunpack.c.l.b16 %v286
  %v1393 = vunpack.c.h.b16 %v286
  %v1394 = vunpack.c.l.b16 %v287
  %v1395 = vunpack.c.h.b16 %v287
  %v1396 = vunpack.c.l.b16 %v288
  %v1397 = vunpack.c.l.b16 %v289
  %v1398 = vunpack.c.h.b16 %v289
  %v1399 = vunpack.c.l.b16 %v290
  %v1400 = vunpack.c.h.b16 %v290
  %v1401 = vunpack.c.l.b16 %v291
  %v1402 = vunpack.c.h.b16 %v291
  %v1403 = vunpack.c.l.b16 %v292
  %v1404 = vunpack.c.l.b16 %v293
  %v1405 = vunpack.c.h.b16 %v293
  %v1406 = vunpack.c.l.b16 %v294
  %v1407 = vunpack.c.h.b16 %v294
  %v1408 = vunpack.c.l.b16 %v295
  %v1409 = vunpack.c.h.b16 %v295
  %v1410 = vunpack.c.l.b16 %v296
  %v1411 = vunpack.c.l.b16 %v297
  %v1412 = vunpack.c.h.b16 %v297
  %v1413 = vunpack.c.l.b16 %v298
  %v1414 = vunpack.c.h.b16 %v298
  %v1415 = vunpack.c.l.b16 %v299
  %v1416 = vunpack.c.h.b16 %v299
  %v1417 = vunpack.c.l.b16 %v300
  %v1418 = vunpack.c.l.b16 %v301
  %v1419 = vunpack.c.h.b16 %v301
  %v1420 = vunpack.c.l.b16 %v302
  %v1421 = vunpack.c.h.b16 %v302
  %v1422 = vunpack.c.l.b16 %v303
  %v1423 = vunpack.c.h.b16 %v303
  %v1424 = vunpack.c.l.b16 %v304
  %v1425 = vunpack.c.l.b16 %v305
  %v1426 = vunpack.c.h.b16 %v305
  %v1427 = vunpack.c.l.b16 %v306
  %v1428 = vunpack.c.h.b16 %v306
  %v1429 = vunpack.c.l.b16 %v307
  %v1430 = vunpack.c.h.b16 %v307
  %v1431 = vunpack.c.l.b16 %v308
  %v1432 = vunpack.c.l.b16 %v309
  %v1433 = vunpack.c.h.b16 %v309
  %v1434 = vunpack.c.l.b16 %v310
  %v1435 = vunpack.c.h.b16 %v310
  %v1436 = vunpack.c.l.b16 %v311
  %v1437 = vunpack.c.h.b16 %v311
  %v1438 = vunpack.c.l.b16 %v312
  %v1439 = vunpack.c.l.b16 %v313
  %v1440 = vunpack.c.h.b16 %v313
  %v1441 = vunpack.c.l.b16 %v314
  %v1442 = vunpack.c.h.b16 %v314
  %v1443 = vunpack.c.l.b16 %v315
  %v1444 = vunpack.c.h.b16 %v315
  %v1445 = vunpack.c.l.b16 %v316
  %v1446 = vunpack.c.l.b16 %v317
  %v1447 = vunpack.c.h.b16 %v317
  %v1448 = vunpack.c.l.b16 %v318
  %v1449 = vunpack.c.h.b16 %v318
  %v1450 = vunpack.c.l.b16 %v319
  %v1451 = vunpack.c.h.b16 %v319
  %v1452 = vunpack.c.l.b16 %v320
  %v1453 = vunpack.c.l.b16 %v321
  %v1454 = vunpack.c.h.b16 %v321
  %v1455 = vunpack.c.l.b16 %v322
  %v1456 = vunpack.c.h.b16 %v322
  %v1457 = vunpack.c.l.b16 %v323
  %v1458 = vunpack.c.h.b16 %v323
  %v1459 = vunpack.c.l.b16 %v324
  %v1460 = vunpack.c.l.b16 %v325
  %v1461 = vunpack.c.h.b16 %v325
  %v1462 = vunpack.c.l.b16 %v326
  %v1463 = vunpack.c.h.b16 %v326
  %v1464 = vunpack.c.l.b16 %v327
  %v1465 = vunpack.c.h.b16 %v327
  %v1466 = vunpack.c.l.b16 %v328
  %v1467 = vunpack.c.l.b16 %v329
  %v1468 = vunpack.c.h.b16 %v329
  %v1469 = vunpack.c.l.b16 %v330
  %v1470 = vunpack.c.h.b16 %v330
  %v1471 = vunpack.c.l.b16 %v331
  %v1472 = vunpack.c.h.b16 %v331
  %v1473 = vunpack.c.l.b16 %v332
  %v1474 = vunpack.c.l.b16 %v333
  %v1475 = vunpack.c.h.b16 %v333
  %v1476 = vunpack.c.l.b16 %v334
  %v1477 = vunpack.c.h.b16 %v334
  %v1478 = vunpack.c.l.b16 %v335
  %v1479 = vunpack.c.h.b16 %v335
  %v1480 = vunpack.c.l.b16 %v336
  %v1481 = vunpack.c.l.b16 %v337
  %v1482 = vunpack.c.h.b16 %v337
  %v1483 = vunpack.c.l.b16 %v338
  %v1484 = vunpack.c.h.b16 %v338
  %v1485 = vunpack.c.l.b16 %v339
  %v1486 = vunpack.c.h.b16 %v339
  %v1487 = vunpack.c.l.b16 %v340
  %v1488 = vunpack.c.l.b16 %v341
  %v1489 = vunpack.c.h.b16 %v341
  %v1490 = vunpack.c.l.b16 %v342
  %v1491 = vunpack.c.h.b16 %v342
  %v1492 = vunpack.c.l.b16 %v343
  %v1493 = vunpack.c.h.b16 %v343
  %v1494 = vunpack.c.l.b16 %v344
  %v1495 = vunpack.c.l.b16 %v345
  %v1496 = vunpack.c.h.b16 %v345
  %v1497 = vunpack.c.l.b16 %v346
  %v1498 = vunpack.c.h.b16 %v346
  %v1499 = vunpack.c.l.b16 %v347
  %v1500 = vunpack.c.h.b16 %v347
  %v1501 = vunpack.c.l.b16 %v348
  %v1502 = vunpack.c.l.b16 %v349
  %v1503 = vunpack.c.h.b16 %v349
  %v1504 = vunpack.c.l.b16 %v350
  %v1505 = vunpack.c.h.b16 %v350
  %v1506 = vunpack.c.l.b16 %v351
  %v1507 = vunpack.c.h.b16 %v351
  %v1508 = vunpack.c.l.b16 %v352
  %v1509 = vunpack.c.l.b16 %v353
  %v1510 = vunpack.c.h.b16 %v353
  %v1511 = vunpack.c.l.b16 %v354
  %v1512 = vunpack.c.h.b16 %v354
  %v1513 = vunpack.c.l.b16 %v355
  %v1514 = vunpack.c.h.b16 %v355
  %v1515 = vunpack.c.l.b16 %v356
  %v1516 = vunpack.c.l.b16 %v357
  %v1517 = vunpack.c.h.b16 %v357
  %v1518 = vunpack.c.l.b16 %v358
  %v1519 = vunpack.c.h.b16 %v358
  %v1520 = vunpack.c.l.b16 %v359
  %v1521 = vunpack.c.h.b16 %v359
  %v1522 = vunpack.c.l.b16 %v360
  %v1523 = vunpack.c.l.b16 %v361
  %v1524 = vunpack.c.h.b16 %v361
  %v1525 = vunpack.c.l.b16 %v362
  %v1526 = vunpack.c.h.b16 %v362
  %v1527 = vunpack.c.l.b16 %v363
  %v1528 = vunpack.c.h.b16 %v363
  %v1529 = vunpack.c.l.b16 %v364
  %v1530 = vunpack.c.l.b16 %v365
  %v1531 = vunpack.c.h.b16 %v365
  %v1532 = vunpack.c.l.b16 %v366
  %v1533 = vunpack.c.h.b16 %v366
  %v1534 = vunpack.c.l.b16 %v367
  %v1535 = vunpack.c.h.b16 %v367
  %v1536 = vunpack.c.l.b16 %v368
  %v1537 = vunpack.c.l.b16 %v369
  %v1538 = vunpack.c.h.b16 %v369
  %v1539 = vunpack.c.l.b16 %v370
  %v1540 = vunpack.c.h.b16 %v370
  %v1541 = vunpack.c.l.b16 %v371
  %v1542 = vunpack.c.h.b16 %v371
  %v1543 = vunpack.c.l.b16 %v372
  %v1544 = vunpack.c.l.b16 %v373
  %v1545 = vunpack.c.h.b16 %v373
  %v1546 = vunpack.c.l.b16 %v374
  %v1547 = vunpack.c.h.b16 %v374
  %v1548 = vunpack.c.l.b16 %v375
  %v1549 = vunpack.c.h.b16 %v375
  %v1550 = vunpack.c.l.b16 %v376
  %v1551 = vunpack.c.l.b16 %v377
  %v1552 = vunpack.c.h.b16 %v377
  %v1553 = vunpack.c.l.b16 %v378
  %v1554 = vunpack.c.h.b16 %v378
  %v1555 = vunpack.c.l.b16 %v379
  %v1556 = vunpack.c.h.b16 %v379
  %v1557 = vunpack.c.l.b16 %v380
  %v1558 = vunpack.c.l.b16 %v381
  %v1559 = vunpack.c.h.b16 %v381
  %v1560 = vunpack.c.l.b16 %v382
  %v1561 = vunpack.c.h.b16 %v382
  %v1562 = vunpack.c.l.b16 %v383
  %v1563 = vunpack.c.h.b16 %v383
  %v1564 = vunpack.c.l.b16 %v384
  %v1565 = vunpack.c.l.b16 %v385
  %v1566 = vunpack.c.h.b16 %v385
  %v1567 = vunpack.c.l.b16 %v386
  %v1568 = vunpack.c.h.b16 %v386
  %v1569 = vunpack.c.l.b16 %v387
  %v1570 = vunpack.c.h.b16 %v387
  %v1571 = vunpack.c.l.b16 %v388
  %v1572 = vunpack.c.l.b16 %v389
  %v1573 = vunpack.c.h.b16 %v389
  %v1574 = vunpack.c.l.b16 %v390
  %v1575 = vunpack.c.h.b16 %v390
  %v1576 = vunpack.c.l.b16 %v391
  %v1577 = vunpack.c.h.b16 %v391
  %v1578 = vunpack.c.l.b16 %v392
  %v1579 = vunpack.c.l.b16 %v393
  %v1580 = vunpack.c.h.b16 %v393
  %v1581 = vunpack.c.l.b16 %v394
  %v1582 = vunpack.c.h.b16 %v394
  %v1583 = vunpack.c.l.b16 %v395
  %v1584 = vunpack.c.h.b16 %v395
  %v1585 = vunpack.c.l.b16 %v396
  %v1586 = vunpack.c.l.b16 %v397
  %v1587 = vunpack.c.h.b16 %v397
  %v1588 = vunpack.c.l.b16 %v398
  %v1589 = vunpack.c.h.b16 %v398
  %v1590 = vunpack.c.l.b16 %v399
  %v1591 = vunpack.c.h.b16 %v399
  %v1592 = vunpack.c.l.b16 %v400
  %v1593 = vunpack.c.l.b16 %v401
  %v1594 = vunpack.c.h.b16 %v401
  %v1595 = vunpack.c.l.b16 %v402
  %v1596 = vunpack.c.h.b16 %v402
  %v1597 = vunpack.c.l.b16 %v403
  %v1598 = vunpack.c.h.b16 %v403
  %v1599 = vunpack.c.l.b16 %v404
  %v1600 = vunpack.c.l.b16 %v405
  %v1601 = vunpack.c.h.b16 %v405
  %v1602 = vunpack.c.l.b16 %v406
  %v1603 = vunpack.c.h.b16 %v406
  %v1604 = vunpack.c.l.b16 %v407
  %v1605 = vunpack.c.h.b16 %v407
  %v1606 = vunpack.c.l.b16 %v408
  %v1607 = vunpack.c.l.b16 %v409
  %v1608 = vunpack.c.h.b16 %v409
  %v1609 = vunpack.c.l.b16 %v410
  %v1610 = vunpack.c.h.b16 %v410
  %v1611 = vunpack.c.l.b16 %v411
  %v1612 = vunpack.c.h.b16 %v411
  %v1613 = vunpack.c.l.b16 %v412
  %v1614 = vunpack.c.l.b16 %v413
  %v1615 = vunpack.c.h.b16 %v413
  %v1616 = vunpack.c.l.b16 %v414
  %v1617 = vunpack.c.h.b16 %v414
  %v1618 = vunpack.c.l.b16 %v415
  %v1619 = vunpack.c.h.b16 %v415
  %v1620 = vunpack.c.l.b16 %v416
  %v1621 = vunpack.c.l.b16 %v417
  %v1622 = vunpack.c.h.b16 %v417
  %v1623 = vunpack.c.l.b16 %v418
  %v1624 = vunpack.c.h.b16 %v418
  %v1625 = vunpack.c.l.b16 %v419
  %v1626 = vunpack.c.h.b16 %v419
  %v1627 = vunpack.c.l.b16 %v420
  %v1628 = vpack.c.b16 %v935, %v928
  %v1629 = vpack.c.b16 %v936, %v929
  %v1630 = vpack.c.b16 %v937, %v930
  %v1631 = vpack.c.b16 %v938, %v931
  %v1632 = vpack.c.b16 %v939, %v932
  %v1633 = vpack.c.b16 %v940, %v933
  %v1634 = vpack.c.b16 %v941, %v934
  %v1635 = vpack.c.b16 %v949, %v942
  %v1636 = vpack.c.b16 %v950, %v943
  %v1637 = vpack.c.b16 %v951, %v944
  %v1638 = vpack.c.b16 %v952, %v945
  %v1639 = vpack.c.b16 %v953, %v946
  %v1640 = vpack.c.b16 %v954, %v947
  %v1641 = vpack.c.b16 %v955, %v948
  %v1642 = vpack.c.b16 %v963, %v956
  %v1643 = vpack.c.b16 %v964, %v957
  %v1644 = vpack.c.b16 %v965, %v958
  %v1645 = vpack.c.b16 %v966, %v959
  %v1646 = vpack.c.b16 %v967, %v960
  %v1647 = vpack.c.b16 %v968, %v961
  %v1648 = vpack.c.b16 %v969, %v962
  %v1649 = vpack.c.b16 %v977, %v970
  %v1650 = vpack.c.b16 %v978, %v971
  %v1651 = vpack.c.b16 %v979, %v972
  %v1652 = vpack.c.b16 %v980, %v973
  %v1653 = vpack.c.b16 %v981, %v974
  %v1654 = vpack.c.b16 %v982, %v975
  %v1655 = vpack.c.b16 %v983, %v976
  %v1656 = vpack.c.b16 %v991, %v984
  %v1657 = vpack.c.b16 %v992, %v985
  %v1658 = vpack.c.b16 %v993, %v986
  %v1659 = vpack.c.b16 %v994, %v987
  %v1660 = vpack.c.b16 %v995, %v988
  %v1661 = vpack.c.b16 %v996, %v989
  %v1662 = vpack.c.b16 %v997, %v990
  %v1663 = vpack.c.b16 %v1005, %v998
  %v1664 = vpack.c.b16 %v1006, %v999
  %v1665 = vpack.c.b16 %v1007, %v1000
  %v1666 = vpack.c.b16 %v1008, %v1001
  %v1667 = vpack.c.b16 %v1009, %v1002
  %v1668 = vpack.c.b16 %v1010, %v1003
  %v1669 = vpack.c.b16 %v1011, %v1004
  %v1670 = vpack.c.b16 %v1019, %v1012
  %v1671 = vpack.c.b16 %v1020, %v1013
  %v1672 = vpack.c.b16 %v1021, %v1014
  %v1673 = vpack.c.b16 %v1022, %v1015
  %v1674 = vpack.c.b16 %v1023, %v1016
  %v1675 = vpack.c.b16 %v1024, %v1017
  %v1676 = vpack.c.b16 %v1025, %v1018
  %v1677 = vpack.c.b16 %v1033, %v1026
  %v1678 = vpack.c.b16 %v1034, %v1027
  %v1679 = vpack.c.b16 %v1035, %v1028
  %v1680 = vpack.c.b16 %v1036, %v1029
  %v1681 = vpack.c.b16 %v1037, %v1030
  %v1682 = vpack.c.b16 %v1038, %v1031
  %v1683 = vpack.c.b16 %v1039, %v1032
  %v1684 = vpack.c.b16 %v1047, %v1040
  %v1685 = vpack.c.b16 %v1048, %v1041
  %v1686 = vpack.c.b16 %v1049, %v1042
  %v1687 = vpack.c.b16 %v1050, %v1043
  %v1688 = vpack.c.b16 %v1051, %v1044
  %v1689 = vpack.c.b16 %v1052, %v1045
  %v1690 = vpack.c.b16 %v1053, %v1046
  %v1691 = vpack.c.b16 %v1061, %v1054
  %v1692 = vpack.c.b16 %v1062, %v1055
  %v1693 = vpack.c.b16 %v1063, %v1056
  %v1694 = vpack.c.b16 %v1064, %v1057
  %v1695 = vpack.c.b16 %v1065, %v1058
  %v1696 = vpack.c.b16 %v1066, %v1059
  %v1697 = vpack.c.b16 %v1067, %v1060
  %v1698 = vpack.c.b16 %v1075, %v1068
  %v1699 = vpack.c.b16 %v1076, %v1069
  %v1700 = vpack.c.b16 %v1077, %v1070
  %v1701 = vpack.c.b16 %v1078, %v1071
  %v1702 = vpack.c.b16 %v1079, %v1072
  %v1703 = vpack.c.b16 %v1080, %v1073
  %v1704 = vpack.c.b16 %v1081, %v1074
  %v1705 = vpack.c.b16 %v1089, %v1082
  %v1706 = vpack.c.b16 %v1090, %v1083
  %v1707 = vpack.c.b16 %v1091, %v1084
  %v1708 = vpack.c.b16 %v1092, %v1085
  %v1709 = vpack.c.b16 %v1093, %v1086
  %v1710 = vpack.c.b16 %v1094, %v1087
  %v1711 = vpack.c.b16 %v1095, %v1088
  %v1712 = vpack.c.b16 %v1103, %v1096
  %v1713 = vpack.c.b16 %v1104, %v1097
  %v1714 = vpack.c.b16 %v1105, %v1098
  %v1715 = vpack.c.b16 %v1106, %v1099
  %v1716 = vpack.c.b16 %v1107, %v1100
  %v1717 = vpack.c.b16 %v1108, %v1101
  %v1718 = vpack.c.b16 %v1109, %v1102
  %v1719 = vpack.c.b16 %v1117, %v1110
  %v1720 = vpack.c.b16 %v1118, %v1111
  %v1721 = vpack.c.b16 %v1119, %v1112
  %v1722 = vpack.c.b16 %v1120, %v1113
  %v1723 = vpack.c.b16 %v1121, %v1114
  %v1724 = vpack.c.b16 %v1122, %v1115
  %v1725 = vpack.c.b16 %v1123, %v1116
  %v1726 = vpack.c.b16 %v1131, %v1124
  %v1727 = vpack.c.b16 %v1132, %v1125
  %v1728 = vpack.c.b16 %v1133, %v1126
  %v1729 = vpack.c.b16 %v1134, %v1127
  %v1730 = vpack.c.b16 %v1135, %v1128
  %v1731 = vpack.c.b16 %v1136, %v1129
  %v1732 = vpack.c.b16 %v1137, %v1130
  %v1733 = vpack.c.b16 %v1145, %v1138
  %v1734 = vpack.c.b16 %v1146, %v1139
  %v1735 = vpack.c.b16 %v1147, %v1140
  %v1736 = vpack.c.b16 %v1148, %v1141
  %v1737 = vpack.c.b16 %v1149, %v1142
  %v1738 = vpack.c.b16 %v1150, %v1143
  %v1739 = vpack.c.b16 %v1151, %v1144
  %v1740 = vpack.c.b16 %v1159, %v1152
  %v1741 = vpack.c.b16 %v1160, %v1153
  %v1742 = vpack.c.b16 %v1161, %v1154
  %v1743 = vpack.c.b16 %v1162, %v1155
  %v1744 = vpack.c.b16 %v1163, %v1156
  %v1745 = vpack.c.b16 %v1164, %v1157
  %v1746 = vpack.c.b16 %v1165, %v1158
  %v1747 = vpack.c.b16 %v1173, %v1166
  %v1748 = vpack.c.b16 %v1174, %v1167
  %v1749 = vpack.c.b16 %v1175, %v1168
  %v1750 = vpack.c.b16 %v1176, %v1169
  %v1751 = vpack.c.b16 %v1177, %v1170
  %v1752 = vpack.c.b16 %v1178, %v1171
  %v1753 = vpack.c.b16 %v1179, %v1172
  %v1754 = vpack.c.b16 %v1187, %v1180
  %v1755 = vpack.c.b16 %v1188, %v1181
  %v1756 = vpack.c.b16 %v1189, %v1182
  %v1757 = vpack.c.b16 %v1190, %v1183
  %v1758 = vpack.c.b16 %v1191, %v1184
  %v1759 = vpack.c.b16 %v1192, %v1185
  %v1760 = vpack.c.b16 %v1193, %v1186
  %v1761 = vpack.c.b16 %v1201, %v1194
  %v1762 = vpack.c.b16 %v1202, %v1195
  %v1763 = vpack.c.b16 %v1203, %v1196
  %v1764 = vpack.c.b16 %v1204, %v1197
  %v1765 = vpack.c.b16 %v1205, %v1198
  %v1766 = vpack.c.b16 %v1206, %v1199
  %v1767 = vpack.c.b16 %v1207, %v1200
  %v1768 = vpack.c.b16 %v1215, %v1208
  %v1769 = vpack.c.b16 %v1216, %v1209
  %v1770 = vpack.c.b16 %v1217, %v1210
  %v1771 = vpack.c.b16 %v1218, %v1211
  %v1772 = vpack.c.b16 %v1219, %v1212
  %v1773 = vpack.c.b16 %v1220, %v1213
  %v1774 = vpack.c.b16 %v1221, %v1214
  %v1775 = vpack.c.b16 %v1229, %v1222
  %v1776 = vpack.c.b16 %v1230, %v1223
  %v1777 = vpack.c.b16 %v1231, %v1224
  %v1778 = vpack.c.b16 %v1232, %v1225
  %v1779 = vpack.c.b16 %v1233, %v1226
  %v1780 = vpack.c.b16 %v1234, %v1227
  %v1781 = vpack.c.b16 %v1235, %v1228
  %v1782 = vpack.c.b16 %v1243, %v1236
  %v1783 = vpack.c.b16 %v1244, %v1237
  %v1784 = vpack.c.b16 %v1245, %v1238
  %v1785 = vpack.c.b16 %v1246, %v1239
  %v1786 = vpack.c.b16 %v1247, %v1240
  %v1787 = vpack.c.b16 %v1248, %v1241
  %v1788 = vpack.c.b16 %v1249, %v1242
  %v1789 = vpack.c.b16 %v1257, %v1250
  %v1790 = vpack.c.b16 %v1258, %v1251
  %v1791 = vpack.c.b16 %v1259, %v1252
  %v1792 = vpack.c.b16 %v1260, %v1253
  %v1793 = vpack.c.b16 %v1261, %v1254
  %v1794 = vpack.c.b16 %v1262, %v1255
  %v1795 = vpack.c.b16 %v1263, %v1256
  %v1796 = vpack.c.b16 %v1271, %v1264
  %v1797 = vpack.c.b16 %v1272, %v1265
  %v1798 = vpack.c.b16 %v1273, %v1266
  %v1799 = vpack.c.b16 %v1274, %v1267
  %v1800 = vpack.c.b16 %v1275, %v1268
  %v1801 = vpack.c.b16 %v1276, %v1269
  %v1802 = vpack.c.b16 %v1277, %v1270
  %v1803 = vpack.c.b16 %v1285, %v1278
  %v1804 = vpack.c.b16 %v1286, %v1279
  %v1805 = vpack.c.b16 %v1287, %v1280
  %v1806 = vpack.c.b16 %v1288, %v1281
  %v1807 = vpack.c.b16 %v1289, %v1282
  %v1808 = vpack.c.b16 %v1290, %v1283
  %v1809 = vpack.c.b16 %v1291, %v1284
  %v1810 = vpack.c.b16 %v1299, %v1292
  %v1811 = vpack.c.b16 %v1300, %v1293
  %v1812 = vpack.c.b16 %v1301, %v1294
  %v1813 = vpack.c.b16 %v1302, %v1295
  %v1814 = vpack.c.b16 %v1303, %v1296
  %v1815 = vpack.c.b16 %v1304, %v1297
  %v1816 = vpack.c.b16 %v1305, %v1298
  %v1817 = vpack.c.b16 %v1313, %v1306
  %v1818 = vpack.c.b16 %v1314, %v1307
  %v1819 = vpack.c.b16 %v1315, %v1308
  %v1820 = vpack.c.b16 %v1316, %v1309
  %v1821 = vpack.c.b16 %v1317, %v1310
  %v1822 = vpack.c.b16 %v1318, %v1311
  %v1823 = vpack.c.b16 %v1319, %v1312
  %v1824 = vpack.c.b16 %v1327, %v1320
  %v1825 = vpack.c.b16 %v1328, %v1321
  %v1826 = vpack.c.b16 %v1329, %v1322
  %v1827 = vpack.c.b16 %v1330, %v1323
  %v1828 = vpack.c.b16 %v1331, %v1324
  %v1829 = vpack.c.b16 %v1332, %v1325
  %v1830 = vpack.c.b16 %v1333, %v1326
  %v1831 = vpack.c.b16 %v1341, %v1334
  %v1832 = vpack.c.b16 %v1342, %v1335
  %v1833 = vpack.c.b16 %v1343, %v1336
  %v1834 = vpack.c.b16 %v1344, %v1337
  %v1835 = vpack.c.b16 %v1345, %v1338
  %v1836 = vpack.c.b16 %v1346, %v1339
  %v1837 = vpack.c.b16 %v1347, %v1340
  %v1838 = vpack.c.b16 %v1355, %v1348
  %v1839 = vpack.c.b16 %v1356, %v1349
  %v1840 = vpack.c.b16 %v1357, %v1350
  %v1841 = vpack.c.b16 %v1358, %v1351
  %v1842 = vpack.c.b16 %v1359, %v1352
  %v1843 = vpack.c.b16 %v1360, %v1353
  %v1844 = vpack.c.b16 %v1361, %v1354
  %v1845 = vpack.c.b16 %v1369, %v1362
  %v1846 = vpack.c.b16 %v1370, %v1363
  %v1847 = vpack.c.b16 %v1371, %v1364
  %v1848 = vpack.c.b16 %v1372, %v1365
  %v1849 = vpack.c.b16 %v1373, %v1366
  %v1850 = vpack.c.b16 %v1374, %v1367
  %v1851 = vpack.c.b16 %v1375, %v1368
  %v1852 = vpack.c.b16 %v1383, %v1376
  %v1853 = vpack.c.b16 %v1384, %v1377
  %v1854 = vpack.c.b16 %v1385, %v1378
  %v1855 = vpack.c.b16 %v1386, %v1379
  %v1856 = vpack.c.b16 %v1387, %v1380
  %v1857 = vpack.c.b16 %v1388, %v1381
  %v1858 = vpack.c.b16 %v1389, %v1382
  %v1859 = vpack.c.b16 %v1397, %v1390
  %v1860 = vpack.c.b16 %v1398, %v1391
  %v1861 = vpack.c.b16 %v1399, %v1392
  %v1862 = vpack.c.b16 %v1400, %v1393
  %v1863 = vpack.c.b16 %v1401, %v1394
  %v1864 = vpack.c.b16 %v1402, %v1395
  %v1865 = vpack.c.b16 %v1403, %v1396
  %v1866 = vpack.c.b16 %v1411, %v1404
  %v1867 = vpack.c.b16 %v1412, %v1405
  %v1868 = vpack.c.b16 %v1413, %v1406
  %v1869 = vpack.c.b16 %v1414, %v1407
  %v1870 = vpack.c.b16 %v1415, %v1408
  %v1871 = vpack.c.b16 %v1416, %v1409
  %v1872 = vpack.c.b16 %v1417, %v1410
  %v1873 = vpack.c.b16 %v1425, %v1418
  %v1874 = vpack.c.b16 %v1426, %v1419
  %v1875 = vpack.c.b16 %v1427, %v1420
  %v1876 = vpack.c.b16 %v1428, %v1421
  %v1877 = vpack.c.b16 %v1429, %v1422
  %v1878 = vpack.c.b16 %v1430, %v1423
  %v1879 = vpack.c.b16 %v1431, %v1424
  %v1880 = vpack.c.b16 %v1439, %v1432
  %v1881 = vpack.c.b16 %v1440, %v1433
  %v1882 = vpack.c.b16 %v1441, %v1434
  %v1883 = vpack.c.b16 %v1442, %v1435
  %v1884 = vpack.c.b16 %v1443, %v1436
  %v1885 = vpack.c.b16 %v1444, %v1437
  %v1886 = vpack.c.b16 %v1445, %v1438
  %v1887 = vpack.c.b16 %v1453, %v1446
  %v1888 = vpack.c.b16 %v1454, %v1447
  %v1889 = vpack.c.b16 %v1455, %v1448
  %v1890 = vpack.c.b16 %v1456, %v1449
  %v1891 = vpack.c.b16 %v1457, %v1450
  %v1892 = vpack.c.b16 %v1458, %v1451
  %v1893 = vpack.c.b16 %v1459, %v1452
  %v1894 = vpack.c.b16 %v1467, %v1460
  %v1895 = vpack.c.b16 %v1468, %v1461
  %v1896 = vpack.c.b16 %v1469, %v1462
  %v1897 = vpack.c.b16 %v1470, %v1463
  %v1898 = vpack.c.b16 %v1471, %v1464
  %v1899 = vpack.c.b16 %v1472, %v1465
  %v1900 = vpack.c.b16 %v1473, %v1466
  %v1901 = vpack.c.b16 %v1481, %v1474
  %v1902 = vpack.c.b16 %v1482, %v1475
  %v1903 = vpack.c.b16 %v1483, %v1476
  %v1904 = vpack.c.b16 %v1484, %v1477
  %v1905 = vpack.c.b16 %v1485, %v1478
  %v1906 = vpack.c.b16 %v1486, %v1479
  %v1907 = vpack.c.b16 %v1487, %v1480
  %v1908 = vpack.c.b16 %v1495, %v1488
  %v1909 = vpack.c.b16 %v1496, %v1489
  %v1910 = vpack.c.b16 %v1497, %v1490
  %v1911 = vpack.c.b16 %v1498, %v1491
  %v1912 = vpack.c.b16 %v1499, %v1492
  %v1913 = vpack.c.b16 %v1500, %v1493
  %v1914 = vpack.c.b16 %v1501, %v1494
  %v1915 = vpack.c.b16 %v1509, %v1502
  %v1916 = vpack.c.b16 %v1510, %v1503
  %v1917 = vpack.c.b16 %v1511, %v1504
  %v1918 = vpack.c.b16 %v1512, %v1505
  %v1919 = vpack.c.b16 %v1513, %v1506
  %v1920 = vpack.c.b16 %v1514, %v1507
  %v1921 = vpack.c.b16 %v1515, %v1508
  %v1922 = vpack.c.b16 %v1523, %v1516
  %v1923 = vpack.c.b16 %v1524, %v1517
  %v1924 = vpack.c.b16 %v1525, %v1518
  %v1925 = vpack.c.b16 %v1526, %v1519
  %v1926 = vpack.c.b16 %v1527, %v1520
  %v1927 = vpack.c.b16 %v1528, %v1521
  %v1928 = vpack.c.b16 %v1529, %v1522
  %v1929 = vpack.c.b16 %v1537, %v1530
  %v1930 = vpack.c.b16 %v1538, %v1531
  %v1931 = vpack.c.b16 %v1539, %v1532
  %v1932 = vpack.c.b16 %v1540, %v1533
  %v1933 = vpack.c.b16 %v1541, %v1534
  %v1934 = vpack.c.b16 %v1542, %v1535
  %v1935 = vpack.c.b16 %v1543, %v1536
  %v1936 = vpack.c.b16 %v1551, %v1544
  %v1937 = vpack.c.b16 %v1552, %v1545
  %v1938 = vpack.c.b16 %v1553, %v1546
  %v1939 = vpack.c.b16 %v1554, %v1547
  %v1940 = vpack.c.b16 %v1555, %v1548
  %v1941 = vpack.c.b16 %v1556, %v1549
  %v1942 = vpack.c.b16 %v1557, %v1550
  %v1943 = vpack.c.b16 %v1565, %v1558
  %v1944 = vpack.c.b16 %v1566, %v1559
  %v1945 = vpack.c.b16 %v1567, %v1560
  %v1946 = vpack.c.b16 %v1568, %v1561
  %v1947 = vpack.c.b16 %v1569, %v1562
  %v1948 = vpack.c.b16 %v1570, %v1563
  %v1949 = vpack.c.b16 %v1571, %v1564
  %v1950 = vpack.c.b16 %v1579, %v1572
  %v1951 = vpack.c.b16 %v1580, %v1573
  %v1952 = vpack.c.b16 %v1581, %v1574
  %v1953 = vpack.c.b16 %v1582, %v1575
  %v1954 = vpack.c.b16 %v1583, %v1576
  %v1955 = vpack.c.b16 %v1584, %v1577
  %v1956 = vpack.c.b16 %v1585, %v1578
  %v1957 = vpack.c.b16 %v1593, %v1586
  %v1958 = vpack.c.b16 %v1594, %v1587
  %v1959 = vpack.c.b16 %v1595, %v1588
  %v1960 = vpack.c.b16 %v1596, %v1589
  %v1961 = vpack.c.b16 %v1597, %v1590
  %v1962 = vpack.c.b16 %v1598, %v1591
  %v1963 = vpack.c.b16 %v1599, %v1592
  %v1964 = vpack.c.b16 %v1607, %v1600
  %v1965 = vpack.c.b16 %v1608, %v1601
  %v1966 = vpack.c.b16 %v1609, %v1602
  %v1967 = vpack.c.b16 %v1610, %v1603
  %v1968 = vpack.c.b16 %v1611, %v1604
  %v1969 = vpack.c.b16 %v1612, %v1605
  %v1970 = vpack.c.b16 %v1613, %v1606
  %v1971 = vpack.c.b16 %v1621, %v1614
  %v1972 = vpack.c.b16 %v1622, %v1615
  %v1973 = vpack.c.b16 %v1623, %v1616
  %v1974 = vpack.c.b16 %v1624, %v1617
  %v1975 = vpack.c.b16 %v1625, %v1618
  %v1976 = vpack.c.b16 %v1626, %v1619
  %v1977 = vpack.c.b16 %v1627, %v1620
  %v2378 = vunpack.c.l.b16 %v421
  %v2379 = vunpack.c.l.b16 %v422
  %v2380 = vunpack.c.l.b16 %v423
  %v2381 = vunpack.c.l.b16 %v424
  %v2382 = vunpack.c.l.b16 %v425
  %v2383 = vunpack.c.l.b16 %v426
  %v2384 = vunpack.c.l.b16 %v427
  %v2385 = vunpack.c.l.b16 %v428
  %v2386 = vunpack.c.l.b16 %v429
  %v2387 = vunpack.c.l.b16 %v430
  %v2388 = vunpack.c.l.b16 %v431
  %v2389 = vunpack.c.l.b16 %v432
  %v2390 = vunpack.c.l.b16 %v433
  %v2391 = vunpack.c.l.b16 %v434
  %v2392 = vunpack.c.l.b16 %v435
  %v2393 = vunpack.c.l.b16 %v436
  %v2394 = vunpack.c.l.b16 %v437
  %v2395 = vunpack.c.l.b16 %v438
  %v2396 = vunpack.c.l.b16 %v439
  %v2397 = vunpack.c.l.b16 %v440
  %v2398 = vunpack.c.l.b16 %v441
  %v2399 = vunpack.c.l.b16 %v442
  %v2400 = vunpack.c.l.b16 %v443
  %v2401 = vunpack.c.l.b16 %v444
  %v2402 = vunpack.c.l.b16 %v445
  %v2403 = vunpack.c.l.b16 %v446
  %v2404 = vunpack.c.l.b16 %v447
  %v2405 = vunpack.c.l.b16 %v448
  %v2406 = vunpack.c.l.b16 %v449
  %v2407 = vunpack.c.l.b16 %v450
  %v2408 = vunpack.c.l.b16 %v451
  %v2409 = vunpack.c.l.b16 %v452
  %v2410 = vunpack.c.l.b16 %v453
  %v2411 = vunpack.c.l.b16 %v454
  %v2412 = vunpack.c.l.b16 %v455
  %v2413 = vunpack.c.l.b16 %v456
  %v2414 = vunpack.c.l.b16 %v457
  %v2415 = vunpack.c.l.b16 %v458
  %v2416 = vunpack.c.l.b16 %v459
  %v2417 = vunpack.c.l.b16 %v460
  %v2418 = vunpack.c.l.b16 %v461
  %v2419 = vunpack.c.l.b16 %v462
  %v2420 = vunpack.c.l.b16 %v463
  %v2421 = vunpack.c.l.b16 %v464
  %v2422 = vunpack.c.l.b16 %v465
  %v2423 = vunpack.c.l.b16 %v466
  %v2424 = vunpack.c.l.b16 %v467
  %v2425 = vunpack.c.l.b16 %v468
  %v2426 = vunpack.c.l.b16 %v469
  %v2427 = vunpack.c.l.b16 %v470
  %v2428 = vunpack.c.l.b16 %v471
  %v2429 = vunpack.c.l.b16 %v472
  %v2430 = vunpack.c.l.b16 %v473
  %v2431 = vunpack.c.l.b16 %v474
  %v2432 = vunpack.c.l.b16 %v475
  %v2433 = vunpack.c.l.b16 %v476
  %v2434 = vunpack.c.l.b16 %v477
  %v2435 = vunpack.c.l.b16 %v478
  %v2436 = vunpack.c.l.b16 %v479
  %v2437 = vunpack.c.l.b16 %v480
  %v2438 = vunpack.c.l.b16 %v481
  %v2439 = vunpack.c.l.b16 %v482
  %v2440 = vunpack.c.l.b16 %v483
  %v2441 = vunpack.c.l.b16 %v484
  %v2442 = vunpack.c.l.b16 %v485
  %v2443 = vunpack.c.l.b16 %v486
  %v2444 = vunpack.c.l.b16 %v487
  %v2445 = vunpack.c.l.b16 %v488
  %v2446 = vunpack.c.l.b16 %v489
  %v2447 = vunpack.c.l.b16 %v490
  %v2448 = vunpack.c.l.b16 %v491
  %v2449 = vunpack.c.l.b16 %v492
  %v2450 = vunpack.c.l.b16 %v493
  %v2451 = vunpack.c.l.b16 %v494
  %v2452 = vunpack.c.l.b16 %v495
  %v2453 = vunpack.c.l.b16 %v496
  %v2454 = vunpack.c.l.b16 %v497
  %v2455 = vunpack.c.l.b16 %v498
  %v2456 = vunpack.c.l.b16 %v499
  %v2457 = vunpack.c.l.b16 %v500
  %v2458 = vunpack.c.l.b16 %v501
  %v2459 = vunpack.c.l.b16 %v502
  %v2460 = vunpack.c.l.b16 %v503
  %v2461 = vunpack.c.l.b16 %v504
  %v2462 = vunpack.c.l.b16 %v505
  %v2463 = vunpack.c.l.b16 %v506
  %v2464 = vunpack.c.l.b16 %v507
  %v2465 = vunpack.c.l.b16 %v508
  %v2466 = vunpack.c.l.b16 %v509
  %v2467 = vunpack.c.l.b16 %v510
  %v2468 = vunpack.c.l.b16 %v511
  %v2469 = vunpack.c.l.b16 %v512
  %v2470 = vunpack.c.l.b16 %v513
  %v2471 = vunpack.c.l.b16 %v514
  %v2472 = vunpack.c.l.b16 %v515
  %v2473 = vunpack.c.l.b16 %v516
  %v2474 = vunpack.c.l.b16 %v517
  %v2475 = vunpack.c.l.b16 %v518
  %v2476 = vunpack.c.l.b16 %v519
  %v2477 = vunpack.c.l.b16 %v520
  %v2478 = vpack.c.b16 %v2379, %v2378
  %v2479 = vpack.c.b16 %v2381, %v2380
  %v2480 = vpack.c.b16 %v2383, %v2382
  %v2481 = vpack.c.b16 %v2385, %v2384
  %v2482 = vpack.c.b16 %v2387, %v2386
  %v2483 = vpack.c.b16 %v2389, %v2388
  %v2484 = vpack.c.b16 %v2391, %v2390
  %v2485 = vpack.c.b16 %v2393, %v2392
  %v2486 = vpack.c.b16 %v2395, %v2394
  %v2487 = vpack.c.b16 %v2397, %v2396
  %v2488 = vpack.c.b16 %v2399, %v2398
  %v2489 = vpack.c.b16 %v2401, %v2400
  %v2490 = vpack.c.b16 %v2403, %v2402
  %v2491 = vpack.c.b16 %v2405, %v2404
  %v2492 = vpack.c.b16 %v2407, %v2406
  %v2493 = vpack.c.b16 %v2409, %v2408
  %v2494 = vpack.c.b16 %v2411, %v2410
  %v2495 = vpack.c.b16 %v2413, %v2412
  %v2496 = vpack.c.b16 %v2415, %v2414
  %v2497 = vpack.c.b16 %v2417, %v2416
  %v2498 = vpack.c.b16 %v2419, %v2418
  %v2499 = vpack.c.b16 %v2421, %v2420
  %v2500 = vpack.c.b16 %v2423, %v2422
  %v2501 = vpack.c.b16 %v2425, %v2424
  %v2502 = vpack.c.b16 %v2427, %v2426
  %v2503 = vpack.c.b16 %v2429, %v2428
  %v2504 = vpack.c.b16 %v2431, %v2430
  %v2505 = vpack.c.b16 %v2433, %v2432
  %v2506 = vpack.c.b16 %v2435, %v2434
  %v2507 = vpack.c.b16 %v2437, %v2436
  %v2508 = vpack.c.b16 %v2439, %v2438
  %v2509 = vpack.c.b16 %v2441, %v2440
  %v2510 = vpack.c.b16 %v2443, %v2442
  %v2511 = vpack.c.b16 %v2445, %v2444
  %v2512 = vpack.c.b16 %v2447, %v2446
  %v2513 = vpack.c.b16 %v2449, %v2448
  %v2514 = vpack.c.b16 %v2451, %v2450
  %v2515 = vpack.c.b16 %v2453, %v2452
  %v2516 = vpack.c.b16 %v2455, %v2454
  %v2517 = vpack.c.b16 %v2457, %v2456
  %v2518 = vpack.c.b16 %v2459, %v2458
  %v2519 = vpack.c.b16 %v2461, %v2460
  %v2520 = vpack.c.b16 %v2463, %v2462
  %v2521 = vpack.c.b16 %v2465, %v2464
  %v2522 = vpack.c.b16 %v2467, %v2466
  %v2523 = vpack.c.b16 %v2469, %v2468
  %v2524 = vpack.c.b16 %v2471, %v2470
  %v2525 = vpack.c.b16 %v2473, %v2472
  %v2526 = vpack.c.b16 %v2475, %v2474
  %v2527 = vpack.c.b16 %v2477, %v2476
  %vm2578 = vcmask 261120
  %v2580 = vsel %vm2578, %v1634, 0
  %v2583 = vsel %vm2578, %v1641, 0
  %v2586 = vsel %vm2578, %v1648, 0
  %v2589 = vsel %vm2578, %v1655, 0
  %v2592 = vsel %vm2578, %v1662, 0
  %v2595 = vsel %vm2578, %v1669, 0
  %v2598 = vsel %vm2578, %v1676, 0
  %v2601 = vsel %vm2578, %v1683, 0
  %v2604 = vsel %vm2578, %v1690, 0
  %v2607 = vsel %vm2578, %v1697, 0
  %v2610 = vsel %vm2578, %v1704, 0
  %v2613 = vsel %vm2578, %v1711, 0
  %v2616 = vsel %vm2578, %v1718, 0
  %v2619 = vsel %vm2578, %v1725, 0
  %v2622 = vsel %vm2578, %v1732, 0
  %v2625 = vsel %vm2578, %v1739, 0
  %v2628 = vsel %vm2578, %v1746, 0
  %v2631 = vsel %vm2578, %v1753, 0
  %v2634 = vsel %vm2578, %v1760, 0
  %v2637 = vsel %vm2578, %v1767, 0
  %v2640 = vsel %vm2578, %v1774, 0
  %v2643 = vsel %vm2578, %v1781, 0
  %v2646 = vsel %vm2578, %v1788, 0
  %v2649 = vsel %vm2578, %v1795, 0
  %v2652 = vsel %vm2578, %v1802, 0
  %v2655 = vsel %vm2578, %v1809, 0
  %v2658 = vsel %vm2578, %v1816, 0
  %v2661 = vsel %vm2578, %v1823, 0
  %v2664 = vsel %vm2578, %v1830, 0
  %v2667 = vsel %vm2578, %v1837, 0
  %v2670 = vsel %vm2578, %v1844, 0
  %v2673 = vsel %vm2578, %v1851, 0
  %v2676 = vsel %vm2578, %v1858, 0
  %v2679 = vsel %vm2578, %v1865, 0
  %v2682 = vsel %vm2578, %v1872, 0
  %v2685 = vsel %vm2578, %v1879, 0
  %v2688 = vsel %vm2578, %v1886, 0
  %v2691 = vsel %vm2578, %v1893, 0
  %v2694 = vsel %vm2578, %v1900, 0
  %v2697 = vsel %vm2578, %v1907, 0
  %v2700 = vsel %vm2578, %v1914, 0
  %v2703 = vsel %vm2578, %v1921, 0
  %v2706 = vsel %vm2578, %v1928, 0
  %v2709 = vsel %vm2578, %v1935, 0
  %v2712 = vsel %vm2578, %v1942, 0
  %v2715 = vsel %vm2578, %v1949, 0
  %v2718 = vsel %vm2578, %v1956, 0
  %v2721 = vsel %vm2578, %v1963, 0
  %v2724 = vsel %vm2578, %v1970, 0
  %v2727 = vsel %vm2578, %v1977, 0
  %2729 = vmatprep.subr.bf16.mxu0 0
  %2730 = vmatpush1.bf16.msra.mxu0 %v2478
  %2731 = vmatprep.subr.bf16.mxu0 0
  %2732 = vmatpush1.bf16.msra.mxu0 %v2479
  %2733 = vmatprep.subr.bf16.mxu0 0
  %2734 = vmatpush1.bf16.msra.mxu0 %v2480
  %2735 = vmatprep.subr.bf16.mxu0 0
  %2736 = vmatpush1.bf16.msra.mxu0 %v2481
  %2737 = vmatprep.subr.bf16.mxu0 0
  %2738 = vmatpush1.bf16.msra.mxu0 %v2482
  %2739 = vmatprep.subr.bf16.mxu0 0
  %2740 = vmatpush1.bf16.msra.mxu0 %v2483
  %2741 = vmatprep.subr.bf16.mxu0 0
  %2742 = vmatpush1.bf16.msra.mxu0 %v2484
  %2743 = vmatprep.subr.bf16.mxu0 0
  %2744 = vmatpush1.bf16.msra.mxu0 %v2485
  %2745 = vmatprep.subr.bf16.mxu0 0
  %2746 = vmatpush1.bf16.msra.mxu0 %v2486
  %2747 = vmatprep.subr.bf16.mxu0 0
  %2748 = vmatpush1.bf16.msra.mxu0 %v2487
  %2749 = vmatprep.subr.bf16.mxu0 0
  %2750 = vmatpush1.bf16.msra.mxu0 %v2488
  %2751 = vmatprep.subr.bf16.mxu0 0
  %2752 = vmatpush1.bf16.msra.mxu0 %v2489
  %2753 = vmatprep.subr.bf16.mxu0 0
  %2754 = vmatpush1.bf16.msra.mxu0 %v2490
  %2755 = vmatprep.subr.bf16.mxu0 0
  %2756 = vmatpush1.bf16.msra.mxu0 %v2491
  %2757 = vmatprep.subr.bf16.mxu0 0
  %2758 = vmatpush1.bf16.msra.mxu0 %v2492
  %2759 = vmatprep.subr.bf16.mxu0 0
  %2760 = vmatpush1.bf16.msra.mxu0 %v2493
  %2761 = vmatprep.mubr.bf16.mxu0 %v1629
  %2762 = vmatmul.mubr.bf16.gmra.mrb[0].mxu0 %v1628
  %v2763 = vpop.f32.mrb[0].mxu0
  %v2764 = vadd.f32 %v526, %v2763
  %v2765 = vpop.f32.mrb[0].mxu0
  %v2766 = vpop.f32.mrb[0].mxu0
  %v2767 = vadd.f32 %v526, %v2766
  %v2768 = vpop.f32.mrb[0].mxu0
  %2769 = vmatprep.mubr.bf16.mxu0 %v1636
  %2770 = vmatmul.mubr.bf16.gmra.mrb[0].mxu0 %v1635
  %v2771 = vpop.f32.mrb[0].mxu0
  %v2772 = vadd.f32 %v526, %v2771
  %v2773 = vpop.f32.mrb[0].mxu0
  %v2774 = vpop.f32.mrb[0].mxu0
  %v2775 = vadd.f32 %v526, %v2774
  %v2776 = vpop.f32.mrb[0].mxu0
  %2777 = vmatprep.mubr.bf16.mxu0 %v1643
  %2778 = vmatmul.mubr.bf16.gmra.mrb[0].mxu0 %v1642
  %v2779 = vpop.f32.mrb[0].mxu0
  %v2780 = vadd.f32 %v526, %v2779
  %v2781 = vpop.f32.mrb[0].mxu0
  %v2782 = vpop.f32.mrb[0].mxu0
  %v2783 = vadd.f32 %v526, %v2782
  %v2784 = vpop.f32.mrb[0].mxu0
  %2785 = vmatprep.mubr.bf16.mxu0 %v1650
  %2786 = vmatmul.mubr.bf16.gmra.mrb[0].mxu0 %v1649
  %v2787 = vpop.f32.mrb[0].mxu0
  %v2788 = vadd.f32 %v526, %v2787
  %v2789 = vpop.f32.mrb[0].mxu0
  %v2790 = vpop.f32.mrb[0].mxu0
  %v2791 = vadd.f32 %v526, %v2790
  %v2792 = vpop.f32.mrb[0].mxu0
  %2793 = vmatprep.mubr.bf16.mxu0 %v1657
  %2794 = vmatmul.mubr.bf16.gmra.mrb[0].mxu0 %v1656
  %v2795 = vpop.f32.mrb[0].mxu0
  %v2796 = vadd.f32 %v526, %v2795
  %v2797 = vpop.f32.mrb[0].mxu0
  %v2798 = vpop.f32.mrb[0].mxu0
  %v2799 = vadd.f32 %v526, %v2798
  %v2800 = vpop.f32.mrb[0].mxu0
  %2801 = vmatprep.mubr.bf16.mxu0 %v1664
  %2802 = vmatmul.mubr.bf16.gmra.mrb[0].mxu0 %v1663
  %v2803 = vpop.f32.mrb[0].mxu0
  %v2804 = vadd.f32 %v526, %v2803
  %v2805 = vpop.f32.mrb[0].mxu0
  %v2806 = vpop.f32.mrb[0].mxu0
  %v2807 = vadd.f32 %v526, %v2806
  %v2808 = vpop.f32.mrb[0].mxu0
  %2809 = vmatprep.mubr.bf16.mxu0 %v1671
  %2810 = vmatmul.mubr.bf16.gmra.mrb[0].mxu0 %v1670
  %v2811 = vpop.f32.mrb[0].mxu0
  %v2812 = vadd.f32 %v526, %v2811
  %v2813 = vpop.f32.mrb[0].mxu0
  %v2814 = vpop.f32.mrb[0].mxu0
  %v2815 = vadd.f32 %v526, %v2814
  %v2816 = vpop.f32.mrb[0].mxu0
  %2817 = vmatprep.mubr.bf16.mxu0 %v1678
  %2818 = vmatmul.mubr.bf16.gmra.mrb[0].mxu0 %v1677
  %v2819 = vpop.f32.mrb[0].mxu0
  %v2820 = vadd.f32 %v526, %v2819
  %v2821 = vpop.f32.mrb[0].mxu0
  %v2822 = vpop.f32.mrb[0].mxu0
  %v2823 = vadd.f32 %v526, %v2822
  %v2824 = vpop.f32.mrb[0].mxu0
  %2825 = vmatprep.mubr.bf16.mxu0 %v1685
  %2826 = vmatmul.mubr.bf16.gmra.mrb[0].mxu0 %v1684
  %v2827 = vpop.f32.mrb[0].mxu0
  %v2828 = vadd.f32 %v526, %v2827
  %v2829 = vpop.f32.mrb[0].mxu0
  %v2830 = vpop.f32.mrb[0].mxu0
  %v2831 = vadd.f32 %v526, %v2830
  %v2832 = vpop.f32.mrb[0].mxu0
  %2833 = vmatprep.mubr.bf16.mxu0 %v1692
  %2834 = vmatmul.mubr.bf16.gmra.mrb[0].mxu0 %v1691
  %v2835 = vpop.f32.mrb[0].mxu0
  %v2836 = vadd.f32 %v526, %v2835
  %v2837 = vpop.f32.mrb[0].mxu0
  %v2838 = vpop.f32.mrb[0].mxu0
  %v2839 = vadd.f32 %v526, %v2838
  %v2840 = vpop.f32.mrb[0].mxu0
  %2841 = vmatprep.mubr.bf16.mxu0 %v1699
  %2842 = vmatmul.mubr.bf16.gmra.mrb[0].mxu0 %v1698
  %v2843 = vpop.f32.mrb[0].mxu0
  %v2844 = vadd.f32 %v526, %v2843
  %v2845 = vpop.f32.mrb[0].mxu0
  %v2846 = vpop.f32.mrb[0].mxu0
  %v2847 = vadd.f32 %v526, %v2846
  %v2848 = vpop.f32.mrb[0].mxu0
  %2849 = vmatprep.mubr.bf16.mxu0 %v1706
  %2850 = vmatmul.mubr.bf16.gmra.mrb[0].mxu0 %v1705
  %v2851 = vpop.f32.mrb[0].mxu0
  %v2852 = vadd.f32 %v526, %v2851
  %v2853 = vpop.f32.mrb[0].mxu0
  %v2854 = vpop.f32.mrb[0].mxu0
  %v2855 = vadd.f32 %v526, %v2854
  %v2856 = vpop.f32.mrb[0].mxu0
  %2857 = vmatprep.mubr.bf16.mxu0 %v1713
  %2858 = vmatmul.mubr.bf16.gmra.mrb[0].mxu0 %v1712
  %v2859 = vpop.f32.mrb[0].mxu0
  %v2860 = vadd.f32 %v526, %v2859
  %v2861 = vpop.f32.mrb[0].mxu0
  %v2862 = vpop.f32.mrb[0].mxu0
  %v2863 = vadd.f32 %v526, %v2862
  %v2864 = vpop.f32.mrb[0].mxu0
  %2865 = vmatprep.mubr.bf16.mxu0 %v1720
  %2866 = vmatmul.mubr.bf16.gmra.mrb[0].mxu0 %v1719
  %v2867 = vpop.f32.mrb[0].mxu0
  %v2868 = vadd.f32 %v526, %v2867
  %v2869 = vpop.f32.mrb[0].mxu0
  %v2870 = vpop.f32.mrb[0].mxu0
  %v2871 = vadd.f32 %v526, %v2870
  %v2872 = vpop.f32.mrb[0].mxu0
  %2873 = vmatprep.mubr.bf16.mxu0 %v1727
  %2874 = vmatmul.mubr.bf16.gmra.mrb[0].mxu0 %v1726
  %v2875 = vpop.f32.mrb[0].mxu0
  %v2876 = vadd.f32 %v526, %v2875
  %v2877 = vpop.f32.mrb[0].mxu0
  %v2878 = vpop.f32.mrb[0].mxu0
  %v2879 = vadd.f32 %v526, %v2878
  %v2880 = vpop.f32.mrb[0].mxu0
  %2881 = vmatprep.mubr.bf16.mxu0 %v1734
  %2882 = vmatmul.mubr.bf16.gmra.mrb[0].mxu0 %v1733
  %v2883 = vpop.f32.mrb[0].mxu0
  %v2884 = vadd.f32 %v526, %v2883
  %v2885 = vpop.f32.mrb[0].mxu0
  %v2886 = vpop.f32.mrb[0].mxu0
  %v2887 = vadd.f32 %v526, %v2886
  %v2888 = vpop.f32.mrb[0].mxu0
  %2889 = vmatprep.mubr.bf16.mxu0 %v1741
  %2890 = vmatmul.mubr.bf16.gmra.mrb[0].mxu0 %v1740
  %v2891 = vpop.f32.mrb[0].mxu0
  %v2892 = vadd.f32 %v526, %v2891
  %v2893 = vpop.f32.mrb[0].mxu0
  %v2894 = vpop.f32.mrb[0].mxu0
  %v2895 = vadd.f32 %v526, %v2894
  %v2896 = vpop.f32.mrb[0].mxu0
  %2897 = vmatprep.mubr.bf16.mxu0 %v1748
  %2898 = vmatmul.mubr.bf16.gmra.mrb[0].mxu0 %v1747
  %v2899 = vpop.f32.mrb[0].mxu0
  %v2900 = vadd.f32 %v526, %v2899
  %v2901 = vpop.f32.mrb[0].mxu0
  %v2902 = vpop.f32.mrb[0].mxu0
  %v2903 = vadd.f32 %v526, %v2902
  %v2904 = vpop.f32.mrb[0].mxu0
  %2905 = vmatprep.mubr.bf16.mxu0 %v1755
  %2906 = vmatmul.mubr.bf16.gmra.mrb[0].mxu0 %v1754
  %v2907 = vpop.f32.mrb[0].mxu0
  %v2908 = vadd.f32 %v526, %v2907
  %v2909 = vpop.f32.mrb[0].mxu0
  %v2910 = vpop.f32.mrb[0].mxu0
  %v2911 = vadd.f32 %v526, %v2910
  %v2912 = vpop.f32.mrb[0].mxu0
  %2913 = vmatprep.mubr.bf16.mxu0 %v1762
  %2914 = vmatmul.mubr.bf16.gmra.mrb[0].mxu0 %v1761
  %v2915 = vpop.f32.mrb[0].mxu0
  %v2916 = vadd.f32 %v526, %v2915
  %v2917 = vpop.f32.mrb[0].mxu0
  %v2918 = vpop.f32.mrb[0].mxu0
  %v2919 = vadd.f32 %v526, %v2918
  %v2920 = vpop.f32.mrb[0].mxu0
  %2921 = vmatprep.mubr.bf16.mxu0 %v1769
  %2922 = vmatmul.mubr.bf16.gmra.mrb[0].mxu0 %v1768
  %v2923 = vpop.f32.mrb[0].mxu0
  %v2924 = vadd.f32 %v526, %v2923
  %v2925 = vpop.f32.mrb[0].mxu0
  %v2926 = vpop.f32.mrb[0].mxu0
  %v2927 = vadd.f32 %v526, %v2926
  %v2928 = vpop.f32.mrb[0].mxu0
  %2929 = vmatprep.mubr.bf16.mxu0 %v1776
  %2930 = vmatmul.mubr.bf16.gmra.mrb[0].mxu0 %v1775
  %v2931 = vpop.f32.mrb[0].mxu0
  %v2932 = vadd.f32 %v526, %v2931
  %v2933 = vpop.f32.mrb[0].mxu0
  %v2934 = vpop.f32.mrb[0].mxu0
  %v2935 = vadd.f32 %v526, %v2934
  %v2936 = vpop.f32.mrb[0].mxu0
  %2937 = vmatprep.mubr.bf16.mxu0 %v1783
  %2938 = vmatmul.mubr.bf16.gmra.mrb[0].mxu0 %v1782
  %v2939 = vpop.f32.mrb[0].mxu0
  %v2940 = vadd.f32 %v526, %v2939
  %v2941 = vpop.f32.mrb[0].mxu0
  %v2942 = vpop.f32.mrb[0].mxu0
  %v2943 = vadd.f32 %v526, %v2942
  %v2944 = vpop.f32.mrb[0].mxu0
  %2945 = vmatprep.mubr.bf16.mxu0 %v1790
  %2946 = vmatmul.mubr.bf16.gmra.mrb[0].mxu0 %v1789
  %v2947 = vpop.f32.mrb[0].mxu0
  %v2948 = vadd.f32 %v526, %v2947
  %v2949 = vpop.f32.mrb[0].mxu0
  %v2950 = vpop.f32.mrb[0].mxu0
  %v2951 = vadd.f32 %v526, %v2950
  %v2952 = vpop.f32.mrb[0].mxu0
  %2953 = vmatprep.mubr.bf16.mxu0 %v1797
  %2954 = vmatmul.mubr.bf16.gmra.mrb[0].mxu0 %v1796
  %v2955 = vpop.f32.mrb[0].mxu0
  %v2956 = vadd.f32 %v526, %v2955
  %v2957 = vpop.f32.mrb[0].mxu0
  %v2958 = vpop.f32.mrb[0].mxu0
  %v2959 = vadd.f32 %v526, %v2958
  %v2960 = vpop.f32.mrb[0].mxu0
  %2961 = vmatprep.mubr.bf16.mxu0 %v1804
  %2962 = vmatmul.mubr.bf16.gmra.mrb[0].mxu0 %v1803
  %v2963 = vpop.f32.mrb[0].mxu0
  %v2964 = vadd.f32 %v526, %v2963
  %v2965 = vpop.f32.mrb[0].mxu0
  %v2966 = vpop.f32.mrb[0].mxu0
  %v2967 = vadd.f32 %v526, %v2966
  %v2968 = vpop.f32.mrb[0].mxu0
  %2969 = vmatprep.mubr.bf16.mxu0 %v1811
  %2970 = vmatmul.mubr.bf16.gmra.mrb[0].mxu0 %v1810
  %v2971 = vpop.f32.mrb[0].mxu0
  %v2972 = vadd.f32 %v526, %v2971
  %v2973 = vpop.f32.mrb[0].mxu0
  %v2974 = vpop.f32.mrb[0].mxu0
  %v2975 = vadd.f32 %v526, %v2974
  %v2976 = vpop.f32.mrb[0].mxu0
  %2977 = vmatprep.mubr.bf16.mxu0 %v1818
  %2978 = vmatmul.mubr.bf16.gmra.mrb[0].mxu0 %v1817
  %v2979 = vpop.f32.mrb[0].mxu0
  %v2980 = vadd.f32 %v526, %v2979
  %v2981 = vpop.f32.mrb[0].mxu0
  %v2982 = vpop.f32.mrb[0].mxu0
  %v2983 = vadd.f32 %v526, %v2982
  %v2984 = vpop.f32.mrb[0].mxu0
  %2985 = vmatprep.mubr.bf16.mxu0 %v1825
  %2986 = vmatmul.mubr.bf16.gmra.mrb[0].mxu0 %v1824
  %v2987 = vpop.f32.mrb[0].mxu0
  %v2988 = vadd.f32 %v526, %v2987
  %v2989 = vpop.f32.mrb[0].mxu0
  %v2990 = vpop.f32.mrb[0].mxu0
  %v2991 = vadd.f32 %v526, %v2990
  %v2992 = vpop.f32.mrb[0].mxu0
  %2993 = vmatprep.mubr.bf16.mxu0 %v1832
  %2994 = vmatmul.mubr.bf16.gmra.mrb[0].mxu0 %v1831
  %v2995 = vpop.f32.mrb[0].mxu0
  %v2996 = vadd.f32 %v526, %v2995
  %v2997 = vpop.f32.mrb[0].mxu0
  %v2998 = vpop.f32.mrb[0].mxu0
  %v2999 = vadd.f32 %v526, %v2998
  %v3000 = vpop.f32.mrb[0].mxu0
  %3001 = vmatprep.mubr.bf16.mxu0 %v1839
  %3002 = vmatmul.mubr.bf16.gmra.mrb[0].mxu0 %v1838
  %v3003 = vpop.f32.mrb[0].mxu0
  %v3004 = vadd.f32 %v526, %v3003
  %v3005 = vpop.f32.mrb[0].mxu0
  %v3006 = vpop.f32.mrb[0].mxu0
  %v3007 = vadd.f32 %v526, %v3006
  %v3008 = vpop.f32.mrb[0].mxu0
  %3009 = vmatprep.mubr.bf16.mxu0 %v1846
  %3010 = vmatmul.mubr.bf16.gmra.mrb[0].mxu0 %v1845
  %v3011 = vpop.f32.mrb[0].mxu0
  %v3012 = vadd.f32 %v526, %v3011
  %v3013 = vpop.f32.mrb[0].mxu0
  %v3014 = vpop.f32.mrb[0].mxu0
  %v3015 = vadd.f32 %v526, %v3014
  %v3016 = vpop.f32.mrb[0].mxu0
  %3017 = vmatprep.mubr.bf16.mxu0 %v1853
  %3018 = vmatmul.mubr.bf16.gmra.mrb[0].mxu0 %v1852
  %v3019 = vpop.f32.mrb[0].mxu0
  %v3020 = vadd.f32 %v526, %v3019
  %v3021 = vpop.f32.mrb[0].mxu0
  %v3022 = vpop.f32.mrb[0].mxu0
  %v3023 = vadd.f32 %v526, %v3022
  %v3024 = vpop.f32.mrb[0].mxu0
  %3025 = vmatprep.mubr.bf16.mxu0 %v1860
  %3026 = vmatmul.mubr.bf16.gmra.mrb[0].mxu0 %v1859
  %v3027 = vpop.f32.mrb[0].mxu0
  %v3028 = vadd.f32 %v526, %v3027
  %v3029 = vpop.f32.mrb[0].mxu0
  %v3030 = vpop.f32.mrb[0].mxu0
  %v3031 = vadd.f32 %v526, %v3030
  %v3032 = vpop.f32.mrb[0].mxu0
  %3033 = vmatprep.mubr.bf16.mxu0 %v1867
  %3034 = vmatmul.mubr.bf16.gmra.mrb[0].mxu0 %v1866
  %v3035 = vpop.f32.mrb[0].mxu0
  %v3036 = vadd.f32 %v526, %v3035
  %v3037 = vpop.f32.mrb[0].mxu0
  %v3038 = vpop.f32.mrb[0].mxu0
  %v3039 = vadd.f32 %v526, %v3038
  %v3040 = vpop.f32.mrb[0].mxu0
  %3041 = vmatprep.mubr.bf16.mxu0 %v1874
  %3042 = vmatmul.mubr.bf16.gmra.mrb[0].mxu0 %v1873
  %v3043 = vpop.f32.mrb[0].mxu0
  %v3044 = vadd.f32 %v526, %v3043
  %v3045 = vpop.f32.mrb[0].mxu0
  %v3046 = vpop.f32.mrb[0].mxu0
  %v3047 = vadd.f32 %v526, %v3046
  %v3048 = vpop.f32.mrb[0].mxu0
  %3049 = vmatprep.mubr.bf16.mxu0 %v1881
  %3050 = vmatmul.mubr.bf16.gmra.mrb[0].mxu0 %v1880
  %v3051 = vpop.f32.mrb[0].mxu0
  %v3052 = vadd.f32 %v526, %v3051
  %v3053 = vpop.f32.mrb[0].mxu0
  %v3054 = vpop.f32.mrb[0].mxu0
  %v3055 = vadd.f32 %v526, %v3054
  %v3056 = vpop.f32.mrb[0].mxu0
  %3057 = vmatprep.mubr.bf16.mxu0 %v1888
  %3058 = vmatmul.mubr.bf16.gmra.mrb[0].mxu0 %v1887
  %v3059 = vpop.f32.mrb[0].mxu0
  %v3060 = vadd.f32 %v526, %v3059
  %v3061 = vpop.f32.mrb[0].mxu0
  %v3062 = vpop.f32.mrb[0].mxu0
  %v3063 = vadd.f32 %v526, %v3062
  %v3064 = vpop.f32.mrb[0].mxu0
  %3065 = vmatprep.mubr.bf16.mxu0 %v1895
  %3066 = vmatmul.mubr.bf16.gmra.mrb[0].mxu0 %v1894
  %v3067 = vpop.f32.mrb[0].mxu0
  %v3068 = vadd.f32 %v526, %v3067
  %v3069 = vpop.f32.mrb[0].mxu0
  %v3070 = vpop.f32.mrb[0].mxu0
  %v3071 = vadd.f32 %v526, %v3070
  %v3072 = vpop.f32.mrb[0].mxu0
  %3073 = vmatprep.mubr.bf16.mxu0 %v1902
  %3074 = vmatmul.mubr.bf16.gmra.mrb[0].mxu0 %v1901
  %v3075 = vpop.f32.mrb[0].mxu0
  %v3076 = vadd.f32 %v526, %v3075
  %v3077 = vpop.f32.mrb[0].mxu0
  %v3078 = vpop.f32.mrb[0].mxu0
  %v3079 = vadd.f32 %v526, %v3078
  %v3080 = vpop.f32.mrb[0].mxu0
  %3081 = vmatprep.mubr.bf16.mxu0 %v1909
  %3082 = vmatmul.mubr.bf16.gmra.mrb[0].mxu0 %v1908
  %v3083 = vpop.f32.mrb[0].mxu0
  %v3084 = vadd.f32 %v526, %v3083
  %v3085 = vpop.f32.mrb[0].mxu0
  %v3086 = vpop.f32.mrb[0].mxu0
  %v3087 = vadd.f32 %v526, %v3086
  %v3088 = vpop.f32.mrb[0].mxu0
  %3089 = vmatprep.mubr.bf16.mxu0 %v1916
  %3090 = vmatmul.mubr.bf16.gmra.mrb[0].mxu0 %v1915
  %v3091 = vpop.f32.mrb[0].mxu0
  %v3092 = vadd.f32 %v526, %v3091
  %v3093 = vpop.f32.mrb[0].mxu0
  %v3094 = vpop.f32.mrb[0].mxu0
  %v3095 = vadd.f32 %v526, %v3094
  %v3096 = vpop.f32.mrb[0].mxu0
  %3097 = vmatprep.mubr.bf16.mxu0 %v1923
  %3098 = vmatmul.mubr.bf16.gmra.mrb[0].mxu0 %v1922
  %v3099 = vpop.f32.mrb[0].mxu0
  %v3100 = vadd.f32 %v526, %v3099
  %v3101 = vpop.f32.mrb[0].mxu0
  %v3102 = vpop.f32.mrb[0].mxu0
  %v3103 = vadd.f32 %v526, %v3102
  %v3104 = vpop.f32.mrb[0].mxu0
  %3105 = vmatprep.mubr.bf16.mxu0 %v1930
  %3106 = vmatmul.mubr.bf16.gmra.mrb[0].mxu0 %v1929
  %v3107 = vpop.f32.mrb[0].mxu0
  %v3108 = vadd.f32 %v526, %v3107
  %v3109 = vpop.f32.mrb[0].mxu0
  %v3110 = vpop.f32.mrb[0].mxu0
  %v3111 = vadd.f32 %v526, %v3110
  %v3112 = vpop.f32.mrb[0].mxu0
  %3113 = vmatprep.mubr.bf16.mxu0 %v1937
  %3114 = vmatmul.mubr.bf16.gmra.mrb[0].mxu0 %v1936
  %v3115 = vpop.f32.mrb[0].mxu0
  %v3116 = vadd.f32 %v526, %v3115
  %v3117 = vpop.f32.mrb[0].mxu0
  %v3118 = vpop.f32.mrb[0].mxu0
  %v3119 = vadd.f32 %v526, %v3118
  %v3120 = vpop.f32.mrb[0].mxu0
  %3121 = vmatprep.mubr.bf16.mxu0 %v1944
  %3122 = vmatmul.mubr.bf16.gmra.mrb[0].mxu0 %v1943
  %v3123 = vpop.f32.mrb[0].mxu0
  %v3124 = vadd.f32 %v526, %v3123
  %v3125 = vpop.f32.mrb[0].mxu0
  %v3126 = vpop.f32.mrb[0].mxu0
  %v3127 = vadd.f32 %v526, %v3126
  %v3128 = vpop.f32.mrb[0].mxu0
  %3129 = vmatprep.mubr.bf16.mxu0 %v1951
  %3130 = vmatmul.mubr.bf16.gmra.mrb[0].mxu0 %v1950
  %v3131 = vpop.f32.mrb[0].mxu0
  %v3132 = vadd.f32 %v526, %v3131
  %v3133 = vpop.f32.mrb[0].mxu0
  %v3134 = vpop.f32.mrb[0].mxu0
  %v3135 = vadd.f32 %v526, %v3134
  %v3136 = vpop.f32.mrb[0].mxu0
  %3137 = vmatprep.mubr.bf16.mxu0 %v1958
  %3138 = vmatmul.mubr.bf16.gmra.mrb[0].mxu0 %v1957
  %v3139 = vpop.f32.mrb[0].mxu0
  %v3140 = vadd.f32 %v526, %v3139
  %v3141 = vpop.f32.mrb[0].mxu0
  %v3142 = vpop.f32.mrb[0].mxu0
  %v3143 = vadd.f32 %v526, %v3142
  %v3144 = vpop.f32.mrb[0].mxu0
  %3145 = vmatprep.mubr.bf16.mxu0 %v1965
  %3146 = vmatmul.mubr.bf16.gmra.mrb[0].mxu0 %v1964
  %v3147 = vpop.f32.mrb[0].mxu0
  %v3148 = vadd.f32 %v526, %v3147
  %v3149 = vpop.f32.mrb[0].mxu0
  %v3150 = vpop.f32.mrb[0].mxu0
  %v3151 = vadd.f32 %v526, %v3150
  %v3152 = vpop.f32.mrb[0].mxu0
  %3153 = vmatprep.mubr.bf16.mxu0 %v1972
  %3154 = vmatmul.mubr.bf16.gmra.mrb[0].mxu0 %v1971
  %v3155 = vpop.f32.mrb[0].mxu0
  %v3156 = vadd.f32 %v526, %v3155
  %v3157 = vpop.f32.mrb[0].mxu0
  %v3158 = vpop.f32.mrb[0].mxu0
  %v3159 = vadd.f32 %v526, %v3158
  %v3160 = vpop.f32.mrb[0].mxu0
  %3161 = vdwg.mxu0
  %3162 = vmatprep.subr.bf16.mxu0 0
  %3163 = vmatpush1.bf16.msra.mxu0 %v2494
  %3164 = vmatprep.subr.bf16.mxu0 0
  %3165 = vmatpush1.bf16.msra.mxu0 %v2495
  %3166 = vmatprep.subr.bf16.mxu0 0
  %3167 = vmatpush1.bf16.msra.mxu0 %v2496
  %3168 = vmatprep.subr.bf16.mxu0 0
  %3169 = vmatpush1.bf16.msra.mxu0 %v2497
  %3170 = vmatprep.subr.bf16.mxu0 0
  %3171 = vmatpush1.bf16.msra.mxu0 %v2498
  %3172 = vmatprep.subr.bf16.mxu0 0
  %3173 = vmatpush1.bf16.msra.mxu0 %v2499
  %3174 = vmatprep.subr.bf16.mxu0 0
  %3175 = vmatpush1.bf16.msra.mxu0 %v2500
  %3176 = vmatprep.subr.bf16.mxu0 0
  %3177 = vmatpush1.bf16.msra.mxu0 %v2501
  %3178 = vmatprep.subr.bf16.mxu0 0
  %3179 = vmatpush1.bf16.msra.mxu0 %v2502
  %3180 = vmatprep.subr.bf16.mxu0 0
  %3181 = vmatpush1.bf16.msra.mxu0 %v2503
  %3182 = vmatprep.subr.bf16.mxu0 0
  %3183 = vmatpush1.bf16.msra.mxu0 %v2504
  %3184 = vmatprep.subr.bf16.mxu0 0
  %3185 = vmatpush1.bf16.msra.mxu0 %v2505
  %3186 = vmatprep.subr.bf16.mxu0 0
  %3187 = vmatpush1.bf16.msra.mxu0 %v2506
  %3188 = vmatprep.subr.bf16.mxu0 0
  %3189 = vmatpush1.bf16.msra.mxu0 %v2507
  %3190 = vmatprep.subr.bf16.mxu0 0
  %3191 = vmatpush1.bf16.msra.mxu0 %v2508
  %3192 = vmatprep.subr.bf16.mxu0 0
  %3193 = vmatpush1.bf16.msra.mxu0 %v2509
  %3194 = vmatprep.mubr.bf16.mxu0 %v1631
  %3195 = vmatmul.mubr.bf16.gmra.mrb[0].mxu0 %v1630
  %v3196 = vpop.f32.mrb[0].mxu0
  %v3197 = vadd.f32 %v2764, %v3196
  %v3198 = vpop.f32.mrb[0].mxu0
  %v3199 = vpop.f32.mrb[0].mxu0
  %v3200 = vadd.f32 %v2767, %v3199
  %v3201 = vpop.f32.mrb[0].mxu0
  %3202 = vmatprep.mubr.bf16.mxu0 %v1638
  %3203 = vmatmul.mubr.bf16.gmra.mrb[0].mxu0 %v1637
  %v3204 = vpop.f32.mrb[0].mxu0
  %v3205 = vadd.f32 %v2772, %v3204
  %v3206 = vpop.f32.mrb[0].mxu0
  %v3207 = vpop.f32.mrb[0].mxu0
  %v3208 = vadd.f32 %v2775, %v3207
  %v3209 = vpop.f32.mrb[0].mxu0
  %3210 = vmatprep.mubr.bf16.mxu0 %v1645
  %3211 = vmatmul.mubr.bf16.gmra.mrb[0].mxu0 %v1644
  %v3212 = vpop.f32.mrb[0].mxu0
  %v3213 = vadd.f32 %v2780, %v3212
  %v3214 = vpop.f32.mrb[0].mxu0
  %v3215 = vpop.f32.mrb[0].mxu0
  %v3216 = vadd.f32 %v2783, %v3215
  %v3217 = vpop.f32.mrb[0].mxu0
  %3218 = vmatprep.mubr.bf16.mxu0 %v1652
  %3219 = vmatmul.mubr.bf16.gmra.mrb[0].mxu0 %v1651
  %v3220 = vpop.f32.mrb[0].mxu0
  %v3221 = vadd.f32 %v2788, %v3220
  %v3222 = vpop.f32.mrb[0].mxu0
  %v3223 = vpop.f32.mrb[0].mxu0
  %v3224 = vadd.f32 %v2791, %v3223
  %v3225 = vpop.f32.mrb[0].mxu0
  %3226 = vmatprep.mubr.bf16.mxu0 %v1659
  %3227 = vmatmul.mubr.bf16.gmra.mrb[0].mxu0 %v1658
  %v3228 = vpop.f32.mrb[0].mxu0
  %v3229 = vadd.f32 %v2796, %v3228
  %v3230 = vpop.f32.mrb[0].mxu0
  %v3231 = vpop.f32.mrb[0].mxu0
  %v3232 = vadd.f32 %v2799, %v3231
  %v3233 = vpop.f32.mrb[0].mxu0
  %3234 = vmatprep.mubr.bf16.mxu0 %v1666
  %3235 = vmatmul.mubr.bf16.gmra.mrb[0].mxu0 %v1665
  %v3236 = vpop.f32.mrb[0].mxu0
  %v3237 = vadd.f32 %v2804, %v3236
  %v3238 = vpop.f32.mrb[0].mxu0
  %v3239 = vpop.f32.mrb[0].mxu0
  %v3240 = vadd.f32 %v2807, %v3239
  %v3241 = vpop.f32.mrb[0].mxu0
  %3242 = vmatprep.mubr.bf16.mxu0 %v1673
  %3243 = vmatmul.mubr.bf16.gmra.mrb[0].mxu0 %v1672
  %v3244 = vpop.f32.mrb[0].mxu0
  %v3245 = vadd.f32 %v2812, %v3244
  %v3246 = vpop.f32.mrb[0].mxu0
  %v3247 = vpop.f32.mrb[0].mxu0
  %v3248 = vadd.f32 %v2815, %v3247
  %v3249 = vpop.f32.mrb[0].mxu0
  %3250 = vmatprep.mubr.bf16.mxu0 %v1680
  %3251 = vmatmul.mubr.bf16.gmra.mrb[0].mxu0 %v1679
  %v3252 = vpop.f32.mrb[0].mxu0
  %v3253 = vadd.f32 %v2820, %v3252
  %v3254 = vpop.f32.mrb[0].mxu0
  %v3255 = vpop.f32.mrb[0].mxu0
  %v3256 = vadd.f32 %v2823, %v3255
  %v3257 = vpop.f32.mrb[0].mxu0
  %3258 = vmatprep.mubr.bf16.mxu0 %v1687
  %3259 = vmatmul.mubr.bf16.gmra.mrb[0].mxu0 %v1686
  %v3260 = vpop.f32.mrb[0].mxu0
  %v3261 = vadd.f32 %v2828, %v3260
  %v3262 = vpop.f32.mrb[0].mxu0
  %v3263 = vpop.f32.mrb[0].mxu0
  %v3264 = vadd.f32 %v2831, %v3263
  %v3265 = vpop.f32.mrb[0].mxu0
  %3266 = vmatprep.mubr.bf16.mxu0 %v1694
  %3267 = vmatmul.mubr.bf16.gmra.mrb[0].mxu0 %v1693
  %v3268 = vpop.f32.mrb[0].mxu0
  %v3269 = vadd.f32 %v2836, %v3268
  %v3270 = vpop.f32.mrb[0].mxu0
  %v3271 = vpop.f32.mrb[0].mxu0
  %v3272 = vadd.f32 %v2839, %v3271
  %v3273 = vpop.f32.mrb[0].mxu0
  %3274 = vmatprep.mubr.bf16.mxu0 %v1701
  %3275 = vmatmul.mubr.bf16.gmra.mrb[0].mxu0 %v1700
  %v3276 = vpop.f32.mrb[0].mxu0
  %v3277 = vadd.f32 %v2844, %v3276
  %v3278 = vpop.f32.mrb[0].mxu0
  %v3279 = vpop.f32.mrb[0].mxu0
  %v3280 = vadd.f32 %v2847, %v3279
  %v3281 = vpop.f32.mrb[0].mxu0
  %3282 = vmatprep.mubr.bf16.mxu0 %v1708
  %3283 = vmatmul.mubr.bf16.gmra.mrb[0].mxu0 %v1707
  %v3284 = vpop.f32.mrb[0].mxu0
  %v3285 = vadd.f32 %v2852, %v3284
  %v3286 = vpop.f32.mrb[0].mxu0
  %v3287 = vpop.f32.mrb[0].mxu0
  %v3288 = vadd.f32 %v2855, %v3287
  %v3289 = vpop.f32.mrb[0].mxu0
  %3290 = vmatprep.mubr.bf16.mxu0 %v1715
  %3291 = vmatmul.mubr.bf16.gmra.mrb[0].mxu0 %v1714
  %v3292 = vpop.f32.mrb[0].mxu0
  %v3293 = vadd.f32 %v2860, %v3292
  %v3294 = vpop.f32.mrb[0].mxu0
  %v3295 = vpop.f32.mrb[0].mxu0
  %v3296 = vadd.f32 %v2863, %v3295
  %v3297 = vpop.f32.mrb[0].mxu0
  %3298 = vmatprep.mubr.bf16.mxu0 %v1722
  %3299 = vmatmul.mubr.bf16.gmra.mrb[0].mxu0 %v1721
  %v3300 = vpop.f32.mrb[0].mxu0
  %v3301 = vadd.f32 %v2868, %v3300
  %v3302 = vpop.f32.mrb[0].mxu0
  %v3303 = vpop.f32.mrb[0].mxu0
  %v3304 = vadd.f32 %v2871, %v3303
  %v3305 = vpop.f32.mrb[0].mxu0
  %3306 = vmatprep.mubr.bf16.mxu0 %v1729
  %3307 = vmatmul.mubr.bf16.gmra.mrb[0].mxu0 %v1728
  %v3308 = vpop.f32.mrb[0].mxu0
  %v3309 = vadd.f32 %v2876, %v3308
  %v3310 = vpop.f32.mrb[0].mxu0
  %v3311 = vpop.f32.mrb[0].mxu0
  %v3312 = vadd.f32 %v2879, %v3311
  %v3313 = vpop.f32.mrb[0].mxu0
  %3314 = vmatprep.mubr.bf16.mxu0 %v1736
  %3315 = vmatmul.mubr.bf16.gmra.mrb[0].mxu0 %v1735
  %v3316 = vpop.f32.mrb[0].mxu0
  %v3317 = vadd.f32 %v2884, %v3316
  %v3318 = vpop.f32.mrb[0].mxu0
  %v3319 = vpop.f32.mrb[0].mxu0
  %v3320 = vadd.f32 %v2887, %v3319
  %v3321 = vpop.f32.mrb[0].mxu0
  %3322 = vmatprep.mubr.bf16.mxu0 %v1743
  %3323 = vmatmul.mubr.bf16.gmra.mrb[0].mxu0 %v1742
  %v3324 = vpop.f32.mrb[0].mxu0
  %v3325 = vadd.f32 %v2892, %v3324
  %v3326 = vpop.f32.mrb[0].mxu0
  %v3327 = vpop.f32.mrb[0].mxu0
  %v3328 = vadd.f32 %v2895, %v3327
  %v3329 = vpop.f32.mrb[0].mxu0
  %3330 = vmatprep.mubr.bf16.mxu0 %v1750
  %3331 = vmatmul.mubr.bf16.gmra.mrb[0].mxu0 %v1749
  %v3332 = vpop.f32.mrb[0].mxu0
  %v3333 = vadd.f32 %v2900, %v3332
  %v3334 = vpop.f32.mrb[0].mxu0
  %v3335 = vpop.f32.mrb[0].mxu0
  %v3336 = vadd.f32 %v2903, %v3335
  %v3337 = vpop.f32.mrb[0].mxu0
  %3338 = vmatprep.mubr.bf16.mxu0 %v1757
  %3339 = vmatmul.mubr.bf16.gmra.mrb[0].mxu0 %v1756
  %v3340 = vpop.f32.mrb[0].mxu0
  %v3341 = vadd.f32 %v2908, %v3340
  %v3342 = vpop.f32.mrb[0].mxu0
  %v3343 = vpop.f32.mrb[0].mxu0
  %v3344 = vadd.f32 %v2911, %v3343
  %v3345 = vpop.f32.mrb[0].mxu0
  %3346 = vmatprep.mubr.bf16.mxu0 %v1764
  %3347 = vmatmul.mubr.bf16.gmra.mrb[0].mxu0 %v1763
  %v3348 = vpop.f32.mrb[0].mxu0
  %v3349 = vadd.f32 %v2916, %v3348
  %v3350 = vpop.f32.mrb[0].mxu0
  %v3351 = vpop.f32.mrb[0].mxu0
  %v3352 = vadd.f32 %v2919, %v3351
  %v3353 = vpop.f32.mrb[0].mxu0
  %3354 = vmatprep.mubr.bf16.mxu0 %v1771
  %3355 = vmatmul.mubr.bf16.gmra.mrb[0].mxu0 %v1770
  %v3356 = vpop.f32.mrb[0].mxu0
  %v3357 = vadd.f32 %v2924, %v3356
  %v3358 = vpop.f32.mrb[0].mxu0
  %v3359 = vpop.f32.mrb[0].mxu0
  %v3360 = vadd.f32 %v2927, %v3359
  %v3361 = vpop.f32.mrb[0].mxu0
  %3362 = vmatprep.mubr.bf16.mxu0 %v1778
  %3363 = vmatmul.mubr.bf16.gmra.mrb[0].mxu0 %v1777
  %v3364 = vpop.f32.mrb[0].mxu0
  %v3365 = vadd.f32 %v2932, %v3364
  %v3366 = vpop.f32.mrb[0].mxu0
  %v3367 = vpop.f32.mrb[0].mxu0
  %v3368 = vadd.f32 %v2935, %v3367
  %v3369 = vpop.f32.mrb[0].mxu0
  %3370 = vmatprep.mubr.bf16.mxu0 %v1785
  %3371 = vmatmul.mubr.bf16.gmra.mrb[0].mxu0 %v1784
  %v3372 = vpop.f32.mrb[0].mxu0
  %v3373 = vadd.f32 %v2940, %v3372
  %v3374 = vpop.f32.mrb[0].mxu0
  %v3375 = vpop.f32.mrb[0].mxu0
  %v3376 = vadd.f32 %v2943, %v3375
  %v3377 = vpop.f32.mrb[0].mxu0
  %3378 = vmatprep.mubr.bf16.mxu0 %v1792
  %3379 = vmatmul.mubr.bf16.gmra.mrb[0].mxu0 %v1791
  %v3380 = vpop.f32.mrb[0].mxu0
  %v3381 = vadd.f32 %v2948, %v3380
  %v3382 = vpop.f32.mrb[0].mxu0
  %v3383 = vpop.f32.mrb[0].mxu0
  %v3384 = vadd.f32 %v2951, %v3383
  %v3385 = vpop.f32.mrb[0].mxu0
  %3386 = vmatprep.mubr.bf16.mxu0 %v1799
  %3387 = vmatmul.mubr.bf16.gmra.mrb[0].mxu0 %v1798
  %v3388 = vpop.f32.mrb[0].mxu0
  %v3389 = vadd.f32 %v2956, %v3388
  %v3390 = vpop.f32.mrb[0].mxu0
  %v3391 = vpop.f32.mrb[0].mxu0
  %v3392 = vadd.f32 %v2959, %v3391
  %v3393 = vpop.f32.mrb[0].mxu0
  %3394 = vmatprep.mubr.bf16.mxu0 %v1806
  %3395 = vmatmul.mubr.bf16.gmra.mrb[0].mxu0 %v1805
  %v3396 = vpop.f32.mrb[0].mxu0
  %v3397 = vadd.f32 %v2964, %v3396
  %v3398 = vpop.f32.mrb[0].mxu0
  %v3399 = vpop.f32.mrb[0].mxu0
  %v3400 = vadd.f32 %v2967, %v3399
  %v3401 = vpop.f32.mrb[0].mxu0
  %3402 = vmatprep.mubr.bf16.mxu0 %v1813
  %3403 = vmatmul.mubr.bf16.gmra.mrb[0].mxu0 %v1812
  %v3404 = vpop.f32.mrb[0].mxu0
  %v3405 = vadd.f32 %v2972, %v3404
  %v3406 = vpop.f32.mrb[0].mxu0
  %v3407 = vpop.f32.mrb[0].mxu0
  %v3408 = vadd.f32 %v2975, %v3407
  %v3409 = vpop.f32.mrb[0].mxu0
  %3410 = vmatprep.mubr.bf16.mxu0 %v1820
  %3411 = vmatmul.mubr.bf16.gmra.mrb[0].mxu0 %v1819
  %v3412 = vpop.f32.mrb[0].mxu0
  %v3413 = vadd.f32 %v2980, %v3412
  %v3414 = vpop.f32.mrb[0].mxu0
  %v3415 = vpop.f32.mrb[0].mxu0
  %v3416 = vadd.f32 %v2983, %v3415
  %v3417 = vpop.f32.mrb[0].mxu0
  %3418 = vmatprep.mubr.bf16.mxu0 %v1827
  %3419 = vmatmul.mubr.bf16.gmra.mrb[0].mxu0 %v1826
  %v3420 = vpop.f32.mrb[0].mxu0
  %v3421 = vadd.f32 %v2988, %v3420
  %v3422 = vpop.f32.mrb[0].mxu0
  %v3423 = vpop.f32.mrb[0].mxu0
  %v3424 = vadd.f32 %v2991, %v3423
  %v3425 = vpop.f32.mrb[0].mxu0
  %3426 = vmatprep.mubr.bf16.mxu0 %v1834
  %3427 = vmatmul.mubr.bf16.gmra.mrb[0].mxu0 %v1833
  %v3428 = vpop.f32.mrb[0].mxu0
  %v3429 = vadd.f32 %v2996, %v3428
  %v3430 = vpop.f32.mrb[0].mxu0
  %v3431 = vpop.f32.mrb[0].mxu0
  %v3432 = vadd.f32 %v2999, %v3431
  %v3433 = vpop.f32.mrb[0].mxu0
  %3434 = vmatprep.mubr.bf16.mxu0 %v1841
  %3435 = vmatmul.mubr.bf16.gmra.mrb[0].mxu0 %v1840
  %v3436 = vpop.f32.mrb[0].mxu0
  %v3437 = vadd.f32 %v3004, %v3436
  %v3438 = vpop.f32.mrb[0].mxu0
  %v3439 = vpop.f32.mrb[0].mxu0
  %v3440 = vadd.f32 %v3007, %v3439
  %v3441 = vpop.f32.mrb[0].mxu0
  %3442 = vmatprep.mubr.bf16.mxu0 %v1848
  %3443 = vmatmul.mubr.bf16.gmra.mrb[0].mxu0 %v1847
  %v3444 = vpop.f32.mrb[0].mxu0
  %v3445 = vadd.f32 %v3012, %v3444
  %v3446 = vpop.f32.mrb[0].mxu0
  %v3447 = vpop.f32.mrb[0].mxu0
  %v3448 = vadd.f32 %v3015, %v3447
  %v3449 = vpop.f32.mrb[0].mxu0
  %3450 = vmatprep.mubr.bf16.mxu0 %v1855
  %3451 = vmatmul.mubr.bf16.gmra.mrb[0].mxu0 %v1854
  %v3452 = vpop.f32.mrb[0].mxu0
  %v3453 = vadd.f32 %v3020, %v3452
  %v3454 = vpop.f32.mrb[0].mxu0
  %v3455 = vpop.f32.mrb[0].mxu0
  %v3456 = vadd.f32 %v3023, %v3455
  %v3457 = vpop.f32.mrb[0].mxu0
  %3458 = vmatprep.mubr.bf16.mxu0 %v1862
  %3459 = vmatmul.mubr.bf16.gmra.mrb[0].mxu0 %v1861
  %v3460 = vpop.f32.mrb[0].mxu0
  %v3461 = vadd.f32 %v3028, %v3460
  %v3462 = vpop.f32.mrb[0].mxu0
  %v3463 = vpop.f32.mrb[0].mxu0
  %v3464 = vadd.f32 %v3031, %v3463
  %v3465 = vpop.f32.mrb[0].mxu0
  %3466 = vmatprep.mubr.bf16.mxu0 %v1869
  %3467 = vmatmul.mubr.bf16.gmra.mrb[0].mxu0 %v1868
  %v3468 = vpop.f32.mrb[0].mxu0
  %v3469 = vadd.f32 %v3036, %v3468
  %v3470 = vpop.f32.mrb[0].mxu0
  %v3471 = vpop.f32.mrb[0].mxu0
  %v3472 = vadd.f32 %v3039, %v3471
  %v3473 = vpop.f32.mrb[0].mxu0
  %3474 = vmatprep.mubr.bf16.mxu0 %v1876
  %3475 = vmatmul.mubr.bf16.gmra.mrb[0].mxu0 %v1875
  %v3476 = vpop.f32.mrb[0].mxu0
  %v3477 = vadd.f32 %v3044, %v3476
  %v3478 = vpop.f32.mrb[0].mxu0
  %v3479 = vpop.f32.mrb[0].mxu0
  %v3480 = vadd.f32 %v3047, %v3479
  %v3481 = vpop.f32.mrb[0].mxu0
  %3482 = vmatprep.mubr.bf16.mxu0 %v1883
  %3483 = vmatmul.mubr.bf16.gmra.mrb[0].mxu0 %v1882
  %v3484 = vpop.f32.mrb[0].mxu0
  %v3485 = vadd.f32 %v3052, %v3484
  %v3486 = vpop.f32.mrb[0].mxu0
  %v3487 = vpop.f32.mrb[0].mxu0
  %v3488 = vadd.f32 %v3055, %v3487
  %v3489 = vpop.f32.mrb[0].mxu0
  %3490 = vmatprep.mubr.bf16.mxu0 %v1890
  %3491 = vmatmul.mubr.bf16.gmra.mrb[0].mxu0 %v1889
  %v3492 = vpop.f32.mrb[0].mxu0
  %v3493 = vadd.f32 %v3060, %v3492
  %v3494 = vpop.f32.mrb[0].mxu0
  %v3495 = vpop.f32.mrb[0].mxu0
  %v3496 = vadd.f32 %v3063, %v3495
  %v3497 = vpop.f32.mrb[0].mxu0
  %3498 = vmatprep.mubr.bf16.mxu0 %v1897
  %3499 = vmatmul.mubr.bf16.gmra.mrb[0].mxu0 %v1896
  %v3500 = vpop.f32.mrb[0].mxu0
  %v3501 = vadd.f32 %v3068, %v3500
  %v3502 = vpop.f32.mrb[0].mxu0
  %v3503 = vpop.f32.mrb[0].mxu0
  %v3504 = vadd.f32 %v3071, %v3503
  %v3505 = vpop.f32.mrb[0].mxu0
  %3506 = vmatprep.mubr.bf16.mxu0 %v1904
  %3507 = vmatmul.mubr.bf16.gmra.mrb[0].mxu0 %v1903
  %v3508 = vpop.f32.mrb[0].mxu0
  %v3509 = vadd.f32 %v3076, %v3508
  %v3510 = vpop.f32.mrb[0].mxu0
  %v3511 = vpop.f32.mrb[0].mxu0
  %v3512 = vadd.f32 %v3079, %v3511
  %v3513 = vpop.f32.mrb[0].mxu0
  %3514 = vmatprep.mubr.bf16.mxu0 %v1911
  %3515 = vmatmul.mubr.bf16.gmra.mrb[0].mxu0 %v1910
  %v3516 = vpop.f32.mrb[0].mxu0
  %v3517 = vadd.f32 %v3084, %v3516
  %v3518 = vpop.f32.mrb[0].mxu0
  %v3519 = vpop.f32.mrb[0].mxu0
  %v3520 = vadd.f32 %v3087, %v3519
  %v3521 = vpop.f32.mrb[0].mxu0
  %3522 = vmatprep.mubr.bf16.mxu0 %v1918
  %3523 = vmatmul.mubr.bf16.gmra.mrb[0].mxu0 %v1917
  %v3524 = vpop.f32.mrb[0].mxu0
  %v3525 = vadd.f32 %v3092, %v3524
  %v3526 = vpop.f32.mrb[0].mxu0
  %v3527 = vpop.f32.mrb[0].mxu0
  %v3528 = vadd.f32 %v3095, %v3527
  %v3529 = vpop.f32.mrb[0].mxu0
  %3530 = vmatprep.mubr.bf16.mxu0 %v1925
  %3531 = vmatmul.mubr.bf16.gmra.mrb[0].mxu0 %v1924
  %v3532 = vpop.f32.mrb[0].mxu0
  %v3533 = vadd.f32 %v3100, %v3532
  %v3534 = vpop.f32.mrb[0].mxu0
  %v3535 = vpop.f32.mrb[0].mxu0
  %v3536 = vadd.f32 %v3103, %v3535
  %v3537 = vpop.f32.mrb[0].mxu0
  %3538 = vmatprep.mubr.bf16.mxu0 %v1932
  %3539 = vmatmul.mubr.bf16.gmra.mrb[0].mxu0 %v1931
  %v3540 = vpop.f32.mrb[0].mxu0
  %v3541 = vadd.f32 %v3108, %v3540
  %v3542 = vpop.f32.mrb[0].mxu0
  %v3543 = vpop.f32.mrb[0].mxu0
  %v3544 = vadd.f32 %v3111, %v3543
  %v3545 = vpop.f32.mrb[0].mxu0
  %3546 = vmatprep.mubr.bf16.mxu0 %v1939
  %3547 = vmatmul.mubr.bf16.gmra.mrb[0].mxu0 %v1938
  %v3548 = vpop.f32.mrb[0].mxu0
  %v3549 = vadd.f32 %v3116, %v3548
  %v3550 = vpop.f32.mrb[0].mxu0
  %v3551 = vpop.f32.mrb[0].mxu0
  %v3552 = vadd.f32 %v3119, %v3551
  %v3553 = vpop.f32.mrb[0].mxu0
  %3554 = vmatprep.mubr.bf16.mxu0 %v1946
  %3555 = vmatmul.mubr.bf16.gmra.mrb[0].mxu0 %v1945
  %v3556 = vpop.f32.mrb[0].mxu0
  %v3557 = vadd.f32 %v3124, %v3556
  %v3558 = vpop.f32.mrb[0].mxu0
  %v3559 = vpop.f32.mrb[0].mxu0
  %v3560 = vadd.f32 %v3127, %v3559
  %v3561 = vpop.f32.mrb[0].mxu0
  %3562 = vmatprep.mubr.bf16.mxu0 %v1953
  %3563 = vmatmul.mubr.bf16.gmra.mrb[0].mxu0 %v1952
  %v3564 = vpop.f32.mrb[0].mxu0
  %v3565 = vadd.f32 %v3132, %v3564
  %v3566 = vpop.f32.mrb[0].mxu0
  %v3567 = vpop.f32.mrb[0].mxu0
  %v3568 = vadd.f32 %v3135, %v3567
  %v3569 = vpop.f32.mrb[0].mxu0
  %3570 = vmatprep.mubr.bf16.mxu0 %v1960
  %3571 = vmatmul.mubr.bf16.gmra.mrb[0].mxu0 %v1959
  %v3572 = vpop.f32.mrb[0].mxu0
  %v3573 = vadd.f32 %v3140, %v3572
  %v3574 = vpop.f32.mrb[0].mxu0
  %v3575 = vpop.f32.mrb[0].mxu0
  %v3576 = vadd.f32 %v3143, %v3575
  %v3577 = vpop.f32.mrb[0].mxu0
  %3578 = vmatprep.mubr.bf16.mxu0 %v1967
  %3579 = vmatmul.mubr.bf16.gmra.mrb[0].mxu0 %v1966
  %v3580 = vpop.f32.mrb[0].mxu0
  %v3581 = vadd.f32 %v3148, %v3580
  %v3582 = vpop.f32.mrb[0].mxu0
  %v3583 = vpop.f32.mrb[0].mxu0
  %v3584 = vadd.f32 %v3151, %v3583
  %v3585 = vpop.f32.mrb[0].mxu0
  %3586 = vmatprep.mubr.bf16.mxu0 %v1974
  %3587 = vmatmul.mubr.bf16.gmra.mrb[0].mxu0 %v1973
  %v3588 = vpop.f32.mrb[0].mxu0
  %v3589 = vadd.f32 %v3156, %v3588
  %v3590 = vpop.f32.mrb[0].mxu0
  %v3591 = vpop.f32.mrb[0].mxu0
  %v3592 = vadd.f32 %v3159, %v3591
  %v3593 = vpop.f32.mrb[0].mxu0
  %3594 = vdwg.mxu0
  %3595 = vmatprep.subr.bf16.mxu0 0
  %3596 = vmatpush1.bf16.msra.mxu0 %v2510
  %3597 = vmatprep.subr.bf16.mxu0 0
  %3598 = vmatpush1.bf16.msra.mxu0 %v2511
  %3599 = vmatprep.subr.bf16.mxu0 0
  %3600 = vmatpush1.bf16.msra.mxu0 %v2512
  %3601 = vmatprep.subr.bf16.mxu0 0
  %3602 = vmatpush1.bf16.msra.mxu0 %v2513
  %3603 = vmatprep.subr.bf16.mxu0 0
  %3604 = vmatpush1.bf16.msra.mxu0 %v2514
  %3605 = vmatprep.subr.bf16.mxu0 0
  %3606 = vmatpush1.bf16.msra.mxu0 %v2515
  %3607 = vmatprep.subr.bf16.mxu0 0
  %3608 = vmatpush1.bf16.msra.mxu0 %v2516
  %3609 = vmatprep.subr.bf16.mxu0 0
  %3610 = vmatpush1.bf16.msra.mxu0 %v2517
  %3611 = vmatprep.subr.bf16.mxu0 0
  %3612 = vmatpush1.bf16.msra.mxu0 %v2518
  %3613 = vmatprep.subr.bf16.mxu0 0
  %3614 = vmatpush1.bf16.msra.mxu0 %v2519
  %3615 = vmatprep.subr.bf16.mxu0 0
  %3616 = vmatpush1.bf16.msra.mxu0 %v2520
  %3617 = vmatprep.subr.bf16.mxu0 0
  %3618 = vmatpush1.bf16.msra.mxu0 %v2521
  %3619 = vmatprep.subr.bf16.mxu0 0
  %3620 = vmatpush1.bf16.msra.mxu0 %v2522
  %3621 = vmatprep.subr.bf16.mxu0 0
  %3622 = vmatpush1.bf16.msra.mxu0 %v2523
  %3623 = vmatprep.subr.bf16.mxu0 0
  %3624 = vmatpush1.bf16.msra.mxu0 %v2524
  %3625 = vmatprep.subr.bf16.mxu0 0
  %3626 = vmatpush1.bf16.msra.mxu0 %v2525
  %3627 = vmatprep.mubr.bf16.mxu0 %v1633
  %3628 = vmatmul.mubr.bf16.gmra.mrb[0].mxu0 %v1632
  %v3629 = vpop.f32.mrb[0].mxu0
  %v3630 = vadd.f32 %v3197, %v3629
  %v3631 = vpop.f32.mrb[0].mxu0
  %v3632 = vpop.f32.mrb[0].mxu0
  %v3633 = vadd.f32 %v3200, %v3632
  %v3634 = vpop.f32.mrb[0].mxu0
  %3635 = vmatprep.mubr.bf16.mxu0 %v1640
  %3636 = vmatmul.mubr.bf16.gmra.mrb[0].mxu0 %v1639
  %v3637 = vpop.f32.mrb[0].mxu0
  %v3638 = vadd.f32 %v3205, %v3637
  %v3639 = vpop.f32.mrb[0].mxu0
  %v3640 = vpop.f32.mrb[0].mxu0
  %v3641 = vadd.f32 %v3208, %v3640
  %v3642 = vpop.f32.mrb[0].mxu0
  %3643 = vmatprep.mubr.bf16.mxu0 %v1647
  %3644 = vmatmul.mubr.bf16.gmra.mrb[0].mxu0 %v1646
  %v3645 = vpop.f32.mrb[0].mxu0
  %v3646 = vadd.f32 %v3213, %v3645
  %v3647 = vpop.f32.mrb[0].mxu0
  %v3648 = vpop.f32.mrb[0].mxu0
  %v3649 = vadd.f32 %v3216, %v3648
  %v3650 = vpop.f32.mrb[0].mxu0
  %3651 = vmatprep.mubr.bf16.mxu0 %v1654
  %3652 = vmatmul.mubr.bf16.gmra.mrb[0].mxu0 %v1653
  %v3653 = vpop.f32.mrb[0].mxu0
  %v3654 = vadd.f32 %v3221, %v3653
  %v3655 = vpop.f32.mrb[0].mxu0
  %v3656 = vpop.f32.mrb[0].mxu0
  %v3657 = vadd.f32 %v3224, %v3656
  %v3658 = vpop.f32.mrb[0].mxu0
  %3659 = vmatprep.mubr.bf16.mxu0 %v1661
  %3660 = vmatmul.mubr.bf16.gmra.mrb[0].mxu0 %v1660
  %v3661 = vpop.f32.mrb[0].mxu0
  %v3662 = vadd.f32 %v3229, %v3661
  %v3663 = vpop.f32.mrb[0].mxu0
  %v3664 = vpop.f32.mrb[0].mxu0
  %v3665 = vadd.f32 %v3232, %v3664
  %v3666 = vpop.f32.mrb[0].mxu0
  %3667 = vmatprep.mubr.bf16.mxu0 %v1668
  %3668 = vmatmul.mubr.bf16.gmra.mrb[0].mxu0 %v1667
  %v3669 = vpop.f32.mrb[0].mxu0
  %v3670 = vadd.f32 %v3237, %v3669
  %v3671 = vpop.f32.mrb[0].mxu0
  %v3672 = vpop.f32.mrb[0].mxu0
  %v3673 = vadd.f32 %v3240, %v3672
  %v3674 = vpop.f32.mrb[0].mxu0
  %3675 = vmatprep.mubr.bf16.mxu0 %v1675
  %3676 = vmatmul.mubr.bf16.gmra.mrb[0].mxu0 %v1674
  %v3677 = vpop.f32.mrb[0].mxu0
  %v3678 = vadd.f32 %v3245, %v3677
  %v3679 = vpop.f32.mrb[0].mxu0
  %v3680 = vpop.f32.mrb[0].mxu0
  %v3681 = vadd.f32 %v3248, %v3680
  %v3682 = vpop.f32.mrb[0].mxu0
  %3683 = vmatprep.mubr.bf16.mxu0 %v1682
  %3684 = vmatmul.mubr.bf16.gmra.mrb[0].mxu0 %v1681
  %v3685 = vpop.f32.mrb[0].mxu0
  %v3686 = vadd.f32 %v3253, %v3685
  %v3687 = vpop.f32.mrb[0].mxu0
  %v3688 = vpop.f32.mrb[0].mxu0
  %v3689 = vadd.f32 %v3256, %v3688
  %v3690 = vpop.f32.mrb[0].mxu0
  %3691 = vmatprep.mubr.bf16.mxu0 %v1689
  %3692 = vmatmul.mubr.bf16.gmra.mrb[0].mxu0 %v1688
  %v3693 = vpop.f32.mrb[0].mxu0
  %v3694 = vadd.f32 %v3261, %v3693
  %v3695 = vpop.f32.mrb[0].mxu0
  %v3696 = vpop.f32.mrb[0].mxu0
  %v3697 = vadd.f32 %v3264, %v3696
  %v3698 = vpop.f32.mrb[0].mxu0
  %3699 = vmatprep.mubr.bf16.mxu0 %v1696
  %3700 = vmatmul.mubr.bf16.gmra.mrb[0].mxu0 %v1695
  %v3701 = vpop.f32.mrb[0].mxu0
  %v3702 = vadd.f32 %v3269, %v3701
  %v3703 = vpop.f32.mrb[0].mxu0
  %v3704 = vpop.f32.mrb[0].mxu0
  %v3705 = vadd.f32 %v3272, %v3704
  %v3706 = vpop.f32.mrb[0].mxu0
  %3707 = vmatprep.mubr.bf16.mxu0 %v1703
  %3708 = vmatmul.mubr.bf16.gmra.mrb[0].mxu0 %v1702
  %v3709 = vpop.f32.mrb[0].mxu0
  %v3710 = vadd.f32 %v3277, %v3709
  %v3711 = vpop.f32.mrb[0].mxu0
  %v3712 = vpop.f32.mrb[0].mxu0
  %v3713 = vadd.f32 %v3280, %v3712
  %v3714 = vpop.f32.mrb[0].mxu0
  %3715 = vmatprep.mubr.bf16.mxu0 %v1710
  %3716 = vmatmul.mubr.bf16.gmra.mrb[0].mxu0 %v1709
  %v3717 = vpop.f32.mrb[0].mxu0
  %v3718 = vadd.f32 %v3285, %v3717
  %v3719 = vpop.f32.mrb[0].mxu0
  %v3720 = vpop.f32.mrb[0].mxu0
  %v3721 = vadd.f32 %v3288, %v3720
  %v3722 = vpop.f32.mrb[0].mxu0
  %3723 = vmatprep.mubr.bf16.mxu0 %v1717
  %3724 = vmatmul.mubr.bf16.gmra.mrb[0].mxu0 %v1716
  %v3725 = vpop.f32.mrb[0].mxu0
  %v3726 = vadd.f32 %v3293, %v3725
  %v3727 = vpop.f32.mrb[0].mxu0
  %v3728 = vpop.f32.mrb[0].mxu0
  %v3729 = vadd.f32 %v3296, %v3728
  %v3730 = vpop.f32.mrb[0].mxu0
  %3731 = vmatprep.mubr.bf16.mxu0 %v1724
  %3732 = vmatmul.mubr.bf16.gmra.mrb[0].mxu0 %v1723
  %v3733 = vpop.f32.mrb[0].mxu0
  %v3734 = vadd.f32 %v3301, %v3733
  %v3735 = vpop.f32.mrb[0].mxu0
  %v3736 = vpop.f32.mrb[0].mxu0
  %v3737 = vadd.f32 %v3304, %v3736
  %v3738 = vpop.f32.mrb[0].mxu0
  %3739 = vmatprep.mubr.bf16.mxu0 %v1731
  %3740 = vmatmul.mubr.bf16.gmra.mrb[0].mxu0 %v1730
  %v3741 = vpop.f32.mrb[0].mxu0
  %v3742 = vadd.f32 %v3309, %v3741
  %v3743 = vpop.f32.mrb[0].mxu0
  %v3744 = vpop.f32.mrb[0].mxu0
  %v3745 = vadd.f32 %v3312, %v3744
  %v3746 = vpop.f32.mrb[0].mxu0
  %3747 = vmatprep.mubr.bf16.mxu0 %v1738
  %3748 = vmatmul.mubr.bf16.gmra.mrb[0].mxu0 %v1737
  %v3749 = vpop.f32.mrb[0].mxu0
  %v3750 = vadd.f32 %v3317, %v3749
  %v3751 = vpop.f32.mrb[0].mxu0
  %v3752 = vpop.f32.mrb[0].mxu0
  %v3753 = vadd.f32 %v3320, %v3752
  %v3754 = vpop.f32.mrb[0].mxu0
  %3755 = vmatprep.mubr.bf16.mxu0 %v1745
  %3756 = vmatmul.mubr.bf16.gmra.mrb[0].mxu0 %v1744
  %v3757 = vpop.f32.mrb[0].mxu0
  %v3758 = vadd.f32 %v3325, %v3757
  %v3759 = vpop.f32.mrb[0].mxu0
  %v3760 = vpop.f32.mrb[0].mxu0
  %v3761 = vadd.f32 %v3328, %v3760
  %v3762 = vpop.f32.mrb[0].mxu0
  %3763 = vmatprep.mubr.bf16.mxu0 %v1752
  %3764 = vmatmul.mubr.bf16.gmra.mrb[0].mxu0 %v1751
  %v3765 = vpop.f32.mrb[0].mxu0
  %v3766 = vadd.f32 %v3333, %v3765
  %v3767 = vpop.f32.mrb[0].mxu0
  %v3768 = vpop.f32.mrb[0].mxu0
  %v3769 = vadd.f32 %v3336, %v3768
  %v3770 = vpop.f32.mrb[0].mxu0
  %3771 = vmatprep.mubr.bf16.mxu0 %v1759
  %3772 = vmatmul.mubr.bf16.gmra.mrb[0].mxu0 %v1758
  %v3773 = vpop.f32.mrb[0].mxu0
  %v3774 = vadd.f32 %v3341, %v3773
  %v3775 = vpop.f32.mrb[0].mxu0
  %v3776 = vpop.f32.mrb[0].mxu0
  %v3777 = vadd.f32 %v3344, %v3776
  %v3778 = vpop.f32.mrb[0].mxu0
  %3779 = vmatprep.mubr.bf16.mxu0 %v1766
  %3780 = vmatmul.mubr.bf16.gmra.mrb[0].mxu0 %v1765
  %v3781 = vpop.f32.mrb[0].mxu0
  %v3782 = vadd.f32 %v3349, %v3781
  %v3783 = vpop.f32.mrb[0].mxu0
  %v3784 = vpop.f32.mrb[0].mxu0
  %v3785 = vadd.f32 %v3352, %v3784
  %v3786 = vpop.f32.mrb[0].mxu0
  %3787 = vmatprep.mubr.bf16.mxu0 %v1773
  %3788 = vmatmul.mubr.bf16.gmra.mrb[0].mxu0 %v1772
  %v3789 = vpop.f32.mrb[0].mxu0
  %v3790 = vadd.f32 %v3357, %v3789
  %v3791 = vpop.f32.mrb[0].mxu0
  %v3792 = vpop.f32.mrb[0].mxu0
  %v3793 = vadd.f32 %v3360, %v3792
  %v3794 = vpop.f32.mrb[0].mxu0
  %3795 = vmatprep.mubr.bf16.mxu0 %v1780
  %3796 = vmatmul.mubr.bf16.gmra.mrb[0].mxu0 %v1779
  %v3797 = vpop.f32.mrb[0].mxu0
  %v3798 = vadd.f32 %v3365, %v3797
  %v3799 = vpop.f32.mrb[0].mxu0
  %v3800 = vpop.f32.mrb[0].mxu0
  %v3801 = vadd.f32 %v3368, %v3800
  %v3802 = vpop.f32.mrb[0].mxu0
  %3803 = vmatprep.mubr.bf16.mxu0 %v1787
  %3804 = vmatmul.mubr.bf16.gmra.mrb[0].mxu0 %v1786
  %v3805 = vpop.f32.mrb[0].mxu0
  %v3806 = vadd.f32 %v3373, %v3805
  %v3807 = vpop.f32.mrb[0].mxu0
  %v3808 = vpop.f32.mrb[0].mxu0
  %v3809 = vadd.f32 %v3376, %v3808
  %v3810 = vpop.f32.mrb[0].mxu0
  %3811 = vmatprep.mubr.bf16.mxu0 %v1794
  %3812 = vmatmul.mubr.bf16.gmra.mrb[0].mxu0 %v1793
  %v3813 = vpop.f32.mrb[0].mxu0
  %v3814 = vadd.f32 %v3381, %v3813
  %v3815 = vpop.f32.mrb[0].mxu0
  %v3816 = vpop.f32.mrb[0].mxu0
  %v3817 = vadd.f32 %v3384, %v3816
  %v3818 = vpop.f32.mrb[0].mxu0
  %3819 = vmatprep.mubr.bf16.mxu0 %v1801
  %3820 = vmatmul.mubr.bf16.gmra.mrb[0].mxu0 %v1800
  %v3821 = vpop.f32.mrb[0].mxu0
  %v3822 = vadd.f32 %v3389, %v3821
  %v3823 = vpop.f32.mrb[0].mxu0
  %v3824 = vpop.f32.mrb[0].mxu0
  %v3825 = vadd.f32 %v3392, %v3824
  %v3826 = vpop.f32.mrb[0].mxu0
  %3827 = vmatprep.mubr.bf16.mxu0 %v1808
  %3828 = vmatmul.mubr.bf16.gmra.mrb[0].mxu0 %v1807
  %v3829 = vpop.f32.mrb[0].mxu0
  %v3830 = vadd.f32 %v3397, %v3829
  %v3831 = vpop.f32.mrb[0].mxu0
  %v3832 = vpop.f32.mrb[0].mxu0
  %v3833 = vadd.f32 %v3400, %v3832
  %v3834 = vpop.f32.mrb[0].mxu0
  %3835 = vmatprep.mubr.bf16.mxu0 %v1815
  %3836 = vmatmul.mubr.bf16.gmra.mrb[0].mxu0 %v1814
  %v3837 = vpop.f32.mrb[0].mxu0
  %v3838 = vadd.f32 %v3405, %v3837
  %v3839 = vpop.f32.mrb[0].mxu0
  %v3840 = vpop.f32.mrb[0].mxu0
  %v3841 = vadd.f32 %v3408, %v3840
  %v3842 = vpop.f32.mrb[0].mxu0
  %3843 = vmatprep.mubr.bf16.mxu0 %v1822
  %3844 = vmatmul.mubr.bf16.gmra.mrb[0].mxu0 %v1821
  %v3845 = vpop.f32.mrb[0].mxu0
  %v3846 = vadd.f32 %v3413, %v3845
  %v3847 = vpop.f32.mrb[0].mxu0
  %v3848 = vpop.f32.mrb[0].mxu0
  %v3849 = vadd.f32 %v3416, %v3848
  %v3850 = vpop.f32.mrb[0].mxu0
  %3851 = vmatprep.mubr.bf16.mxu0 %v1829
  %3852 = vmatmul.mubr.bf16.gmra.mrb[0].mxu0 %v1828
  %v3853 = vpop.f32.mrb[0].mxu0
  %v3854 = vadd.f32 %v3421, %v3853
  %v3855 = vpop.f32.mrb[0].mxu0
  %v3856 = vpop.f32.mrb[0].mxu0
  %v3857 = vadd.f32 %v3424, %v3856
  %v3858 = vpop.f32.mrb[0].mxu0
  %3859 = vmatprep.mubr.bf16.mxu0 %v1836
  %3860 = vmatmul.mubr.bf16.gmra.mrb[0].mxu0 %v1835
  %v3861 = vpop.f32.mrb[0].mxu0
  %v3862 = vadd.f32 %v3429, %v3861
  %v3863 = vpop.f32.mrb[0].mxu0
  %v3864 = vpop.f32.mrb[0].mxu0
  %v3865 = vadd.f32 %v3432, %v3864
  %v3866 = vpop.f32.mrb[0].mxu0
  %3867 = vmatprep.mubr.bf16.mxu0 %v1843
  %3868 = vmatmul.mubr.bf16.gmra.mrb[0].mxu0 %v1842
  %v3869 = vpop.f32.mrb[0].mxu0
  %v3870 = vadd.f32 %v3437, %v3869
  %v3871 = vpop.f32.mrb[0].mxu0
  %v3872 = vpop.f32.mrb[0].mxu0
  %v3873 = vadd.f32 %v3440, %v3872
  %v3874 = vpop.f32.mrb[0].mxu0
  %3875 = vmatprep.mubr.bf16.mxu0 %v1850
  %3876 = vmatmul.mubr.bf16.gmra.mrb[0].mxu0 %v1849
  %v3877 = vpop.f32.mrb[0].mxu0
  %v3878 = vadd.f32 %v3445, %v3877
  %v3879 = vpop.f32.mrb[0].mxu0
  %v3880 = vpop.f32.mrb[0].mxu0
  %v3881 = vadd.f32 %v3448, %v3880
  %v3882 = vpop.f32.mrb[0].mxu0
  %3883 = vmatprep.mubr.bf16.mxu0 %v1857
  %3884 = vmatmul.mubr.bf16.gmra.mrb[0].mxu0 %v1856
  %v3885 = vpop.f32.mrb[0].mxu0
  %v3886 = vadd.f32 %v3453, %v3885
  %v3887 = vpop.f32.mrb[0].mxu0
  %v3888 = vpop.f32.mrb[0].mxu0
  %v3889 = vadd.f32 %v3456, %v3888
  %v3890 = vpop.f32.mrb[0].mxu0
  %3891 = vmatprep.mubr.bf16.mxu0 %v1864
  %3892 = vmatmul.mubr.bf16.gmra.mrb[0].mxu0 %v1863
  %v3893 = vpop.f32.mrb[0].mxu0
  %v3894 = vadd.f32 %v3461, %v3893
  %v3895 = vpop.f32.mrb[0].mxu0
  %v3896 = vpop.f32.mrb[0].mxu0
  %v3897 = vadd.f32 %v3464, %v3896
  %v3898 = vpop.f32.mrb[0].mxu0
  %3899 = vmatprep.mubr.bf16.mxu0 %v1871
  %3900 = vmatmul.mubr.bf16.gmra.mrb[0].mxu0 %v1870
  %v3901 = vpop.f32.mrb[0].mxu0
  %v3902 = vadd.f32 %v3469, %v3901
  %v3903 = vpop.f32.mrb[0].mxu0
  %v3904 = vpop.f32.mrb[0].mxu0
  %v3905 = vadd.f32 %v3472, %v3904
  %v3906 = vpop.f32.mrb[0].mxu0
  %3907 = vmatprep.mubr.bf16.mxu0 %v1878
  %3908 = vmatmul.mubr.bf16.gmra.mrb[0].mxu0 %v1877
  %v3909 = vpop.f32.mrb[0].mxu0
  %v3910 = vadd.f32 %v3477, %v3909
  %v3911 = vpop.f32.mrb[0].mxu0
  %v3912 = vpop.f32.mrb[0].mxu0
  %v3913 = vadd.f32 %v3480, %v3912
  %v3914 = vpop.f32.mrb[0].mxu0
  %3915 = vmatprep.mubr.bf16.mxu0 %v1885
  %3916 = vmatmul.mubr.bf16.gmra.mrb[0].mxu0 %v1884
  %v3917 = vpop.f32.mrb[0].mxu0
  %v3918 = vadd.f32 %v3485, %v3917
  %v3919 = vpop.f32.mrb[0].mxu0
  %v3920 = vpop.f32.mrb[0].mxu0
  %v3921 = vadd.f32 %v3488, %v3920
  %v3922 = vpop.f32.mrb[0].mxu0
  %3923 = vmatprep.mubr.bf16.mxu0 %v1892
  %3924 = vmatmul.mubr.bf16.gmra.mrb[0].mxu0 %v1891
  %v3925 = vpop.f32.mrb[0].mxu0
  %v3926 = vadd.f32 %v3493, %v3925
  %v3927 = vpop.f32.mrb[0].mxu0
  %v3928 = vpop.f32.mrb[0].mxu0
  %v3929 = vadd.f32 %v3496, %v3928
  %v3930 = vpop.f32.mrb[0].mxu0
  %3931 = vmatprep.mubr.bf16.mxu0 %v1899
  %3932 = vmatmul.mubr.bf16.gmra.mrb[0].mxu0 %v1898
  %v3933 = vpop.f32.mrb[0].mxu0
  %v3934 = vadd.f32 %v3501, %v3933
  %v3935 = vpop.f32.mrb[0].mxu0
  %v3936 = vpop.f32.mrb[0].mxu0
  %v3937 = vadd.f32 %v3504, %v3936
  %v3938 = vpop.f32.mrb[0].mxu0
  %3939 = vmatprep.mubr.bf16.mxu0 %v1906
  %3940 = vmatmul.mubr.bf16.gmra.mrb[0].mxu0 %v1905
  %v3941 = vpop.f32.mrb[0].mxu0
  %v3942 = vadd.f32 %v3509, %v3941
  %v3943 = vpop.f32.mrb[0].mxu0
  %v3944 = vpop.f32.mrb[0].mxu0
  %v3945 = vadd.f32 %v3512, %v3944
  %v3946 = vpop.f32.mrb[0].mxu0
  %3947 = vmatprep.mubr.bf16.mxu0 %v1913
  %3948 = vmatmul.mubr.bf16.gmra.mrb[0].mxu0 %v1912
  %v3949 = vpop.f32.mrb[0].mxu0
  %v3950 = vadd.f32 %v3517, %v3949
  %v3951 = vpop.f32.mrb[0].mxu0
  %v3952 = vpop.f32.mrb[0].mxu0
  %v3953 = vadd.f32 %v3520, %v3952
  %v3954 = vpop.f32.mrb[0].mxu0
  %3955 = vmatprep.mubr.bf16.mxu0 %v1920
  %3956 = vmatmul.mubr.bf16.gmra.mrb[0].mxu0 %v1919
  %v3957 = vpop.f32.mrb[0].mxu0
  %v3958 = vadd.f32 %v3525, %v3957
  %v3959 = vpop.f32.mrb[0].mxu0
  %v3960 = vpop.f32.mrb[0].mxu0
  %v3961 = vadd.f32 %v3528, %v3960
  %v3962 = vpop.f32.mrb[0].mxu0
  %3963 = vmatprep.mubr.bf16.mxu0 %v1927
  %3964 = vmatmul.mubr.bf16.gmra.mrb[0].mxu0 %v1926
  %v3965 = vpop.f32.mrb[0].mxu0
  %v3966 = vadd.f32 %v3533, %v3965
  %v3967 = vpop.f32.mrb[0].mxu0
  %v3968 = vpop.f32.mrb[0].mxu0
  %v3969 = vadd.f32 %v3536, %v3968
  %v3970 = vpop.f32.mrb[0].mxu0
  %3971 = vmatprep.mubr.bf16.mxu0 %v1934
  %3972 = vmatmul.mubr.bf16.gmra.mrb[0].mxu0 %v1933
  %v3973 = vpop.f32.mrb[0].mxu0
  %v3974 = vadd.f32 %v3541, %v3973
  %v3975 = vpop.f32.mrb[0].mxu0
  %v3976 = vpop.f32.mrb[0].mxu0
  %v3977 = vadd.f32 %v3544, %v3976
  %v3978 = vpop.f32.mrb[0].mxu0
  %3979 = vmatprep.mubr.bf16.mxu0 %v1941
  %3980 = vmatmul.mubr.bf16.gmra.mrb[0].mxu0 %v1940
  %v3981 = vpop.f32.mrb[0].mxu0
  %v3982 = vadd.f32 %v3549, %v3981
  %v3983 = vpop.f32.mrb[0].mxu0
  %v3984 = vpop.f32.mrb[0].mxu0
  %v3985 = vadd.f32 %v3552, %v3984
  %v3986 = vpop.f32.mrb[0].mxu0
  %3987 = vmatprep.mubr.bf16.mxu0 %v1948
  %3988 = vmatmul.mubr.bf16.gmra.mrb[0].mxu0 %v1947
  %v3989 = vpop.f32.mrb[0].mxu0
  %v3990 = vadd.f32 %v3557, %v3989
  %v3991 = vpop.f32.mrb[0].mxu0
  %v3992 = vpop.f32.mrb[0].mxu0
  %v3993 = vadd.f32 %v3560, %v3992
  %v3994 = vpop.f32.mrb[0].mxu0
  %3995 = vmatprep.mubr.bf16.mxu0 %v1955
  %3996 = vmatmul.mubr.bf16.gmra.mrb[0].mxu0 %v1954
  %v3997 = vpop.f32.mrb[0].mxu0
  %v3998 = vadd.f32 %v3565, %v3997
  %v3999 = vpop.f32.mrb[0].mxu0
  %v4000 = vpop.f32.mrb[0].mxu0
  %v4001 = vadd.f32 %v3568, %v4000
  %v4002 = vpop.f32.mrb[0].mxu0
  %4003 = vmatprep.mubr.bf16.mxu0 %v1962
  %4004 = vmatmul.mubr.bf16.gmra.mrb[0].mxu0 %v1961
  %v4005 = vpop.f32.mrb[0].mxu0
  %v4006 = vadd.f32 %v3573, %v4005
  %v4007 = vpop.f32.mrb[0].mxu0
  %v4008 = vpop.f32.mrb[0].mxu0
  %v4009 = vadd.f32 %v3576, %v4008
  %v4010 = vpop.f32.mrb[0].mxu0
  %4011 = vmatprep.mubr.bf16.mxu0 %v1969
  %4012 = vmatmul.mubr.bf16.gmra.mrb[0].mxu0 %v1968
  %v4013 = vpop.f32.mrb[0].mxu0
  %v4014 = vadd.f32 %v3581, %v4013
  %v4015 = vpop.f32.mrb[0].mxu0
  %v4016 = vpop.f32.mrb[0].mxu0
  %v4017 = vadd.f32 %v3584, %v4016
  %v4018 = vpop.f32.mrb[0].mxu0
  %4019 = vmatprep.mubr.bf16.mxu0 %v1976
  %4020 = vmatmul.mubr.bf16.gmra.mrb[0].mxu0 %v1975
  %v4021 = vpop.f32.mrb[0].mxu0
  %v4022 = vadd.f32 %v3589, %v4021
  %v4023 = vpop.f32.mrb[0].mxu0
  %v4024 = vpop.f32.mrb[0].mxu0
  %v4025 = vadd.f32 %v3592, %v4024
  %v4026 = vpop.f32.mrb[0].mxu0
  %4027 = vdwg.mxu0
  %4028 = vmatprep.subr.bf16.mxu0 0
  %4029 = vmatpush1.bf16.msra.mxu0 %v2526
  %4030 = vmatprep.subr.bf16.mxu0 0
  %4031 = vmatpush1.bf16.msra.mxu0 %v2527
  %4032 = vmatprep.subr.bf16.mxu0 0
  %4033 = vmatpush1.bf16.msra.mxu0 0
  %4034 = vmatprep.subr.bf16.mxu0 0
  %4035 = vmatpush1.bf16.msra.mxu0 0
  %4036 = vmatprep.subr.bf16.mxu0 0
  %4037 = vmatpush1.bf16.msra.mxu0 0
  %4038 = vmatprep.subr.bf16.mxu0 0
  %4039 = vmatpush1.bf16.msra.mxu0 0
  %4040 = vmatprep.subr.bf16.mxu0 0
  %4041 = vmatpush1.bf16.msra.mxu0 0
  %4042 = vmatprep.subr.bf16.mxu0 0
  %4043 = vmatpush1.bf16.msra.mxu0 0
  %4044 = vmatprep.subr.bf16.mxu0 0
  %4045 = vmatpush1.bf16.msra.mxu0 0
  %4046 = vmatprep.subr.bf16.mxu0 0
  %4047 = vmatpush1.bf16.msra.mxu0 0
  %4048 = vmatprep.subr.bf16.mxu0 0
  %4049 = vmatpush1.bf16.msra.mxu0 0
  %4050 = vmatprep.subr.bf16.mxu0 0
  %4051 = vmatpush1.bf16.msra.mxu0 0
  %4052 = vmatprep.subr.bf16.mxu0 0
  %4053 = vmatpush1.bf16.msra.mxu0 0
  %4054 = vmatprep.subr.bf16.mxu0 0
  %4055 = vmatpush1.bf16.msra.mxu0 0
  %4056 = vmatprep.subr.bf16.mxu0 0
  %4057 = vmatpush1.bf16.msra.mxu0 0
  %4058 = vmatprep.subr.bf16.mxu0 0
  %4059 = vmatpush1.bf16.msra.mxu0 0
  %4060 = vmatprep.mubr.bf16.mxu0 0
  %4061 = vmatmul.mubr.bf16.gmra.mrb[0].mxu0 %v2580
  %v4062 = vpop.f32.mrb[0].mxu0
  %v4063 = vadd.f32 %v3630, %v4062
  %v4064 = vpop.f32.mrb[0].mxu0
  %v4065 = vpop.f32.mrb[0].mxu0
  %v4066 = vadd.f32 %v3633, %v4065
  %v4067 = vpop.f32.mrb[0].mxu0
  %4068 = vmatprep.mubr.bf16.mxu0 0
  %4069 = vmatmul.mubr.bf16.gmra.mrb[0].mxu0 %v2583
  %v4070 = vpop.f32.mrb[0].mxu0
  %v4071 = vadd.f32 %v3638, %v4070
  %v4072 = vpop.f32.mrb[0].mxu0
  %v4073 = vpop.f32.mrb[0].mxu0
  %v4074 = vadd.f32 %v3641, %v4073
  %v4075 = vpop.f32.mrb[0].mxu0
  %4076 = vmatprep.mubr.bf16.mxu0 0
  %4077 = vmatmul.mubr.bf16.gmra.mrb[0].mxu0 %v2586
  %v4078 = vpop.f32.mrb[0].mxu0
  %v4079 = vadd.f32 %v3646, %v4078
  %v4080 = vpop.f32.mrb[0].mxu0
  %v4081 = vpop.f32.mrb[0].mxu0
  %v4082 = vadd.f32 %v3649, %v4081
  %v4083 = vpop.f32.mrb[0].mxu0
  %4084 = vmatprep.mubr.bf16.mxu0 0
  %4085 = vmatmul.mubr.bf16.gmra.mrb[0].mxu0 %v2589
  %v4086 = vpop.f32.mrb[0].mxu0
  %v4087 = vadd.f32 %v3654, %v4086
  %v4088 = vpop.f32.mrb[0].mxu0
  %v4089 = vpop.f32.mrb[0].mxu0
  %v4090 = vadd.f32 %v3657, %v4089
  %v4091 = vpop.f32.mrb[0].mxu0
  %4092 = vmatprep.mubr.bf16.mxu0 0
  %4093 = vmatmul.mubr.bf16.gmra.mrb[0].mxu0 %v2592
  %v4094 = vpop.f32.mrb[0].mxu0
  %v4095 = vadd.f32 %v3662, %v4094
  %v4096 = vpop.f32.mrb[0].mxu0
  %v4097 = vpop.f32.mrb[0].mxu0
  %v4098 = vadd.f32 %v3665, %v4097
  %v4099 = vpop.f32.mrb[0].mxu0
  %4100 = vmatprep.mubr.bf16.mxu0 0
  %4101 = vmatmul.mubr.bf16.gmra.mrb[0].mxu0 %v2595
  %v4102 = vpop.f32.mrb[0].mxu0
  %v4103 = vadd.f32 %v3670, %v4102
  %v4104 = vpop.f32.mrb[0].mxu0
  %v4105 = vpop.f32.mrb[0].mxu0
  %v4106 = vadd.f32 %v3673, %v4105
  %v4107 = vpop.f32.mrb[0].mxu0
  %4108 = vmatprep.mubr.bf16.mxu0 0
  %4109 = vmatmul.mubr.bf16.gmra.mrb[0].mxu0 %v2598
  %v4110 = vpop.f32.mrb[0].mxu0
  %v4111 = vadd.f32 %v3678, %v4110
  %v4112 = vpop.f32.mrb[0].mxu0
  %v4113 = vpop.f32.mrb[0].mxu0
  %v4114 = vadd.f32 %v3681, %v4113
  %v4115 = vpop.f32.mrb[0].mxu0
  %4116 = vmatprep.mubr.bf16.mxu0 0
  %4117 = vmatmul.mubr.bf16.gmra.mrb[0].mxu0 %v2601
  %v4118 = vpop.f32.mrb[0].mxu0
  %v4119 = vadd.f32 %v3686, %v4118
  %v4120 = vpop.f32.mrb[0].mxu0
  %v4121 = vpop.f32.mrb[0].mxu0
  %v4122 = vadd.f32 %v3689, %v4121
  %v4123 = vpop.f32.mrb[0].mxu0
  %4124 = vmatprep.mubr.bf16.mxu0 0
  %4125 = vmatmul.mubr.bf16.gmra.mrb[0].mxu0 %v2604
  %v4126 = vpop.f32.mrb[0].mxu0
  %v4127 = vadd.f32 %v3694, %v4126
  %v4128 = vpop.f32.mrb[0].mxu0
  %v4129 = vpop.f32.mrb[0].mxu0
  %v4130 = vadd.f32 %v3697, %v4129
  %v4131 = vpop.f32.mrb[0].mxu0
  %4132 = vmatprep.mubr.bf16.mxu0 0
  %4133 = vmatmul.mubr.bf16.gmra.mrb[0].mxu0 %v2607
  %v4134 = vpop.f32.mrb[0].mxu0
  %v4135 = vadd.f32 %v3702, %v4134
  %v4136 = vpop.f32.mrb[0].mxu0
  %v4137 = vpop.f32.mrb[0].mxu0
  %v4138 = vadd.f32 %v3705, %v4137
  %v4139 = vpop.f32.mrb[0].mxu0
  %4140 = vmatprep.mubr.bf16.mxu0 0
  %4141 = vmatmul.mubr.bf16.gmra.mrb[0].mxu0 %v2610
  %v4142 = vpop.f32.mrb[0].mxu0
  %v4143 = vadd.f32 %v3710, %v4142
  %v4144 = vpop.f32.mrb[0].mxu0
  %v4145 = vpop.f32.mrb[0].mxu0
  %v4146 = vadd.f32 %v3713, %v4145
  %v4147 = vpop.f32.mrb[0].mxu0
  %4148 = vmatprep.mubr.bf16.mxu0 0
  %4149 = vmatmul.mubr.bf16.gmra.mrb[0].mxu0 %v2613
  %v4150 = vpop.f32.mrb[0].mxu0
  %v4151 = vadd.f32 %v3718, %v4150
  %v4152 = vpop.f32.mrb[0].mxu0
  %v4153 = vpop.f32.mrb[0].mxu0
  %v4154 = vadd.f32 %v3721, %v4153
  %v4155 = vpop.f32.mrb[0].mxu0
  %4156 = vmatprep.mubr.bf16.mxu0 0
  %4157 = vmatmul.mubr.bf16.gmra.mrb[0].mxu0 %v2616
  %v4158 = vpop.f32.mrb[0].mxu0
  %v4159 = vadd.f32 %v3726, %v4158
  %v4160 = vpop.f32.mrb[0].mxu0
  %v4161 = vpop.f32.mrb[0].mxu0
  %v4162 = vadd.f32 %v3729, %v4161
  %v4163 = vpop.f32.mrb[0].mxu0
  %4164 = vmatprep.mubr.bf16.mxu0 0
  %4165 = vmatmul.mubr.bf16.gmra.mrb[0].mxu0 %v2619
  %v4166 = vpop.f32.mrb[0].mxu0
  %v4167 = vadd.f32 %v3734, %v4166
  %v4168 = vpop.f32.mrb[0].mxu0
  %v4169 = vpop.f32.mrb[0].mxu0
  %v4170 = vadd.f32 %v3737, %v4169
  %v4171 = vpop.f32.mrb[0].mxu0
  %4172 = vmatprep.mubr.bf16.mxu0 0
  %4173 = vmatmul.mubr.bf16.gmra.mrb[0].mxu0 %v2622
  %v4174 = vpop.f32.mrb[0].mxu0
  %v4175 = vadd.f32 %v3742, %v4174
  %v4176 = vpop.f32.mrb[0].mxu0
  %v4177 = vpop.f32.mrb[0].mxu0
  %v4178 = vadd.f32 %v3745, %v4177
  %v4179 = vpop.f32.mrb[0].mxu0
  %4180 = vmatprep.mubr.bf16.mxu0 0
  %4181 = vmatmul.mubr.bf16.gmra.mrb[0].mxu0 %v2625
  %v4182 = vpop.f32.mrb[0].mxu0
  %v4183 = vadd.f32 %v3750, %v4182
  %v4184 = vpop.f32.mrb[0].mxu0
  %v4185 = vpop.f32.mrb[0].mxu0
  %v4186 = vadd.f32 %v3753, %v4185
  %v4187 = vpop.f32.mrb[0].mxu0
  %4188 = vmatprep.mubr.bf16.mxu0 0
  %4189 = vmatmul.mubr.bf16.gmra.mrb[0].mxu0 %v2628
  %v4190 = vpop.f32.mrb[0].mxu0
  %v4191 = vadd.f32 %v3758, %v4190
  %v4192 = vpop.f32.mrb[0].mxu0
  %v4193 = vpop.f32.mrb[0].mxu0
  %v4194 = vadd.f32 %v3761, %v4193
  %v4195 = vpop.f32.mrb[0].mxu0
  %4196 = vmatprep.mubr.bf16.mxu0 0
  %4197 = vmatmul.mubr.bf16.gmra.mrb[0].mxu0 %v2631
  %v4198 = vpop.f32.mrb[0].mxu0
  %v4199 = vadd.f32 %v3766, %v4198
  %v4200 = vpop.f32.mrb[0].mxu0
  %v4201 = vpop.f32.mrb[0].mxu0
  %v4202 = vadd.f32 %v3769, %v4201
  %v4203 = vpop.f32.mrb[0].mxu0
  %4204 = vmatprep.mubr.bf16.mxu0 0
  %4205 = vmatmul.mubr.bf16.gmra.mrb[0].mxu0 %v2634
  %v4206 = vpop.f32.mrb[0].mxu0
  %v4207 = vadd.f32 %v3774, %v4206
  %v4208 = vpop.f32.mrb[0].mxu0
  %v4209 = vpop.f32.mrb[0].mxu0
  %v4210 = vadd.f32 %v3777, %v4209
  %v4211 = vpop.f32.mrb[0].mxu0
  %4212 = vmatprep.mubr.bf16.mxu0 0
  %4213 = vmatmul.mubr.bf16.gmra.mrb[0].mxu0 %v2637
  %v4214 = vpop.f32.mrb[0].mxu0
  %v4215 = vadd.f32 %v3782, %v4214
  %v4216 = vpop.f32.mrb[0].mxu0
  %v4217 = vpop.f32.mrb[0].mxu0
  %v4218 = vadd.f32 %v3785, %v4217
  %v4219 = vpop.f32.mrb[0].mxu0
  %4220 = vmatprep.mubr.bf16.mxu0 0
  %4221 = vmatmul.mubr.bf16.gmra.mrb[0].mxu0 %v2640
  %v4222 = vpop.f32.mrb[0].mxu0
  %v4223 = vadd.f32 %v3790, %v4222
  %v4224 = vpop.f32.mrb[0].mxu0
  %v4225 = vpop.f32.mrb[0].mxu0
  %v4226 = vadd.f32 %v3793, %v4225
  %v4227 = vpop.f32.mrb[0].mxu0
  %4228 = vmatprep.mubr.bf16.mxu0 0
  %4229 = vmatmul.mubr.bf16.gmra.mrb[0].mxu0 %v2643
  %v4230 = vpop.f32.mrb[0].mxu0
  %v4231 = vadd.f32 %v3798, %v4230
  %v4232 = vpop.f32.mrb[0].mxu0
  %v4233 = vpop.f32.mrb[0].mxu0
  %v4234 = vadd.f32 %v3801, %v4233
  %v4235 = vpop.f32.mrb[0].mxu0
  %4236 = vmatprep.mubr.bf16.mxu0 0
  %4237 = vmatmul.mubr.bf16.gmra.mrb[0].mxu0 %v2646
  %v4238 = vpop.f32.mrb[0].mxu0
  %v4239 = vadd.f32 %v3806, %v4238
  %v4240 = vpop.f32.mrb[0].mxu0
  %v4241 = vpop.f32.mrb[0].mxu0
  %v4242 = vadd.f32 %v3809, %v4241
  %v4243 = vpop.f32.mrb[0].mxu0
  %4244 = vmatprep.mubr.bf16.mxu0 0
  %4245 = vmatmul.mubr.bf16.gmra.mrb[0].mxu0 %v2649
  %v4246 = vpop.f32.mrb[0].mxu0
  %v4247 = vadd.f32 %v3814, %v4246
  %v4248 = vpop.f32.mrb[0].mxu0
  %v4249 = vpop.f32.mrb[0].mxu0
  %v4250 = vadd.f32 %v3817, %v4249
  %v4251 = vpop.f32.mrb[0].mxu0
  %4252 = vmatprep.mubr.bf16.mxu0 0
  %4253 = vmatmul.mubr.bf16.gmra.mrb[0].mxu0 %v2652
  %v4254 = vpop.f32.mrb[0].mxu0
  %v4255 = vadd.f32 %v3822, %v4254
  %v4256 = vpop.f32.mrb[0].mxu0
  %v4257 = vpop.f32.mrb[0].mxu0
  %v4258 = vadd.f32 %v3825, %v4257
  %v4259 = vpop.f32.mrb[0].mxu0
  %4260 = vmatprep.mubr.bf16.mxu0 0
  %4261 = vmatmul.mubr.bf16.gmra.mrb[0].mxu0 %v2655
  %v4262 = vpop.f32.mrb[0].mxu0
  %v4263 = vadd.f32 %v3830, %v4262
  %v4264 = vpop.f32.mrb[0].mxu0
  %v4265 = vpop.f32.mrb[0].mxu0
  %v4266 = vadd.f32 %v3833, %v4265
  %v4267 = vpop.f32.mrb[0].mxu0
  %4268 = vmatprep.mubr.bf16.mxu0 0
  %4269 = vmatmul.mubr.bf16.gmra.mrb[0].mxu0 %v2658
  %v4270 = vpop.f32.mrb[0].mxu0
  %v4271 = vadd.f32 %v3838, %v4270
  %v4272 = vpop.f32.mrb[0].mxu0
  %v4273 = vpop.f32.mrb[0].mxu0
  %v4274 = vadd.f32 %v3841, %v4273
  %v4275 = vpop.f32.mrb[0].mxu0
  %4276 = vmatprep.mubr.bf16.mxu0 0
  %4277 = vmatmul.mubr.bf16.gmra.mrb[0].mxu0 %v2661
  %v4278 = vpop.f32.mrb[0].mxu0
  %v4279 = vadd.f32 %v3846, %v4278
  %v4280 = vpop.f32.mrb[0].mxu0
  %v4281 = vpop.f32.mrb[0].mxu0
  %v4282 = vadd.f32 %v3849, %v4281
  %v4283 = vpop.f32.mrb[0].mxu0
  %4284 = vmatprep.mubr.bf16.mxu0 0
  %4285 = vmatmul.mubr.bf16.gmra.mrb[0].mxu0 %v2664
  %v4286 = vpop.f32.mrb[0].mxu0
  %v4287 = vadd.f32 %v3854, %v4286
  %v4288 = vpop.f32.mrb[0].mxu0
  %v4289 = vpop.f32.mrb[0].mxu0
  %v4290 = vadd.f32 %v3857, %v4289
  %v4291 = vpop.f32.mrb[0].mxu0
  %4292 = vmatprep.mubr.bf16.mxu0 0
  %4293 = vmatmul.mubr.bf16.gmra.mrb[0].mxu0 %v2667
  %v4294 = vpop.f32.mrb[0].mxu0
  %v4295 = vadd.f32 %v3862, %v4294
  %v4296 = vpop.f32.mrb[0].mxu0
  %v4297 = vpop.f32.mrb[0].mxu0
  %v4298 = vadd.f32 %v3865, %v4297
  %v4299 = vpop.f32.mrb[0].mxu0
  %4300 = vmatprep.mubr.bf16.mxu0 0
  %4301 = vmatmul.mubr.bf16.gmra.mrb[0].mxu0 %v2670
  %v4302 = vpop.f32.mrb[0].mxu0
  %v4303 = vadd.f32 %v3870, %v4302
  %v4304 = vpop.f32.mrb[0].mxu0
  %v4305 = vpop.f32.mrb[0].mxu0
  %v4306 = vadd.f32 %v3873, %v4305
  %v4307 = vpop.f32.mrb[0].mxu0
  %4308 = vmatprep.mubr.bf16.mxu0 0
  %4309 = vmatmul.mubr.bf16.gmra.mrb[0].mxu0 %v2673
  %v4310 = vpop.f32.mrb[0].mxu0
  %v4311 = vadd.f32 %v3878, %v4310
  %v4312 = vpop.f32.mrb[0].mxu0
  %v4313 = vpop.f32.mrb[0].mxu0
  %v4314 = vadd.f32 %v3881, %v4313
  %v4315 = vpop.f32.mrb[0].mxu0
  %4316 = vmatprep.mubr.bf16.mxu0 0
  %4317 = vmatmul.mubr.bf16.gmra.mrb[0].mxu0 %v2676
  %v4318 = vpop.f32.mrb[0].mxu0
  %v4319 = vadd.f32 %v3886, %v4318
  %v4320 = vpop.f32.mrb[0].mxu0
  %v4321 = vpop.f32.mrb[0].mxu0
  %v4322 = vadd.f32 %v3889, %v4321
  %v4323 = vpop.f32.mrb[0].mxu0
  %4324 = vmatprep.mubr.bf16.mxu0 0
  %4325 = vmatmul.mubr.bf16.gmra.mrb[0].mxu0 %v2679
  %v4326 = vpop.f32.mrb[0].mxu0
  %v4327 = vadd.f32 %v3894, %v4326
  %v4328 = vpop.f32.mrb[0].mxu0
  %v4329 = vpop.f32.mrb[0].mxu0
  %v4330 = vadd.f32 %v3897, %v4329
  %v4331 = vpop.f32.mrb[0].mxu0
  %4332 = vmatprep.mubr.bf16.mxu0 0
  %4333 = vmatmul.mubr.bf16.gmra.mrb[0].mxu0 %v2682
  %v4334 = vpop.f32.mrb[0].mxu0
  %v4335 = vadd.f32 %v3902, %v4334
  %v4336 = vpop.f32.mrb[0].mxu0
  %v4337 = vpop.f32.mrb[0].mxu0
  %v4338 = vadd.f32 %v3905, %v4337
  %v4339 = vpop.f32.mrb[0].mxu0
  %4340 = vmatprep.mubr.bf16.mxu0 0
  %4341 = vmatmul.mubr.bf16.gmra.mrb[0].mxu0 %v2685
  %v4342 = vpop.f32.mrb[0].mxu0
  %v4343 = vadd.f32 %v3910, %v4342
  %v4344 = vpop.f32.mrb[0].mxu0
  %v4345 = vpop.f32.mrb[0].mxu0
  %v4346 = vadd.f32 %v3913, %v4345
  %v4347 = vpop.f32.mrb[0].mxu0
  %4348 = vmatprep.mubr.bf16.mxu0 0
  %4349 = vmatmul.mubr.bf16.gmra.mrb[0].mxu0 %v2688
  %v4350 = vpop.f32.mrb[0].mxu0
  %v4351 = vadd.f32 %v3918, %v4350
  %v4352 = vpop.f32.mrb[0].mxu0
  %v4353 = vpop.f32.mrb[0].mxu0
  %v4354 = vadd.f32 %v3921, %v4353
  %v4355 = vpop.f32.mrb[0].mxu0
  %4356 = vmatprep.mubr.bf16.mxu0 0
  %4357 = vmatmul.mubr.bf16.gmra.mrb[0].mxu0 %v2691
  %v4358 = vpop.f32.mrb[0].mxu0
  %v4359 = vadd.f32 %v3926, %v4358
  %v4360 = vpop.f32.mrb[0].mxu0
  %v4361 = vpop.f32.mrb[0].mxu0
  %v4362 = vadd.f32 %v3929, %v4361
  %v4363 = vpop.f32.mrb[0].mxu0
  %4364 = vmatprep.mubr.bf16.mxu0 0
  %4365 = vmatmul.mubr.bf16.gmra.mrb[0].mxu0 %v2694
  %v4366 = vpop.f32.mrb[0].mxu0
  %v4367 = vadd.f32 %v3934, %v4366
  %v4368 = vpop.f32.mrb[0].mxu0
  %v4369 = vpop.f32.mrb[0].mxu0
  %v4370 = vadd.f32 %v3937, %v4369
  %v4371 = vpop.f32.mrb[0].mxu0
  %4372 = vmatprep.mubr.bf16.mxu0 0
  %4373 = vmatmul.mubr.bf16.gmra.mrb[0].mxu0 %v2697
  %v4374 = vpop.f32.mrb[0].mxu0
  %v4375 = vadd.f32 %v3942, %v4374
  %v4376 = vpop.f32.mrb[0].mxu0
  %v4377 = vpop.f32.mrb[0].mxu0
  %v4378 = vadd.f32 %v3945, %v4377
  %v4379 = vpop.f32.mrb[0].mxu0
  %4380 = vmatprep.mubr.bf16.mxu0 0
  %4381 = vmatmul.mubr.bf16.gmra.mrb[0].mxu0 %v2700
  %v4382 = vpop.f32.mrb[0].mxu0
  %v4383 = vadd.f32 %v3950, %v4382
  %v4384 = vpop.f32.mrb[0].mxu0
  %v4385 = vpop.f32.mrb[0].mxu0
  %v4386 = vadd.f32 %v3953, %v4385
  %v4387 = vpop.f32.mrb[0].mxu0
  %4388 = vmatprep.mubr.bf16.mxu0 0
  %4389 = vmatmul.mubr.bf16.gmra.mrb[0].mxu0 %v2703
  %v4390 = vpop.f32.mrb[0].mxu0
  %v4391 = vadd.f32 %v3958, %v4390
  %v4392 = vpop.f32.mrb[0].mxu0
  %v4393 = vpop.f32.mrb[0].mxu0
  %v4394 = vadd.f32 %v3961, %v4393
  %v4395 = vpop.f32.mrb[0].mxu0
  %4396 = vmatprep.mubr.bf16.mxu0 0
  %4397 = vmatmul.mubr.bf16.gmra.mrb[0].mxu0 %v2706
  %v4398 = vpop.f32.mrb[0].mxu0
  %v4399 = vadd.f32 %v3966, %v4398
  %v4400 = vpop.f32.mrb[0].mxu0
  %v4401 = vpop.f32.mrb[0].mxu0
  %v4402 = vadd.f32 %v3969, %v4401
  %v4403 = vpop.f32.mrb[0].mxu0
  %4404 = vmatprep.mubr.bf16.mxu0 0
  %4405 = vmatmul.mubr.bf16.gmra.mrb[0].mxu0 %v2709
  %v4406 = vpop.f32.mrb[0].mxu0
  %v4407 = vadd.f32 %v3974, %v4406
  %v4408 = vpop.f32.mrb[0].mxu0
  %v4409 = vpop.f32.mrb[0].mxu0
  %v4410 = vadd.f32 %v3977, %v4409
  %v4411 = vpop.f32.mrb[0].mxu0
  %4412 = vmatprep.mubr.bf16.mxu0 0
  %4413 = vmatmul.mubr.bf16.gmra.mrb[0].mxu0 %v2712
  %v4414 = vpop.f32.mrb[0].mxu0
  %v4415 = vadd.f32 %v3982, %v4414
  %v4416 = vpop.f32.mrb[0].mxu0
  %v4417 = vpop.f32.mrb[0].mxu0
  %v4418 = vadd.f32 %v3985, %v4417
  %v4419 = vpop.f32.mrb[0].mxu0
  %4420 = vmatprep.mubr.bf16.mxu0 0
  %4421 = vmatmul.mubr.bf16.gmra.mrb[0].mxu0 %v2715
  %v4422 = vpop.f32.mrb[0].mxu0
  %v4423 = vadd.f32 %v3990, %v4422
  %v4424 = vpop.f32.mrb[0].mxu0
  %v4425 = vpop.f32.mrb[0].mxu0
  %v4426 = vadd.f32 %v3993, %v4425
  %v4427 = vpop.f32.mrb[0].mxu0
  %4428 = vmatprep.mubr.bf16.mxu0 0
  %4429 = vmatmul.mubr.bf16.gmra.mrb[0].mxu0 %v2718
  %v4430 = vpop.f32.mrb[0].mxu0
  %v4431 = vadd.f32 %v3998, %v4430
  %v4432 = vpop.f32.mrb[0].mxu0
  %v4433 = vpop.f32.mrb[0].mxu0
  %v4434 = vadd.f32 %v4001, %v4433
  %v4435 = vpop.f32.mrb[0].mxu0
  %4436 = vmatprep.mubr.bf16.mxu0 0
  %4437 = vmatmul.mubr.bf16.gmra.mrb[0].mxu0 %v2721
  %v4438 = vpop.f32.mrb[0].mxu0
  %v4439 = vadd.f32 %v4006, %v4438
  %v4440 = vpop.f32.mrb[0].mxu0
  %v4441 = vpop.f32.mrb[0].mxu0
  %v4442 = vadd.f32 %v4009, %v4441
  %v4443 = vpop.f32.mrb[0].mxu0
  %4444 = vmatprep.mubr.bf16.mxu0 0
  %4445 = vmatmul.mubr.bf16.gmra.mrb[0].mxu0 %v2724
  %v4446 = vpop.f32.mrb[0].mxu0
  %v4447 = vadd.f32 %v4014, %v4446
  %v4448 = vpop.f32.mrb[0].mxu0
  %v4449 = vpop.f32.mrb[0].mxu0
  %v4450 = vadd.f32 %v4017, %v4449
  %v4451 = vpop.f32.mrb[0].mxu0
  %4452 = vmatprep.mubr.bf16.mxu0 0
  %4453 = vmatmul.mubr.bf16.gmra.mrb[0].mxu0 %v2727
  %v4454 = vpop.f32.mrb[0].mxu0
  %v4455 = vadd.f32 %v4022, %v4454
  %v4456 = vpop.f32.mrb[0].mxu0
  %v4457 = vpop.f32.mrb[0].mxu0
  %v4458 = vadd.f32 %v4025, %v4457
  %v4459 = vpop.f32.mrb[0].mxu0
  %4460 = vdwg.mxu0
  %v4461 = vmax.f32 %v4063, 0.0
  %v4462 = vmax.f32 %v4066, 0.0
  %v4463 = vmax.f32 %v4071, 0.0
  %v4464 = vmax.f32 %v4074, 0.0
  %v4465 = vmax.f32 %v4079, 0.0
  %v4466 = vmax.f32 %v4082, 0.0
  %v4467 = vmax.f32 %v4087, 0.0
  %v4468 = vmax.f32 %v4090, 0.0
  %v4469 = vmax.f32 %v4095, 0.0
  %v4470 = vmax.f32 %v4098, 0.0
  %v4471 = vmax.f32 %v4103, 0.0
  %v4472 = vmax.f32 %v4106, 0.0
  %v4473 = vmax.f32 %v4111, 0.0
  %v4474 = vmax.f32 %v4114, 0.0
  %v4475 = vmax.f32 %v4119, 0.0
  %v4476 = vmax.f32 %v4122, 0.0
  %v4477 = vmax.f32 %v4127, 0.0
  %v4478 = vmax.f32 %v4130, 0.0
  %v4479 = vmax.f32 %v4135, 0.0
  %v4480 = vmax.f32 %v4138, 0.0
  %v4481 = vmax.f32 %v4143, 0.0
  %v4482 = vmax.f32 %v4146, 0.0
  %v4483 = vmax.f32 %v4151, 0.0
  %v4484 = vmax.f32 %v4154, 0.0
  %v4485 = vmax.f32 %v4159, 0.0
  %v4486 = vmax.f32 %v4162, 0.0
  %v4487 = vmax.f32 %v4167, 0.0
  %v4488 = vmax.f32 %v4170, 0.0
  %v4489 = vmax.f32 %v4175, 0.0
  %v4490 = vmax.f32 %v4178, 0.0
  %v4491 = vmax.f32 %v4183, 0.0
  %v4492 = vmax.f32 %v4186, 0.0
  %v4493 = vmax.f32 %v4191, 0.0
  %v4494 = vmax.f32 %v4194, 0.0
  %v4495 = vmax.f32 %v4199, 0.0
  %v4496 = vmax.f32 %v4202, 0.0
  %v4497 = vmax.f32 %v4207, 0.0
  %v4498 = vmax.f32 %v4210, 0.0
  %v4499 = vmax.f32 %v4215, 0.0
  %v4500 = vmax.f32 %v4218, 0.0
  %v4501 = vmax.f32 %v4223, 0.0
  %v4502 = vmax.f32 %v4226, 0.0
  %v4503 = vmax.f32 %v4231, 0.0
  %v4504 = vmax.f32 %v4234, 0.0
  %v4505 = vmax.f32 %v4239, 0.0
  %v4506 = vmax.f32 %v4242, 0.0
  %v4507 = vmax.f32 %v4247, 0.0
  %v4508 = vmax.f32 %v4250, 0.0
  %v4509 = vmax.f32 %v4255, 0.0
  %v4510 = vmax.f32 %v4258, 0.0
  %v4511 = vmax.f32 %v4263, 0.0
  %v4512 = vmax.f32 %v4266, 0.0
  %v4513 = vmax.f32 %v4271, 0.0
  %v4514 = vmax.f32 %v4274, 0.0
  %v4515 = vmax.f32 %v4279, 0.0
  %v4516 = vmax.f32 %v4282, 0.0
  %v4517 = vmax.f32 %v4287, 0.0
  %v4518 = vmax.f32 %v4290, 0.0
  %v4519 = vmax.f32 %v4295, 0.0
  %v4520 = vmax.f32 %v4298, 0.0
  %v4521 = vmax.f32 %v4303, 0.0
  %v4522 = vmax.f32 %v4306, 0.0
  %v4523 = vmax.f32 %v4311, 0.0
  %v4524 = vmax.f32 %v4314, 0.0
  %v4525 = vmax.f32 %v4319, 0.0
  %v4526 = vmax.f32 %v4322, 0.0
  %v4527 = vmax.f32 %v4327, 0.0
  %v4528 = vmax.f32 %v4330, 0.0
  %v4529 = vmax.f32 %v4335, 0.0
  %v4530 = vmax.f32 %v4338, 0.0
  %v4531 = vmax.f32 %v4343, 0.0
  %v4532 = vmax.f32 %v4346, 0.0
  %v4533 = vmax.f32 %v4351, 0.0
  %v4534 = vmax.f32 %v4354, 0.0
  %v4535 = vmax.f32 %v4359, 0.0
  %v4536 = vmax.f32 %v4362, 0.0
  %v4537 = vmax.f32 %v4367, 0.0
  %v4538 = vmax.f32 %v4370, 0.0
  %v4539 = vmax.f32 %v4375, 0.0
  %v4540 = vmax.f32 %v4378, 0.0
  %v4541 = vmax.f32 %v4383, 0.0
  %v4542 = vmax.f32 %v4386, 0.0
  %v4543 = vmax.f32 %v4391, 0.0
  %v4544 = vmax.f32 %v4394, 0.0
  %v4545 = vmax.f32 %v4399, 0.0
  %v4546 = vmax.f32 %v4402, 0.0
  %v4547 = vmax.f32 %v4407, 0.0
  %v4548 = vmax.f32 %v4410, 0.0
  %v4549 = vmax.f32 %v4415, 0.0
  %v4550 = vmax.f32 %v4418, 0.0
  %v4551 = vmax.f32 %v4423, 0.0
  %v4552 = vmax.f32 %v4426, 0.0
  %v4553 = vmax.f32 %v4431, 0.0
  %v4554 = vmax.f32 %v4434, 0.0
  %v4555 = vmax.f32 %v4439, 0.0
  %v4556 = vmax.f32 %v4442, 0.0
  %v4557 = vmax.f32 %v4447, 0.0
  %v4558 = vmax.f32 %v4450, 0.0
  %v4559 = vmax.f32 %v4455, 0.0
  %v4560 = vmax.f32 %v4458, 0.0
  %v4561 = vld [vmem:[%s3] sm:$0x1]
  %v4562 = vld [vmem:[%s4] sm:$0x1]
  %v4563 = vsel %vm2578, %v4461, 0.0
  %v4564 = vsel %vm2578, %v4462, 0.0
  %v4565 = vadd.f32 %v4563, %v4564
  %v4566 = vsel %vm2578, %v4463, 0.0
  %v4567 = vadd.f32 %v4565, %v4566
  %v4568 = vsel %vm2578, %v4464, 0.0
  %v4569 = vadd.f32 %v4567, %v4568
  %v4570 = vsel %vm2578, %v4465, 0.0
  %v4571 = vadd.f32 %v4569, %v4570
  %v4572 = vsel %vm2578, %v4466, 0.0
  %v4573 = vadd.f32 %v4571, %v4572
  %v4574 = vsel %vm2578, %v4467, 0.0
  %v4575 = vadd.f32 %v4573, %v4574
  %v4576 = vsel %vm2578, %v4468, 0.0
  %v4577 = vadd.f32 %v4575, %v4576
  %v4578 = vsel %vm2578, %v4469, 0.0
  %v4579 = vadd.f32 %v4577, %v4578
  %v4580 = vsel %vm2578, %v4470, 0.0
  %v4581 = vadd.f32 %v4579, %v4580
  %v4582 = vsel %vm2578, %v4471, 0.0
  %v4583 = vadd.f32 %v4581, %v4582
  %v4584 = vsel %vm2578, %v4472, 0.0
  %v4585 = vadd.f32 %v4583, %v4584
  %v4586 = vsel %vm2578, %v4473, 0.0
  %v4587 = vadd.f32 %v4585, %v4586
  %v4588 = vsel %vm2578, %v4474, 0.0
  %v4589 = vadd.f32 %v4587, %v4588
  %v4590 = vsel %vm2578, %v4475, 0.0
  %v4591 = vadd.f32 %v4589, %v4590
  %v4592 = vsel %vm2578, %v4476, 0.0
  %v4593 = vadd.f32 %v4591, %v4592
  %v4594 = vsel %vm2578, %v4477, 0.0
  %v4595 = vadd.f32 %v4593, %v4594
  %v4596 = vsel %vm2578, %v4478, 0.0
  %v4597 = vadd.f32 %v4595, %v4596
  %v4598 = vsel %vm2578, %v4479, 0.0
  %v4599 = vadd.f32 %v4597, %v4598
  %v4600 = vsel %vm2578, %v4480, 0.0
  %v4601 = vadd.f32 %v4599, %v4600
  %v4602 = vsel %vm2578, %v4481, 0.0
  %v4603 = vadd.f32 %v4601, %v4602
  %v4604 = vsel %vm2578, %v4482, 0.0
  %v4605 = vadd.f32 %v4603, %v4604
  %v4606 = vsel %vm2578, %v4483, 0.0
  %v4607 = vadd.f32 %v4605, %v4606
  %v4608 = vsel %vm2578, %v4484, 0.0
  %v4609 = vadd.f32 %v4607, %v4608
  %v4610 = vsel %vm2578, %v4485, 0.0
  %v4611 = vadd.f32 %v4609, %v4610
  %v4612 = vsel %vm2578, %v4486, 0.0
  %v4613 = vadd.f32 %v4611, %v4612
  %v4614 = vsel %vm2578, %v4487, 0.0
  %v4615 = vadd.f32 %v4613, %v4614
  %v4616 = vsel %vm2578, %v4488, 0.0
  %v4617 = vadd.f32 %v4615, %v4616
  %v4618 = vsel %vm2578, %v4489, 0.0
  %v4619 = vadd.f32 %v4617, %v4618
  %v4620 = vsel %vm2578, %v4490, 0.0
  %v4621 = vadd.f32 %v4619, %v4620
  %v4622 = vsel %vm2578, %v4491, 0.0
  %v4623 = vadd.f32 %v4621, %v4622
  %v4624 = vsel %vm2578, %v4492, 0.0
  %v4625 = vadd.f32 %v4623, %v4624
  %v4626 = vsel %vm2578, %v4493, 0.0
  %v4627 = vadd.f32 %v4625, %v4626
  %v4628 = vsel %vm2578, %v4494, 0.0
  %v4629 = vadd.f32 %v4627, %v4628
  %v4630 = vsel %vm2578, %v4495, 0.0
  %v4631 = vadd.f32 %v4629, %v4630
  %v4632 = vsel %vm2578, %v4496, 0.0
  %v4633 = vadd.f32 %v4631, %v4632
  %v4634 = vsel %vm2578, %v4497, 0.0
  %v4635 = vadd.f32 %v4633, %v4634
  %v4636 = vsel %vm2578, %v4498, 0.0
  %v4637 = vadd.f32 %v4635, %v4636
  %v4638 = vsel %vm2578, %v4499, 0.0
  %v4639 = vadd.f32 %v4637, %v4638
  %v4640 = vsel %vm2578, %v4500, 0.0
  %v4641 = vadd.f32 %v4639, %v4640
  %v4642 = vsel %vm2578, %v4501, 0.0
  %v4643 = vadd.f32 %v4641, %v4642
  %v4644 = vsel %vm2578, %v4502, 0.0
  %v4645 = vadd.f32 %v4643, %v4644
  %v4646 = vsel %vm2578, %v4503, 0.0
  %v4647 = vadd.f32 %v4645, %v4646
  %v4648 = vsel %vm2578, %v4504, 0.0
  %v4649 = vadd.f32 %v4647, %v4648
  %v4650 = vsel %vm2578, %v4505, 0.0
  %v4651 = vadd.f32 %v4649, %v4650
  %v4652 = vsel %vm2578, %v4506, 0.0
  %v4653 = vadd.f32 %v4651, %v4652
  %v4654 = vsel %vm2578, %v4507, 0.0
  %v4655 = vadd.f32 %v4653, %v4654
  %v4656 = vsel %vm2578, %v4508, 0.0
  %v4657 = vadd.f32 %v4655, %v4656
  %v4658 = vsel %vm2578, %v4509, 0.0
  %v4659 = vadd.f32 %v4657, %v4658
  %v4660 = vsel %vm2578, %v4510, 0.0
  %v4661 = vadd.f32 %v4659, %v4660
  %v4662 = vsel %vm2578, %v4511, 0.0
  %v4663 = vadd.f32 %v4661, %v4662
  %v4664 = vsel %vm2578, %v4512, 0.0
  %v4665 = vadd.f32 %v4663, %v4664
  %v4666 = vsel %vm2578, %v4513, 0.0
  %v4667 = vadd.f32 %v4665, %v4666
  %v4668 = vsel %vm2578, %v4514, 0.0
  %v4669 = vadd.f32 %v4667, %v4668
  %v4670 = vsel %vm2578, %v4515, 0.0
  %v4671 = vadd.f32 %v4669, %v4670
  %v4672 = vsel %vm2578, %v4516, 0.0
  %v4673 = vadd.f32 %v4671, %v4672
  %v4674 = vsel %vm2578, %v4517, 0.0
  %v4675 = vadd.f32 %v4673, %v4674
  %v4676 = vsel %vm2578, %v4518, 0.0
  %v4677 = vadd.f32 %v4675, %v4676
  %v4678 = vsel %vm2578, %v4519, 0.0
  %v4679 = vadd.f32 %v4677, %v4678
  %v4680 = vsel %vm2578, %v4520, 0.0
  %v4681 = vadd.f32 %v4679, %v4680
  %v4682 = vsel %vm2578, %v4521, 0.0
  %v4683 = vadd.f32 %v4681, %v4682
  %v4684 = vsel %vm2578, %v4522, 0.0
  %v4685 = vadd.f32 %v4683, %v4684
  %v4686 = vsel %vm2578, %v4523, 0.0
  %v4687 = vadd.f32 %v4685, %v4686
  %v4688 = vsel %vm2578, %v4524, 0.0
  %v4689 = vadd.f32 %v4687, %v4688
  %v4690 = vsel %vm2578, %v4525, 0.0
  %v4691 = vadd.f32 %v4689, %v4690
  %v4692 = vsel %vm2578, %v4526, 0.0
  %v4693 = vadd.f32 %v4691, %v4692
  %v4694 = vsel %vm2578, %v4527, 0.0
  %v4695 = vadd.f32 %v4693, %v4694
  %v4696 = vsel %vm2578, %v4528, 0.0
  %v4697 = vadd.f32 %v4695, %v4696
  %v4698 = vsel %vm2578, %v4529, 0.0
  %v4699 = vadd.f32 %v4697, %v4698
  %v4700 = vsel %vm2578, %v4530, 0.0
  %v4701 = vadd.f32 %v4699, %v4700
  %v4702 = vsel %vm2578, %v4531, 0.0
  %v4703 = vadd.f32 %v4701, %v4702
  %v4704 = vsel %vm2578, %v4532, 0.0
  %v4705 = vadd.f32 %v4703, %v4704
  %v4706 = vsel %vm2578, %v4533, 0.0
  %v4707 = vadd.f32 %v4705, %v4706
  %v4708 = vsel %vm2578, %v4534, 0.0
  %v4709 = vadd.f32 %v4707, %v4708
  %v4710 = vsel %vm2578, %v4535, 0.0
  %v4711 = vadd.f32 %v4709, %v4710
  %v4712 = vsel %vm2578, %v4536, 0.0
  %v4713 = vadd.f32 %v4711, %v4712
  %v4714 = vsel %vm2578, %v4537, 0.0
  %v4715 = vadd.f32 %v4713, %v4714
  %v4716 = vsel %vm2578, %v4538, 0.0
  %v4717 = vadd.f32 %v4715, %v4716
  %v4718 = vsel %vm2578, %v4539, 0.0
  %v4719 = vadd.f32 %v4717, %v4718
  %v4720 = vsel %vm2578, %v4540, 0.0
  %v4721 = vadd.f32 %v4719, %v4720
  %v4722 = vsel %vm2578, %v4541, 0.0
  %v4723 = vadd.f32 %v4721, %v4722
  %v4724 = vsel %vm2578, %v4542, 0.0
  %v4725 = vadd.f32 %v4723, %v4724
  %v4726 = vsel %vm2578, %v4543, 0.0
  %v4727 = vadd.f32 %v4725, %v4726
  %v4728 = vsel %vm2578, %v4544, 0.0
  %v4729 = vadd.f32 %v4727, %v4728
  %v4730 = vsel %vm2578, %v4545, 0.0
  %v4731 = vadd.f32 %v4729, %v4730
  %v4732 = vsel %vm2578, %v4546, 0.0
  %v4733 = vadd.f32 %v4731, %v4732
  %v4734 = vsel %vm2578, %v4547, 0.0
  %v4735 = vadd.f32 %v4733, %v4734
  %v4736 = vsel %vm2578, %v4548, 0.0
  %v4737 = vadd.f32 %v4735, %v4736
  %v4738 = vsel %vm2578, %v4549, 0.0
  %v4739 = vadd.f32 %v4737, %v4738
  %v4740 = vsel %vm2578, %v4550, 0.0
  %v4741 = vadd.f32 %v4739, %v4740
  %v4742 = vsel %vm2578, %v4551, 0.0
  %v4743 = vadd.f32 %v4741, %v4742
  %v4744 = vsel %vm2578, %v4552, 0.0
  %v4745 = vadd.f32 %v4743, %v4744
  %v4746 = vsel %vm2578, %v4553, 0.0
  %v4747 = vadd.f32 %v4745, %v4746
  %v4748 = vsel %vm2578, %v4554, 0.0
  %v4749 = vadd.f32 %v4747, %v4748
  %v4750 = vsel %vm2578, %v4555, 0.0
  %v4751 = vadd.f32 %v4749, %v4750
  %v4752 = vsel %vm2578, %v4556, 0.0
  %v4753 = vadd.f32 %v4751, %v4752
  %v4754 = vsel %vm2578, %v4557, 0.0
  %v4755 = vadd.f32 %v4753, %v4754
  %v4756 = vsel %vm2578, %v4558, 0.0
  %v4757 = vadd.f32 %v4755, %v4756
  %v4758 = vsel %vm2578, %v4559, 0.0
  %v4759 = vadd.f32 %v4757, %v4758
  %v4760 = vsel %vm2578, %v4560, 0.0
  %v4761 = vadd.f32 %v4759, %v4760
  %v4762 = vrot.slane %v4761, 4
  %v4763 = vadd.f32 %v4761, %v4762
  %v4764 = vrot.slane %v4763, 2
  %v4765 = vadd.f32 %v4763, %v4764
  %v4766 = vrot.slane %v4765, 1
  %v4767 = vadd.f32 %v4765, %v4766
  %v4768 = vmul.f32 %v4461, %v4461
  %v4769 = vmul.f32 %v4462, %v4462
  %v4770 = vmul.f32 %v4463, %v4463
  %v4771 = vmul.f32 %v4464, %v4464
  %v4772 = vmul.f32 %v4465, %v4465
  %v4773 = vmul.f32 %v4466, %v4466
  %v4774 = vmul.f32 %v4467, %v4467
  %v4775 = vmul.f32 %v4468, %v4468
  %v4776 = vmul.f32 %v4469, %v4469
  %v4777 = vmul.f32 %v4470, %v4470
  %v4778 = vmul.f32 %v4471, %v4471
  %v4779 = vmul.f32 %v4472, %v4472
  %v4780 = vmul.f32 %v4473, %v4473
  %v4781 = vmul.f32 %v4474, %v4474
  %v4782 = vmul.f32 %v4475, %v4475
  %v4783 = vmul.f32 %v4476, %v4476
  %v4784 = vmul.f32 %v4477, %v4477
  %v4785 = vmul.f32 %v4478, %v4478
  %v4786 = vmul.f32 %v4479, %v4479
  %v4787 = vmul.f32 %v4480, %v4480
  %v4788 = vmul.f32 %v4481, %v4481
  %v4789 = vmul.f32 %v4482, %v4482
  %v4790 = vmul.f32 %v4483, %v4483
  %v4791 = vmul.f32 %v4484, %v4484
  %v4792 = vmul.f32 %v4485, %v4485
  %v4793 = vmul.f32 %v4486, %v4486
  %v4794 = vmul.f32 %v4487, %v4487
  %v4795 = vmul.f32 %v4488, %v4488
  %v4796 = vmul.f32 %v4489, %v4489
  %v4797 = vmul.f32 %v4490, %v4490
  %v4798 = vmul.f32 %v4491, %v4491
  %v4799 = vmul.f32 %v4492, %v4492
  %v4800 = vmul.f32 %v4493, %v4493
  %v4801 = vmul.f32 %v4494, %v4494
  %v4802 = vmul.f32 %v4495, %v4495
  %v4803 = vmul.f32 %v4496, %v4496
  %v4804 = vmul.f32 %v4497, %v4497
  %v4805 = vmul.f32 %v4498, %v4498
  %v4806 = vmul.f32 %v4499, %v4499
  %v4807 = vmul.f32 %v4500, %v4500
  %v4808 = vmul.f32 %v4501, %v4501
  %v4809 = vmul.f32 %v4502, %v4502
  %v4810 = vmul.f32 %v4503, %v4503
  %v4811 = vmul.f32 %v4504, %v4504
  %v4812 = vmul.f32 %v4505, %v4505
  %v4813 = vmul.f32 %v4506, %v4506
  %v4814 = vmul.f32 %v4507, %v4507
  %v4815 = vmul.f32 %v4508, %v4508
  %v4816 = vmul.f32 %v4509, %v4509
  %v4817 = vmul.f32 %v4510, %v4510
  %v4818 = vmul.f32 %v4511, %v4511
  %v4819 = vmul.f32 %v4512, %v4512
  %v4820 = vmul.f32 %v4513, %v4513
  %v4821 = vmul.f32 %v4514, %v4514
  %v4822 = vmul.f32 %v4515, %v4515
  %v4823 = vmul.f32 %v4516, %v4516
  %v4824 = vmul.f32 %v4517, %v4517
  %v4825 = vmul.f32 %v4518, %v4518
  %v4826 = vmul.f32 %v4519, %v4519
  %v4827 = vmul.f32 %v4520, %v4520
  %v4828 = vmul.f32 %v4521, %v4521
  %v4829 = vmul.f32 %v4522, %v4522
  %v4830 = vmul.f32 %v4523, %v4523
  %v4831 = vmul.f32 %v4524, %v4524
  %v4832 = vmul.f32 %v4525, %v4525
  %v4833 = vmul.f32 %v4526, %v4526
  %v4834 = vmul.f32 %v4527, %v4527
  %v4835 = vmul.f32 %v4528, %v4528
  %v4836 = vmul.f32 %v4529, %v4529
  %v4837 = vmul.f32 %v4530, %v4530
  %v4838 = vmul.f32 %v4531, %v4531
  %v4839 = vmul.f32 %v4532, %v4532
  %v4840 = vmul.f32 %v4533, %v4533
  %v4841 = vmul.f32 %v4534, %v4534
  %v4842 = vmul.f32 %v4535, %v4535
  %v4843 = vmul.f32 %v4536, %v4536
  %v4844 = vmul.f32 %v4537, %v4537
  %v4845 = vmul.f32 %v4538, %v4538
  %v4846 = vmul.f32 %v4539, %v4539
  %v4847 = vmul.f32 %v4540, %v4540
  %v4848 = vmul.f32 %v4541, %v4541
  %v4849 = vmul.f32 %v4542, %v4542
  %v4850 = vmul.f32 %v4543, %v4543
  %v4851 = vmul.f32 %v4544, %v4544
  %v4852 = vmul.f32 %v4545, %v4545
  %v4853 = vmul.f32 %v4546, %v4546
  %v4854 = vmul.f32 %v4547, %v4547
  %v4855 = vmul.f32 %v4548, %v4548
  %v4856 = vmul.f32 %v4549, %v4549
  %v4857 = vmul.f32 %v4550, %v4550
  %v4858 = vmul.f32 %v4551, %v4551
  %v4859 = vmul.f32 %v4552, %v4552
  %v4860 = vmul.f32 %v4553, %v4553
  %v4861 = vmul.f32 %v4554, %v4554
  %v4862 = vmul.f32 %v4555, %v4555
  %v4863 = vmul.f32 %v4556, %v4556
  %v4864 = vmul.f32 %v4557, %v4557
  %v4865 = vmul.f32 %v4558, %v4558
  %v4866 = vmul.f32 %v4559, %v4559
  %v4867 = vmul.f32 %v4560, %v4560
  %v4868 = vsel %vm2578, %v4768, 0.0
  %v4869 = vsel %vm2578, %v4769, 0.0
  %v4870 = vadd.f32 %v4868, %v4869
  %v4871 = vsel %vm2578, %v4770, 0.0
  %v4872 = vadd.f32 %v4870, %v4871
  %v4873 = vsel %vm2578, %v4771, 0.0
  %v4874 = vadd.f32 %v4872, %v4873
  %v4875 = vsel %vm2578, %v4772, 0.0
  %v4876 = vadd.f32 %v4874, %v4875
  %v4877 = vsel %vm2578, %v4773, 0.0
  %v4878 = vadd.f32 %v4876, %v4877
  %v4879 = vsel %vm2578, %v4774, 0.0
  %v4880 = vadd.f32 %v4878, %v4879
  %v4881 = vsel %vm2578, %v4775, 0.0
  %v4882 = vadd.f32 %v4880, %v4881
  %v4883 = vsel %vm2578, %v4776, 0.0
  %v4884 = vadd.f32 %v4882, %v4883
  %v4885 = vsel %vm2578, %v4777, 0.0
  %v4886 = vadd.f32 %v4884, %v4885
  %v4887 = vsel %vm2578, %v4778, 0.0
  %v4888 = vadd.f32 %v4886, %v4887
  %v4889 = vsel %vm2578, %v4779, 0.0
  %v4890 = vadd.f32 %v4888, %v4889
  %v4891 = vsel %vm2578, %v4780, 0.0
  %v4892 = vadd.f32 %v4890, %v4891
  %v4893 = vsel %vm2578, %v4781, 0.0
  %v4894 = vadd.f32 %v4892, %v4893
  %v4895 = vsel %vm2578, %v4782, 0.0
  %v4896 = vadd.f32 %v4894, %v4895
  %v4897 = vsel %vm2578, %v4783, 0.0
  %v4898 = vadd.f32 %v4896, %v4897
  %v4899 = vsel %vm2578, %v4784, 0.0
  %v4900 = vadd.f32 %v4898, %v4899
  %v4901 = vsel %vm2578, %v4785, 0.0
  %v4902 = vadd.f32 %v4900, %v4901
  %v4903 = vsel %vm2578, %v4786, 0.0
  %v4904 = vadd.f32 %v4902, %v4903
  %v4905 = vsel %vm2578, %v4787, 0.0
  %v4906 = vadd.f32 %v4904, %v4905
  %v4907 = vsel %vm2578, %v4788, 0.0
  %v4908 = vadd.f32 %v4906, %v4907
  %v4909 = vsel %vm2578, %v4789, 0.0
  %v4910 = vadd.f32 %v4908, %v4909
  %v4911 = vsel %vm2578, %v4790, 0.0
  %v4912 = vadd.f32 %v4910, %v4911
  %v4913 = vsel %vm2578, %v4791, 0.0
  %v4914 = vadd.f32 %v4912, %v4913
  %v4915 = vsel %vm2578, %v4792, 0.0
  %v4916 = vadd.f32 %v4914, %v4915
  %v4917 = vsel %vm2578, %v4793, 0.0
  %v4918 = vadd.f32 %v4916, %v4917
  %v4919 = vsel %vm2578, %v4794, 0.0
  %v4920 = vadd.f32 %v4918, %v4919
  %v4921 = vsel %vm2578, %v4795, 0.0
  %v4922 = vadd.f32 %v4920, %v4921
  %v4923 = vsel %vm2578, %v4796, 0.0
  %v4924 = vadd.f32 %v4922, %v4923
  %v4925 = vsel %vm2578, %v4797, 0.0
  %v4926 = vadd.f32 %v4924, %v4925
  %v4927 = vsel %vm2578, %v4798, 0.0
  %v4928 = vadd.f32 %v4926, %v4927
  %v4929 = vsel %vm2578, %v4799, 0.0
  %v4930 = vadd.f32 %v4928, %v4929
  %v4931 = vsel %vm2578, %v4800, 0.0
  %v4932 = vadd.f32 %v4930, %v4931
  %v4933 = vsel %vm2578, %v4801, 0.0
  %v4934 = vadd.f32 %v4932, %v4933
  %v4935 = vsel %vm2578, %v4802, 0.0
  %v4936 = vadd.f32 %v4934, %v4935
  %v4937 = vsel %vm2578, %v4803, 0.0
  %v4938 = vadd.f32 %v4936, %v4937
  %v4939 = vsel %vm2578, %v4804, 0.0
  %v4940 = vadd.f32 %v4938, %v4939
  %v4941 = vsel %vm2578, %v4805, 0.0
  %v4942 = vadd.f32 %v4940, %v4941
  %v4943 = vsel %vm2578, %v4806, 0.0
  %v4944 = vadd.f32 %v4942, %v4943
  %v4945 = vsel %vm2578, %v4807, 0.0
  %v4946 = vadd.f32 %v4944, %v4945
  %v4947 = vsel %vm2578, %v4808, 0.0
  %v4948 = vadd.f32 %v4946, %v4947
  %v4949 = vsel %vm2578, %v4809, 0.0
  %v4950 = vadd.f32 %v4948, %v4949
  %v4951 = vsel %vm2578, %v4810, 0.0
  %v4952 = vadd.f32 %v4950, %v4951
  %v4953 = vsel %vm2578, %v4811, 0.0
  %v4954 = vadd.f32 %v4952, %v4953
  %v4955 = vsel %vm2578, %v4812, 0.0
  %v4956 = vadd.f32 %v4954, %v4955
  %v4957 = vsel %vm2578, %v4813, 0.0
  %v4958 = vadd.f32 %v4956, %v4957
  %v4959 = vsel %vm2578, %v4814, 0.0
  %v4960 = vadd.f32 %v4958, %v4959
  %v4961 = vsel %vm2578, %v4815, 0.0
  %v4962 = vadd.f32 %v4960, %v4961
  %v4963 = vsel %vm2578, %v4816, 0.0
  %v4964 = vadd.f32 %v4962, %v4963
  %v4965 = vsel %vm2578, %v4817, 0.0
  %v4966 = vadd.f32 %v4964, %v4965
  %v4967 = vsel %vm2578, %v4818, 0.0
  %v4968 = vadd.f32 %v4966, %v4967
  %v4969 = vsel %vm2578, %v4819, 0.0
  %v4970 = vadd.f32 %v4968, %v4969
  %v4971 = vsel %vm2578, %v4820, 0.0
  %v4972 = vadd.f32 %v4970, %v4971
  %v4973 = vsel %vm2578, %v4821, 0.0
  %v4974 = vadd.f32 %v4972, %v4973
  %v4975 = vsel %vm2578, %v4822, 0.0
  %v4976 = vadd.f32 %v4974, %v4975
  %v4977 = vsel %vm2578, %v4823, 0.0
  %v4978 = vadd.f32 %v4976, %v4977
  %v4979 = vsel %vm2578, %v4824, 0.0
  %v4980 = vadd.f32 %v4978, %v4979
  %v4981 = vsel %vm2578, %v4825, 0.0
  %v4982 = vadd.f32 %v4980, %v4981
  %v4983 = vsel %vm2578, %v4826, 0.0
  %v4984 = vadd.f32 %v4982, %v4983
  %v4985 = vsel %vm2578, %v4827, 0.0
  %v4986 = vadd.f32 %v4984, %v4985
  %v4987 = vsel %vm2578, %v4828, 0.0
  %v4988 = vadd.f32 %v4986, %v4987
  %v4989 = vsel %vm2578, %v4829, 0.0
  %v4990 = vadd.f32 %v4988, %v4989
  %v4991 = vsel %vm2578, %v4830, 0.0
  %v4992 = vadd.f32 %v4990, %v4991
  %v4993 = vsel %vm2578, %v4831, 0.0
  %v4994 = vadd.f32 %v4992, %v4993
  %v4995 = vsel %vm2578, %v4832, 0.0
  %v4996 = vadd.f32 %v4994, %v4995
  %v4997 = vsel %vm2578, %v4833, 0.0
  %v4998 = vadd.f32 %v4996, %v4997
  %v4999 = vsel %vm2578, %v4834, 0.0
  %v5000 = vadd.f32 %v4998, %v4999
  %v5001 = vsel %vm2578, %v4835, 0.0
  %v5002 = vadd.f32 %v5000, %v5001
  %v5003 = vsel %vm2578, %v4836, 0.0
  %v5004 = vadd.f32 %v5002, %v5003
  %v5005 = vsel %vm2578, %v4837, 0.0
  %v5006 = vadd.f32 %v5004, %v5005
  %v5007 = vsel %vm2578, %v4838, 0.0
  %v5008 = vadd.f32 %v5006, %v5007
  %v5009 = vsel %vm2578, %v4839, 0.0
  %v5010 = vadd.f32 %v5008, %v5009
  %v5011 = vsel %vm2578, %v4840, 0.0
  %v5012 = vadd.f32 %v5010, %v5011
  %v5013 = vsel %vm2578, %v4841, 0.0
  %v5014 = vadd.f32 %v5012, %v5013
  %v5015 = vsel %vm2578, %v4842, 0.0
  %v5016 = vadd.f32 %v5014, %v5015
  %v5017 = vsel %vm2578, %v4843, 0.0
  %v5018 = vadd.f32 %v5016, %v5017
  %v5019 = vsel %vm2578, %v4844, 0.0
  %v5020 = vadd.f32 %v5018, %v5019
  %v5021 = vsel %vm2578, %v4845, 0.0
  %v5022 = vadd.f32 %v5020, %v5021
  %v5023 = vsel %vm2578, %v4846, 0.0
  %v5024 = vadd.f32 %v5022, %v5023
  %v5025 = vsel %vm2578, %v4847, 0.0
  %v5026 = vadd.f32 %v5024, %v5025
  %v5027 = vsel %vm2578, %v4848, 0.0
  %v5028 = vadd.f32 %v5026, %v5027
  %v5029 = vsel %vm2578, %v4849, 0.0
  %v5030 = vadd.f32 %v5028, %v5029
  %v5031 = vsel %vm2578, %v4850, 0.0
  %v5032 = vadd.f32 %v5030, %v5031
  %v5033 = vsel %vm2578, %v4851, 0.0
  %v5034 = vadd.f32 %v5032, %v5033
  %v5035 = vsel %vm2578, %v4852, 0.0
  %v5036 = vadd.f32 %v5034, %v5035
  %v5037 = vsel %vm2578, %v4853, 0.0
  %v5038 = vadd.f32 %v5036, %v5037
  %v5039 = vsel %vm2578, %v4854, 0.0
  %v5040 = vadd.f32 %v5038, %v5039
  %v5041 = vsel %vm2578, %v4855, 0.0
  %v5042 = vadd.f32 %v5040, %v5041
  %v5043 = vsel %vm2578, %v4856, 0.0
  %v5044 = vadd.f32 %v5042, %v5043
  %v5045 = vsel %vm2578, %v4857, 0.0
  %v5046 = vadd.f32 %v5044, %v5045
  %v5047 = vsel %vm2578, %v4858, 0.0
  %v5048 = vadd.f32 %v5046, %v5047
  %v5049 = vsel %vm2578, %v4859, 0.0
  %v5050 = vadd.f32 %v5048, %v5049
  %v5051 = vsel %vm2578, %v4860, 0.0
  %v5052 = vadd.f32 %v5050, %v5051
  %v5053 = vsel %vm2578, %v4861, 0.0
  %v5054 = vadd.f32 %v5052, %v5053
  %v5055 = vsel %vm2578, %v4862, 0.0
  %v5056 = vadd.f32 %v5054, %v5055
  %v5057 = vsel %vm2578, %v4863, 0.0
  %v5058 = vadd.f32 %v5056, %v5057
  %v5059 = vsel %vm2578, %v4864, 0.0
  %v5060 = vadd.f32 %v5058, %v5059
  %v5061 = vsel %vm2578, %v4865, 0.0
  %v5062 = vadd.f32 %v5060, %v5061
  %v5063 = vsel %vm2578, %v4866, 0.0
  %v5064 = vadd.f32 %v5062, %v5063
  %v5065 = vsel %vm2578, %v4867, 0.0
  %v5066 = vadd.f32 %v5064, %v5065
  %v5067 = vrot.slane %v5066, 4
  %v5068 = vadd.f32 %v5066, %v5067
  %v5069 = vrot.slane %v5068, 2
  %v5070 = vadd.f32 %v5068, %v5069
  %v5071 = vrot.slane %v5070, 1
  %v5072 = vadd.f32 %v5070, %v5071
  %v5073 = vrcp.pop 800.0
  %v5074 = vmul.f32 %v4767, %v5073
  %v5075 = vmul.f32 %v5072, %v5073
  %v5076 = vmul.f32 %v5074, %v5074
  %v5077 = vsub.f32 %v5075, %v5076
  %v5078 = vsub.f32 %v4461, %v5074
  %v5079 = vsub.f32 %v4462, %v5074
  %v5080 = vsub.f32 %v4463, %v5074
  %v5081 = vsub.f32 %v4464, %v5074
  %v5082 = vsub.f32 %v4465, %v5074
  %v5083 = vsub.f32 %v4466, %v5074
  %v5084 = vsub.f32 %v4467, %v5074
  %v5085 = vsub.f32 %v4468, %v5074
  %v5086 = vsub.f32 %v4469, %v5074
  %v5087 = vsub.f32 %v4470, %v5074
  %v5088 = vsub.f32 %v4471, %v5074
  %v5089 = vsub.f32 %v4472, %v5074
  %v5090 = vsub.f32 %v4473, %v5074
  %v5091 = vsub.f32 %v4474, %v5074
  %v5092 = vsub.f32 %v4475, %v5074
  %v5093 = vsub.f32 %v4476, %v5074
  %v5094 = vsub.f32 %v4477, %v5074
  %v5095 = vsub.f32 %v4478, %v5074
  %v5096 = vsub.f32 %v4479, %v5074
  %v5097 = vsub.f32 %v4480, %v5074
  %v5098 = vsub.f32 %v4481, %v5074
  %v5099 = vsub.f32 %v4482, %v5074
  %v5100 = vsub.f32 %v4483, %v5074
  %v5101 = vsub.f32 %v4484, %v5074
  %v5102 = vsub.f32 %v4485, %v5074
  %v5103 = vsub.f32 %v4486, %v5074
  %v5104 = vsub.f32 %v4487, %v5074
  %v5105 = vsub.f32 %v4488, %v5074
  %v5106 = vsub.f32 %v4489, %v5074
  %v5107 = vsub.f32 %v4490, %v5074
  %v5108 = vsub.f32 %v4491, %v5074
  %v5109 = vsub.f32 %v4492, %v5074
  %v5110 = vsub.f32 %v4493, %v5074
  %v5111 = vsub.f32 %v4494, %v5074
  %v5112 = vsub.f32 %v4495, %v5074
  %v5113 = vsub.f32 %v4496, %v5074
  %v5114 = vsub.f32 %v4497, %v5074
  %v5115 = vsub.f32 %v4498, %v5074
  %v5116 = vsub.f32 %v4499, %v5074
  %v5117 = vsub.f32 %v4500, %v5074
  %v5118 = vsub.f32 %v4501, %v5074
  %v5119 = vsub.f32 %v4502, %v5074
  %v5120 = vsub.f32 %v4503, %v5074
  %v5121 = vsub.f32 %v4504, %v5074
  %v5122 = vsub.f32 %v4505, %v5074
  %v5123 = vsub.f32 %v4506, %v5074
  %v5124 = vsub.f32 %v4507, %v5074
  %v5125 = vsub.f32 %v4508, %v5074
  %v5126 = vsub.f32 %v4509, %v5074
  %v5127 = vsub.f32 %v4510, %v5074
  %v5128 = vsub.f32 %v4511, %v5074
  %v5129 = vsub.f32 %v4512, %v5074
  %v5130 = vsub.f32 %v4513, %v5074
  %v5131 = vsub.f32 %v4514, %v5074
  %v5132 = vsub.f32 %v4515, %v5074
  %v5133 = vsub.f32 %v4516, %v5074
  %v5134 = vsub.f32 %v4517, %v5074
  %v5135 = vsub.f32 %v4518, %v5074
  %v5136 = vsub.f32 %v4519, %v5074
  %v5137 = vsub.f32 %v4520, %v5074
  %v5138 = vsub.f32 %v4521, %v5074
  %v5139 = vsub.f32 %v4522, %v5074
  %v5140 = vsub.f32 %v4523, %v5074
  %v5141 = vsub.f32 %v4524, %v5074
  %v5142 = vsub.f32 %v4525, %v5074
  %v5143 = vsub.f32 %v4526, %v5074
  %v5144 = vsub.f32 %v4527, %v5074
  %v5145 = vsub.f32 %v4528, %v5074
  %v5146 = vsub.f32 %v4529, %v5074
  %v5147 = vsub.f32 %v4530, %v5074
  %v5148 = vsub.f32 %v4531, %v5074
  %v5149 = vsub.f32 %v4532, %v5074
  %v5150 = vsub.f32 %v4533, %v5074
  %v5151 = vsub.f32 %v4534, %v5074
  %v5152 = vsub.f32 %v4535, %v5074
  %v5153 = vsub.f32 %v4536, %v5074
  %v5154 = vsub.f32 %v4537, %v5074
  %v5155 = vsub.f32 %v4538, %v5074
  %v5156 = vsub.f32 %v4539, %v5074
  %v5157 = vsub.f32 %v4540, %v5074
  %v5158 = vsub.f32 %v4541, %v5074
  %v5159 = vsub.f32 %v4542, %v5074
  %v5160 = vsub.f32 %v4543, %v5074
  %v5161 = vsub.f32 %v4544, %v5074
  %v5162 = vsub.f32 %v4545, %v5074
  %v5163 = vsub.f32 %v4546, %v5074
  %v5164 = vsub.f32 %v4547, %v5074
  %v5165 = vsub.f32 %v4548, %v5074
  %v5166 = vsub.f32 %v4549, %v5074
  %v5167 = vsub.f32 %v4550, %v5074
  %v5168 = vsub.f32 %v4551, %v5074
  %v5169 = vsub.f32 %v4552, %v5074
  %v5170 = vsub.f32 %v4553, %v5074
  %v5171 = vsub.f32 %v4554, %v5074
  %v5172 = vsub.f32 %v4555, %v5074
  %v5173 = vsub.f32 %v4556, %v5074
  %v5174 = vsub.f32 %v4557, %v5074
  %v5175 = vsub.f32 %v4558, %v5074
  %v5176 = vsub.f32 %v4559, %v5074
  %v5177 = vsub.f32 %v4560, %v5074
  %v5178 = vadd.f32 %v5077, 1e-05
  %v5179 = vrsqrt.pop %v5178
  %v5180 = vmul.f32 %v5078, %v5179
  %v5181 = vmul.f32 %v5079, %v5179
  %v5182 = vmul.f32 %v5080, %v5179
  %v5183 = vmul.f32 %v5081, %v5179
  %v5184 = vmul.f32 %v5082, %v5179
  %v5185 = vmul.f32 %v5083, %v5179
  %v5186 = vmul.f32 %v5084, %v5179
  %v5187 = vmul.f32 %v5085, %v5179
  %v5188 = vmul.f32 %v5086, %v5179
  %v5189 = vmul.f32 %v5087, %v5179
  %v5190 = vmul.f32 %v5088, %v5179
  %v5191 = vmul.f32 %v5089, %v5179
  %v5192 = vmul.f32 %v5090, %v5179
  %v5193 = vmul.f32 %v5091, %v5179
  %v5194 = vmul.f32 %v5092, %v5179
  %v5195 = vmul.f32 %v5093, %v5179
  %v5196 = vmul.f32 %v5094, %v5179
  %v5197 = vmul.f32 %v5095, %v5179
  %v5198 = vmul.f32 %v5096, %v5179
  %v5199 = vmul.f32 %v5097, %v5179
  %v5200 = vmul.f32 %v5098, %v5179
  %v5201 = vmul.f32 %v5099, %v5179
  %v5202 = vmul.f32 %v5100, %v5179
  %v5203 = vmul.f32 %v5101, %v5179
  %v5204 = vmul.f32 %v5102, %v5179
  %v5205 = vmul.f32 %v5103, %v5179
  %v5206 = vmul.f32 %v5104, %v5179
  %v5207 = vmul.f32 %v5105, %v5179
  %v5208 = vmul.f32 %v5106, %v5179
  %v5209 = vmul.f32 %v5107, %v5179
  %v5210 = vmul.f32 %v5108, %v5179
  %v5211 = vmul.f32 %v5109, %v5179
  %v5212 = vmul.f32 %v5110, %v5179
  %v5213 = vmul.f32 %v5111, %v5179
  %v5214 = vmul.f32 %v5112, %v5179
  %v5215 = vmul.f32 %v5113, %v5179
  %v5216 = vmul.f32 %v5114, %v5179
  %v5217 = vmul.f32 %v5115, %v5179
  %v5218 = vmul.f32 %v5116, %v5179
  %v5219 = vmul.f32 %v5117, %v5179
  %v5220 = vmul.f32 %v5118, %v5179
  %v5221 = vmul.f32 %v5119, %v5179
  %v5222 = vmul.f32 %v5120, %v5179
  %v5223 = vmul.f32 %v5121, %v5179
  %v5224 = vmul.f32 %v5122, %v5179
  %v5225 = vmul.f32 %v5123, %v5179
  %v5226 = vmul.f32 %v5124, %v5179
  %v5227 = vmul.f32 %v5125, %v5179
  %v5228 = vmul.f32 %v5126, %v5179
  %v5229 = vmul.f32 %v5127, %v5179
  %v5230 = vmul.f32 %v5128, %v5179
  %v5231 = vmul.f32 %v5129, %v5179
  %v5232 = vmul.f32 %v5130, %v5179
  %v5233 = vmul.f32 %v5131, %v5179
  %v5234 = vmul.f32 %v5132, %v5179
  %v5235 = vmul.f32 %v5133, %v5179
  %v5236 = vmul.f32 %v5134, %v5179
  %v5237 = vmul.f32 %v5135, %v5179
  %v5238 = vmul.f32 %v5136, %v5179
  %v5239 = vmul.f32 %v5137, %v5179
  %v5240 = vmul.f32 %v5138, %v5179
  %v5241 = vmul.f32 %v5139, %v5179
  %v5242 = vmul.f32 %v5140, %v5179
  %v5243 = vmul.f32 %v5141, %v5179
  %v5244 = vmul.f32 %v5142, %v5179
  %v5245 = vmul.f32 %v5143, %v5179
  %v5246 = vmul.f32 %v5144, %v5179
  %v5247 = vmul.f32 %v5145, %v5179
  %v5248 = vmul.f32 %v5146, %v5179
  %v5249 = vmul.f32 %v5147, %v5179
  %v5250 = vmul.f32 %v5148, %v5179
  %v5251 = vmul.f32 %v5149, %v5179
  %v5252 = vmul.f32 %v5150, %v5179
  %v5253 = vmul.f32 %v5151, %v5179
  %v5254 = vmul.f32 %v5152, %v5179
  %v5255 = vmul.f32 %v5153, %v5179
  %v5256 = vmul.f32 %v5154, %v5179
  %v5257 = vmul.f32 %v5155, %v5179
  %v5258 = vmul.f32 %v5156, %v5179
  %v5259 = vmul.f32 %v5157, %v5179
  %v5260 = vmul.f32 %v5158, %v5179
  %v5261 = vmul.f32 %v5159, %v5179
  %v5262 = vmul.f32 %v5160, %v5179
  %v5263 = vmul.f32 %v5161, %v5179
  %v5264 = vmul.f32 %v5162, %v5179
  %v5265 = vmul.f32 %v5163, %v5179
  %v5266 = vmul.f32 %v5164, %v5179
  %v5267 = vmul.f32 %v5165, %v5179
  %v5268 = vmul.f32 %v5166, %v5179
  %v5269 = vmul.f32 %v5167, %v5179
  %v5270 = vmul.f32 %v5168, %v5179
  %v5271 = vmul.f32 %v5169, %v5179
  %v5272 = vmul.f32 %v5170, %v5179
  %v5273 = vmul.f32 %v5171, %v5179
  %v5274 = vmul.f32 %v5172, %v5179
  %v5275 = vmul.f32 %v5173, %v5179
  %v5276 = vmul.f32 %v5174, %v5179
  %v5277 = vmul.f32 %v5175, %v5179
  %v5278 = vmul.f32 %v5176, %v5179
  %v5279 = vmul.f32 %v5177, %v5179
  %v5281 = vlaneseq
  %v5282 = vshrl.u32 %v5281, 7
  %v5283 = vsub.s32 0, %v5282
  %v5284 = vrot.slane %v4561, %v5283
  %v5286 = vmul.f32 %v5180, %v5284
  %v5287 = vmul.f32 %v5181, %v5284
  %v5288 = vmul.f32 %v5182, %v5284
  %v5289 = vmul.f32 %v5183, %v5284
  %v5290 = vmul.f32 %v5184, %v5284
  %v5291 = vmul.f32 %v5185, %v5284
  %v5292 = vmul.f32 %v5186, %v5284
  %v5293 = vmul.f32 %v5187, %v5284
  %v5294 = vmul.f32 %v5188, %v5284
  %v5295 = vmul.f32 %v5189, %v5284
  %v5296 = vmul.f32 %v5190, %v5284
  %v5297 = vmul.f32 %v5191, %v5284
  %v5298 = vmul.f32 %v5192, %v5284
  %v5299 = vmul.f32 %v5193, %v5284
  %v5300 = vmul.f32 %v5194, %v5284
  %v5301 = vmul.f32 %v5195, %v5284
  %v5302 = vmul.f32 %v5196, %v5284
  %v5303 = vmul.f32 %v5197, %v5284
  %v5304 = vmul.f32 %v5198, %v5284
  %v5305 = vmul.f32 %v5199, %v5284
  %v5306 = vmul.f32 %v5200, %v5284
  %v5307 = vmul.f32 %v5201, %v5284
  %v5308 = vmul.f32 %v5202, %v5284
  %v5309 = vmul.f32 %v5203, %v5284
  %v5310 = vmul.f32 %v5204, %v5284
  %v5311 = vmul.f32 %v5205, %v5284
  %v5312 = vmul.f32 %v5206, %v5284
  %v5313 = vmul.f32 %v5207, %v5284
  %v5314 = vmul.f32 %v5208, %v5284
  %v5315 = vmul.f32 %v5209, %v5284
  %v5316 = vmul.f32 %v5210, %v5284
  %v5317 = vmul.f32 %v5211, %v5284
  %v5318 = vmul.f32 %v5212, %v5284
  %v5319 = vmul.f32 %v5213, %v5284
  %v5320 = vmul.f32 %v5214, %v5284
  %v5321 = vmul.f32 %v5215, %v5284
  %v5322 = vmul.f32 %v5216, %v5284
  %v5323 = vmul.f32 %v5217, %v5284
  %v5324 = vmul.f32 %v5218, %v5284
  %v5325 = vmul.f32 %v5219, %v5284
  %v5326 = vmul.f32 %v5220, %v5284
  %v5327 = vmul.f32 %v5221, %v5284
  %v5328 = vmul.f32 %v5222, %v5284
  %v5329 = vmul.f32 %v5223, %v5284
  %v5330 = vmul.f32 %v5224, %v5284
  %v5331 = vmul.f32 %v5225, %v5284
  %v5332 = vmul.f32 %v5226, %v5284
  %v5333 = vmul.f32 %v5227, %v5284
  %v5334 = vmul.f32 %v5228, %v5284
  %v5335 = vmul.f32 %v5229, %v5284
  %v5336 = vmul.f32 %v5230, %v5284
  %v5337 = vmul.f32 %v5231, %v5284
  %v5338 = vmul.f32 %v5232, %v5284
  %v5339 = vmul.f32 %v5233, %v5284
  %v5340 = vmul.f32 %v5234, %v5284
  %v5341 = vmul.f32 %v5235, %v5284
  %v5342 = vmul.f32 %v5236, %v5284
  %v5343 = vmul.f32 %v5237, %v5284
  %v5344 = vmul.f32 %v5238, %v5284
  %v5345 = vmul.f32 %v5239, %v5284
  %v5346 = vmul.f32 %v5240, %v5284
  %v5347 = vmul.f32 %v5241, %v5284
  %v5348 = vmul.f32 %v5242, %v5284
  %v5349 = vmul.f32 %v5243, %v5284
  %v5350 = vmul.f32 %v5244, %v5284
  %v5351 = vmul.f32 %v5245, %v5284
  %v5352 = vmul.f32 %v5246, %v5284
  %v5353 = vmul.f32 %v5247, %v5284
  %v5354 = vmul.f32 %v5248, %v5284
  %v5355 = vmul.f32 %v5249, %v5284
  %v5356 = vmul.f32 %v5250, %v5284
  %v5357 = vmul.f32 %v5251, %v5284
  %v5358 = vmul.f32 %v5252, %v5284
  %v5359 = vmul.f32 %v5253, %v5284
  %v5360 = vmul.f32 %v5254, %v5284
  %v5361 = vmul.f32 %v5255, %v5284
  %v5362 = vmul.f32 %v5256, %v5284
  %v5363 = vmul.f32 %v5257, %v5284
  %v5364 = vmul.f32 %v5258, %v5284
  %v5365 = vmul.f32 %v5259, %v5284
  %v5366 = vmul.f32 %v5260, %v5284
  %v5367 = vmul.f32 %v5261, %v5284
  %v5368 = vmul.f32 %v5262, %v5284
  %v5369 = vmul.f32 %v5263, %v5284
  %v5370 = vmul.f32 %v5264, %v5284
  %v5371 = vmul.f32 %v5265, %v5284
  %v5372 = vmul.f32 %v5266, %v5284
  %v5373 = vmul.f32 %v5267, %v5284
  %v5374 = vmul.f32 %v5268, %v5284
  %v5375 = vmul.f32 %v5269, %v5284
  %v5376 = vmul.f32 %v5270, %v5284
  %v5377 = vmul.f32 %v5271, %v5284
  %v5378 = vmul.f32 %v5272, %v5284
  %v5379 = vmul.f32 %v5273, %v5284
  %v5380 = vmul.f32 %v5274, %v5284
  %v5381 = vmul.f32 %v5275, %v5284
  %v5382 = vmul.f32 %v5276, %v5284
  %v5383 = vmul.f32 %v5277, %v5284
  %v5384 = vmul.f32 %v5278, %v5284
  %v5385 = vmul.f32 %v5279, %v5284
  %v5387 = vlaneseq
  %v5388 = vshrl.u32 %v5387, 7
  %v5389 = vsub.s32 0, %v5388
  %v5390 = vrot.slane %v4562, %v5389
  %v5392 = vadd.f32 %v5286, %v5390
  %v5393 = vadd.f32 %v5287, %v5390
  %v5394 = vadd.f32 %v5288, %v5390
  %v5395 = vadd.f32 %v5289, %v5390
  %v5396 = vadd.f32 %v5290, %v5390
  %v5397 = vadd.f32 %v5291, %v5390
  %v5398 = vadd.f32 %v5292, %v5390
  %v5399 = vadd.f32 %v5293, %v5390
  %v5400 = vadd.f32 %v5294, %v5390
  %v5401 = vadd.f32 %v5295, %v5390
  %v5402 = vadd.f32 %v5296, %v5390
  %v5403 = vadd.f32 %v5297, %v5390
  %v5404 = vadd.f32 %v5298, %v5390
  %v5405 = vadd.f32 %v5299, %v5390
  %v5406 = vadd.f32 %v5300, %v5390
  %v5407 = vadd.f32 %v5301, %v5390
  %v5408 = vadd.f32 %v5302, %v5390
  %v5409 = vadd.f32 %v5303, %v5390
  %v5410 = vadd.f32 %v5304, %v5390
  %v5411 = vadd.f32 %v5305, %v5390
  %v5412 = vadd.f32 %v5306, %v5390
  %v5413 = vadd.f32 %v5307, %v5390
  %v5414 = vadd.f32 %v5308, %v5390
  %v5415 = vadd.f32 %v5309, %v5390
  %v5416 = vadd.f32 %v5310, %v5390
  %v5417 = vadd.f32 %v5311, %v5390
  %v5418 = vadd.f32 %v5312, %v5390
  %v5419 = vadd.f32 %v5313, %v5390
  %v5420 = vadd.f32 %v5314, %v5390
  %v5421 = vadd.f32 %v5315, %v5390
  %v5422 = vadd.f32 %v5316, %v5390
  %v5423 = vadd.f32 %v5317, %v5390
  %v5424 = vadd.f32 %v5318, %v5390
  %v5425 = vadd.f32 %v5319, %v5390
  %v5426 = vadd.f32 %v5320, %v5390
  %v5427 = vadd.f32 %v5321, %v5390
  %v5428 = vadd.f32 %v5322, %v5390
  %v5429 = vadd.f32 %v5323, %v5390
  %v5430 = vadd.f32 %v5324, %v5390
  %v5431 = vadd.f32 %v5325, %v5390
  %v5432 = vadd.f32 %v5326, %v5390
  %v5433 = vadd.f32 %v5327, %v5390
  %v5434 = vadd.f32 %v5328, %v5390
  %v5435 = vadd.f32 %v5329, %v5390
  %v5436 = vadd.f32 %v5330, %v5390
  %v5437 = vadd.f32 %v5331, %v5390
  %v5438 = vadd.f32 %v5332, %v5390
  %v5439 = vadd.f32 %v5333, %v5390
  %v5440 = vadd.f32 %v5334, %v5390
  %v5441 = vadd.f32 %v5335, %v5390
  %v5442 = vadd.f32 %v5336, %v5390
  %v5443 = vadd.f32 %v5337, %v5390
  %v5444 = vadd.f32 %v5338, %v5390
  %v5445 = vadd.f32 %v5339, %v5390
  %v5446 = vadd.f32 %v5340, %v5390
  %v5447 = vadd.f32 %v5341, %v5390
  %v5448 = vadd.f32 %v5342, %v5390
  %v5449 = vadd.f32 %v5343, %v5390
  %v5450 = vadd.f32 %v5344, %v5390
  %v5451 = vadd.f32 %v5345, %v5390
  %v5452 = vadd.f32 %v5346, %v5390
  %v5453 = vadd.f32 %v5347, %v5390
  %v5454 = vadd.f32 %v5348, %v5390
  %v5455 = vadd.f32 %v5349, %v5390
  %v5456 = vadd.f32 %v5350, %v5390
  %v5457 = vadd.f32 %v5351, %v5390
  %v5458 = vadd.f32 %v5352, %v5390
  %v5459 = vadd.f32 %v5353, %v5390
  %v5460 = vadd.f32 %v5354, %v5390
  %v5461 = vadd.f32 %v5355, %v5390
  %v5462 = vadd.f32 %v5356, %v5390
  %v5463 = vadd.f32 %v5357, %v5390
  %v5464 = vadd.f32 %v5358, %v5390
  %v5465 = vadd.f32 %v5359, %v5390
  %v5466 = vadd.f32 %v5360, %v5390
  %v5467 = vadd.f32 %v5361, %v5390
  %v5468 = vadd.f32 %v5362, %v5390
  %v5469 = vadd.f32 %v5363, %v5390
  %v5470 = vadd.f32 %v5364, %v5390
  %v5471 = vadd.f32 %v5365, %v5390
  %v5472 = vadd.f32 %v5366, %v5390
  %v5473 = vadd.f32 %v5367, %v5390
  %v5474 = vadd.f32 %v5368, %v5390
  %v5475 = vadd.f32 %v5369, %v5390
  %v5476 = vadd.f32 %v5370, %v5390
  %v5477 = vadd.f32 %v5371, %v5390
  %v5478 = vadd.f32 %v5372, %v5390
  %v5479 = vadd.f32 %v5373, %v5390
  %v5480 = vadd.f32 %v5374, %v5390
  %v5481 = vadd.f32 %v5375, %v5390
  %v5482 = vadd.f32 %v5376, %v5390
  %v5483 = vadd.f32 %v5377, %v5390
  %v5484 = vadd.f32 %v5378, %v5390
  %v5485 = vadd.f32 %v5379, %v5390
  %v5486 = vadd.f32 %v5380, %v5390
  %v5487 = vadd.f32 %v5381, %v5390
  %v5488 = vadd.f32 %v5382, %v5390
  %v5489 = vadd.f32 %v5383, %v5390
  %v5490 = vadd.f32 %v5384, %v5390
  %v5491 = vadd.f32 %v5385, %v5390
  %5492 = vst.msk [vmem:[%s5] sm:$0xff] %vm2578, %v5392
  %5493 = vst.msk [vmem:[%s5 + $0x8] sm:$0xff] %vm2578, %v5393
  %5494 = vst.msk [vmem:[%s5 + $0x10] sm:$0xff] %vm2578, %v5394
  %5495 = vst.msk [vmem:[%s5 + $0x18] sm:$0xff] %vm2578, %v5395
  %5496 = vst.msk [vmem:[%s5 + $0x20] sm:$0xff] %vm2578, %v5396
  %5497 = vst.msk [vmem:[%s5 + $0x28] sm:$0xff] %vm2578, %v5397
  %5498 = vst.msk [vmem:[%s5 + $0x30] sm:$0xff] %vm2578, %v5398
  %5499 = vst.msk [vmem:[%s5 + $0x38] sm:$0xff] %vm2578, %v5399
  %5500 = vst.msk [vmem:[%s5 + $0x40] sm:$0xff] %vm2578, %v5400
  %5501 = vst.msk [vmem:[%s5 + $0x48] sm:$0xff] %vm2578, %v5401
  %5502 = vst.msk [vmem:[%s5 + $0x50] sm:$0xff] %vm2578, %v5402
  %5503 = vst.msk [vmem:[%s5 + $0x58] sm:$0xff] %vm2578, %v5403
  %5504 = vst.msk [vmem:[%s5 + $0x60] sm:$0xff] %vm2578, %v5404
  %5505 = vst.msk [vmem:[%s5 + $0x68] sm:$0xff] %vm2578, %v5405
  %5506 = vst.msk [vmem:[%s5 + $0x70] sm:$0xff] %vm2578, %v5406
  %5507 = vst.msk [vmem:[%s5 + $0x78] sm:$0xff] %vm2578, %v5407
  %5508 = vst.msk [vmem:[%s5 + $0x80] sm:$0xff] %vm2578, %v5408
  %5509 = vst.msk [vmem:[%s5 + $0x88] sm:$0xff] %vm2578, %v5409
  %5510 = vst.msk [vmem:[%s5 + $0x90] sm:$0xff] %vm2578, %v5410
  %5511 = vst.msk [vmem:[%s5 + $0x98] sm:$0xff] %vm2578, %v5411
  %5512 = vst.msk [vmem:[%s5 + $0xa0] sm:$0xff] %vm2578, %v5412
  %5513 = vst.msk [vmem:[%s5 + $0xa8] sm:$0xff] %vm2578, %v5413
  %5514 = vst.msk [vmem:[%s5 + $0xb0] sm:$0xff] %vm2578, %v5414
  %5515 = vst.msk [vmem:[%s5 + $0xb8] sm:$0xff] %vm2578, %v5415
  %5516 = vst.msk [vmem:[%s5 + $0xc0] sm:$0xff] %vm2578, %v5416
  %5517 = vst.msk [vmem:[%s5 + $0xc8] sm:$0xff] %vm2578, %v5417
  %5518 = vst.msk [vmem:[%s5 + $0xd0] sm:$0xff] %vm2578, %v5418
  %5519 = vst.msk [vmem:[%s5 + $0xd8] sm:$0xff] %vm2578, %v5419
  %5520 = vst.msk [vmem:[%s5 + $0xe0] sm:$0xff] %vm2578, %v5420
  %5521 = vst.msk [vmem:[%s5 + $0xe8] sm:$0xff] %vm2578, %v5421
  %5522 = vst.msk [vmem:[%s5 + $0xf0] sm:$0xff] %vm2578, %v5422
  %5523 = vst.msk [vmem:[%s5 + $0xf8] sm:$0xff] %vm2578, %v5423
  %5524 = vst.msk [vmem:[%s5 + $0x100] sm:$0xff] %vm2578, %v5424
  %5525 = vst.msk [vmem:[%s5 + $0x108] sm:$0xff] %vm2578, %v5425
  %5526 = vst.msk [vmem:[%s5 + $0x110] sm:$0xff] %vm2578, %v5426
  %5527 = vst.msk [vmem:[%s5 + $0x118] sm:$0xff] %vm2578, %v5427
  %5528 = vst.msk [vmem:[%s5 + $0x120] sm:$0xff] %vm2578, %v5428
  %5529 = vst.msk [vmem:[%s5 + $0x128] sm:$0xff] %vm2578, %v5429
  %5530 = vst.msk [vmem:[%s5 + $0x130] sm:$0xff] %vm2578, %v5430
  %5531 = vst.msk [vmem:[%s5 + $0x138] sm:$0xff] %vm2578, %v5431
  %5532 = vst.msk [vmem:[%s5 + $0x140] sm:$0xff] %vm2578, %v5432
  %5533 = vst.msk [vmem:[%s5 + $0x148] sm:$0xff] %vm2578, %v5433
  %5534 = vst.msk [vmem:[%s5 + $0x150] sm:$0xff] %vm2578, %v5434
  %5535 = vst.msk [vmem:[%s5 + $0x158] sm:$0xff] %vm2578, %v5435
  %5536 = vst.msk [vmem:[%s5 + $0x160] sm:$0xff] %vm2578, %v5436
  %5537 = vst.msk [vmem:[%s5 + $0x168] sm:$0xff] %vm2578, %v5437
  %5538 = vst.msk [vmem:[%s5 + $0x170] sm:$0xff] %vm2578, %v5438
  %5539 = vst.msk [vmem:[%s5 + $0x178] sm:$0xff] %vm2578, %v5439
  %5540 = vst.msk [vmem:[%s5 + $0x180] sm:$0xff] %vm2578, %v5440
  %5541 = vst.msk [vmem:[%s5 + $0x188] sm:$0xff] %vm2578, %v5441
  %5542 = vst.msk [vmem:[%s5 + $0x190] sm:$0xff] %vm2578, %v5442
  %5543 = vst.msk [vmem:[%s5 + $0x198] sm:$0xff] %vm2578, %v5443
  %5544 = vst.msk [vmem:[%s5 + $0x1a0] sm:$0xff] %vm2578, %v5444
  %5545 = vst.msk [vmem:[%s5 + $0x1a8] sm:$0xff] %vm2578, %v5445
  %5546 = vst.msk [vmem:[%s5 + $0x1b0] sm:$0xff] %vm2578, %v5446
  %5547 = vst.msk [vmem:[%s5 + $0x1b8] sm:$0xff] %vm2578, %v5447
  %5548 = vst.msk [vmem:[%s5 + $0x1c0] sm:$0xff] %vm2578, %v5448
  %5549 = vst.msk [vmem:[%s5 + $0x1c8] sm:$0xff] %vm2578, %v5449
  %5550 = vst.msk [vmem:[%s5 + $0x1d0] sm:$0xff] %vm2578, %v5450
  %5551 = vst.msk [vmem:[%s5 + $0x1d8] sm:$0xff] %vm2578, %v5451
  %5552 = vst.msk [vmem:[%s5 + $0x1e0] sm:$0xff] %vm2578, %v5452
  %5553 = vst.msk [vmem:[%s5 + $0x1e8] sm:$0xff] %vm2578, %v5453
  %5554 = vst.msk [vmem:[%s5 + $0x1f0] sm:$0xff] %vm2578, %v5454
  %5555 = vst.msk [vmem:[%s5 + $0x1f8] sm:$0xff] %vm2578, %v5455
  %5556 = vst.msk [vmem:[%s5 + $0x200] sm:$0xff] %vm2578, %v5456
  %5557 = vst.msk [vmem:[%s5 + $0x208] sm:$0xff] %vm2578, %v5457
  %5558 = vst.msk [vmem:[%s5 + $0x210] sm:$0xff] %vm2578, %v5458
  %5559 = vst.msk [vmem:[%s5 + $0x218] sm:$0xff] %vm2578, %v5459
  %5560 = vst.msk [vmem:[%s5 + $0x220] sm:$0xff] %vm2578, %v5460
  %5561 = vst.msk [vmem:[%s5 + $0x228] sm:$0xff] %vm2578, %v5461
  %5562 = vst.msk [vmem:[%s5 + $0x230] sm:$0xff] %vm2578, %v5462
  %5563 = vst.msk [vmem:[%s5 + $0x238] sm:$0xff] %vm2578, %v5463
  %5564 = vst.msk [vmem:[%s5 + $0x240] sm:$0xff] %vm2578, %v5464
  %5565 = vst.msk [vmem:[%s5 + $0x248] sm:$0xff] %vm2578, %v5465
  %5566 = vst.msk [vmem:[%s5 + $0x250] sm:$0xff] %vm2578, %v5466
  %5567 = vst.msk [vmem:[%s5 + $0x258] sm:$0xff] %vm2578, %v5467
  %5568 = vst.msk [vmem:[%s5 + $0x260] sm:$0xff] %vm2578, %v5468
  %5569 = vst.msk [vmem:[%s5 + $0x268] sm:$0xff] %vm2578, %v5469
  %5570 = vst.msk [vmem:[%s5 + $0x270] sm:$0xff] %vm2578, %v5470
  %5571 = vst.msk [vmem:[%s5 + $0x278] sm:$0xff] %vm2578, %v5471
  %5572 = vst.msk [vmem:[%s5 + $0x280] sm:$0xff] %vm2578, %v5472
  %5573 = vst.msk [vmem:[%s5 + $0x288] sm:$0xff] %vm2578, %v5473
  %5574 = vst.msk [vmem:[%s5 + $0x290] sm:$0xff] %vm2578, %v5474
  %5575 = vst.msk [vmem:[%s5 + $0x298] sm:$0xff] %vm2578, %v5475
  %5576 = vst.msk [vmem:[%s5 + $0x2a0] sm:$0xff] %vm2578, %v5476
  %5577 = vst.msk [vmem:[%s5 + $0x2a8] sm:$0xff] %vm2578, %v5477
  %5578 = vst.msk [vmem:[%s5 + $0x2b0] sm:$0xff] %vm2578, %v5478
  %5579 = vst.msk [vmem:[%s5 + $0x2b8] sm:$0xff] %vm2578, %v5479
  %5580 = vst.msk [vmem:[%s5 + $0x2c0] sm:$0xff] %vm2578, %v5480
  %5581 = vst.msk [vmem:[%s5 + $0x2c8] sm:$0xff] %vm2578, %v5481
  %5582 = vst.msk [vmem:[%s5 + $0x2d0] sm:$0xff] %vm2578, %v5482
  %5583 = vst.msk [vmem:[%s5 + $0x2d8] sm:$0xff] %vm2578, %v5483
  %5584 = vst.msk [vmem:[%s5 + $0x2e0] sm:$0xff] %vm2578, %v5484
  %5585 = vst.msk [vmem:[%s5 + $0x2e8] sm:$0xff] %vm2578, %v5485
  %5586 = vst.msk [vmem:[%s5 + $0x2f0] sm:$0xff] %vm2578, %v5486
  %5587 = vst.msk [vmem:[%s5 + $0x2f8] sm:$0xff] %vm2578, %v5487
  %5588 = vst.msk [vmem:[%s5 + $0x300] sm:$0xff] %vm2578, %v5488
  %5589 = vst.msk [vmem:[%s5 + $0x308] sm:$0xff] %vm2578, %v5489
  %5590 = vst.msk [vmem:[%s5 + $0x310] sm:$0xff] %vm2578, %v5490
  %5591 = vst.msk [vmem:[%s5 + $0x318] sm:$0xff] %vm2578, %v5491
  // Predicated region
  $region22: #{mnistnet_forward.8} parent=0 // pred_check
    _
  $region23: #{mnistnet_forward.8} parent=0 // pred_check_branch
    %5593 = sbr.rel (0) target = $region25
  $region24: #{mnistnet_forward.8} parent=0 // pred_region
    _
  $region25: #{mnistnet_forward.8} parent=0 // pred_fallthru
    _
  // Predicated region
  $region26: #{mnistnet_forward.8} parent=0 // pred_check
    _
  $region27: #{mnistnet_forward.8} parent=0 // pred_check_branch
    %5595 = sbr.rel (0) target = $region29
  $region28: #{mnistnet_forward.8} parent=0 // pred_region
    _
  $region29: #{mnistnet_forward.8} parent=0 // pred_fallthru
    _

// kernel: mnistnet_forward.10
$region0: #{mnistnet_forward.10}
  #allocation0 [shape = 'u32[]', space=smem, size = 0x4, offset = 0x4, fixed_abs, tag = 'smem constant byte address 0x4 - core index']
  #allocation1 [shape = 'u32[144,128]{1,0:T(1,128)}', space=vmem, size = 0x12000, scoped, tag = 'internal scratch']
  %s0 = inlined_call_operand.vmem [shape: bf16[128,288], index: 0, kind: input, shape index: {}]
  %s1 = inlined_call_operand.vmem [shape: bf16[288,64], index: 1, kind: input, shape index: {}]
  %s2 = inlined_call_operand.vmem [shape: f32[1,64], index: 2, kind: input, shape index: {}]
  %s3 = inlined_call_operand.vmem [shape: f32[1,64], index: 3, kind: input, shape index: {}]
  %s4 = inlined_call_operand.vmem [shape: f32[1,64], index: 4, kind: input, shape index: {}]
  %s5 = inlined_call_operand.vmem [shape: f32[128,64], index: 5, kind: output, shape index: {}]
  %s6 = sld [smem:[#allocation0]]
  $region30: #{mnistnet_forward.10} parent=0
    _
  %s8 = ssub.s32 1, %s6
  %s9 = scalar_select 0, %s8, %s6
  // Predicated region
  $region2: #{mnistnet_forward.10} parent=0 // pred_check
    _
  $region3: #{mnistnet_forward.10} parent=0 // pred_check_branch
    %11 = sbr.rel (0) target = $region5
  $region4: #{mnistnet_forward.10} parent=0 // pred_region
    _
  $region5: #{mnistnet_forward.10} parent=0 // pred_fallthru
    _
  // Predicated region
  $region6: #{mnistnet_forward.10} parent=0 // pred_check
    _
  $region7: #{mnistnet_forward.10} parent=0 // pred_check_branch
    %13 = sbr.rel (0) target = $region9
  $region8: #{mnistnet_forward.10} parent=0 // pred_region
    _
  $region9: #{mnistnet_forward.10} parent=0 // pred_fallthru
    _
  // Predicated region
  $region10: #{mnistnet_forward.10} parent=0 // pred_check
    _
  $region11: #{mnistnet_forward.10} parent=0 // pred_check_branch
    %15 = sbr.rel (0) target = $region13
  $region12: #{mnistnet_forward.10} parent=0 // pred_region
    _
  $region13: #{mnistnet_forward.10} parent=0 // pred_fallthru
    _
  // Predicated region
  $region14: #{mnistnet_forward.10} parent=0 // pred_check
    _
  $region15: #{mnistnet_forward.10} parent=0 // pred_check_branch
    %17 = sbr.rel (0) target = $region17
  $region16: #{mnistnet_forward.10} parent=0 // pred_region
    _
  $region17: #{mnistnet_forward.10} parent=0 // pred_fallthru
    _
  // Predicated region
  $region18: #{mnistnet_forward.10} parent=0 // pred_check
    _
  $region19: #{mnistnet_forward.10} parent=0 // pred_check_branch
    %19 = sbr.rel (0) target = $region21
  $region20: #{mnistnet_forward.10} parent=0 // pred_region
    _
  $region21: #{mnistnet_forward.10} parent=0 // pred_fallthru
    _
  %v21 = vld [vmem:[%s0] sm:$0xff]
  %v22 = vld [vmem:[%s0 + $0x8] sm:$0xf]
  %v23 = vld [vmem:[%s0 + $0xc] sm:$0xff]
  %v24 = vld [vmem:[%s0 + $0x14] sm:$0xf]
  %v25 = vld [vmem:[%s0 + $0x18] sm:$0xff]
  %v26 = vld [vmem:[%s0 + $0x20] sm:$0xf]
  %v27 = vld [vmem:[%s0 + $0x24] sm:$0xff]
  %v28 = vld [vmem:[%s0 + $0x2c] sm:$0xf]
  %v29 = vld [vmem:[%s0 + $0x30] sm:$0xff]
  %v30 = vld [vmem:[%s0 + $0x38] sm:$0xf]
  %v31 = vld [vmem:[%s0 + $0x3c] sm:$0xff]
  %v32 = vld [vmem:[%s0 + $0x44] sm:$0xf]
  %v33 = vld [vmem:[%s0 + $0x48] sm:$0xff]
  %v34 = vld [vmem:[%s0 + $0x50] sm:$0xf]
  %v35 = vld [vmem:[%s0 + $0x54] sm:$0xff]
  %v36 = vld [vmem:[%s0 + $0x5c] sm:$0xf]
  %v37 = vld [vmem:[%s0 + $0x60] sm:$0xff]
  %v38 = vld [vmem:[%s0 + $0x68] sm:$0xf]
  %v39 = vld [vmem:[%s0 + $0x6c] sm:$0xff]
  %v40 = vld [vmem:[%s0 + $0x74] sm:$0xf]
  %v41 = vld [vmem:[%s0 + $0x78] sm:$0xff]
  %v42 = vld [vmem:[%s0 + $0x80] sm:$0xf]
  %v43 = vld [vmem:[%s0 + $0x84] sm:$0xff]
  %v44 = vld [vmem:[%s0 + $0x8c] sm:$0xf]
  %v45 = vld [vmem:[%s0 + $0x90] sm:$0xff]
  %v46 = vld [vmem:[%s0 + $0x98] sm:$0xf]
  %v47 = vld [vmem:[%s0 + $0x9c] sm:$0xff]
  %v48 = vld [vmem:[%s0 + $0xa4] sm:$0xf]
  %v49 = vld [vmem:[%s0 + $0xa8] sm:$0xff]
  %v50 = vld [vmem:[%s0 + $0xb0] sm:$0xf]
  %v51 = vld [vmem:[%s0 + $0xb4] sm:$0xff]
  %v52 = vld [vmem:[%s0 + $0xbc] sm:$0xf]
  %v53 = vld [vmem:[%s1] sm:$0xf]
  %v54 = vld [vmem:[%s1 + $0x4] sm:$0xf]
  %v55 = vld [vmem:[%s1 + $0x8] sm:$0xf]
  %v56 = vld [vmem:[%s1 + $0xc] sm:$0xf]
  %v57 = vld [vmem:[%s1 + $0x10] sm:$0xf]
  %v58 = vld [vmem:[%s1 + $0x14] sm:$0xf]
  %v59 = vld [vmem:[%s1 + $0x18] sm:$0xf]
  %v60 = vld [vmem:[%s1 + $0x1c] sm:$0xf]
  %v61 = vld [vmem:[%s1 + $0x20] sm:$0xf]
  %v62 = vld [vmem:[%s1 + $0x24] sm:$0xf]
  %v63 = vld [vmem:[%s1 + $0x28] sm:$0xf]
  %v64 = vld [vmem:[%s1 + $0x2c] sm:$0xf]
  %v65 = vld [vmem:[%s1 + $0x30] sm:$0xf]
  %v66 = vld [vmem:[%s1 + $0x34] sm:$0xf]
  %v67 = vld [vmem:[%s1 + $0x38] sm:$0xf]
  %v68 = vld [vmem:[%s1 + $0x3c] sm:$0xf]
  %v69 = vld [vmem:[%s1 + $0x40] sm:$0xf]
  %v70 = vld [vmem:[%s1 + $0x44] sm:$0xf]
  %v71 = vld [vmem:[%s1 + $0x48] sm:$0xf]
  %v72 = vld [vmem:[%s1 + $0x4c] sm:$0xf]
  %v73 = vld [vmem:[%s1 + $0x50] sm:$0xf]
  %v74 = vld [vmem:[%s1 + $0x54] sm:$0xf]
  %v75 = vld [vmem:[%s1 + $0x58] sm:$0xf]
  %v76 = vld [vmem:[%s1 + $0x5c] sm:$0xf]
  %v77 = vld [vmem:[%s1 + $0x60] sm:$0xf]
  %v78 = vld [vmem:[%s1 + $0x64] sm:$0xf]
  %v79 = vld [vmem:[%s1 + $0x68] sm:$0xf]
  %v80 = vld [vmem:[%s1 + $0x6c] sm:$0xf]
  %v81 = vld [vmem:[%s1 + $0x70] sm:$0xf]
  %v82 = vld [vmem:[%s1 + $0x74] sm:$0xf]
  %v83 = vld [vmem:[%s1 + $0x78] sm:$0xf]
  %v84 = vld [vmem:[%s1 + $0x7c] sm:$0xf]
  %v85 = vld [vmem:[%s1 + $0x80] sm:$0xf]
  %v86 = vld [vmem:[%s1 + $0x84] sm:$0xf]
  %v87 = vld [vmem:[%s1 + $0x88] sm:$0xf]
  %v88 = vld [vmem:[%s1 + $0x8c] sm:$0xf]
  %v89 = vld [vmem:[%s2] sm:$0x1]
  %v91 = vlaneseq
  %v92 = vshrl.u32 %v91, 7
  %v93 = vsub.s32 0, %v92
  %v94 = vrot.slane %v89, %v93
  %v128 = vunpack.c.l.b16 %v21
  %v129 = vunpack.c.h.b16 %v21
  %v130 = vunpack.c.l.b16 %v22
  %v131 = vunpack.c.l.b16 %v23
  %v132 = vunpack.c.h.b16 %v23
  %v133 = vunpack.c.l.b16 %v24
  %v134 = vunpack.c.l.b16 %v25
  %v135 = vunpack.c.h.b16 %v25
  %v136 = vunpack.c.l.b16 %v26
  %v137 = vunpack.c.l.b16 %v27
  %v138 = vunpack.c.h.b16 %v27
  %v139 = vunpack.c.l.b16 %v28
  %v140 = vunpack.c.l.b16 %v29
  %v141 = vunpack.c.h.b16 %v29
  %v142 = vunpack.c.l.b16 %v30
  %v143 = vunpack.c.l.b16 %v31
  %v144 = vunpack.c.h.b16 %v31
  %v145 = vunpack.c.l.b16 %v32
  %v146 = vunpack.c.l.b16 %v33
  %v147 = vunpack.c.h.b16 %v33
  %v148 = vunpack.c.l.b16 %v34
  %v149 = vunpack.c.l.b16 %v35
  %v150 = vunpack.c.h.b16 %v35
  %v151 = vunpack.c.l.b16 %v36
  %v152 = vunpack.c.l.b16 %v37
  %v153 = vunpack.c.h.b16 %v37
  %v154 = vunpack.c.l.b16 %v38
  %v155 = vunpack.c.l.b16 %v39
  %v156 = vunpack.c.h.b16 %v39
  %v157 = vunpack.c.l.b16 %v40
  %v158 = vunpack.c.l.b16 %v41
  %v159 = vunpack.c.h.b16 %v41
  %v160 = vunpack.c.l.b16 %v42
  %v161 = vunpack.c.l.b16 %v43
  %v162 = vunpack.c.h.b16 %v43
  %v163 = vunpack.c.l.b16 %v44
  %v164 = vunpack.c.l.b16 %v45
  %v165 = vunpack.c.h.b16 %v45
  %v166 = vunpack.c.l.b16 %v46
  %v167 = vunpack.c.l.b16 %v47
  %v168 = vunpack.c.h.b16 %v47
  %v169 = vunpack.c.l.b16 %v48
  %v170 = vunpack.c.l.b16 %v49
  %v171 = vunpack.c.h.b16 %v49
  %v172 = vunpack.c.l.b16 %v50
  %v173 = vunpack.c.l.b16 %v51
  %v174 = vunpack.c.h.b16 %v51
  %v175 = vunpack.c.l.b16 %v52
  %v176 = vpack.c.b16 %v131, %v128
  %v177 = vpack.c.b16 %v132, %v129
  %v178 = vpack.c.b16 %v133, %v130
  %v179 = vpack.c.b16 %v137, %v134
  %v180 = vpack.c.b16 %v138, %v135
  %v181 = vpack.c.b16 %v139, %v136
  %v182 = vpack.c.b16 %v143, %v140
  %v183 = vpack.c.b16 %v144, %v141
  %v184 = vpack.c.b16 %v145, %v142
  %v185 = vpack.c.b16 %v149, %v146
  %v186 = vpack.c.b16 %v150, %v147
  %v187 = vpack.c.b16 %v151, %v148
  %v188 = vpack.c.b16 %v155, %v152
  %v189 = vpack.c.b16 %v156, %v153
  %v190 = vpack.c.b16 %v157, %v154
  %v191 = vpack.c.b16 %v161, %v158
  %v192 = vpack.c.b16 %v162, %v159
  %v193 = vpack.c.b16 %v163, %v160
  %v194 = vpack.c.b16 %v167, %v164
  %v195 = vpack.c.b16 %v168, %v165
  %v196 = vpack.c.b16 %v169, %v166
  %v197 = vpack.c.b16 %v173, %v170
  %v198 = vpack.c.b16 %v174, %v171
  %v199 = vpack.c.b16 %v175, %v172
  %v252 = vunpack.c.l.b16 %v53
  %v253 = vunpack.c.l.b16 %v54
  %v254 = vunpack.c.l.b16 %v55
  %v255 = vunpack.c.l.b16 %v56
  %v256 = vunpack.c.l.b16 %v57
  %v257 = vunpack.c.l.b16 %v58
  %v258 = vunpack.c.l.b16 %v59
  %v259 = vunpack.c.l.b16 %v60
  %v260 = vunpack.c.l.b16 %v61
  %v261 = vunpack.c.l.b16 %v62
  %v262 = vunpack.c.l.b16 %v63
  %v263 = vunpack.c.l.b16 %v64
  %v264 = vunpack.c.l.b16 %v65
  %v265 = vunpack.c.l.b16 %v66
  %v266 = vunpack.c.l.b16 %v67
  %v267 = vunpack.c.l.b16 %v68
  %v268 = vunpack.c.l.b16 %v69
  %v269 = vunpack.c.l.b16 %v70
  %v270 = vunpack.c.l.b16 %v71
  %v271 = vunpack.c.l.b16 %v72
  %v272 = vunpack.c.l.b16 %v73
  %v273 = vunpack.c.l.b16 %v74
  %v274 = vunpack.c.l.b16 %v75
  %v275 = vunpack.c.l.b16 %v76
  %v276 = vunpack.c.l.b16 %v77
  %v277 = vunpack.c.l.b16 %v78
  %v278 = vunpack.c.l.b16 %v79
  %v279 = vunpack.c.l.b16 %v80
  %v280 = vunpack.c.l.b16 %v81
  %v281 = vunpack.c.l.b16 %v82
  %v282 = vunpack.c.l.b16 %v83
  %v283 = vunpack.c.l.b16 %v84
  %v284 = vunpack.c.l.b16 %v85
  %v285 = vunpack.c.l.b16 %v86
  %v286 = vunpack.c.l.b16 %v87
  %v287 = vunpack.c.l.b16 %v88
  %v288 = vpack.c.b16 %v253, %v252
  %v289 = vpack.c.b16 %v255, %v254
  %v290 = vpack.c.b16 %v257, %v256
  %v291 = vpack.c.b16 %v259, %v258
  %v292 = vpack.c.b16 %v261, %v260
  %v293 = vpack.c.b16 %v263, %v262
  %v294 = vpack.c.b16 %v265, %v264
  %v295 = vpack.c.b16 %v267, %v266
  %v296 = vpack.c.b16 %v269, %v268
  %v297 = vpack.c.b16 %v271, %v270
  %v298 = vpack.c.b16 %v273, %v272
  %v299 = vpack.c.b16 %v275, %v274
  %v300 = vpack.c.b16 %v277, %v276
  %v301 = vpack.c.b16 %v279, %v278
  %v302 = vpack.c.b16 %v281, %v280
  %v303 = vpack.c.b16 %v283, %v282
  %v304 = vpack.c.b16 %v285, %v284
  %v305 = vpack.c.b16 %v287, %v286
  %vm324 = vcmask 261120
  %v326 = vsel %vm324, %v178, 0
  %v329 = vsel %vm324, %v181, 0
  %v332 = vsel %vm324, %v184, 0
  %v335 = vsel %vm324, %v187, 0
  %v338 = vsel %vm324, %v190, 0
  %v341 = vsel %vm324, %v193, 0
  %v344 = vsel %vm324, %v196, 0
  %v347 = vsel %vm324, %v199, 0
  %349 = vmatprep.subr.bf16.mxu0 0
  %350 = vmatpush1.bf16.msra.mxu0 %v288
  %351 = vmatprep.subr.bf16.mxu0 0
  %352 = vmatpush1.bf16.msra.mxu0 %v289
  %353 = vmatprep.subr.bf16.mxu0 0
  %354 = vmatpush1.bf16.msra.mxu0 %v290
  %355 = vmatprep.subr.bf16.mxu0 0
  %356 = vmatpush1.bf16.msra.mxu0 %v291
  %357 = vmatprep.subr.bf16.mxu0 0
  %358 = vmatpush1.bf16.msra.mxu0 %v292
  %359 = vmatprep.subr.bf16.mxu0 0
  %360 = vmatpush1.bf16.msra.mxu0 %v293
  %361 = vmatprep.subr.bf16.mxu0 0
  %362 = vmatpush1.bf16.msra.mxu0 %v294
  %363 = vmatprep.subr.bf16.mxu0 0
  %364 = vmatpush1.bf16.msra.mxu0 %v295
  %365 = vmatprep.subr.bf16.mxu0 0
  %366 = vmatpush1.bf16.msra.mxu0 %v296
  %367 = vmatprep.subr.bf16.mxu0 0
  %368 = vmatpush1.bf16.msra.mxu0 %v297
  %369 = vmatprep.subr.bf16.mxu0 0
  %370 = vmatpush1.bf16.msra.mxu0 %v298
  %371 = vmatprep.subr.bf16.mxu0 0
  %372 = vmatpush1.bf16.msra.mxu0 %v299
  %373 = vmatprep.subr.bf16.mxu0 0
  %374 = vmatpush1.bf16.msra.mxu0 %v300
  %375 = vmatprep.subr.bf16.mxu0 0
  %376 = vmatpush1.bf16.msra.mxu0 %v301
  %377 = vmatprep.subr.bf16.mxu0 0
  %378 = vmatpush1.bf16.msra.mxu0 %v302
  %379 = vmatprep.subr.bf16.mxu0 0
  %380 = vmatpush1.bf16.msra.mxu0 %v303
  %381 = vmatprep.mubr.bf16.mxu0 %v177
  %382 = vmatmul.mubr.bf16.gmra.mrb[0].mxu0 %v176
  %v383 = vpop.f32.mrb[0].mxu0
  %v384 = vadd.f32 %v94, %v383
  %v385 = vpop.f32.mrb[0].mxu0
  %v386 = vpop.f32.mrb[0].mxu0
  %v387 = vadd.f32 %v94, %v386
  %v388 = vpop.f32.mrb[0].mxu0
  %389 = vmatprep.mubr.bf16.mxu0 %v180
  %390 = vmatmul.mubr.bf16.gmra.mrb[0].mxu0 %v179
  %v391 = vpop.f32.mrb[0].mxu0
  %v392 = vadd.f32 %v94, %v391
  %v393 = vpop.f32.mrb[0].mxu0
  %v394 = vpop.f32.mrb[0].mxu0
  %v395 = vadd.f32 %v94, %v394
  %v396 = vpop.f32.mrb[0].mxu0
  %397 = vmatprep.mubr.bf16.mxu0 %v183
  %398 = vmatmul.mubr.bf16.gmra.mrb[0].mxu0 %v182
  %v399 = vpop.f32.mrb[0].mxu0
  %v400 = vadd.f32 %v94, %v399
  %v401 = vpop.f32.mrb[0].mxu0
  %v402 = vpop.f32.mrb[0].mxu0
  %v403 = vadd.f32 %v94, %v402
  %v404 = vpop.f32.mrb[0].mxu0
  %405 = vmatprep.mubr.bf16.mxu0 %v186
  %406 = vmatmul.mubr.bf16.gmra.mrb[0].mxu0 %v185
  %v407 = vpop.f32.mrb[0].mxu0
  %v408 = vadd.f32 %v94, %v407
  %v409 = vpop.f32.mrb[0].mxu0
  %v410 = vpop.f32.mrb[0].mxu0
  %v411 = vadd.f32 %v94, %v410
  %v412 = vpop.f32.mrb[0].mxu0
  %413 = vmatprep.mubr.bf16.mxu0 %v189
  %414 = vmatmul.mubr.bf16.gmra.mrb[0].mxu0 %v188
  %v415 = vpop.f32.mrb[0].mxu0
  %v416 = vadd.f32 %v94, %v415
  %v417 = vpop.f32.mrb[0].mxu0
  %v418 = vpop.f32.mrb[0].mxu0
  %v419 = vadd.f32 %v94, %v418
  %v420 = vpop.f32.mrb[0].mxu0
  %421 = vmatprep.mubr.bf16.mxu0 %v192
  %422 = vmatmul.mubr.bf16.gmra.mrb[0].mxu0 %v191
  %v423 = vpop.f32.mrb[0].mxu0
  %v424 = vadd.f32 %v94, %v423
  %v425 = vpop.f32.mrb[0].mxu0
  %v426 = vpop.f32.mrb[0].mxu0
  %v427 = vadd.f32 %v94, %v426
  %v428 = vpop.f32.mrb[0].mxu0
  %429 = vmatprep.mubr.bf16.mxu0 %v195
  %430 = vmatmul.mubr.bf16.gmra.mrb[0].mxu0 %v194
  %v431 = vpop.f32.mrb[0].mxu0
  %v432 = vadd.f32 %v94, %v431
  %v433 = vpop.f32.mrb[0].mxu0
  %v434 = vpop.f32.mrb[0].mxu0
  %v435 = vadd.f32 %v94, %v434
  %v436 = vpop.f32.mrb[0].mxu0
  %437 = vmatprep.mubr.bf16.mxu0 %v198
  %438 = vmatmul.mubr.bf16.gmra.mrb[0].mxu0 %v197
  %v439 = vpop.f32.mrb[0].mxu0
  %v440 = vadd.f32 %v94, %v439
  %v441 = vpop.f32.mrb[0].mxu0
  %v442 = vpop.f32.mrb[0].mxu0
  %v443 = vadd.f32 %v94, %v442
  %v444 = vpop.f32.mrb[0].mxu0
  %445 = vdwg.mxu0
  %446 = vmatprep.subr.bf16.mxu0 0
  %447 = vmatpush1.bf16.msra.mxu0 %v304
  %448 = vmatprep.subr.bf16.mxu0 0
  %449 = vmatpush1.bf16.msra.mxu0 %v305
  %450 = vmatprep.subr.bf16.mxu0 0
  %451 = vmatpush1.bf16.msra.mxu0 0
  %452 = vmatprep.subr.bf16.mxu0 0
  %453 = vmatpush1.bf16.msra.mxu0 0
  %454 = vmatprep.subr.bf16.mxu0 0
  %455 = vmatpush1.bf16.msra.mxu0 0
  %456 = vmatprep.subr.bf16.mxu0 0
  %457 = vmatpush1.bf16.msra.mxu0 0
  %458 = vmatprep.subr.bf16.mxu0 0
  %459 = vmatpush1.bf16.msra.mxu0 0
  %460 = vmatprep.subr.bf16.mxu0 0
  %461 = vmatpush1.bf16.msra.mxu0 0
  %462 = vmatprep.subr.bf16.mxu0 0
  %463 = vmatpush1.bf16.msra.mxu0 0
  %464 = vmatprep.subr.bf16.mxu0 0
  %465 = vmatpush1.bf16.msra.mxu0 0
  %466 = vmatprep.subr.bf16.mxu0 0
  %467 = vmatpush1.bf16.msra.mxu0 0
  %468 = vmatprep.subr.bf16.mxu0 0
  %469 = vmatpush1.bf16.msra.mxu0 0
  %470 = vmatprep.subr.bf16.mxu0 0
  %471 = vmatpush1.bf16.msra.mxu0 0
  %472 = vmatprep.subr.bf16.mxu0 0
  %473 = vmatpush1.bf16.msra.mxu0 0
  %474 = vmatprep.subr.bf16.mxu0 0
  %475 = vmatpush1.bf16.msra.mxu0 0
  %476 = vmatprep.subr.bf16.mxu0 0
  %477 = vmatpush1.bf16.msra.mxu0 0
  %478 = vmatprep.mubr.bf16.mxu0 0
  %479 = vmatmul.mubr.bf16.gmra.mrb[0].mxu0 %v326
  %v480 = vpop.f32.mrb[0].mxu0
  %v481 = vadd.f32 %v384, %v480
  %v482 = vpop.f32.mrb[0].mxu0
  %v483 = vpop.f32.mrb[0].mxu0
  %v484 = vadd.f32 %v387, %v483
  %v485 = vpop.f32.mrb[0].mxu0
  %486 = vmatprep.mubr.bf16.mxu0 0
  %487 = vmatmul.mubr.bf16.gmra.mrb[0].mxu0 %v329
  %v488 = vpop.f32.mrb[0].mxu0
  %v489 = vadd.f32 %v392, %v488
  %v490 = vpop.f32.mrb[0].mxu0
  %v491 = vpop.f32.mrb[0].mxu0
  %v492 = vadd.f32 %v395, %v491
  %v493 = vpop.f32.mrb[0].mxu0
  %494 = vmatprep.mubr.bf16.mxu0 0
  %495 = vmatmul.mubr.bf16.gmra.mrb[0].mxu0 %v332
  %v496 = vpop.f32.mrb[0].mxu0
  %v497 = vadd.f32 %v400, %v496
  %v498 = vpop.f32.mrb[0].mxu0
  %v499 = vpop.f32.mrb[0].mxu0
  %v500 = vadd.f32 %v403, %v499
  %v501 = vpop.f32.mrb[0].mxu0
  %502 = vmatprep.mubr.bf16.mxu0 0
  %503 = vmatmul.mubr.bf16.gmra.mrb[0].mxu0 %v335
  %v504 = vpop.f32.mrb[0].mxu0
  %v505 = vadd.f32 %v408, %v504
  %v506 = vpop.f32.mrb[0].mxu0
  %v507 = vpop.f32.mrb[0].mxu0
  %v508 = vadd.f32 %v411, %v507
  %v509 = vpop.f32.mrb[0].mxu0
  %510 = vmatprep.mubr.bf16.mxu0 0
  %511 = vmatmul.mubr.bf16.gmra.mrb[0].mxu0 %v338
  %v512 = vpop.f32.mrb[0].mxu0
  %v513 = vadd.f32 %v416, %v512
  %v514 = vpop.f32.mrb[0].mxu0
  %v515 = vpop.f32.mrb[0].mxu0
  %v516 = vadd.f32 %v419, %v515
  %v517 = vpop.f32.mrb[0].mxu0
  %518 = vmatprep.mubr.bf16.mxu0 0
  %519 = vmatmul.mubr.bf16.gmra.mrb[0].mxu0 %v341
  %v520 = vpop.f32.mrb[0].mxu0
  %v521 = vadd.f32 %v424, %v520
  %v522 = vpop.f32.mrb[0].mxu0
  %v523 = vpop.f32.mrb[0].mxu0
  %v524 = vadd.f32 %v427, %v523
  %v525 = vpop.f32.mrb[0].mxu0
  %526 = vmatprep.mubr.bf16.mxu0 0
  %527 = vmatmul.mubr.bf16.gmra.mrb[0].mxu0 %v344
  %v528 = vpop.f32.mrb[0].mxu0
  %v529 = vadd.f32 %v432, %v528
  %v530 = vpop.f32.mrb[0].mxu0
  %v531 = vpop.f32.mrb[0].mxu0
  %v532 = vadd.f32 %v435, %v531
  %v533 = vpop.f32.mrb[0].mxu0
  %534 = vmatprep.mubr.bf16.mxu0 0
  %535 = vmatmul.mubr.bf16.gmra.mrb[0].mxu0 %v347
  %v536 = vpop.f32.mrb[0].mxu0
  %v537 = vadd.f32 %v440, %v536
  %v538 = vpop.f32.mrb[0].mxu0
  %v539 = vpop.f32.mrb[0].mxu0
  %v540 = vadd.f32 %v443, %v539
  %v541 = vpop.f32.mrb[0].mxu0
  %542 = vdwg.mxu0
  %v543 = vmax.f32 %v481, 0.0
  %v544 = vmax.f32 %v484, 0.0
  %v545 = vmax.f32 %v489, 0.0
  %v546 = vmax.f32 %v492, 0.0
  %v547 = vmax.f32 %v497, 0.0
  %v548 = vmax.f32 %v500, 0.0
  %v549 = vmax.f32 %v505, 0.0
  %v550 = vmax.f32 %v508, 0.0
  %v551 = vmax.f32 %v513, 0.0
  %v552 = vmax.f32 %v516, 0.0
  %v553 = vmax.f32 %v521, 0.0
  %v554 = vmax.f32 %v524, 0.0
  %v555 = vmax.f32 %v529, 0.0
  %v556 = vmax.f32 %v532, 0.0
  %v557 = vmax.f32 %v537, 0.0
  %v558 = vmax.f32 %v540, 0.0
  %v559 = vld [vmem:[%s3] sm:$0x1]
  %v560 = vld [vmem:[%s4] sm:$0x1]
  %vm561 = vcmask 523264
  %v562 = vsel %vm561, %v543, 0.0
  %v563 = vsel %vm561, %v544, 0.0
  %v564 = vadd.f32 %v562, %v563
  %v565 = vsel %vm561, %v545, 0.0
  %v566 = vadd.f32 %v564, %v565
  %v567 = vsel %vm561, %v546, 0.0
  %v568 = vadd.f32 %v566, %v567
  %v569 = vsel %vm561, %v547, 0.0
  %v570 = vadd.f32 %v568, %v569
  %v571 = vsel %vm561, %v548, 0.0
  %v572 = vadd.f32 %v570, %v571
  %v573 = vsel %vm561, %v549, 0.0
  %v574 = vadd.f32 %v572, %v573
  %v575 = vsel %vm561, %v550, 0.0
  %v576 = vadd.f32 %v574, %v575
  %v577 = vsel %vm561, %v551, 0.0
  %v578 = vadd.f32 %v576, %v577
  %v579 = vsel %vm561, %v552, 0.0
  %v580 = vadd.f32 %v578, %v579
  %v581 = vsel %vm561, %v553, 0.0
  %v582 = vadd.f32 %v580, %v581
  %v583 = vsel %vm561, %v554, 0.0
  %v584 = vadd.f32 %v582, %v583
  %v585 = vsel %vm561, %v555, 0.0
  %v586 = vadd.f32 %v584, %v585
  %v587 = vsel %vm561, %v556, 0.0
  %v588 = vadd.f32 %v586, %v587
  %v589 = vsel %vm561, %v557, 0.0
  %v590 = vadd.f32 %v588, %v589
  %v591 = vsel %vm561, %v558, 0.0
  %v592 = vadd.f32 %v590, %v591
  %v593 = vrot.slane %v592, 4
  %v594 = vadd.f32 %v592, %v593
  %v595 = vrot.slane %v594, 2
  %v596 = vadd.f32 %v594, %v595
  %v597 = vrot.slane %v596, 1
  %v598 = vadd.f32 %v596, %v597
  %v599 = vmul.f32 %v543, %v543
  %v600 = vmul.f32 %v544, %v544
  %v601 = vmul.f32 %v545, %v545
  %v602 = vmul.f32 %v546, %v546
  %v603 = vmul.f32 %v547, %v547
  %v604 = vmul.f32 %v548, %v548
  %v605 = vmul.f32 %v549, %v549
  %v606 = vmul.f32 %v550, %v550
  %v607 = vmul.f32 %v551, %v551
  %v608 = vmul.f32 %v552, %v552
  %v609 = vmul.f32 %v553, %v553
  %v610 = vmul.f32 %v554, %v554
  %v611 = vmul.f32 %v555, %v555
  %v612 = vmul.f32 %v556, %v556
  %v613 = vmul.f32 %v557, %v557
  %v614 = vmul.f32 %v558, %v558
  %v615 = vsel %vm561, %v599, 0.0
  %v616 = vsel %vm561, %v600, 0.0
  %v617 = vadd.f32 %v615, %v616
  %v618 = vsel %vm561, %v601, 0.0
  %v619 = vadd.f32 %v617, %v618
  %v620 = vsel %vm561, %v602, 0.0
  %v621 = vadd.f32 %v619, %v620
  %v622 = vsel %vm561, %v603, 0.0
  %v623 = vadd.f32 %v621, %v622
  %v624 = vsel %vm561, %v604, 0.0
  %v625 = vadd.f32 %v623, %v624
  %v626 = vsel %vm561, %v605, 0.0
  %v627 = vadd.f32 %v625, %v626
  %v628 = vsel %vm561, %v606, 0.0
  %v629 = vadd.f32 %v627, %v628
  %v630 = vsel %vm561, %v607, 0.0
  %v631 = vadd.f32 %v629, %v630
  %v632 = vsel %vm561, %v608, 0.0
  %v633 = vadd.f32 %v631, %v632
  %v634 = vsel %vm561, %v609, 0.0
  %v635 = vadd.f32 %v633, %v634
  %v636 = vsel %vm561, %v610, 0.0
  %v637 = vadd.f32 %v635, %v636
  %v638 = vsel %vm561, %v611, 0.0
  %v639 = vadd.f32 %v637, %v638
  %v640 = vsel %vm561, %v612, 0.0
  %v641 = vadd.f32 %v639, %v640
  %v642 = vsel %vm561, %v613, 0.0
  %v643 = vadd.f32 %v641, %v642
  %v644 = vsel %vm561, %v614, 0.0
  %v645 = vadd.f32 %v643, %v644
  %v646 = vrot.slane %v645, 4
  %v647 = vadd.f32 %v645, %v646
  %v648 = vrot.slane %v647, 2
  %v649 = vadd.f32 %v647, %v648
  %v650 = vrot.slane %v649, 1
  %v651 = vadd.f32 %v649, %v650
  %v652 = vrcp.pop 128.0
  %v653 = vmul.f32 %v598, %v652
  %v654 = vmul.f32 %v651, %v652
  %v655 = vmul.f32 %v653, %v653
  %v656 = vsub.f32 %v654, %v655
  %v657 = vsub.f32 %v543, %v653
  %v658 = vsub.f32 %v544, %v653
  %v659 = vsub.f32 %v545, %v653
  %v660 = vsub.f32 %v546, %v653
  %v661 = vsub.f32 %v547, %v653
  %v662 = vsub.f32 %v548, %v653
  %v663 = vsub.f32 %v549, %v653
  %v664 = vsub.f32 %v550, %v653
  %v665 = vsub.f32 %v551, %v653
  %v666 = vsub.f32 %v552, %v653
  %v667 = vsub.f32 %v553, %v653
  %v668 = vsub.f32 %v554, %v653
  %v669 = vsub.f32 %v555, %v653
  %v670 = vsub.f32 %v556, %v653
  %v671 = vsub.f32 %v557, %v653
  %v672 = vsub.f32 %v558, %v653
  %v673 = vadd.f32 %v656, 1e-05
  %v674 = vrsqrt.pop %v673
  %v675 = vmul.f32 %v657, %v674
  %v676 = vmul.f32 %v658, %v674
  %v677 = vmul.f32 %v659, %v674
  %v678 = vmul.f32 %v660, %v674
  %v679 = vmul.f32 %v661, %v674
  %v680 = vmul.f32 %v662, %v674
  %v681 = vmul.f32 %v663, %v674
  %v682 = vmul.f32 %v664, %v674
  %v683 = vmul.f32 %v665, %v674
  %v684 = vmul.f32 %v666, %v674
  %v685 = vmul.f32 %v667, %v674
  %v686 = vmul.f32 %v668, %v674
  %v687 = vmul.f32 %v669, %v674
  %v688 = vmul.f32 %v670, %v674
  %v689 = vmul.f32 %v671, %v674
  %v690 = vmul.f32 %v672, %v674
  %v692 = vlaneseq
  %v693 = vshrl.u32 %v692, 7
  %v694 = vsub.s32 0, %v693
  %v695 = vrot.slane %v559, %v694
  %v697 = vmul.f32 %v675, %v695
  %v698 = vmul.f32 %v676, %v695
  %v699 = vmul.f32 %v677, %v695
  %v700 = vmul.f32 %v678, %v695
  %v701 = vmul.f32 %v679, %v695
  %v702 = vmul.f32 %v680, %v695
  %v703 = vmul.f32 %v681, %v695
  %v704 = vmul.f32 %v682, %v695
  %v705 = vmul.f32 %v683, %v695
  %v706 = vmul.f32 %v684, %v695
  %v707 = vmul.f32 %v685, %v695
  %v708 = vmul.f32 %v686, %v695
  %v709 = vmul.f32 %v687, %v695
  %v710 = vmul.f32 %v688, %v695
  %v711 = vmul.f32 %v689, %v695
  %v712 = vmul.f32 %v690, %v695
  %v714 = vlaneseq
  %v715 = vshrl.u32 %v714, 7
  %v716 = vsub.s32 0, %v715
  %v717 = vrot.slane %v560, %v716
  %v719 = vadd.f32 %v697, %v717
  %v720 = vadd.f32 %v698, %v717
  %v721 = vadd.f32 %v699, %v717
  %v722 = vadd.f32 %v700, %v717
  %v723 = vadd.f32 %v701, %v717
  %v724 = vadd.f32 %v702, %v717
  %v725 = vadd.f32 %v703, %v717
  %v726 = vadd.f32 %v704, %v717
  %v727 = vadd.f32 %v705, %v717
  %v728 = vadd.f32 %v706, %v717
  %v729 = vadd.f32 %v707, %v717
  %v730 = vadd.f32 %v708, %v717
  %v731 = vadd.f32 %v709, %v717
  %v732 = vadd.f32 %v710, %v717
  %v733 = vadd.f32 %v711, %v717
  %v734 = vadd.f32 %v712, %v717
  %735 = vst.msk [vmem:[%s5] sm:$0xff] %vm561, %v719
  %736 = vst.msk [vmem:[%s5 + $0x8] sm:$0xff] %vm561, %v720
  %737 = vst.msk [vmem:[%s5 + $0x10] sm:$0xff] %vm561, %v721
  %738 = vst.msk [vmem:[%s5 + $0x18] sm:$0xff] %vm561, %v722
  %739 = vst.msk [vmem:[%s5 + $0x20] sm:$0xff] %vm561, %v723
  %740 = vst.msk [vmem:[%s5 + $0x28] sm:$0xff] %vm561, %v724
  %741 = vst.msk [vmem:[%s5 + $0x30] sm:$0xff] %vm561, %v725
  %742 = vst.msk [vmem:[%s5 + $0x38] sm:$0xff] %vm561, %v726
  %743 = vst.msk [vmem:[%s5 + $0x40] sm:$0xff] %vm561, %v727
  %744 = vst.msk [vmem:[%s5 + $0x48] sm:$0xff] %vm561, %v728
  %745 = vst.msk [vmem:[%s5 + $0x50] sm:$0xff] %vm561, %v729
  %746 = vst.msk [vmem:[%s5 + $0x58] sm:$0xff] %vm561, %v730
  %747 = vst.msk [vmem:[%s5 + $0x60] sm:$0xff] %vm561, %v731
  %748 = vst.msk [vmem:[%s5 + $0x68] sm:$0xff] %vm561, %v732
  %749 = vst.msk [vmem:[%s5 + $0x70] sm:$0xff] %vm561, %v733
  %750 = vst.msk [vmem:[%s5 + $0x78] sm:$0xff] %vm561, %v734
  // Predicated region
  $region22: #{mnistnet_forward.10} parent=0 // pred_check
    _
  $region23: #{mnistnet_forward.10} parent=0 // pred_check_branch
    %752 = sbr.rel (0) target = $region25
  $region24: #{mnistnet_forward.10} parent=0 // pred_region
    _
  $region25: #{mnistnet_forward.10} parent=0 // pred_fallthru
    _
  // Predicated region
  $region26: #{mnistnet_forward.10} parent=0 // pred_check
    _
  $region27: #{mnistnet_forward.10} parent=0 // pred_check_branch
    %754 = sbr.rel (0) target = $region29
  $region28: #{mnistnet_forward.10} parent=0 // pred_region
    _
  $region29: #{mnistnet_forward.10} parent=0 // pred_fallthru
    _

// kernel: mnistnet_forward.11
$region0: #{mnistnet_forward.11}
  #allocation0 [shape = 'u32[]', space=smem, size = 0x4, offset = 0x4, fixed_abs, tag = 'smem constant byte address 0x4 - core index']
  #allocation1 [shape = 'u32[144,128]{1,0:T(1,128)}', space=vmem, size = 0x12000, scoped, tag = 'internal scratch']
  %s0 = inlined_call_operand.vmem [shape: bf16[72,576], index: 0, kind: input, shape index: {}]
  %s1 = inlined_call_operand.vmem [shape: bf16[576,64], index: 1, kind: input, shape index: {}]
  %s2 = inlined_call_operand.vmem [shape: f32[1,64], index: 2, kind: input, shape index: {}]
  %s3 = inlined_call_operand.vmem [shape: f32[1,64], index: 3, kind: input, shape index: {}]
  %s4 = inlined_call_operand.vmem [shape: f32[1,64], index: 4, kind: input, shape index: {}]
  %s5 = inlined_call_operand.vmem [shape: f32[72,64], index: 5, kind: output, shape index: {}]
  %s6 = sld [smem:[#allocation0]]
  $region30: #{mnistnet_forward.11} parent=0
    _
  %s8 = ssub.s32 1, %s6
  %s9 = scalar_select 0, %s8, %s6
  // Predicated region
  $region2: #{mnistnet_forward.11} parent=0 // pred_check
    _
  $region3: #{mnistnet_forward.11} parent=0 // pred_check_branch
    %11 = sbr.rel (0) target = $region5
  $region4: #{mnistnet_forward.11} parent=0 // pred_region
    _
  $region5: #{mnistnet_forward.11} parent=0 // pred_fallthru
    _
  // Predicated region
  $region6: #{mnistnet_forward.11} parent=0 // pred_check
    _
  $region7: #{mnistnet_forward.11} parent=0 // pred_check_branch
    %13 = sbr.rel (0) target = $region9
  $region8: #{mnistnet_forward.11} parent=0 // pred_region
    _
  $region9: #{mnistnet_forward.11} parent=0 // pred_fallthru
    _
  // Predicated region
  $region10: #{mnistnet_forward.11} parent=0 // pred_check
    _
  $region11: #{mnistnet_forward.11} parent=0 // pred_check_branch
    %15 = sbr.rel (0) target = $region13
  $region12: #{mnistnet_forward.11} parent=0 // pred_region
    _
  $region13: #{mnistnet_forward.11} parent=0 // pred_fallthru
    _
  // Predicated region
  $region14: #{mnistnet_forward.11} parent=0 // pred_check
    _
  $region15: #{mnistnet_forward.11} parent=0 // pred_check_branch
    %17 = sbr.rel (0) target = $region17
  $region16: #{mnistnet_forward.11} parent=0 // pred_region
    _
  $region17: #{mnistnet_forward.11} parent=0 // pred_fallthru
    _
  // Predicated region
  $region18: #{mnistnet_forward.11} parent=0 // pred_check
    _
  $region19: #{mnistnet_forward.11} parent=0 // pred_check_branch
    %19 = sbr.rel (0) target = $region21
  $region20: #{mnistnet_forward.11} parent=0 // pred_region
    _
  $region21: #{mnistnet_forward.11} parent=0 // pred_fallthru
    _
  %v21 = vld [vmem:[%s0] sm:$0xff]
  %v22 = vld [vmem:[%s0 + $0x8] sm:$0xff]
  %v23 = vld [vmem:[%s0 + $0x10] sm:$0xf]
  %v24 = vld [vmem:[%s0 + $0x14] sm:$0xff]
  %v25 = vld [vmem:[%s0 + $0x1c] sm:$0xff]
  %v26 = vld [vmem:[%s0 + $0x24] sm:$0xf]
  %v27 = vld [vmem:[%s0 + $0x28] sm:$0xff]
  %v28 = vld [vmem:[%s0 + $0x30] sm:$0xff]
  %v29 = vld [vmem:[%s0 + $0x38] sm:$0xf]
  %v30 = vld [vmem:[%s0 + $0x3c] sm:$0xff]
  %v31 = vld [vmem:[%s0 + $0x44] sm:$0xff]
  %v32 = vld [vmem:[%s0 + $0x4c] sm:$0xf]
  %v33 = vld [vmem:[%s0 + $0x50] sm:$0xff]
  %v34 = vld [vmem:[%s0 + $0x58] sm:$0xff]
  %v35 = vld [vmem:[%s0 + $0x60] sm:$0xf]
  %v36 = vld [vmem:[%s0 + $0x64] sm:$0xff]
  %v37 = vld [vmem:[%s0 + $0x6c] sm:$0xff]
  %v38 = vld [vmem:[%s0 + $0x74] sm:$0xf]
  %v39 = vld [vmem:[%s0 + $0x78] sm:$0xff]
  %v40 = vld [vmem:[%s0 + $0x80] sm:$0xff]
  %v41 = vld [vmem:[%s0 + $0x88] sm:$0xf]
  %v42 = vld [vmem:[%s0 + $0x8c] sm:$0xff]
  %v43 = vld [vmem:[%s0 + $0x94] sm:$0xff]
  %v44 = vld [vmem:[%s0 + $0x9c] sm:$0xf]
  %v45 = vld [vmem:[%s0 + $0xa0] sm:$0xff]
  %v46 = vld [vmem:[%s0 + $0xa8] sm:$0xff]
  %v47 = vld [vmem:[%s0 + $0xb0] sm:$0xf]
  %v48 = vld [vmem:[%s1] sm:$0xf]
  %v49 = vld [vmem:[%s1 + $0x4] sm:$0xf]
  %v50 = vld [vmem:[%s1 + $0x8] sm:$0xf]
  %v51 = vld [vmem:[%s1 + $0xc] sm:$0xf]
  %v52 = vld [vmem:[%s1 + $0x10] sm:$0xf]
  %v53 = vld [vmem:[%s1 + $0x14] sm:$0xf]
  %v54 = vld [vmem:[%s1 + $0x18] sm:$0xf]
  %v55 = vld [vmem:[%s1 + $0x1c] sm:$0xf]
  %v56 = vld [vmem:[%s1 + $0x20] sm:$0xf]
  %v57 = vld [vmem:[%s1 + $0x24] sm:$0xf]
  %v58 = vld [vmem:[%s1 + $0x28] sm:$0xf]
  %v59 = vld [vmem:[%s1 + $0x2c] sm:$0xf]
  %v60 = vld [vmem:[%s1 + $0x30] sm:$0xf]
  %v61 = vld [vmem:[%s1 + $0x34] sm:$0xf]
  %v62 = vld [vmem:[%s1 + $0x38] sm:$0xf]
  %v63 = vld [vmem:[%s1 + $0x3c] sm:$0xf]
  %v64 = vld [vmem:[%s1 + $0x40] sm:$0xf]
  %v65 = vld [vmem:[%s1 + $0x44] sm:$0xf]
  %v66 = vld [vmem:[%s1 + $0x48] sm:$0xf]
  %v67 = vld [vmem:[%s1 + $0x4c] sm:$0xf]
  %v68 = vld [vmem:[%s1 + $0x50] sm:$0xf]
  %v69 = vld [vmem:[%s1 + $0x54] sm:$0xf]
  %v70 = vld [vmem:[%s1 + $0x58] sm:$0xf]
  %v71 = vld [vmem:[%s1 + $0x5c] sm:$0xf]
  %v72 = vld [vmem:[%s1 + $0x60] sm:$0xf]
  %v73 = vld [vmem:[%s1 + $0x64] sm:$0xf]
  %v74 = vld [vmem:[%s1 + $0x68] sm:$0xf]
  %v75 = vld [vmem:[%s1 + $0x6c] sm:$0xf]
  %v76 = vld [vmem:[%s1 + $0x70] sm:$0xf]
  %v77 = vld [vmem:[%s1 + $0x74] sm:$0xf]
  %v78 = vld [vmem:[%s1 + $0x78] sm:$0xf]
  %v79 = vld [vmem:[%s1 + $0x7c] sm:$0xf]
  %v80 = vld [vmem:[%s1 + $0x80] sm:$0xf]
  %v81 = vld [vmem:[%s1 + $0x84] sm:$0xf]
  %v82 = vld [vmem:[%s1 + $0x88] sm:$0xf]
  %v83 = vld [vmem:[%s1 + $0x8c] sm:$0xf]
  %v84 = vld [vmem:[%s1 + $0x90] sm:$0xf]
  %v85 = vld [vmem:[%s1 + $0x94] sm:$0xf]
  %v86 = vld [vmem:[%s1 + $0x98] sm:$0xf]
  %v87 = vld [vmem:[%s1 + $0x9c] sm:$0xf]
  %v88 = vld [vmem:[%s1 + $0xa0] sm:$0xf]
  %v89 = vld [vmem:[%s1 + $0xa4] sm:$0xf]
  %v90 = vld [vmem:[%s1 + $0xa8] sm:$0xf]
  %v91 = vld [vmem:[%s1 + $0xac] sm:$0xf]
  %v92 = vld [vmem:[%s1 + $0xb0] sm:$0xf]
  %v93 = vld [vmem:[%s1 + $0xb4] sm:$0xf]
  %v94 = vld [vmem:[%s1 + $0xb8] sm:$0xf]
  %v95 = vld [vmem:[%s1 + $0xbc] sm:$0xf]
  %v96 = vld [vmem:[%s1 + $0xc0] sm:$0xf]
  %v97 = vld [vmem:[%s1 + $0xc4] sm:$0xf]
  %v98 = vld [vmem:[%s1 + $0xc8] sm:$0xf]
  %v99 = vld [vmem:[%s1 + $0xcc] sm:$0xf]
  %v100 = vld [vmem:[%s1 + $0xd0] sm:$0xf]
  %v101 = vld [vmem:[%s1 + $0xd4] sm:$0xf]
  %v102 = vld [vmem:[%s1 + $0xd8] sm:$0xf]
  %v103 = vld [vmem:[%s1 + $0xdc] sm:$0xf]
  %v104 = vld [vmem:[%s1 + $0xe0] sm:$0xf]
  %v105 = vld [vmem:[%s1 + $0xe4] sm:$0xf]
  %v106 = vld [vmem:[%s1 + $0xe8] sm:$0xf]
  %v107 = vld [vmem:[%s1 + $0xec] sm:$0xf]
  %v108 = vld [vmem:[%s1 + $0xf0] sm:$0xf]
  %v109 = vld [vmem:[%s1 + $0xf4] sm:$0xf]
  %v110 = vld [vmem:[%s1 + $0xf8] sm:$0xf]
  %v111 = vld [vmem:[%s1 + $0xfc] sm:$0xf]
  %v112 = vld [vmem:[%s1 + $0x100] sm:$0xf]
  %v113 = vld [vmem:[%s1 + $0x104] sm:$0xf]
  %v114 = vld [vmem:[%s1 + $0x108] sm:$0xf]
  %v115 = vld [vmem:[%s1 + $0x10c] sm:$0xf]
  %v116 = vld [vmem:[%s1 + $0x110] sm:$0xf]
  %v117 = vld [vmem:[%s1 + $0x114] sm:$0xf]
  %v118 = vld [vmem:[%s1 + $0x118] sm:$0xf]
  %v119 = vld [vmem:[%s1 + $0x11c] sm:$0xf]
  %v120 = vld [vmem:[%s2] sm:$0x1]
  %v122 = vlaneseq
  %v123 = vshrl.u32 %v122, 7
  %v124 = vsub.s32 0, %v123
  %v125 = vrot.slane %v120, %v124
  %v154 = vunpack.c.l.b16 %v21
  %v155 = vunpack.c.h.b16 %v21
  %v156 = vunpack.c.l.b16 %v22
  %v157 = vunpack.c.h.b16 %v22
  %v158 = vunpack.c.l.b16 %v23
  %v159 = vunpack.c.l.b16 %v24
  %v160 = vunpack.c.h.b16 %v24
  %v161 = vunpack.c.l.b16 %v25
  %v162 = vunpack.c.h.b16 %v25
  %v163 = vunpack.c.l.b16 %v26
  %v164 = vunpack.c.l.b16 %v27
  %v165 = vunpack.c.h.b16 %v27
  %v166 = vunpack.c.l.b16 %v28
  %v167 = vunpack.c.h.b16 %v28
  %v168 = vunpack.c.l.b16 %v29
  %v169 = vunpack.c.l.b16 %v30
  %v170 = vunpack.c.h.b16 %v30
  %v171 = vunpack.c.l.b16 %v31
  %v172 = vunpack.c.h.b16 %v31
  %v173 = vunpack.c.l.b16 %v32
  %v174 = vunpack.c.l.b16 %v33
  %v175 = vunpack.c.h.b16 %v33
  %v176 = vunpack.c.l.b16 %v34
  %v177 = vunpack.c.h.b16 %v34
  %v178 = vunpack.c.l.b16 %v35
  %v179 = vunpack.c.l.b16 %v36
  %v180 = vunpack.c.h.b16 %v36
  %v181 = vunpack.c.l.b16 %v37
  %v182 = vunpack.c.h.b16 %v37
  %v183 = vunpack.c.l.b16 %v38
  %v184 = vunpack.c.l.b16 %v39
  %v185 = vunpack.c.h.b16 %v39
  %v186 = vunpack.c.l.b16 %v40
  %v187 = vunpack.c.h.b16 %v40
  %v188 = vunpack.c.l.b16 %v41
  %v189 = vunpack.c.l.b16 %v42
  %v190 = vunpack.c.h.b16 %v42
  %v191 = vunpack.c.l.b16 %v43
  %v192 = vunpack.c.h.b16 %v43
  %v193 = vunpack.c.l.b16 %v44
  %v194 = vunpack.c.l.b16 %v45
  %v195 = vunpack.c.h.b16 %v45
  %v196 = vunpack.c.l.b16 %v46
  %v197 = vunpack.c.h.b16 %v46
  %v198 = vunpack.c.l.b16 %v47
  %v199 = vpack.c.b16 %v159, %v154
  %v200 = vpack.c.b16 %v160, %v155
  %v201 = vpack.c.b16 %v161, %v156
  %v202 = vpack.c.b16 %v162, %v157
  %v203 = vpack.c.b16 %v163, %v158
  %v204 = vpack.c.b16 %v169, %v164
  %v205 = vpack.c.b16 %v170, %v165
  %v206 = vpack.c.b16 %v171, %v166
  %v207 = vpack.c.b16 %v172, %v167
  %v208 = vpack.c.b16 %v173, %v168
  %v209 = vpack.c.b16 %v179, %v174
  %v210 = vpack.c.b16 %v180, %v175
  %v211 = vpack.c.b16 %v181, %v176
  %v212 = vpack.c.b16 %v182, %v177
  %v213 = vpack.c.b16 %v183, %v178
  %v214 = vpack.c.b16 %v189, %v184
  %v215 = vpack.c.b16 %v190, %v185
  %v216 = vpack.c.b16 %v191, %v186
  %v217 = vpack.c.b16 %v192, %v187
  %v218 = vpack.c.b16 %v193, %v188
  %v219 = vpack.c.b16 %v194, %v194
  %v220 = vpack.c.b16 %v195, %v195
  %v221 = vpack.c.b16 %v196, %v196
  %v222 = vpack.c.b16 %v197, %v197
  %v223 = vpack.c.b16 %v198, %v198
  %v316 = vunpack.c.l.b16 %v48
  %v317 = vunpack.c.l.b16 %v49
  %v318 = vunpack.c.l.b16 %v50
  %v319 = vunpack.c.l.b16 %v51
  %v320 = vunpack.c.l.b16 %v52
  %v321 = vunpack.c.l.b16 %v53
  %v322 = vunpack.c.l.b16 %v54
  %v323 = vunpack.c.l.b16 %v55
  %v324 = vunpack.c.l.b16 %v56
  %v325 = vunpack.c.l.b16 %v57
  %v326 = vunpack.c.l.b16 %v58
  %v327 = vunpack.c.l.b16 %v59
  %v328 = vunpack.c.l.b16 %v60
  %v329 = vunpack.c.l.b16 %v61
  %v330 = vunpack.c.l.b16 %v62
  %v331 = vunpack.c.l.b16 %v63
  %v332 = vunpack.c.l.b16 %v64
  %v333 = vunpack.c.l.b16 %v65
  %v334 = vunpack.c.l.b16 %v66
  %v335 = vunpack.c.l.b16 %v67
  %v336 = vunpack.c.l.b16 %v68
  %v337 = vunpack.c.l.b16 %v69
  %v338 = vunpack.c.l.b16 %v70
  %v339 = vunpack.c.l.b16 %v71
  %v340 = vunpack.c.l.b16 %v72
  %v341 = vunpack.c.l.b16 %v73
  %v342 = vunpack.c.l.b16 %v74
  %v343 = vunpack.c.l.b16 %v75
  %v344 = vunpack.c.l.b16 %v76
  %v345 = vunpack.c.l.b16 %v77
  %v346 = vunpack.c.l.b16 %v78
  %v347 = vunpack.c.l.b16 %v79
  %v348 = vunpack.c.l.b16 %v80
  %v349 = vunpack.c.l.b16 %v81
  %v350 = vunpack.c.l.b16 %v82
  %v351 = vunpack.c.l.b16 %v83
  %v352 = vunpack.c.l.b16 %v84
  %v353 = vunpack.c.l.b16 %v85
  %v354 = vunpack.c.l.b16 %v86
  %v355 = vunpack.c.l.b16 %v87
  %v356 = vunpack.c.l.b16 %v88
  %v357 = vunpack.c.l.b16 %v89
  %v358 = vunpack.c.l.b16 %v90
  %v359 = vunpack.c.l.b16 %v91
  %v360 = vunpack.c.l.b16 %v92
  %v361 = vunpack.c.l.b16 %v93
  %v362 = vunpack.c.l.b16 %v94
  %v363 = vunpack.c.l.b16 %v95
  %v364 = vunpack.c.l.b16 %v96
  %v365 = vunpack.c.l.b16 %v97
  %v366 = vunpack.c.l.b16 %v98
  %v367 = vunpack.c.l.b16 %v99
  %v368 = vunpack.c.l.b16 %v100
  %v369 = vunpack.c.l.b16 %v101
  %v370 = vunpack.c.l.b16 %v102
  %v371 = vunpack.c.l.b16 %v103
  %v372 = vunpack.c.l.b16 %v104
  %v373 = vunpack.c.l.b16 %v105
  %v374 = vunpack.c.l.b16 %v106
  %v375 = vunpack.c.l.b16 %v107
  %v376 = vunpack.c.l.b16 %v108
  %v377 = vunpack.c.l.b16 %v109
  %v378 = vunpack.c.l.b16 %v110
  %v379 = vunpack.c.l.b16 %v111
  %v380 = vunpack.c.l.b16 %v112
  %v381 = vunpack.c.l.b16 %v113
  %v382 = vunpack.c.l.b16 %v114
  %v383 = vunpack.c.l.b16 %v115
  %v384 = vunpack.c.l.b16 %v116
  %v385 = vunpack.c.l.b16 %v117
  %v386 = vunpack.c.l.b16 %v118
  %v387 = vunpack.c.l.b16 %v119
  %v388 = vpack.c.b16 %v317, %v316
  %v389 = vpack.c.b16 %v319, %v318
  %v390 = vpack.c.b16 %v321, %v320
  %v391 = vpack.c.b16 %v323, %v322
  %v392 = vpack.c.b16 %v325, %v324
  %v393 = vpack.c.b16 %v327, %v326
  %v394 = vpack.c.b16 %v329, %v328
  %v395 = vpack.c.b16 %v331, %v330
  %v396 = vpack.c.b16 %v333, %v332
  %v397 = vpack.c.b16 %v335, %v334
  %v398 = vpack.c.b16 %v337, %v336
  %v399 = vpack.c.b16 %v339, %v338
  %v400 = vpack.c.b16 %v341, %v340
  %v401 = vpack.c.b16 %v343, %v342
  %v402 = vpack.c.b16 %v345, %v344
  %v403 = vpack.c.b16 %v347, %v346
  %v404 = vpack.c.b16 %v349, %v348
  %v405 = vpack.c.b16 %v351, %v350
  %v406 = vpack.c.b16 %v353, %v352
  %v407 = vpack.c.b16 %v355, %v354
  %v408 = vpack.c.b16 %v357, %v356
  %v409 = vpack.c.b16 %v359, %v358
  %v410 = vpack.c.b16 %v361, %v360
  %v411 = vpack.c.b16 %v363, %v362
  %v412 = vpack.c.b16 %v365, %v364
  %v413 = vpack.c.b16 %v367, %v366
  %v414 = vpack.c.b16 %v369, %v368
  %v415 = vpack.c.b16 %v371, %v370
  %v416 = vpack.c.b16 %v373, %v372
  %v417 = vpack.c.b16 %v375, %v374
  %v418 = vpack.c.b16 %v377, %v376
  %v419 = vpack.c.b16 %v379, %v378
  %v420 = vpack.c.b16 %v381, %v380
  %v421 = vpack.c.b16 %v383, %v382
  %v422 = vpack.c.b16 %v385, %v384
  %v423 = vpack.c.b16 %v387, %v386
  %vm460 = vcmask 523264
  %v462 = vsel %vm460, %v203, 0
  %v465 = vsel %vm460, %v208, 0
  %v468 = vsel %vm460, %v213, 0
  %v471 = vsel %vm460, %v218, 0
  %v474 = vsel %vm460, %v223, 0
  %476 = vmatprep.subr.bf16.mxu0 0
  %477 = vmatpush1.bf16.msra.mxu0 %v388
  %478 = vmatprep.subr.bf16.mxu0 0
  %479 = vmatpush1.bf16.msra.mxu0 %v389
  %480 = vmatprep.subr.bf16.mxu0 0
  %481 = vmatpush1.bf16.msra.mxu0 %v390
  %482 = vmatprep.subr.bf16.mxu0 0
  %483 = vmatpush1.bf16.msra.mxu0 %v391
  %484 = vmatprep.subr.bf16.mxu0 0
  %485 = vmatpush1.bf16.msra.mxu0 %v392
  %486 = vmatprep.subr.bf16.mxu0 0
  %487 = vmatpush1.bf16.msra.mxu0 %v393
  %488 = vmatprep.subr.bf16.mxu0 0
  %489 = vmatpush1.bf16.msra.mxu0 %v394
  %490 = vmatprep.subr.bf16.mxu0 0
  %491 = vmatpush1.bf16.msra.mxu0 %v395
  %492 = vmatprep.subr.bf16.mxu0 0
  %493 = vmatpush1.bf16.msra.mxu0 %v396
  %494 = vmatprep.subr.bf16.mxu0 0
  %495 = vmatpush1.bf16.msra.mxu0 %v397
  %496 = vmatprep.subr.bf16.mxu0 0
  %497 = vmatpush1.bf16.msra.mxu0 %v398
  %498 = vmatprep.subr.bf16.mxu0 0
  %499 = vmatpush1.bf16.msra.mxu0 %v399
  %500 = vmatprep.subr.bf16.mxu0 0
  %501 = vmatpush1.bf16.msra.mxu0 %v400
  %502 = vmatprep.subr.bf16.mxu0 0
  %503 = vmatpush1.bf16.msra.mxu0 %v401
  %504 = vmatprep.subr.bf16.mxu0 0
  %505 = vmatpush1.bf16.msra.mxu0 %v402
  %506 = vmatprep.subr.bf16.mxu0 0
  %507 = vmatpush1.bf16.msra.mxu0 %v403
  %508 = vmatprep.mubr.bf16.mxu0 %v200
  %509 = vmatmul.mubr.bf16.gmra.mrb[0].mxu0 %v199
  %v510 = vpop.f32.mrb[0].mxu0
  %v511 = vadd.f32 %v125, %v510
  %v512 = vpop.f32.mrb[0].mxu0
  %v513 = vpop.f32.mrb[0].mxu0
  %v514 = vadd.f32 %v125, %v513
  %v515 = vpop.f32.mrb[0].mxu0
  %516 = vmatprep.mubr.bf16.mxu0 %v205
  %517 = vmatmul.mubr.bf16.gmra.mrb[0].mxu0 %v204
  %v518 = vpop.f32.mrb[0].mxu0
  %v519 = vadd.f32 %v125, %v518
  %v520 = vpop.f32.mrb[0].mxu0
  %v521 = vpop.f32.mrb[0].mxu0
  %v522 = vadd.f32 %v125, %v521
  %v523 = vpop.f32.mrb[0].mxu0
  %524 = vmatprep.mubr.bf16.mxu0 %v210
  %525 = vmatmul.mubr.bf16.gmra.mrb[0].mxu0 %v209
  %v526 = vpop.f32.mrb[0].mxu0
  %v527 = vadd.f32 %v125, %v526
  %v528 = vpop.f32.mrb[0].mxu0
  %v529 = vpop.f32.mrb[0].mxu0
  %v530 = vadd.f32 %v125, %v529
  %v531 = vpop.f32.mrb[0].mxu0
  %532 = vmatprep.mubr.bf16.mxu0 %v215
  %533 = vmatmul.mubr.bf16.gmra.mrb[0].mxu0 %v214
  %v534 = vpop.f32.mrb[0].mxu0
  %v535 = vadd.f32 %v125, %v534
  %v536 = vpop.f32.mrb[0].mxu0
  %v537 = vpop.f32.mrb[0].mxu0
  %v538 = vadd.f32 %v125, %v537
  %v539 = vpop.f32.mrb[0].mxu0
  %540 = vmatprep.mubr.bf16.mxu0 %v220
  %541 = vmatmul.mubr.bf16.gmra.mrb[0].mxu0 %v219
  %v542 = vpop.f32.mrb[0].mxu0
  %v543 = vadd.f32 %v125, %v542
  %v544 = vpop.f32.mrb[0].mxu0
  %v545 = vpop.f32.mrb[0].mxu0
  %v546 = vpop.f32.mrb[0].mxu0
  %547 = vdwg.mxu0
  %548 = vmatprep.subr.bf16.mxu0 0
  %549 = vmatpush1.bf16.msra.mxu0 %v404
  %550 = vmatprep.subr.bf16.mxu0 0
  %551 = vmatpush1.bf16.msra.mxu0 %v405
  %552 = vmatprep.subr.bf16.mxu0 0
  %553 = vmatpush1.bf16.msra.mxu0 %v406
  %554 = vmatprep.subr.bf16.mxu0 0
  %555 = vmatpush1.bf16.msra.mxu0 %v407
  %556 = vmatprep.subr.bf16.mxu0 0
  %557 = vmatpush1.bf16.msra.mxu0 %v408
  %558 = vmatprep.subr.bf16.mxu0 0
  %559 = vmatpush1.bf16.msra.mxu0 %v409
  %560 = vmatprep.subr.bf16.mxu0 0
  %561 = vmatpush1.bf16.msra.mxu0 %v410
  %562 = vmatprep.subr.bf16.mxu0 0
  %563 = vmatpush1.bf16.msra.mxu0 %v411
  %564 = vmatprep.subr.bf16.mxu0 0
  %565 = vmatpush1.bf16.msra.mxu0 %v412
  %566 = vmatprep.subr.bf16.mxu0 0
  %567 = vmatpush1.bf16.msra.mxu0 %v413
  %568 = vmatprep.subr.bf16.mxu0 0
  %569 = vmatpush1.bf16.msra.mxu0 %v414
  %570 = vmatprep.subr.bf16.mxu0 0
  %571 = vmatpush1.bf16.msra.mxu0 %v415
  %572 = vmatprep.subr.bf16.mxu0 0
  %573 = vmatpush1.bf16.msra.mxu0 %v416
  %574 = vmatprep.subr.bf16.mxu0 0
  %575 = vmatpush1.bf16.msra.mxu0 %v417
  %576 = vmatprep.subr.bf16.mxu0 0
  %577 = vmatpush1.bf16.msra.mxu0 %v418
  %578 = vmatprep.subr.bf16.mxu0 0
  %579 = vmatpush1.bf16.msra.mxu0 %v419
  %580 = vmatprep.mubr.bf16.mxu0 %v202
  %581 = vmatmul.mubr.bf16.gmra.mrb[0].mxu0 %v201
  %v582 = vpop.f32.mrb[0].mxu0
  %v583 = vadd.f32 %v511, %v582
  %v584 = vpop.f32.mrb[0].mxu0
  %v585 = vpop.f32.mrb[0].mxu0
  %v586 = vadd.f32 %v514, %v585
  %v587 = vpop.f32.mrb[0].mxu0
  %588 = vmatprep.mubr.bf16.mxu0 %v207
  %589 = vmatmul.mubr.bf16.gmra.mrb[0].mxu0 %v206
  %v590 = vpop.f32.mrb[0].mxu0
  %v591 = vadd.f32 %v519, %v590
  %v592 = vpop.f32.mrb[0].mxu0
  %v593 = vpop.f32.mrb[0].mxu0
  %v594 = vadd.f32 %v522, %v593
  %v595 = vpop.f32.mrb[0].mxu0
  %596 = vmatprep.mubr.bf16.mxu0 %v212
  %597 = vmatmul.mubr.bf16.gmra.mrb[0].mxu0 %v211
  %v598 = vpop.f32.mrb[0].mxu0
  %v599 = vadd.f32 %v527, %v598
  %v600 = vpop.f32.mrb[0].mxu0
  %v601 = vpop.f32.mrb[0].mxu0
  %v602 = vadd.f32 %v530, %v601
  %v603 = vpop.f32.mrb[0].mxu0
  %604 = vmatprep.mubr.bf16.mxu0 %v217
  %605 = vmatmul.mubr.bf16.gmra.mrb[0].mxu0 %v216
  %v606 = vpop.f32.mrb[0].mxu0
  %v607 = vadd.f32 %v535, %v606
  %v608 = vpop.f32.mrb[0].mxu0
  %v609 = vpop.f32.mrb[0].mxu0
  %v610 = vadd.f32 %v538, %v609
  %v611 = vpop.f32.mrb[0].mxu0
  %612 = vmatprep.mubr.bf16.mxu0 %v222
  %613 = vmatmul.mubr.bf16.gmra.mrb[0].mxu0 %v221
  %v614 = vpop.f32.mrb[0].mxu0
  %v615 = vadd.f32 %v543, %v614
  %v616 = vpop.f32.mrb[0].mxu0
  %v617 = vpop.f32.mrb[0].mxu0
  %v618 = vpop.f32.mrb[0].mxu0
  %619 = vdwg.mxu0
  %620 = vmatprep.subr.bf16.mxu0 0
  %621 = vmatpush1.bf16.msra.mxu0 %v420
  %622 = vmatprep.subr.bf16.mxu0 0
  %623 = vmatpush1.bf16.msra.mxu0 %v421
  %624 = vmatprep.subr.bf16.mxu0 0
  %625 = vmatpush1.bf16.msra.mxu0 %v422
  %626 = vmatprep.subr.bf16.mxu0 0
  %627 = vmatpush1.bf16.msra.mxu0 %v423
  %628 = vmatprep.subr.bf16.mxu0 0
  %629 = vmatpush1.bf16.msra.mxu0 0
  %630 = vmatprep.subr.bf16.mxu0 0
  %631 = vmatpush1.bf16.msra.mxu0 0
  %632 = vmatprep.subr.bf16.mxu0 0
  %633 = vmatpush1.bf16.msra.mxu0 0
  %634 = vmatprep.subr.bf16.mxu0 0
  %635 = vmatpush1.bf16.msra.mxu0 0
  %636 = vmatprep.subr.bf16.mxu0 0
  %637 = vmatpush1.bf16.msra.mxu0 0
  %638 = vmatprep.subr.bf16.mxu0 0
  %639 = vmatpush1.bf16.msra.mxu0 0
  %640 = vmatprep.subr.bf16.mxu0 0
  %641 = vmatpush1.bf16.msra.mxu0 0
  %642 = vmatprep.subr.bf16.mxu0 0
  %643 = vmatpush1.bf16.msra.mxu0 0
  %644 = vmatprep.subr.bf16.mxu0 0
  %645 = vmatpush1.bf16.msra.mxu0 0
  %646 = vmatprep.subr.bf16.mxu0 0
  %647 = vmatpush1.bf16.msra.mxu0 0
  %648 = vmatprep.subr.bf16.mxu0 0
  %649 = vmatpush1.bf16.msra.mxu0 0
  %650 = vmatprep.subr.bf16.mxu0 0
  %651 = vmatpush1.bf16.msra.mxu0 0
  %652 = vmatprep.mubr.bf16.mxu0 0
  %653 = vmatmul.mubr.bf16.gmra.mrb[0].mxu0 %v462
  %v654 = vpop.f32.mrb[0].mxu0
  %v655 = vadd.f32 %v583, %v654
  %v656 = vpop.f32.mrb[0].mxu0
  %v657 = vpop.f32.mrb[0].mxu0
  %v658 = vadd.f32 %v586, %v657
  %v659 = vpop.f32.mrb[0].mxu0
  %660 = vmatprep.mubr.bf16.mxu0 0
  %661 = vmatmul.mubr.bf16.gmra.mrb[0].mxu0 %v465
  %v662 = vpop.f32.mrb[0].mxu0
  %v663 = vadd.f32 %v591, %v662
  %v664 = vpop.f32.mrb[0].mxu0
  %v665 = vpop.f32.mrb[0].mxu0
  %v666 = vadd.f32 %v594, %v665
  %v667 = vpop.f32.mrb[0].mxu0
  %668 = vmatprep.mubr.bf16.mxu0 0
  %669 = vmatmul.mubr.bf16.gmra.mrb[0].mxu0 %v468
  %v670 = vpop.f32.mrb[0].mxu0
  %v671 = vadd.f32 %v599, %v670
  %v672 = vpop.f32.mrb[0].mxu0
  %v673 = vpop.f32.mrb[0].mxu0
  %v674 = vadd.f32 %v602, %v673
  %v675 = vpop.f32.mrb[0].mxu0
  %676 = vmatprep.mubr.bf16.mxu0 0
  %677 = vmatmul.mubr.bf16.gmra.mrb[0].mxu0 %v471
  %v678 = vpop.f32.mrb[0].mxu0
  %v679 = vadd.f32 %v607, %v678
  %v680 = vpop.f32.mrb[0].mxu0
  %v681 = vpop.f32.mrb[0].mxu0
  %v682 = vadd.f32 %v610, %v681
  %v683 = vpop.f32.mrb[0].mxu0
  %684 = vmatprep.mubr.bf16.mxu0 0
  %685 = vmatmul.mubr.bf16.gmra.mrb[0].mxu0 %v474
  %v686 = vpop.f32.mrb[0].mxu0
  %v687 = vadd.f32 %v615, %v686
  %v688 = vpop.f32.mrb[0].mxu0
  %v689 = vpop.f32.mrb[0].mxu0
  %v690 = vpop.f32.mrb[0].mxu0
  %691 = vdwg.mxu0
  %v692 = vmax.f32 %v655, 0.0
  %v693 = vmax.f32 %v658, 0.0
  %v694 = vmax.f32 %v663, 0.0
  %v695 = vmax.f32 %v666, 0.0
  %v696 = vmax.f32 %v671, 0.0
  %v697 = vmax.f32 %v674, 0.0
  %v698 = vmax.f32 %v679, 0.0
  %v699 = vmax.f32 %v682, 0.0
  %v700 = vmax.f32 %v687, 0.0
  %v701 = vld [vmem:[%s3] sm:$0x1]
  %v702 = vld [vmem:[%s4] sm:$0x1]
  %v703 = vsel %vm460, %v692, 0.0
  %v704 = vsel %vm460, %v693, 0.0
  %v705 = vadd.f32 %v703, %v704
  %v706 = vsel %vm460, %v694, 0.0
  %v707 = vadd.f32 %v705, %v706
  %v708 = vsel %vm460, %v695, 0.0
  %v709 = vadd.f32 %v707, %v708
  %v710 = vsel %vm460, %v696, 0.0
  %v711 = vadd.f32 %v709, %v710
  %v712 = vsel %vm460, %v697, 0.0
  %v713 = vadd.f32 %v711, %v712
  %v714 = vsel %vm460, %v698, 0.0
  %v715 = vadd.f32 %v713, %v714
  %v716 = vsel %vm460, %v699, 0.0
  %v717 = vadd.f32 %v715, %v716
  %v718 = vsel %vm460, %v700, 0.0
  %v719 = vadd.f32 %v717, %v718
  %v720 = vrot.slane %v719, 4
  %v721 = vadd.f32 %v719, %v720
  %v722 = vrot.slane %v721, 2
  %v723 = vadd.f32 %v721, %v722
  %v724 = vrot.slane %v723, 1
  %v725 = vadd.f32 %v723, %v724
  %v726 = vmul.f32 %v692, %v692
  %v727 = vmul.f32 %v693, %v693
  %v728 = vmul.f32 %v694, %v694
  %v729 = vmul.f32 %v695, %v695
  %v730 = vmul.f32 %v696, %v696
  %v731 = vmul.f32 %v697, %v697
  %v732 = vmul.f32 %v698, %v698
  %v733 = vmul.f32 %v699, %v699
  %v734 = vmul.f32 %v700, %v700
  %v735 = vsel %vm460, %v726, 0.0
  %v736 = vsel %vm460, %v727, 0.0
  %v737 = vadd.f32 %v735, %v736
  %v738 = vsel %vm460, %v728, 0.0
  %v739 = vadd.f32 %v737, %v738
  %v740 = vsel %vm460, %v729, 0.0
  %v741 = vadd.f32 %v739, %v740
  %v742 = vsel %vm460, %v730, 0.0
  %v743 = vadd.f32 %v741, %v742
  %v744 = vsel %vm460, %v731, 0.0
  %v745 = vadd.f32 %v743, %v744
  %v746 = vsel %vm460, %v732, 0.0
  %v747 = vadd.f32 %v745, %v746
  %v748 = vsel %vm460, %v733, 0.0
  %v749 = vadd.f32 %v747, %v748
  %v750 = vsel %vm460, %v734, 0.0
  %v751 = vadd.f32 %v749, %v750
  %v752 = vrot.slane %v751, 4
  %v753 = vadd.f32 %v751, %v752
  %v754 = vrot.slane %v753, 2
  %v755 = vadd.f32 %v753, %v754
  %v756 = vrot.slane %v755, 1
  %v757 = vadd.f32 %v755, %v756
  %v758 = vrcp.pop 72.0
  %v759 = vmul.f32 %v725, %v758
  %v760 = vmul.f32 %v757, %v758
  %v761 = vmul.f32 %v759, %v759
  %v762 = vsub.f32 %v760, %v761
  %v763 = vsub.f32 %v692, %v759
  %v764 = vsub.f32 %v693, %v759
  %v765 = vsub.f32 %v694, %v759
  %v766 = vsub.f32 %v695, %v759
  %v767 = vsub.f32 %v696, %v759
  %v768 = vsub.f32 %v697, %v759
  %v769 = vsub.f32 %v698, %v759
  %v770 = vsub.f32 %v699, %v759
  %v771 = vsub.f32 %v700, %v759
  %v772 = vadd.f32 %v762, 1e-05
  %v773 = vrsqrt.pop %v772
  %v774 = vmul.f32 %v763, %v773
  %v775 = vmul.f32 %v764, %v773
  %v776 = vmul.f32 %v765, %v773
  %v777 = vmul.f32 %v766, %v773
  %v778 = vmul.f32 %v767, %v773
  %v779 = vmul.f32 %v768, %v773
  %v780 = vmul.f32 %v769, %v773
  %v781 = vmul.f32 %v770, %v773
  %v782 = vmul.f32 %v771, %v773
  %v784 = vlaneseq
  %v785 = vshrl.u32 %v784, 7
  %v786 = vsub.s32 0, %v785
  %v787 = vrot.slane %v701, %v786
  %v789 = vmul.f32 %v774, %v787
  %v790 = vmul.f32 %v775, %v787
  %v791 = vmul.f32 %v776, %v787
  %v792 = vmul.f32 %v777, %v787
  %v793 = vmul.f32 %v778, %v787
  %v794 = vmul.f32 %v779, %v787
  %v795 = vmul.f32 %v780, %v787
  %v796 = vmul.f32 %v781, %v787
  %v797 = vmul.f32 %v782, %v787
  %v799 = vlaneseq
  %v800 = vshrl.u32 %v799, 7
  %v801 = vsub.s32 0, %v800
  %v802 = vrot.slane %v702, %v801
  %v804 = vadd.f32 %v789, %v802
  %v805 = vadd.f32 %v790, %v802
  %v806 = vadd.f32 %v791, %v802
  %v807 = vadd.f32 %v792, %v802
  %v808 = vadd.f32 %v793, %v802
  %v809 = vadd.f32 %v794, %v802
  %v810 = vadd.f32 %v795, %v802
  %v811 = vadd.f32 %v796, %v802
  %v812 = vadd.f32 %v797, %v802
  %813 = vst.msk [vmem:[%s5] sm:$0xff] %vm460, %v804
  %814 = vst.msk [vmem:[%s5 + $0x8] sm:$0xff] %vm460, %v805
  %815 = vst.msk [vmem:[%s5 + $0x10] sm:$0xff] %vm460, %v806
  %816 = vst.msk [vmem:[%s5 + $0x18] sm:$0xff] %vm460, %v807
  %817 = vst.msk [vmem:[%s5 + $0x20] sm:$0xff] %vm460, %v808
  %818 = vst.msk [vmem:[%s5 + $0x28] sm:$0xff] %vm460, %v809
  %819 = vst.msk [vmem:[%s5 + $0x30] sm:$0xff] %vm460, %v810
  %820 = vst.msk [vmem:[%s5 + $0x38] sm:$0xff] %vm460, %v811
  %821 = vst.msk [vmem:[%s5 + $0x40] sm:$0xff] %vm460, %v812
  // Predicated region
  $region22: #{mnistnet_forward.11} parent=0 // pred_check
    _
  $region23: #{mnistnet_forward.11} parent=0 // pred_check_branch
    %823 = sbr.rel (0) target = $region25
  $region24: #{mnistnet_forward.11} parent=0 // pred_region
    _
  $region25: #{mnistnet_forward.11} parent=0 // pred_fallthru
    _
  // Predicated region
  $region26: #{mnistnet_forward.11} parent=0 // pred_check
    _
  $region27: #{mnistnet_forward.11} parent=0 // pred_check_branch
    %825 = sbr.rel (0) target = $region29
  $region28: #{mnistnet_forward.11} parent=0 // pred_region
    _
  $region29: #{mnistnet_forward.11} parent=0 // pred_fallthru
    _

// kernel: mnistnet_forward.12
$region0: #{mnistnet_forward.12}
  #allocation0 [shape = 'u32[]', space=smem, size = 0x4, offset = 0x4, fixed_abs, tag = 'smem constant byte address 0x4 - core index']
  #allocation1 [shape = 'u32[144,128]{1,0:T(1,128)}', space=vmem, size = 0x12000, scoped, tag = 'internal scratch']
  %s0 = inlined_call_operand.vmem [shape: f32[18,64], index: 0, kind: input, shape index: {}]
  %s1 = inlined_call_operand.vmem [shape: f32[18,64], index: 1, kind: input, shape index: {}]
  %s2 = inlined_call_operand.vmem [shape: f32[18,64], index: 2, kind: input, shape index: {}]
  %s3 = inlined_call_operand.vmem [shape: f32[18,64], index: 3, kind: input, shape index: {}]
  %s4 = inlined_call_operand.vmem [shape: f32[18,64], index: 4, kind: output, shape index: {}]
  %s5 = sld [smem:[#allocation0]]
  $region26: #{mnistnet_forward.12} parent=0
    _
  %s7 = ssub.s32 1, %s5
  %s8 = scalar_select 0, %s7, %s5
  // Predicated region
  $region2: #{mnistnet_forward.12} parent=0 // pred_check
    _
  $region3: #{mnistnet_forward.12} parent=0 // pred_check_branch
    %10 = sbr.rel (0) target = $region5
  $region4: #{mnistnet_forward.12} parent=0 // pred_region
    _
  $region5: #{mnistnet_forward.12} parent=0 // pred_fallthru
    _
  // Predicated region
  $region6: #{mnistnet_forward.12} parent=0 // pred_check
    _
  $region7: #{mnistnet_forward.12} parent=0 // pred_check_branch
    %12 = sbr.rel (0) target = $region9
  $region8: #{mnistnet_forward.12} parent=0 // pred_region
    _
  $region9: #{mnistnet_forward.12} parent=0 // pred_fallthru
    _
  // Predicated region
  $region10: #{mnistnet_forward.12} parent=0 // pred_check
    _
  $region11: #{mnistnet_forward.12} parent=0 // pred_check_branch
    %14 = sbr.rel (0) target = $region13
  $region12: #{mnistnet_forward.12} parent=0 // pred_region
    _
  $region13: #{mnistnet_forward.12} parent=0 // pred_fallthru
    _
  // Predicated region
  $region14: #{mnistnet_forward.12} parent=0 // pred_check
    _
  $region15: #{mnistnet_forward.12} parent=0 // pred_check_branch
    %16 = sbr.rel (0) target = $region17
  $region16: #{mnistnet_forward.12} parent=0 // pred_region
    _
  $region17: #{mnistnet_forward.12} parent=0 // pred_fallthru
    _
  %v17 = vld [vmem:[%s0] sm:$0xff]
  %v18 = vld [vmem:[%s0 + $0x8] sm:$0xff]
  %v19 = vld [vmem:[%s0 + $0x10] sm:$0x3]
  %v20 = vld [vmem:[%s1] sm:$0xff]
  %v21 = vld [vmem:[%s1 + $0x8] sm:$0xff]
  %v22 = vld [vmem:[%s1 + $0x10] sm:$0x3]
  %v23 = vmax.f32 %v17, %v20
  %v24 = vmax.f32 %v18, %v21
  %v25 = vmax.f32 %v19, %v22
  %v26 = vld [vmem:[%s2] sm:$0xff]
  %v27 = vld [vmem:[%s2 + $0x8] sm:$0xff]
  %v28 = vld [vmem:[%s2 + $0x10] sm:$0x3]
  %v29 = vld [vmem:[%s3] sm:$0xff]
  %v30 = vld [vmem:[%s3 + $0x8] sm:$0xff]
  %v31 = vld [vmem:[%s3 + $0x10] sm:$0x3]
  %v32 = vmax.f32 %v26, %v29
  %v33 = vmax.f32 %v27, %v30
  %v34 = vmax.f32 %v28, %v31
  %v35 = vmax.f32 %v23, %v32
  %v36 = vmax.f32 %v24, %v33
  %v37 = vmax.f32 %v25, %v34
  %vm38 = vcmask 523264
  %39 = vst.msk [vmem:[%s4] sm:$0xff] %vm38, %v35
  %40 = vst.msk [vmem:[%s4 + $0x8] sm:$0xff] %vm38, %v36
  %vm41 = vcmask 517120
  %42 = vst.msk [vmem:[%s4 + $0x10] sm:$0x3] %vm41, %v37
  // Predicated region
  $region18: #{mnistnet_forward.12} parent=0 // pred_check
    _
  $region19: #{mnistnet_forward.12} parent=0 // pred_check_branch
    %44 = sbr.rel (0) target = $region21
  $region20: #{mnistnet_forward.12} parent=0 // pred_region
    _
  $region21: #{mnistnet_forward.12} parent=0 // pred_fallthru
    _
  // Predicated region
  $region22: #{mnistnet_forward.12} parent=0 // pred_check
    _
  $region23: #{mnistnet_forward.12} parent=0 // pred_check_branch
    %46 = sbr.rel (0) target = $region25
  $region24: #{mnistnet_forward.12} parent=0 // pred_region
    _
  $region25: #{mnistnet_forward.12} parent=0 // pred_fallthru
    _

// kernel: mnistnet_forward.13
$region0: #{mnistnet_forward.13}
  #allocation0 [shape = 'u32[]', space=smem, size = 0x4, offset = 0x4, fixed_abs, tag = 'smem constant byte address 0x4 - core index']
  #allocation1 [shape = 'u32[144,128]{1,0:T(1,128)}', space=vmem, size = 0x12000, scoped, tag = 'internal scratch']
  %s0 = inlined_call_operand.vmem [shape: bf16[2,576], index: 0, kind: input, shape index: {}]
  %s1 = inlined_call_operand.vmem [shape: bf16[576,128], index: 1, kind: input, shape index: {}]
  %s2 = inlined_call_operand.vmem [shape: f32[1,128], index: 2, kind: input, shape index: {}]
  %s3 = inlined_call_operand.vmem [shape: f32[1,128], index: 3, kind: input, shape index: {}]
  %s4 = inlined_call_operand.vmem [shape: f32[1,128], index: 4, kind: input, shape index: {}]
  %s5 = inlined_call_operand.vmem [shape: bf16[128,128], index: 5, kind: input, shape index: {}]
  %s6 = inlined_call_operand.vmem [shape: f32[1,128], index: 6, kind: input, shape index: {}]
  %s7 = inlined_call_operand.vmem [shape: f32[1,128], index: 7, kind: input, shape index: {}]
  %s8 = inlined_call_operand.vmem [shape: f32[1,128], index: 8, kind: input, shape index: {}]
  %s9 = inlined_call_operand.vmem [shape: bf16[128,100], index: 9, kind: input, shape index: {}]
  %s10 = inlined_call_operand.vmem [shape: f32[1,100], index: 10, kind: input, shape index: {}]
  %s11 = inlined_call_operand.vmem [shape: bf16[100,10], index: 11, kind: input, shape index: {}]
  %s12 = inlined_call_operand.vmem [shape: f32[1,10], index: 12, kind: input, shape index: {}]
  %s13 = inlined_call_operand.hbm [shape: f32[2,10], index: 13, kind: output, shape index: {}]
  %s14 = sld [smem:[#allocation0]]
  $region62: #{mnistnet_forward.13} parent=0
    _
  %s16 = ssub.s32 1, %s14
  %s17 = scalar_select 0, %s16, %s14
  $region1: #{mnistnet_forward.13} parent=0
    #allocation2 [shape = 'u8[1024]{0}', space=vmem, size = 0x400, scoped, tag = 'output window, operand 0, single buffered']
    #allocation3 [shape = 's32[1]{0}', space=sflag, size = 0x4, scoped, tag = 'scoped memory for mnistnet_forward.13']
    %18 = vsyncpa [#allocation3], 0
    // Predicated region
    $region2: #{mnistnet_forward.13} parent=1 // pred_check
      _
    $region3: #{mnistnet_forward.13} parent=1 // pred_check_branch
      %20 = sbr.rel (0) target = $region5
    $region4: #{mnistnet_forward.13} parent=1 // pred_region
      _
    $region5: #{mnistnet_forward.13} parent=1 // pred_fallthru
      _
    // Predicated region
    $region6: #{mnistnet_forward.13} parent=1 // pred_check
      _
    $region7: #{mnistnet_forward.13} parent=1 // pred_check_branch
      %22 = sbr.rel (0) target = $region9
    $region8: #{mnistnet_forward.13} parent=1 // pred_region
      _
    $region9: #{mnistnet_forward.13} parent=1 // pred_fallthru
      _
    // Predicated region
    $region10: #{mnistnet_forward.13} parent=1 // pred_check
      _
    $region11: #{mnistnet_forward.13} parent=1 // pred_check_branch
      %24 = sbr.rel (0) target = $region13
    $region12: #{mnistnet_forward.13} parent=1 // pred_region
      _
    $region13: #{mnistnet_forward.13} parent=1 // pred_fallthru
      _
    // Predicated region
    $region14: #{mnistnet_forward.13} parent=1 // pred_check
      _
    $region15: #{mnistnet_forward.13} parent=1 // pred_check_branch
      %26 = sbr.rel (0) target = $region17
    $region16: #{mnistnet_forward.13} parent=1 // pred_region
      _
    $region17: #{mnistnet_forward.13} parent=1 // pred_fallthru
      _
    // Predicated region
    $region18: #{mnistnet_forward.13} parent=1 // pred_check
      _
    $region19: #{mnistnet_forward.13} parent=1 // pred_check_branch
      %28 = sbr.rel (0) target = $region21
    $region20: #{mnistnet_forward.13} parent=1 // pred_region
      _
    $region21: #{mnistnet_forward.13} parent=1 // pred_fallthru
      _
    // Predicated region
    $region22: #{mnistnet_forward.13} parent=1 // pred_check
      _
    $region23: #{mnistnet_forward.13} parent=1 // pred_check_branch
      %30 = sbr.rel (0) target = $region25
    $region24: #{mnistnet_forward.13} parent=1 // pred_region
      _
    $region25: #{mnistnet_forward.13} parent=1 // pred_fallthru
      _
    // Predicated region
    $region26: #{mnistnet_forward.13} parent=1 // pred_check
      _
    $region27: #{mnistnet_forward.13} parent=1 // pred_check_branch
      %32 = sbr.rel (0) target = $region29
    $region28: #{mnistnet_forward.13} parent=1 // pred_region
      _
    $region29: #{mnistnet_forward.13} parent=1 // pred_fallthru
      _
    // Predicated region
    $region30: #{mnistnet_forward.13} parent=1 // pred_check
      _
    $region31: #{mnistnet_forward.13} parent=1 // pred_check_branch
      %34 = sbr.rel (0) target = $region33
    $region32: #{mnistnet_forward.13} parent=1 // pred_region
      _
    $region33: #{mnistnet_forward.13} parent=1 // pred_fallthru
      _
    // Predicated region
    $region34: #{mnistnet_forward.13} parent=1 // pred_check
      _
    $region35: #{mnistnet_forward.13} parent=1 // pred_check_branch
      %36 = sbr.rel (0) target = $region37
    $region36: #{mnistnet_forward.13} parent=1 // pred_region
      _
    $region37: #{mnistnet_forward.13} parent=1 // pred_fallthru
      _
    // Predicated region
    $region38: #{mnistnet_forward.13} parent=1 // pred_check
      _
    $region39: #{mnistnet_forward.13} parent=1 // pred_check_branch
      %38 = sbr.rel (0) target = $region41
    $region40: #{mnistnet_forward.13} parent=1 // pred_region
      _
    $region41: #{mnistnet_forward.13} parent=1 // pred_fallthru
      _
    // Predicated region
    $region42: #{mnistnet_forward.13} parent=1 // pred_check
      _
    $region43: #{mnistnet_forward.13} parent=1 // pred_check_branch
      %40 = sbr.rel (0) target = $region45
    $region44: #{mnistnet_forward.13} parent=1 // pred_region
      _
    $region45: #{mnistnet_forward.13} parent=1 // pred_fallthru
      _
    // Predicated region
    $region46: #{mnistnet_forward.13} parent=1 // pred_check
      _
    $region47: #{mnistnet_forward.13} parent=1 // pred_check_branch
      %42 = sbr.rel (0) target = $region49
    $region48: #{mnistnet_forward.13} parent=1 // pred_region
      _
    $region49: #{mnistnet_forward.13} parent=1 // pred_fallthru
      _
    // Predicated region
    $region50: #{mnistnet_forward.13} parent=1 // pred_check
      _
    $region51: #{mnistnet_forward.13} parent=1 // pred_check_branch
      %44 = sbr.rel (0) target = $region53
    $region52: #{mnistnet_forward.13} parent=1 // pred_region
      _
    $region53: #{mnistnet_forward.13} parent=1 // pred_fallthru
      _
    %v46 = vld [vmem:[%s0] sm:$0x1f]
    %v47 = vld [vmem:[%s1] sm:$0xf]
    %v48 = vld [vmem:[%s1 + $0x4] sm:$0xf]
    %v49 = vld [vmem:[%s1 + $0x8] sm:$0xf]
    %v50 = vld [vmem:[%s1 + $0xc] sm:$0xf]
    %v51 = vld [vmem:[%s1 + $0x10] sm:$0xf]
    %v52 = vld [vmem:[%s1 + $0x14] sm:$0xf]
    %v53 = vld [vmem:[%s1 + $0x18] sm:$0xf]
    %v54 = vld [vmem:[%s1 + $0x1c] sm:$0xf]
    %v55 = vld [vmem:[%s1 + $0x20] sm:$0xf]
    %v56 = vld [vmem:[%s1 + $0x24] sm:$0xf]
    %v57 = vld [vmem:[%s1 + $0x28] sm:$0xf]
    %v58 = vld [vmem:[%s1 + $0x2c] sm:$0xf]
    %v59 = vld [vmem:[%s1 + $0x30] sm:$0xf]
    %v60 = vld [vmem:[%s1 + $0x34] sm:$0xf]
    %v61 = vld [vmem:[%s1 + $0x38] sm:$0xf]
    %v62 = vld [vmem:[%s1 + $0x3c] sm:$0xf]
    %v63 = vld [vmem:[%s1 + $0x40] sm:$0xf]
    %v64 = vld [vmem:[%s1 + $0x44] sm:$0xf]
    %v65 = vld [vmem:[%s1 + $0x48] sm:$0xf]
    %v66 = vld [vmem:[%s1 + $0x4c] sm:$0xf]
    %v67 = vld [vmem:[%s1 + $0x50] sm:$0xf]
    %v68 = vld [vmem:[%s1 + $0x54] sm:$0xf]
    %v69 = vld [vmem:[%s1 + $0x58] sm:$0xf]
    %v70 = vld [vmem:[%s1 + $0x5c] sm:$0xf]
    %v71 = vld [vmem:[%s1 + $0x60] sm:$0xf]
    %v72 = vld [vmem:[%s1 + $0x64] sm:$0xf]
    %v73 = vld [vmem:[%s1 + $0x68] sm:$0xf]
    %v74 = vld [vmem:[%s1 + $0x6c] sm:$0xf]
    %v75 = vld [vmem:[%s1 + $0x70] sm:$0xf]
    %v76 = vld [vmem:[%s1 + $0x74] sm:$0xf]
    %v77 = vld [vmem:[%s1 + $0x78] sm:$0xf]
    %v78 = vld [vmem:[%s1 + $0x7c] sm:$0xf]
    %v79 = vld [vmem:[%s1 + $0x80] sm:$0xf]
    %v80 = vld [vmem:[%s1 + $0x84] sm:$0xf]
    %v81 = vld [vmem:[%s1 + $0x88] sm:$0xf]
    %v82 = vld [vmem:[%s1 + $0x8c] sm:$0xf]
    %v83 = vld [vmem:[%s1 + $0x90] sm:$0xf]
    %v84 = vld [vmem:[%s1 + $0x94] sm:$0xf]
    %v85 = vld [vmem:[%s1 + $0x98] sm:$0xf]
    %v86 = vld [vmem:[%s1 + $0x9c] sm:$0xf]
    %v87 = vld [vmem:[%s1 + $0xa0] sm:$0xf]
    %v88 = vld [vmem:[%s1 + $0xa4] sm:$0xf]
    %v89 = vld [vmem:[%s1 + $0xa8] sm:$0xf]
    %v90 = vld [vmem:[%s1 + $0xac] sm:$0xf]
    %v91 = vld [vmem:[%s1 + $0xb0] sm:$0xf]
    %v92 = vld [vmem:[%s1 + $0xb4] sm:$0xf]
    %v93 = vld [vmem:[%s1 + $0xb8] sm:$0xf]
    %v94 = vld [vmem:[%s1 + $0xbc] sm:$0xf]
    %v95 = vld [vmem:[%s1 + $0xc0] sm:$0xf]
    %v96 = vld [vmem:[%s1 + $0xc4] sm:$0xf]
    %v97 = vld [vmem:[%s1 + $0xc8] sm:$0xf]
    %v98 = vld [vmem:[%s1 + $0xcc] sm:$0xf]
    %v99 = vld [vmem:[%s1 + $0xd0] sm:$0xf]
    %v100 = vld [vmem:[%s1 + $0xd4] sm:$0xf]
    %v101 = vld [vmem:[%s1 + $0xd8] sm:$0xf]
    %v102 = vld [vmem:[%s1 + $0xdc] sm:$0xf]
    %v103 = vld [vmem:[%s1 + $0xe0] sm:$0xf]
    %v104 = vld [vmem:[%s1 + $0xe4] sm:$0xf]
    %v105 = vld [vmem:[%s1 + $0xe8] sm:$0xf]
    %v106 = vld [vmem:[%s1 + $0xec] sm:$0xf]
    %v107 = vld [vmem:[%s1 + $0xf0] sm:$0xf]
    %v108 = vld [vmem:[%s1 + $0xf4] sm:$0xf]
    %v109 = vld [vmem:[%s1 + $0xf8] sm:$0xf]
    %v110 = vld [vmem:[%s1 + $0xfc] sm:$0xf]
    %v111 = vld [vmem:[%s1 + $0x100] sm:$0xf]
    %v112 = vld [vmem:[%s1 + $0x104] sm:$0xf]
    %v113 = vld [vmem:[%s1 + $0x108] sm:$0xf]
    %v114 = vld [vmem:[%s1 + $0x10c] sm:$0xf]
    %v115 = vld [vmem:[%s1 + $0x110] sm:$0xf]
    %v116 = vld [vmem:[%s1 + $0x114] sm:$0xf]
    %v117 = vld [vmem:[%s1 + $0x118] sm:$0xf]
    %v118 = vld [vmem:[%s1 + $0x11c] sm:$0xf]
    %v119 = vld [vmem:[%s2] sm:$0x1]
    %v121 = vlaneseq
    %v122 = vshrl.u32 %v121, 7
    %v123 = vsub.s32 0, %v122
    %v124 = vrot.slane %v119, %v123
    %v127 = vcombine.high %v46, %v46
    %v129 = vunpack.c.l.s4 1966171168
    %v130 = vunpack.c.0.s8 %v129
    %v131 = vlaneseq
    %v132 = vshrl.u32 %v131, 7
    %v133 = vsub.s32 %v130, %v132
    %v134 = vrot.slane %v46, %v133
    %v136 = vunpack.c.l.s4 1966171168
    %v137 = vunpack.c.0.s8 %v136
    %v138 = vlaneseq
    %v139 = vshrl.u32 %v138, 7
    %v140 = vsub.s32 %v137, %v139
    %v141 = vrot.slane %v127, %v140
    %v142 = vcombine.high %v134, %v134
    %v144 = vunpack.c.l.s4 1966171168
    %v145 = vunpack.c.0.s8 %v144
    %v146 = vlaneseq
    %v147 = vshrl.u32 %v146, 7
    %v148 = vsub.s32 %v145, %v147
    %v149 = vrot.slane %v134, %v148
    %v151 = vunpack.c.l.s4 1966171168
    %v152 = vunpack.c.0.s8 %v151
    %v153 = vlaneseq
    %v154 = vshrl.u32 %v153, 7
    %v155 = vsub.s32 %v152, %v154
    %v156 = vrot.slane %v141, %v155
    %v158 = vunpack.c.l.s4 1966171168
    %v159 = vunpack.c.0.s8 %v158
    %v160 = vlaneseq
    %v161 = vshrl.u32 %v160, 7
    %v162 = vsub.s32 %v159, %v161
    %v163 = vrot.slane %v142, %v162
    %v164 = vcombine.high %v149, %v149
    %v165 = vcombine.high %v163, %v163
    %v242 = vunpack.c.l.b16 %v47
    %v243 = vunpack.c.l.b16 %v48
    %v244 = vunpack.c.l.b16 %v49
    %v245 = vunpack.c.l.b16 %v50
    %v246 = vunpack.c.l.b16 %v51
    %v247 = vunpack.c.l.b16 %v52
    %v248 = vunpack.c.l.b16 %v53
    %v249 = vunpack.c.l.b16 %v54
    %v250 = vunpack.c.l.b16 %v55
    %v251 = vunpack.c.l.b16 %v56
    %v252 = vunpack.c.l.b16 %v57
    %v253 = vunpack.c.l.b16 %v58
    %v254 = vunpack.c.l.b16 %v59
    %v255 = vunpack.c.l.b16 %v60
    %v256 = vunpack.c.l.b16 %v61
    %v257 = vunpack.c.l.b16 %v62
    %v258 = vunpack.c.l.b16 %v63
    %v259 = vunpack.c.l.b16 %v64
    %v260 = vunpack.c.l.b16 %v65
    %v261 = vunpack.c.l.b16 %v66
    %v262 = vunpack.c.l.b16 %v67
    %v263 = vunpack.c.l.b16 %v68
    %v264 = vunpack.c.l.b16 %v69
    %v265 = vunpack.c.l.b16 %v70
    %v266 = vunpack.c.l.b16 %v71
    %v267 = vunpack.c.l.b16 %v72
    %v268 = vunpack.c.l.b16 %v73
    %v269 = vunpack.c.l.b16 %v74
    %v270 = vunpack.c.l.b16 %v75
    %v271 = vunpack.c.l.b16 %v76
    %v272 = vunpack.c.l.b16 %v77
    %v273 = vunpack.c.l.b16 %v78
    %v274 = vunpack.c.l.b16 %v79
    %v275 = vunpack.c.l.b16 %v80
    %v276 = vunpack.c.l.b16 %v81
    %v277 = vunpack.c.l.b16 %v82
    %v278 = vunpack.c.l.b16 %v83
    %v279 = vunpack.c.l.b16 %v84
    %v280 = vunpack.c.l.b16 %v85
    %v281 = vunpack.c.l.b16 %v86
    %v282 = vunpack.c.l.b16 %v87
    %v283 = vunpack.c.l.b16 %v88
    %v284 = vunpack.c.l.b16 %v89
    %v285 = vunpack.c.l.b16 %v90
    %v286 = vunpack.c.l.b16 %v91
    %v287 = vunpack.c.l.b16 %v92
    %v288 = vunpack.c.l.b16 %v93
    %v289 = vunpack.c.l.b16 %v94
    %v290 = vunpack.c.l.b16 %v95
    %v291 = vunpack.c.l.b16 %v96
    %v292 = vunpack.c.l.b16 %v97
    %v293 = vunpack.c.l.b16 %v98
    %v294 = vunpack.c.l.b16 %v99
    %v295 = vunpack.c.l.b16 %v100
    %v296 = vunpack.c.l.b16 %v101
    %v297 = vunpack.c.l.b16 %v102
    %v298 = vunpack.c.l.b16 %v103
    %v299 = vunpack.c.l.b16 %v104
    %v300 = vunpack.c.l.b16 %v105
    %v301 = vunpack.c.l.b16 %v106
    %v302 = vunpack.c.l.b16 %v107
    %v303 = vunpack.c.l.b16 %v108
    %v304 = vunpack.c.l.b16 %v109
    %v305 = vunpack.c.l.b16 %v110
    %v306 = vunpack.c.l.b16 %v111
    %v307 = vunpack.c.l.b16 %v112
    %v308 = vunpack.c.l.b16 %v113
    %v309 = vunpack.c.l.b16 %v114
    %v310 = vunpack.c.l.b16 %v115
    %v311 = vunpack.c.l.b16 %v116
    %v312 = vunpack.c.l.b16 %v117
    %v313 = vunpack.c.l.b16 %v118
    %v314 = vpack.c.b16 %v243, %v242
    %v315 = vpack.c.b16 %v245, %v244
    %v316 = vpack.c.b16 %v247, %v246
    %v317 = vpack.c.b16 %v249, %v248
    %v318 = vpack.c.b16 %v251, %v250
    %v319 = vpack.c.b16 %v253, %v252
    %v320 = vpack.c.b16 %v255, %v254
    %v321 = vpack.c.b16 %v257, %v256
    %v322 = vpack.c.b16 %v259, %v258
    %v323 = vpack.c.b16 %v261, %v260
    %v324 = vpack.c.b16 %v263, %v262
    %v325 = vpack.c.b16 %v265, %v264
    %v326 = vpack.c.b16 %v267, %v266
    %v327 = vpack.c.b16 %v269, %v268
    %v328 = vpack.c.b16 %v271, %v270
    %v329 = vpack.c.b16 %v273, %v272
    %v330 = vpack.c.b16 %v275, %v274
    %v331 = vpack.c.b16 %v277, %v276
    %v332 = vpack.c.b16 %v279, %v278
    %v333 = vpack.c.b16 %v281, %v280
    %v334 = vpack.c.b16 %v283, %v282
    %v335 = vpack.c.b16 %v285, %v284
    %v336 = vpack.c.b16 %v287, %v286
    %v337 = vpack.c.b16 %v289, %v288
    %v338 = vpack.c.b16 %v291, %v290
    %v339 = vpack.c.b16 %v293, %v292
    %v340 = vpack.c.b16 %v295, %v294
    %v341 = vpack.c.b16 %v297, %v296
    %v342 = vpack.c.b16 %v299, %v298
    %v343 = vpack.c.b16 %v301, %v300
    %v344 = vpack.c.b16 %v303, %v302
    %v345 = vpack.c.b16 %v305, %v304
    %v346 = vpack.c.b16 %v307, %v306
    %v347 = vpack.c.b16 %v309, %v308
    %v348 = vpack.c.b16 %v311, %v310
    %v349 = vpack.c.b16 %v313, %v312
    %vm386 = vcmask 523264
    %v388 = vsel %vm386, %v156, 0
    %390 = vmatprep.subr.bf16.mxu0 0
    %391 = vmatpush1.bf16.msra.mxu0 %v314
    %392 = vmatprep.subr.bf16.mxu0 0
    %393 = vmatpush1.bf16.msra.mxu0 %v315
    %394 = vmatprep.subr.bf16.mxu0 0
    %395 = vmatpush1.bf16.msra.mxu0 %v316
    %396 = vmatprep.subr.bf16.mxu0 0
    %397 = vmatpush1.bf16.msra.mxu0 %v317
    %398 = vmatprep.subr.bf16.mxu0 0
    %399 = vmatpush1.bf16.msra.mxu0 %v318
    %400 = vmatprep.subr.bf16.mxu0 0
    %401 = vmatpush1.bf16.msra.mxu0 %v319
    %402 = vmatprep.subr.bf16.mxu0 0
    %403 = vmatpush1.bf16.msra.mxu0 %v320
    %404 = vmatprep.subr.bf16.mxu0 0
    %405 = vmatpush1.bf16.msra.mxu0 %v321
    %406 = vmatprep.subr.bf16.mxu0 0
    %407 = vmatpush1.bf16.msra.mxu0 %v322
    %408 = vmatprep.subr.bf16.mxu0 0
    %409 = vmatpush1.bf16.msra.mxu0 %v323
    %410 = vmatprep.subr.bf16.mxu0 0
    %411 = vmatpush1.bf16.msra.mxu0 %v324
    %412 = vmatprep.subr.bf16.mxu0 0
    %413 = vmatpush1.bf16.msra.mxu0 %v325
    %414 = vmatprep.subr.bf16.mxu0 0
    %415 = vmatpush1.bf16.msra.mxu0 %v326
    %416 = vmatprep.subr.bf16.mxu0 0
    %417 = vmatpush1.bf16.msra.mxu0 %v327
    %418 = vmatprep.subr.bf16.mxu0 0
    %419 = vmatpush1.bf16.msra.mxu0 %v328
    %420 = vmatprep.subr.bf16.mxu0 0
    %421 = vmatpush1.bf16.msra.mxu0 %v329
    %422 = vmatprep.mubr.bf16.mxu0 %v163
    %423 = vmatmul.mubr.bf16.gmra.mrb[0].mxu0 %v149
    %v424 = vpop.f32.mrb[0].mxu0
    %v425 = vadd.f32 %v124, %v424
    %v426 = vpop.f32.mrb[0].mxu0
    %v427 = vpop.f32.mrb[0].mxu0
    %v428 = vpop.f32.mrb[0].mxu0
    %429 = vdwg.mxu0
    %430 = vmatprep.subr.bf16.mxu0 0
    %431 = vmatpush1.bf16.msra.mxu0 %v330
    %432 = vmatprep.subr.bf16.mxu0 0
    %433 = vmatpush1.bf16.msra.mxu0 %v331
    %434 = vmatprep.subr.bf16.mxu0 0
    %435 = vmatpush1.bf16.msra.mxu0 %v332
    %436 = vmatprep.subr.bf16.mxu0 0
    %437 = vmatpush1.bf16.msra.mxu0 %v333
    %438 = vmatprep.subr.bf16.mxu0 0
    %439 = vmatpush1.bf16.msra.mxu0 %v334
    %440 = vmatprep.subr.bf16.mxu0 0
    %441 = vmatpush1.bf16.msra.mxu0 %v335
    %442 = vmatprep.subr.bf16.mxu0 0
    %443 = vmatpush1.bf16.msra.mxu0 %v336
    %444 = vmatprep.subr.bf16.mxu0 0
    %445 = vmatpush1.bf16.msra.mxu0 %v337
    %446 = vmatprep.subr.bf16.mxu0 0
    %447 = vmatpush1.bf16.msra.mxu0 %v338
    %448 = vmatprep.subr.bf16.mxu0 0
    %449 = vmatpush1.bf16.msra.mxu0 %v339
    %450 = vmatprep.subr.bf16.mxu0 0
    %451 = vmatpush1.bf16.msra.mxu0 %v340
    %452 = vmatprep.subr.bf16.mxu0 0
    %453 = vmatpush1.bf16.msra.mxu0 %v341
    %454 = vmatprep.subr.bf16.mxu0 0
    %455 = vmatpush1.bf16.msra.mxu0 %v342
    %456 = vmatprep.subr.bf16.mxu0 0
    %457 = vmatpush1.bf16.msra.mxu0 %v343
    %458 = vmatprep.subr.bf16.mxu0 0
    %459 = vmatpush1.bf16.msra.mxu0 %v344
    %460 = vmatprep.subr.bf16.mxu0 0
    %461 = vmatpush1.bf16.msra.mxu0 %v345
    %462 = vmatprep.mubr.bf16.mxu0 %v165
    %463 = vmatmul.mubr.bf16.gmra.mrb[0].mxu0 %v164
    %v464 = vpop.f32.mrb[0].mxu0
    %v465 = vadd.f32 %v425, %v464
    %v466 = vpop.f32.mrb[0].mxu0
    %v467 = vpop.f32.mrb[0].mxu0
    %v468 = vpop.f32.mrb[0].mxu0
    %469 = vdwg.mxu0
    %470 = vmatprep.subr.bf16.mxu0 0
    %471 = vmatpush1.bf16.msra.mxu0 %v346
    %472 = vmatprep.subr.bf16.mxu0 0
    %473 = vmatpush1.bf16.msra.mxu0 %v347
    %474 = vmatprep.subr.bf16.mxu0 0
    %475 = vmatpush1.bf16.msra.mxu0 %v348
    %476 = vmatprep.subr.bf16.mxu0 0
    %477 = vmatpush1.bf16.msra.mxu0 %v349
    %478 = vmatprep.subr.bf16.mxu0 0
    %479 = vmatpush1.bf16.msra.mxu0 0
    %480 = vmatprep.subr.bf16.mxu0 0
    %481 = vmatpush1.bf16.msra.mxu0 0
    %482 = vmatprep.subr.bf16.mxu0 0
    %483 = vmatpush1.bf16.msra.mxu0 0
    %484 = vmatprep.subr.bf16.mxu0 0
    %485 = vmatpush1.bf16.msra.mxu0 0
    %486 = vmatprep.subr.bf16.mxu0 0
    %487 = vmatpush1.bf16.msra.mxu0 0
    %488 = vmatprep.subr.bf16.mxu0 0
    %489 = vmatpush1.bf16.msra.mxu0 0
    %490 = vmatprep.subr.bf16.mxu0 0
    %491 = vmatpush1.bf16.msra.mxu0 0
    %492 = vmatprep.subr.bf16.mxu0 0
    %493 = vmatpush1.bf16.msra.mxu0 0
    %494 = vmatprep.subr.bf16.mxu0 0
    %495 = vmatpush1.bf16.msra.mxu0 0
    %496 = vmatprep.subr.bf16.mxu0 0
    %497 = vmatpush1.bf16.msra.mxu0 0
    %498 = vmatprep.subr.bf16.mxu0 0
    %499 = vmatpush1.bf16.msra.mxu0 0
    %500 = vmatprep.subr.bf16.mxu0 0
    %501 = vmatpush1.bf16.msra.mxu0 0
    %502 = vmatprep.mubr.bf16.mxu0 0
    %503 = vmatmul.mubr.bf16.gmra.mrb[0].mxu0 %v388
    %v504 = vpop.f32.mrb[0].mxu0
    %v505 = vadd.f32 %v465, %v504
    %v506 = vpop.f32.mrb[0].mxu0
    %v507 = vpop.f32.mrb[0].mxu0
    %v508 = vpop.f32.mrb[0].mxu0
    %509 = vdwg.mxu0
    %v510 = vmax.f32 %v505, 0.0
    %v511 = vld [vmem:[%s3] sm:$0x1]
    %v512 = vld [vmem:[%s4] sm:$0x1]
    %vm513 = vcmask 1041408
    %v514 = vsel %vm513, %v510, 0.0
    %v515 = vrot.slane %v514, 4
    %v516 = vadd.f32 %v514, %v515
    %v517 = vrot.slane %v516, 2
    %v518 = vadd.f32 %v516, %v517
    %v519 = vrot.slane %v518, 1
    %v520 = vadd.f32 %v518, %v519
    %v521 = vmul.f32 %v510, %v510
    %v522 = vsel %vm513, %v521, 0.0
    %v523 = vrot.slane %v522, 4
    %v524 = vadd.f32 %v522, %v523
    %v525 = vrot.slane %v524, 2
    %v526 = vadd.f32 %v524, %v525
    %v527 = vrot.slane %v526, 1
    %v528 = vadd.f32 %v526, %v527
    %v529 = vrcp.pop 2.0
    %v530 = vmul.f32 %v520, %v529
    %v531 = vmul.f32 %v528, %v529
    %v532 = vmul.f32 %v530, %v530
    %v533 = vsub.f32 %v531, %v532
    %v534 = vsub.f32 %v510, %v530
    %v535 = vadd.f32 %v533, 1e-05
    %v536 = vrsqrt.pop %v535
    %v537 = vmul.f32 %v534, %v536
    %v539 = vlaneseq
    %v540 = vshrl.u32 %v539, 7
    %v541 = vsub.s32 0, %v540
    %v542 = vrot.slane %v511, %v541
    %v544 = vmul.f32 %v537, %v542
    %v546 = vlaneseq
    %v547 = vshrl.u32 %v546, 7
    %v548 = vsub.s32 0, %v547
    %v549 = vrot.slane %v512, %v548
    %v551 = vadd.f32 %v544, %v549
    %v552 = vpack.c.bf16 %v551, %v551
    %v553 = vld [vmem:[%s5] sm:$0xf]
    %v554 = vld [vmem:[%s5 + $0x4] sm:$0xf]
    %v555 = vld [vmem:[%s5 + $0x8] sm:$0xf]
    %v556 = vld [vmem:[%s5 + $0xc] sm:$0xf]
    %v557 = vld [vmem:[%s5 + $0x10] sm:$0xf]
    %v558 = vld [vmem:[%s5 + $0x14] sm:$0xf]
    %v559 = vld [vmem:[%s5 + $0x18] sm:$0xf]
    %v560 = vld [vmem:[%s5 + $0x1c] sm:$0xf]
    %v561 = vld [vmem:[%s5 + $0x20] sm:$0xf]
    %v562 = vld [vmem:[%s5 + $0x24] sm:$0xf]
    %v563 = vld [vmem:[%s5 + $0x28] sm:$0xf]
    %v564 = vld [vmem:[%s5 + $0x2c] sm:$0xf]
    %v565 = vld [vmem:[%s5 + $0x30] sm:$0xf]
    %v566 = vld [vmem:[%s5 + $0x34] sm:$0xf]
    %v567 = vld [vmem:[%s5 + $0x38] sm:$0xf]
    %v568 = vld [vmem:[%s5 + $0x3c] sm:$0xf]
    %v569 = vld [vmem:[%s6] sm:$0x1]
    %v571 = vlaneseq
    %v572 = vshrl.u32 %v571, 7
    %v573 = vsub.s32 0, %v572
    %v574 = vrot.slane %v569, %v573
    %v592 = vunpack.c.l.b16 %v553
    %v593 = vunpack.c.l.b16 %v554
    %v594 = vunpack.c.l.b16 %v555
    %v595 = vunpack.c.l.b16 %v556
    %v596 = vunpack.c.l.b16 %v557
    %v597 = vunpack.c.l.b16 %v558
    %v598 = vunpack.c.l.b16 %v559
    %v599 = vunpack.c.l.b16 %v560
    %v600 = vunpack.c.l.b16 %v561
    %v601 = vunpack.c.l.b16 %v562
    %v602 = vunpack.c.l.b16 %v563
    %v603 = vunpack.c.l.b16 %v564
    %v604 = vunpack.c.l.b16 %v565
    %v605 = vunpack.c.l.b16 %v566
    %v606 = vunpack.c.l.b16 %v567
    %v607 = vunpack.c.l.b16 %v568
    %v608 = vpack.c.b16 %v593, %v592
    %v609 = vpack.c.b16 %v595, %v594
    %v610 = vpack.c.b16 %v597, %v596
    %v611 = vpack.c.b16 %v599, %v598
    %v612 = vpack.c.b16 %v601, %v600
    %v613 = vpack.c.b16 %v603, %v602
    %v614 = vpack.c.b16 %v605, %v604
    %v615 = vpack.c.b16 %v607, %v606
    %624 = vmatprep.subr.bf16.mxu0 0
    %625 = vmatpush1.bf16.msra.mxu0 %v608
    %626 = vmatprep.subr.bf16.mxu0 0
    %627 = vmatpush1.bf16.msra.mxu0 %v609
    %628 = vmatprep.subr.bf16.mxu0 0
    %629 = vmatpush1.bf16.msra.mxu0 %v610
    %630 = vmatprep.subr.bf16.mxu0 0
    %631 = vmatpush1.bf16.msra.mxu0 %v611
    %632 = vmatprep.subr.bf16.mxu0 0
    %633 = vmatpush1.bf16.msra.mxu0 %v612
    %634 = vmatprep.subr.bf16.mxu0 0
    %635 = vmatpush1.bf16.msra.mxu0 %v613
    %636 = vmatprep.subr.bf16.mxu0 0
    %637 = vmatpush1.bf16.msra.mxu0 %v614
    %638 = vmatprep.subr.bf16.mxu0 0
    %639 = vmatpush1.bf16.msra.mxu0 %v615
    %640 = vmatprep.subr.bf16.mxu0 0
    %641 = vmatpush1.bf16.msra.mxu0 0
    %642 = vmatprep.subr.bf16.mxu0 0
    %643 = vmatpush1.bf16.msra.mxu0 0
    %644 = vmatprep.subr.bf16.mxu0 0
    %645 = vmatpush1.bf16.msra.mxu0 0
    %646 = vmatprep.subr.bf16.mxu0 0
    %647 = vmatpush1.bf16.msra.mxu0 0
    %648 = vmatprep.subr.bf16.mxu0 0
    %649 = vmatpush1.bf16.msra.mxu0 0
    %650 = vmatprep.subr.bf16.mxu0 0
    %651 = vmatpush1.bf16.msra.mxu0 0
    %652 = vmatprep.subr.bf16.mxu0 0
    %653 = vmatpush1.bf16.msra.mxu0 0
    %654 = vmatprep.subr.bf16.mxu0 0
    %655 = vmatpush1.bf16.msra.mxu0 0
    %656 = vmatprep.mubr.bf16.mxu0 0
    %657 = vmatmul.mubr.bf16.gmra.mrb[0].mxu0 %v552
    %v658 = vpop.f32.mrb[0].mxu0
    %v659 = vadd.f32 %v574, %v658
    %v660 = vpop.f32.mrb[0].mxu0
    %v661 = vpop.f32.mrb[0].mxu0
    %v662 = vpop.f32.mrb[0].mxu0
    %663 = vdwg.mxu0
    %v664 = vmax.f32 %v659, 0.0
    %v665 = vld [vmem:[%s7] sm:$0x1]
    %v666 = vld [vmem:[%s8] sm:$0x1]
    %v667 = vsel %vm513, %v664, 0.0
    %v668 = vrot.slane %v667, 4
    %v669 = vadd.f32 %v667, %v668
    %v670 = vrot.slane %v669, 2
    %v671 = vadd.f32 %v669, %v670
    %v672 = vrot.slane %v671, 1
    %v673 = vadd.f32 %v671, %v672
    %v674 = vmul.f32 %v664, %v664
    %v675 = vsel %vm513, %v674, 0.0
    %v676 = vrot.slane %v675, 4
    %v677 = vadd.f32 %v675, %v676
    %v678 = vrot.slane %v677, 2
    %v679 = vadd.f32 %v677, %v678
    %v680 = vrot.slane %v679, 1
    %v681 = vadd.f32 %v679, %v680
    %v682 = vmul.f32 %v673, %v529
    %v683 = vmul.f32 %v681, %v529
    %v684 = vmul.f32 %v682, %v682
    %v685 = vsub.f32 %v683, %v684
    %v686 = vsub.f32 %v664, %v682
    %v687 = vadd.f32 %v685, 1e-05
    %v688 = vrsqrt.pop %v687
    %v689 = vmul.f32 %v686, %v688
    %v691 = vlaneseq
    %v692 = vshrl.u32 %v691, 7
    %v693 = vsub.s32 0, %v692
    %v694 = vrot.slane %v665, %v693
    %v696 = vmul.f32 %v689, %v694
    %v698 = vlaneseq
    %v699 = vshrl.u32 %v698, 7
    %v700 = vsub.s32 0, %v699
    %v701 = vrot.slane %v666, %v700
    %v703 = vadd.f32 %v696, %v701
    %v704 = vpack.c.bf16 %v703, %v703
    %v705 = vld [vmem:[%s9] sm:$0xf]
    %v706 = vld [vmem:[%s9 + $0x4] sm:$0xf]
    %v707 = vld [vmem:[%s9 + $0x8] sm:$0xf]
    %v708 = vld [vmem:[%s9 + $0xc] sm:$0xf]
    %v709 = vld [vmem:[%s9 + $0x10] sm:$0xf]
    %v710 = vld [vmem:[%s9 + $0x14] sm:$0xf]
    %v711 = vld [vmem:[%s9 + $0x18] sm:$0xf]
    %v712 = vld [vmem:[%s9 + $0x1c] sm:$0xf]
    %v713 = vld [vmem:[%s9 + $0x20] sm:$0xf]
    %v714 = vld [vmem:[%s9 + $0x24] sm:$0xf]
    %v715 = vld [vmem:[%s9 + $0x28] sm:$0xf]
    %v716 = vld [vmem:[%s9 + $0x2c] sm:$0xf]
    %v717 = vld [vmem:[%s9 + $0x30] sm:$0xf]
    %v718 = vld [vmem:[%s9 + $0x34] sm:$0xf]
    %v719 = vld [vmem:[%s9 + $0x38] sm:$0xf]
    %v720 = vld [vmem:[%s9 + $0x3c] sm:$0xf]
    %v721 = vld [vmem:[%s10] sm:$0x1]
    %v723 = vlaneseq
    %v724 = vshrl.u32 %v723, 7
    %v725 = vsub.s32 0, %v724
    %v726 = vrot.slane %v721, %v725
    %v744 = vunpack.c.l.b16 %v705
    %v745 = vunpack.c.l.b16 %v706
    %v746 = vunpack.c.l.b16 %v707
    %v747 = vunpack.c.l.b16 %v708
    %v748 = vunpack.c.l.b16 %v709
    %v749 = vunpack.c.l.b16 %v710
    %v750 = vunpack.c.l.b16 %v711
    %v751 = vunpack.c.l.b16 %v712
    %v752 = vunpack.c.l.b16 %v713
    %v753 = vunpack.c.l.b16 %v714
    %v754 = vunpack.c.l.b16 %v715
    %v755 = vunpack.c.l.b16 %v716
    %v756 = vunpack.c.l.b16 %v717
    %v757 = vunpack.c.l.b16 %v718
    %v758 = vunpack.c.l.b16 %v719
    %v759 = vunpack.c.l.b16 %v720
    %v760 = vpack.c.b16 %v745, %v744
    %v761 = vpack.c.b16 %v747, %v746
    %v762 = vpack.c.b16 %v749, %v748
    %v763 = vpack.c.b16 %v751, %v750
    %v764 = vpack.c.b16 %v753, %v752
    %v765 = vpack.c.b16 %v755, %v754
    %v766 = vpack.c.b16 %v757, %v756
    %v767 = vpack.c.b16 %v759, %v758
    %776 = vmatprep.subr.bf16.mxu0 0
    %777 = vmatpush1.bf16.msra.mxu0 %v760
    %778 = vmatprep.subr.bf16.mxu0 0
    %779 = vmatpush1.bf16.msra.mxu0 %v761
    %780 = vmatprep.subr.bf16.mxu0 0
    %781 = vmatpush1.bf16.msra.mxu0 %v762
    %782 = vmatprep.subr.bf16.mxu0 0
    %783 = vmatpush1.bf16.msra.mxu0 %v763
    %784 = vmatprep.subr.bf16.mxu0 0
    %785 = vmatpush1.bf16.msra.mxu0 %v764
    %786 = vmatprep.subr.bf16.mxu0 0
    %787 = vmatpush1.bf16.msra.mxu0 %v765
    %788 = vmatprep.subr.bf16.mxu0 0
    %789 = vmatpush1.bf16.msra.mxu0 %v766
    %790 = vmatprep.subr.bf16.mxu0 0
    %791 = vmatpush1.bf16.msra.mxu0 %v767
    %792 = vmatprep.subr.bf16.mxu0 0
    %793 = vmatpush1.bf16.msra.mxu0 0
    %794 = vmatprep.subr.bf16.mxu0 0
    %795 = vmatpush1.bf16.msra.mxu0 0
    %796 = vmatprep.subr.bf16.mxu0 0
    %797 = vmatpush1.bf16.msra.mxu0 0
    %798 = vmatprep.subr.bf16.mxu0 0
    %799 = vmatpush1.bf16.msra.mxu0 0
    %800 = vmatprep.subr.bf16.mxu0 0
    %801 = vmatpush1.bf16.msra.mxu0 0
    %802 = vmatprep.subr.bf16.mxu0 0
    %803 = vmatpush1.bf16.msra.mxu0 0
    %804 = vmatprep.subr.bf16.mxu0 0
    %805 = vmatpush1.bf16.msra.mxu0 0
    %806 = vmatprep.subr.bf16.mxu0 0
    %807 = vmatpush1.bf16.msra.mxu0 0
    %808 = vmatprep.mubr.bf16.mxu0 0
    %809 = vmatmul.mubr.bf16.gmra.mrb[0].mxu0 %v704
    %v810 = vpop.f32.mrb[0].mxu0
    %v811 = vadd.f32 %v726, %v810
    %v812 = vpop.f32.mrb[0].mxu0
    %v813 = vpop.f32.mrb[0].mxu0
    %v814 = vpop.f32.mrb[0].mxu0
    %815 = vdwg.mxu0
    %v816 = vmax.f32 %v811, 0.0
    %v817 = vpack.c.bf16 %v816, %v816
    %v818 = vld [vmem:[%s11] sm:$0xf]
    %v819 = vld [vmem:[%s11 + $0x4] sm:$0xf]
    %v820 = vld [vmem:[%s11 + $0x8] sm:$0xf]
    %v821 = vld [vmem:[%s11 + $0xc] sm:$0xf]
    %v822 = vld [vmem:[%s11 + $0x10] sm:$0xf]
    %v823 = vld [vmem:[%s11 + $0x14] sm:$0xf]
    %v824 = vld [vmem:[%s11 + $0x18] sm:$0xf]
    %v825 = vld [vmem:[%s11 + $0x1c] sm:$0xf]
    %v826 = vld [vmem:[%s11 + $0x20] sm:$0xf]
    %v827 = vld [vmem:[%s11 + $0x24] sm:$0xf]
    %v828 = vld [vmem:[%s11 + $0x28] sm:$0xf]
    %v829 = vld [vmem:[%s11 + $0x2c] sm:$0xf]
    %v830 = vld [vmem:[%s11 + $0x30] sm:$0x3]
    %v831 = vld [vmem:[%s12] sm:$0x1]
    %v833 = vlaneseq
    %v834 = vshrl.u32 %v833, 7
    %v835 = vsub.s32 0, %v834
    %v836 = vrot.slane %v831, %v835
    %v851 = vunpack.c.l.b16 %v818
    %v852 = vunpack.c.l.b16 %v819
    %v853 = vunpack.c.l.b16 %v820
    %v854 = vunpack.c.l.b16 %v821
    %v855 = vunpack.c.l.b16 %v822
    %v856 = vunpack.c.l.b16 %v823
    %v857 = vunpack.c.l.b16 %v824
    %v858 = vunpack.c.l.b16 %v825
    %v859 = vunpack.c.l.b16 %v826
    %v860 = vunpack.c.l.b16 %v827
    %v861 = vunpack.c.l.b16 %v828
    %v862 = vunpack.c.l.b16 %v829
    %v863 = vunpack.c.l.b16 %v830
    %v864 = vpack.c.b16 %v852, %v851
    %v865 = vpack.c.b16 %v854, %v853
    %v866 = vpack.c.b16 %v856, %v855
    %v867 = vpack.c.b16 %v858, %v857
    %v868 = vpack.c.b16 %v860, %v859
    %v869 = vpack.c.b16 %v862, %v861
    %v870 = vpack.c.b16 %v863, %v863
    %vm877 = vcmask 818176
    %v879 = vsel %vm877, %v817, 0
    %v882 = vsel %vm513, %v870, 0
    %884 = vmatprep.subr.bf16.mxu0 0
    %885 = vmatpush1.bf16.msra.mxu0 %v864
    %886 = vmatprep.subr.bf16.mxu0 0
    %887 = vmatpush1.bf16.msra.mxu0 %v865
    %888 = vmatprep.subr.bf16.mxu0 0
    %889 = vmatpush1.bf16.msra.mxu0 %v866
    %890 = vmatprep.subr.bf16.mxu0 0
    %891 = vmatpush1.bf16.msra.mxu0 %v867
    %892 = vmatprep.subr.bf16.mxu0 0
    %893 = vmatpush1.bf16.msra.mxu0 %v868
    %894 = vmatprep.subr.bf16.mxu0 0
    %895 = vmatpush1.bf16.msra.mxu0 %v869
    %896 = vmatprep.subr.bf16.mxu0 0
    %897 = vmatpush1.bf16.msra.mxu0 %v882
    %898 = vmatprep.subr.bf16.mxu0 0
    %899 = vmatpush1.bf16.msra.mxu0 0
    %900 = vmatprep.subr.bf16.mxu0 0
    %901 = vmatpush1.bf16.msra.mxu0 0
    %902 = vmatprep.subr.bf16.mxu0 0
    %903 = vmatpush1.bf16.msra.mxu0 0
    %904 = vmatprep.subr.bf16.mxu0 0
    %905 = vmatpush1.bf16.msra.mxu0 0
    %906 = vmatprep.subr.bf16.mxu0 0
    %907 = vmatpush1.bf16.msra.mxu0 0
    %908 = vmatprep.subr.bf16.mxu0 0
    %909 = vmatpush1.bf16.msra.mxu0 0
    %910 = vmatprep.subr.bf16.mxu0 0
    %911 = vmatpush1.bf16.msra.mxu0 0
    %912 = vmatprep.subr.bf16.mxu0 0
    %913 = vmatpush1.bf16.msra.mxu0 0
    %914 = vmatprep.subr.bf16.mxu0 0
    %915 = vmatpush1.bf16.msra.mxu0 0
    %916 = vmatprep.mubr.bf16.mxu0 0
    %917 = vmatmul.mubr.bf16.gmra.mrb[0].mxu0 %v879
    %v918 = vpop.f32.mrb[0].mxu0
    %v919 = vadd.f32 %v836, %v918
    %v920 = vpop.f32.mrb[0].mxu0
    %v921 = vpop.f32.mrb[0].mxu0
    %v922 = vpop.f32.mrb[0].mxu0
    %923 = vdwg.mxu0
    %vm924 = vcmask 74752
    %925 = vst.msk [vmem:[#allocation2] sm:$0x3] %vm924, %v919
    // Predicated region
    $region54: #{mnistnet_forward.13} parent=1 // pred_check
      _
    $region55: #{mnistnet_forward.13} parent=1 // pred_check_branch
      %927 = sbr.rel (0) target = $region57
    $region56: #{mnistnet_forward.13} parent=1 // pred_region
      %s929 = ssub.s32 32, 32
      %930 = vsyncadd [#allocation3], %s929
      %s932 = sshll.u32 [#allocation2], 4
      %s933 = int_to_ptr.vmem [resolvable:$true] %s932
      %935 = dma.vmem_to_hbm [thread:$0]  %s933, 32, %s13, [#allocation3]
    $region57: #{mnistnet_forward.13} parent=1 // pred_fallthru
      _
    // Predicated region
    $region58: #{mnistnet_forward.13} parent=1 // pred_check
      _
    $region59: #{mnistnet_forward.13} parent=1 // pred_check_branch
      %937 = sbr.rel (0) target = $region61
    $region60: #{mnistnet_forward.13} parent=1 // pred_region
      %938 = dma.done [#allocation3], 32
    $region61: #{mnistnet_forward.13} parent=1 // pred_fallthru
      _
    %939 = vsyncpa [#allocation3], 1

</llo_original>
